<compile_context>
chip_gen: v7x
topology: tpu7x:2x2x1
jax: 0.10.0
libtpu: 0.0.40
codegen_flags: <defaults>
</compile_context>

<pallas_src>
import functools

import numpy as np
import jax
import jax.numpy as jnp
from jax import lax
from jax.experimental import pallas as pl
from jax.experimental.pallas import tpu as pltpu

F32 = jnp.float32
BF16 = jnp.bfloat16
BN_EPS = 1e-5
LEAKY_SLOPE = 0.1


# ---------------------------------------------------------------------------
# Compiler params (generation-aware VMEM limit)
# ---------------------------------------------------------------------------
def _vmem_limit_bytes():
    try:
        cap = getattr(pltpu.get_tpu_info(), "vmem_capacity_bytes", None)
    except Exception:
        cap = None
    if not cap:
        return 48 * 1024 * 1024            # safe fallback (ran clean previously)
    # ~60% of physical: ~38 MiB on v7x (64 MiB), ~77 MiB on v5e/v6e (128 MiB).
    return int(min(max(cap * 0.6, 32 * 1024 * 1024), 100 * 1024 * 1024))


_VMEM_LIMIT = None


def _cparams(n_axes):
    global _VMEM_LIMIT
    if _VMEM_LIMIT is None:
        _VMEM_LIMIT = _vmem_limit_bytes()
    return pltpu.CompilerParams(dimension_semantics=("parallel",) * n_axes,
                                vmem_limit_bytes=_VMEM_LIMIT)


# ---------------------------------------------------------------------------
# Small in-kernel helpers
# ---------------------------------------------------------------------------
def _leaky(a, slope):
    return jnp.where(a >= 0.0, a, slope * a)


def _stats(y_f32):
    ssum = jnp.sum(y_f32, axis=0, keepdims=True)          # (1, Co)
    ssq = jnp.sum(y_f32 * y_f32, axis=0, keepdims=True)   # (1, Co)
    return jnp.concatenate([ssum, ssq], axis=0)            # (2, Co)


# ---------------------------------------------------------------------------
# Pallas kernels
# ---------------------------------------------------------------------------
def _matmul_stats_kernel(x_ref, w_ref, y_ref, s_ref):
    """y = x @ w (bf16 in, f32 acc) stored bf16; per-tile sum/sum_sq from f32."""
    y = jnp.dot(x_ref[...], w_ref[...], preferred_element_type=F32)
    y_ref[...] = y.astype(y_ref.dtype)
    s_ref[0, :, :] = _stats(y)


def _bn_act_matmul_stats_kernel(x_ref, w_ref, sc_ref, sh_ref, y_ref, s_ref, *,
                                slope, tm, valid_rows):
    """Fused BN-apply + LeakyReLU prologue, then matmul + per-tile stats."""
    a = x_ref[...].astype(F32) * sc_ref[...] + sh_ref[...]
    a = _leaky(a, slope)
    if valid_rows is not None:
        # Zero rows that only exist because of row padding, so they do not
        # contaminate the stats of the matmul output.
        row = lax.broadcasted_iota(jnp.int32, a.shape, 0) + pl.program_id(0) * tm
        a = jnp.where(row < valid_rows, a, 0.0)
    y = jnp.dot(a.astype(x_ref.dtype), w_ref[...], preferred_element_type=F32)
    y_ref[...] = y.astype(y_ref.dtype)
    s_ref[0, :, :] = _stats(y)


def _bn_act_conv3x3_stats_kernel(xp_ref, w_ref, sc_ref, sh_ref, y_ref, s_ref, *,
                                 k, dil, pad, oh, ow, slope):
    """Direct 3x3 conv on one padded NHWC image with fused BN1 + LeakyReLU.

    The HBM buffer was zero-padded BEFORE BN, but the conv must pad AFTER the
    activation, so the halo is masked back to zero after the prologue.
    """
    hp, wp, cin = xp_ref.shape[1], xp_ref.shape[2], xp_ref.shape[3]
    co = w_ref.shape[-1]

    a = xp_ref[0].astype(F32) * sc_ref[...] + sh_ref[...]
    a = _leaky(a, slope)
    r = lax.broadcasted_iota(jnp.int32, (hp, wp, cin), 0)
    c = lax.broadcasted_iota(jnp.int32, (hp, wp, cin), 1)
    interior = (r >= pad) & (r < hp - pad) & (c >= pad) & (c < wp - pad)
    a = jnp.where(interior, a, 0.0).astype(xp_ref.dtype)   # bf16 for the MXU

    # TODO(synk): for very large H*W*C on v7x (64 MiB VMEM), tile over output
    # rows with a halo'd block instead of one image per grid step.
    acc = jnp.zeros((oh * ow, co), F32)
    for kh in range(k):
        for kw in range(k):
            win = a[kh * dil: kh * dil + oh, kw * dil: kw * dil + ow, :]
            acc = acc + jnp.dot(win.reshape(oh * ow, cin), w_ref[kh * k + kw],
                                preferred_element_type=F32)
    y_ref[0] = acc.astype(y_ref.dtype)
    s_ref[0, :, :] = _stats(acc)


def _bn_residual_act_kernel(y_ref, id_ref, sc_ref, sh_ref, o_ref, *, slope):
    """Fused BN3 + residual add + LeakyReLU (operands lane-dense folded)."""
    a = (y_ref[...].astype(F32) * sc_ref[...] + sh_ref[...]
         + id_ref[...].astype(F32))
    o_ref[...] = _leaky(a, slope).astype(o_ref.dtype)


# ---------------------------------------------------------------------------
# Wrappers
# ---------------------------------------------------------------------------
def _row_tiling(m, tm):
    """Returns (tile, padded_rows, num_tiles); whole-array tile if m <= tm."""
    if m <= tm:
        return m, m, 1
    mp = pl.cdiv(m, tm) * tm
    return tm, mp, mp // tm


def _pad_rows_to(x, mp):
    if x.shape[0] == mp:
        return x
    return jnp.pad(x, ((0, mp - x.shape[0]), (0, 0)))


def conv1x1_stats(x_rows, w, *, tm=512):
    """x_rows (M,K) bf16, w (K,Co) bf16 -> y (M,Co) bf16, stats (2,Co) f32."""
    m, k = x_rows.shape
    co = w.shape[1]
    tme, mp, mt = _row_tiling(m, tm)
    xp = _pad_rows_to(x_rows, mp)
    y, s = pl.pallas_call(
        _matmul_stats_kernel,
        out_shape=(jax.ShapeDtypeStruct((mp, co), BF16),
                   jax.ShapeDtypeStruct((mt, 2, co), F32)),
        grid_spec=pltpu.PrefetchScalarGridSpec(
            num_scalar_prefetch=0, grid=(mt,),
            in_specs=[pl.BlockSpec((tme, k), lambda i: (i, 0)),
                      pl.BlockSpec((k, co), lambda i: (0, 0))],
            out_specs=(pl.BlockSpec((tme, co), lambda i: (i, 0)),
                       pl.BlockSpec((1, 2, co), lambda i: (i, 0, 0)))),
        compiler_params=_cparams(1),
    )(xp, w)
    if mp != m:
        y = y[:m]
    return y, jnp.sum(s, axis=0)


def bn_act_conv1x1_stats(y_prev, scale, shift, w, *, slope, tm=512):
    """BN+LeakyReLU applied to y_prev (bf16), then 1x1 conv + stats."""
    m, k = y_prev.shape
    co = w.shape[1]
    tme, mp, mt = _row_tiling(m, tm)
    xp = _pad_rows_to(y_prev, mp)
    kernel = functools.partial(_bn_act_matmul_stats_kernel, slope=slope, tm=tme,
                               valid_rows=(m if mp != m else None))
    y, s = pl.pallas_call(
        kernel,
        out_shape=(jax.ShapeDtypeStruct((mp, co), BF16),
                   jax.ShapeDtypeStruct((mt, 2, co), F32)),
        grid_spec=pltpu.PrefetchScalarGridSpec(
            num_scalar_prefetch=0, grid=(mt,),
            in_specs=[pl.BlockSpec((tme, k), lambda i: (i, 0)),
                      pl.BlockSpec((k, co), lambda i: (0, 0)),
                      pl.BlockSpec((1, k), lambda i: (0, 0)),
                      pl.BlockSpec((1, k), lambda i: (0, 0))],
            out_specs=(pl.BlockSpec((tme, co), lambda i: (i, 0)),
                       pl.BlockSpec((1, 2, co), lambda i: (i, 0, 0)))),
        compiler_params=_cparams(1),
    )(xp, w, scale, shift)
    if mp != m:
        y = y[:m]
    return y, jnp.sum(s, axis=0)


def bn_act_conv3x3_stats(y1_4d, scale, shift, w_kkcc, *, dil, pad, oh, ow, slope):
    """y1_4d (N,H,W,Cin) raw conv1 output bf16; BN1+act fused in-kernel."""
    n, h, w, cin = y1_4d.shape
    kk, _, co = w_kkcc.shape
    k = int(round(kk ** 0.5))
    xpad = jnp.pad(y1_4d, ((0, 0), (pad, pad), (pad, pad), (0, 0)))
    hp, wp = h + 2 * pad, w + 2 * pad
    kernel = functools.partial(_bn_act_conv3x3_stats_kernel, k=k, dil=dil,
                               pad=pad, oh=oh, ow=ow, slope=slope)
    y, s = pl.pallas_call(
        kernel,
        out_shape=(jax.ShapeDtypeStruct((n, oh * ow, co), BF16),
                   jax.ShapeDtypeStruct((n, 2, co), F32)),
        grid_spec=pltpu.PrefetchScalarGridSpec(
            num_scalar_prefetch=0, grid=(n,),
            in_specs=[pl.BlockSpec((1, hp, wp, cin), lambda b: (b, 0, 0, 0)),
                      pl.BlockSpec((kk, cin, co), lambda b: (0, 0, 0)),
                      pl.BlockSpec((1, cin), lambda b: (0, 0)),
                      pl.BlockSpec((1, cin), lambda b: (0, 0))],
            out_specs=(pl.BlockSpec((1, oh * ow, co), lambda b: (b, 0, 0)),
                       pl.BlockSpec((1, 2, co), lambda b: (b, 0, 0)))),
        compiler_params=_cparams(1),
    )(xpad, w_kkcc, scale, shift)
    return y.reshape(n * oh * ow, co), jnp.sum(s, axis=0)


def bn_residual_act(y_rows, id_rows, scale, shift, *, slope, tm=512):
    """Final BN3 + residual + LeakyReLU; operands lane-dense folded if C<128."""
    m, c = y_rows.shape
    fold = 1
    if c < 128 and 128 % c == 0:
        f = 128 // c
        if m % f == 0:
            fold = f
    mf, cf = m // fold, c * fold
    yf = y_rows.reshape(mf, cf)
    idf = id_rows.reshape(mf, cf)
    scf = jnp.tile(scale, (1, fold))
    shf = jnp.tile(shift, (1, fold))

    tme, mp, mt = _row_tiling(mf, tm)
    yp = _pad_rows_to(yf, mp)
    ip = _pad_rows_to(idf, mp)
    kernel = functools.partial(_bn_residual_act_kernel, slope=slope)
    out = pl.pallas_call(
        kernel,
        out_shape=jax.ShapeDtypeStruct((mp, cf), F32),
        grid_spec=pltpu.PrefetchScalarGridSpec(
            num_scalar_prefetch=0, grid=(mt,),
            in_specs=[pl.BlockSpec((tme, cf), lambda i: (i, 0)),
                      pl.BlockSpec((tme, cf), lambda i: (i, 0)),
                      pl.BlockSpec((1, cf), lambda i: (0, 0)),
                      pl.BlockSpec((1, cf), lambda i: (0, 0))],
            out_specs=pl.BlockSpec((tme, cf), lambda i: (i, 0))),
        compiler_params=_cparams(1),
    )(yp, ip, scf, shf)
    if mp != mf:
        out = out[:mf]
    return out.reshape(m, c)


# ---------------------------------------------------------------------------
# BatchNorm helper: training-mode batch statistics -> affine scale/shift
# ---------------------------------------------------------------------------
def bn_scale_shift(stats, count, gamma, beta):
    mean = stats[0] / count
    # TODO(synk): E[x^2]-E[x]^2 can cancel for large-mean activations; a
    # mean-shifted (Welford-style) accumulation would be more robust.
    var = jnp.maximum(stats[1] / count - mean * mean, 0.0)   # biased batch var
    inv = gamma / jnp.sqrt(var + BN_EPS)
    scale = inv
    shift = beta - mean * inv
    return scale[None, :].astype(F32), shift[None, :].astype(F32)


# ---------------------------------------------------------------------------
# Bottleneck forward pass (NCHW in / NCHW out, like the PyTorch module)
# ---------------------------------------------------------------------------
def bottleneck_forward(params, x_nchw, *, stride=1, dilation=1):
    n, cin, h, w = x_nchw.shape
    width = params['w1'].shape[1]
    cout = params['w3'].shape[1]
    # downsample=None (default module config) requires a shape-preserving block.
    assert stride == 1 and cin == cout, "downsample branch not implemented"
    # TODO(synk): optional `downsample` module (conv1x1+BN on identity) and the
    # stride>1 conv2 path are not translated (unreachable with downsample=None).

    # Single XLA fusion: NCHW -> NHWC rows + cast to bf16 (also the identity).
    rows_x = jnp.transpose(x_nchw, (0, 2, 3, 1)).reshape(n * h * w, cin).astype(BF16)

    # ---- conv1 (1x1, no bias) -> raw y1 bf16 + BN1 batch stats ------------
    y1, s1 = conv1x1_stats(rows_x, params['w1'].astype(BF16))
    sc1, sh1 = bn_scale_shift(s1, n * h * w, params['g1'], params['b1'])
    a1_raw = y1.reshape(n, h, w, width)

    # ---- BN1 + LeakyReLU fused into conv2 (3x3) -> y2 bf16 + BN2 stats ----
    pad = dilation
    oh = (h + 2 * pad - dilation * 2 - 1) // stride + 1
    ow = (w + 2 * pad - dilation * 2 - 1) // stride + 1
    w2 = params['w2'].reshape(9, width, width).astype(BF16)   # (k*k, Cin, Co)
    y2, s2 = bn_act_conv3x3_stats(a1_raw, sc1, sh1, w2, dil=dilation, pad=pad,
                                  oh=oh, ow=ow, slope=LEAKY_SLOPE)
    sc2, sh2 = bn_scale_shift(s2, n * oh * ow, params['g2'], params['b2'])

    # ---- BN2 + LeakyReLU fused into conv3 (1x1) -> y3 bf16 + BN3 stats ----
    y3, s3 = bn_act_conv1x1_stats(y2, sc2, sh2, params['w3'].astype(BF16),
                                  slope=LEAKY_SLOPE)
    sc3, sh3 = bn_scale_shift(s3, n * oh * ow, params['g3'], params['b3'])

    # ---- BN3 + residual add + LeakyReLU (lane-dense elementwise) ----------
    out_rows = bn_residual_act(y3, rows_x, sc3, sh3, slope=LEAKY_SLOPE)
    return out_rows.reshape(n, oh, ow, cout).transpose(0, 3, 1, 2)


# ---------------------------------------------------------------------------
# Pure-JAX reference (mirrors the kernel's bf16 cast points exactly)
# ---------------------------------------------------------------------------
def reference_forward(params, x_nchw, *, stride=1, dilation=1):
    assert stride == 1
    n, cin, h, w = x_nchw.shape

    def leaky(a):
        return jnp.where(a >= 0.0, a, LEAKY_SLOPE * a)

    def bn_apply(y_stats_f32, y_in, g, b):
        count = y_stats_f32.shape[0]
        mean = jnp.sum(y_stats_f32, axis=0) / count
        var = jnp.maximum(jnp.sum(y_stats_f32 * y_stats_f32, axis=0) / count
                          - mean * mean, 0.0)
        inv = g / jnp.sqrt(var + BN_EPS)
        return y_in.astype(F32) * inv + (b - mean * inv)

    rows = jnp.transpose(x_nchw, (0, 2, 3, 1)).reshape(n * h * w, cin).astype(BF16)

    w1 = params['w1'].astype(BF16).astype(F32)
    y1 = jnp.dot(rows.astype(F32), w1, precision='highest')
    width = w1.shape[1]
    a1 = leaky(bn_apply(y1, y1.astype(BF16),
                        params['g1'], params['b1'])).astype(BF16)
    a1 = a1.reshape(n, h, w, width)

    pad = dilation
    oh = (h + 2 * pad - dilation * 2 - 1) // stride + 1
    ow = (w + 2 * pad - dilation * 2 - 1) // stride + 1
    a1p = jnp.pad(a1, ((0, 0), (pad, pad), (pad, pad), (0, 0))).astype(F32)
    w2 = params['w2'].astype(BF16).astype(F32)                # (3,3,Cin,Co)
    acc = jnp.zeros((n, oh, ow, width), F32)
    for kh in range(3):
        for kw in range(3):
            win = a1p[:, kh * dilation: kh * dilation + oh,
                      kw * dilation: kw * dilation + ow, :]
            acc = acc + jnp.einsum('nhwc,cd->nhwd', win, w2[kh, kw],
                                   precision='highest')
    y2 = acc.reshape(n * oh * ow, width)
    a2 = leaky(bn_apply(y2, y2.astype(BF16),
                        params['g2'], params['b2'])).astype(BF16)

    w3 = params['w3'].astype(BF16).astype(F32)
    y3 = jnp.dot(a2.astype(F32), w3, precision='highest')
    out = leaky(bn_apply(y3, y3.astype(BF16), params['g3'], params['b3'])
                + rows.astype(F32))
    return out.reshape(n, oh, ow, -1).transpose(0, 3, 1, 2)


# ---------------------------------------------------------------------------
# Parameter init (shapes match PyTorch Bottleneck; stored pre-transposed)
# ---------------------------------------------------------------------------
def init_params(key, inplanes, planes, base_width=64, groups=1, expansion=4):
    width = int(planes * (base_width / 64.0)) * groups
    cout = planes * expansion
    ks = jax.random.split(key, 6)

    def conv_w(k, fan_in, shape):
        std = (2.0 / fan_in) ** 0.5
        return jax.random.normal(k, shape, F32) * std

    return dict(
        # conv1: torch (width, inplanes, 1, 1) -> (inplanes, width)
        w1=conv_w(ks[0], inplanes, (inplanes, width)),
        # conv2: torch (width, width, 3, 3) -> (KH, KW, Cin, Co)
        w2=conv_w(ks[1], width * 9, (3, 3, width, width)),
        # conv3: torch (cout, width, 1, 1) -> (width, cout)
        w3=conv_w(ks[2], width, (width, cout)),
        g1=jax.random.uniform(ks[3], (width,), F32, 0.5, 1.5),
        b1=jnp.zeros((width,), F32),
        g2=jax.random.uniform(ks[4], (width,), F32, 0.5, 1.5),
        b2=jnp.zeros((width,), F32),
        g3=jax.random.uniform(ks[5], (cout,), F32, 0.5, 1.5),
        b3=jnp.zeros((cout,), F32),
    )


# ---------------------------------------------------------------------------
if __name__ == "__main__":
    key = jax.random.PRNGKey(0)
    k_x, k_p = jax.random.split(key)

    # Bottleneck(inplanes=64, planes=16): width=16, out channels=64 so the
    # identity add works with downsample=None (as in the reference default).
    N, INPLANES, PLANES, H, W = 2, 64, 16, 16, 16
    x = jax.random.normal(k_x, (N, INPLANES, H, W), F32)
    params = init_params(k_p, INPLANES, PLANES)

    fwd = jax.jit(functools.partial(bottleneck_forward, stride=1, dilation=1))
    out = jax.block_until_ready(fwd(params, x))

    ref = jax.block_until_ready(reference_forward(params, x, stride=1, dilation=1))
    np.testing.assert_allclose(np.asarray(out), np.asarray(ref),
                               rtol=1e-2, atol=1e-2)
    assert out.shape == (N, PLANES * 4, H, W)
    print("KERNEL_OK")
</pallas_src>

<mosaic_0001>
module attributes {stable_mosaic.version = 11 : i64} {
  func.func @_matmul_stats_kernel(%arg0: i32, %arg1: memref<512x64xbf16, #tpu.memory_space<vmem>>, %arg2: memref<64x16xbf16, #tpu.memory_space<vmem>>, %arg3: memref<512x16xbf16, #tpu.memory_space<vmem>>, %arg4: memref<1x2x16xf32, #tpu.memory_space<vmem>>) attributes {dimension_semantics = [#tpu.dimension_semantics<parallel>], iteration_bounds = array<i64: 1>, scalar_prefetch = 0 : i64, scratch_operands = 0 : i64, tpu.core_type = #tpu.core_type<tc>, window_params = [{transform_indices = @transform_0, window_bounds = array<i64: 512, 64>}, {pipeline_mode = #tpu.pipeline_mode<synchronous>, transform_indices = @transform_1, window_bounds = array<i64: 64, 16>}, {transform_indices = @transform_2, window_bounds = array<i64: 512, 16>}, {transform_indices = @transform_3, window_bounds = array<i64: 1, 2, 16>}]} {
    %c0 = arith.constant 0 : index
    %c0_0 = arith.constant 0 : index
    %0 = vector.load %arg1[%c0, %c0_0] : memref<512x64xbf16, #tpu.memory_space<vmem>>, vector<512x64xbf16>
    %c0_1 = arith.constant 0 : index
    %c0_2 = arith.constant 0 : index
    %1 = vector.load %arg2[%c0_1, %c0_2] : memref<64x16xbf16, #tpu.memory_space<vmem>>, vector<64x16xbf16>
    %cst = arith.constant dense<0.000000e+00> : vector<512x16xf32>
    %2 = tpu.matmul %0, %1, %cst {dimension_numbers = #tpu.dot_dimension_numbers<[1], [0], [0], [1], [0, 0, 1, 1], [], []>} : vector<512x64xbf16>, vector<64x16xbf16>, vector<512x16xf32> -> vector<512x16xf32>
    %3 = arith.truncf %2 : vector<512x16xf32> to vector<512x16xbf16>
    %c0_3 = arith.constant 0 : index
    %c0_4 = arith.constant 0 : index
    %4 = vector.load %arg3[%c0_3, %c0_4] : memref<512x16xbf16, #tpu.memory_space<vmem>>, vector<512x16xbf16>
    tpu.vector_store %arg3[%c0_3, %c0_4], %3 {strides = array<i32>} : memref<512x16xbf16, #tpu.memory_space<vmem>>, vector<512x16xbf16>,
    %cst_5 = arith.constant dense<0.000000e+00> : vector<16xf32>
    %5 = vector.multi_reduction <add>, %2, %cst_5 [0] : vector<512x16xf32> to vector<16xf32>
    %6 = vector.shape_cast %5 : vector<16xf32> to vector<1x16xf32>
    %7 = arith.mulf %2, %2 : vector<512x16xf32>
    %cst_6 = arith.constant dense<0.000000e+00> : vector<16xf32>
    %8 = vector.multi_reduction <add>, %7, %cst_6 [0] : vector<512x16xf32> to vector<16xf32>
    %9 = vector.shape_cast %8 : vector<16xf32> to vector<1x16xf32>
    %10 = tpu.concatenate %6, %9 in 0 : vector<1x16xf32>, vector<1x16xf32> -> vector<2x16xf32>
    %c0_7 = arith.constant 0 : index
    %c0_8 = arith.constant 0 : index
    %c0_9 = arith.constant 0 : index
    %11 = vector.load %arg4[%c0_7, %c0_8, %c0_9] : memref<1x2x16xf32, #tpu.memory_space<vmem>>, vector<1x2x16xf32>
    %12 = vector.shape_cast %11 : vector<1x2x16xf32> to vector<2x16xf32>
    %13 = vector.shape_cast %10 : vector<2x16xf32> to vector<1x2x16xf32>
    tpu.vector_store %arg4[%c0_7, %c0_8, %c0_9], %13 {strides = array<i32>} : memref<1x2x16xf32, #tpu.memory_space<vmem>>, vector<1x2x16xf32>,
    return
  }
  func.func @transform_0(%arg0: i32) -> (i32, i32) {
    %c0_i32 = arith.constant 0 : i32
    %c0_i32_0 = arith.constant 0 : i32
    return %arg0, %c0_i32 : i32, i32
  }
  func.func @transform_1(%arg0: i32) -> (i32, i32) {
    %c0_i32 = arith.constant 0 : i32
    %c0_i32_0 = arith.constant 0 : i32
    %c0_i32_1 = arith.constant 0 : i32
    return %c0_i32, %c0_i32_0 : i32, i32
  }
  func.func @transform_2(%arg0: i32) -> (i32, i32) {
    %c0_i32 = arith.constant 0 : i32
    %c0_i32_0 = arith.constant 0 : i32
    return %arg0, %c0_i32 : i32, i32
  }
  func.func @transform_3(%arg0: i32) -> (i32, i32, i32) {
    %c0_i32 = arith.constant 0 : i32
    %c0_i32_0 = arith.constant 0 : i32
    %c0_i32_1 = arith.constant 0 : i32
    return %arg0, %c0_i32, %c0_i32_0 : i32, i32, i32
  }
}

module attributes {stable_mosaic.version = 11 : i64} {
  func.func @_bn_act_conv3x3_stats_kernel(%arg0: i32, %arg1: memref<1x18x18x16xbf16, #tpu.memory_space<vmem>>, %arg2: memref<9x16x16xbf16, #tpu.memory_space<vmem>>, %arg3: memref<1x16xf32, #tpu.memory_space<vmem>>, %arg4: memref<1x16xf32, #tpu.memory_space<vmem>>, %arg5: memref<1x256x16xbf16, #tpu.memory_space<vmem>>, %arg6: memref<1x2x16xf32, #tpu.memory_space<vmem>>) attributes {dimension_semantics = [#tpu.dimension_semantics<parallel>], iteration_bounds = array<i64: 2>, scalar_prefetch = 0 : i64, scratch_operands = 0 : i64, tpu.core_type = #tpu.core_type<tc>, window_params = [{transform_indices = @transform_0, window_bounds = array<i64: 1, 18, 18, 16>}, {pipeline_mode = #tpu.pipeline_mode<synchronous>, transform_indices = @transform_1, window_bounds = array<i64: 9, 16, 16>}, {pipeline_mode = #tpu.pipeline_mode<synchronous>, transform_indices = @transform_2, window_bounds = array<i64: 1, 16>}, {pipeline_mode = #tpu.pipeline_mode<synchronous>, transform_indices = @transform_3, window_bounds = array<i64: 1, 16>}, {transform_indices = @transform_4, window_bounds = array<i64: 1, 256, 16>}, {transform_indices = @transform_5, window_bounds = array<i64: 1, 2, 16>}]} {
    %c0 = arith.constant 0 : index
    %c0_0 = arith.constant 0 : index
    %c0_1 = arith.constant 0 : index
    %c0_2 = arith.constant 0 : index
    %0 = vector.load %arg1[%c0, %c0_0, %c0_1, %c0_2] : memref<1x18x18x16xbf16, #tpu.memory_space<vmem>>, vector<1x18x18x16xbf16>
    %1 = vector.shape_cast %0 : vector<1x18x18x16xbf16> to vector<18x18x16xbf16>
    %2 = arith.extf %1 : vector<18x18x16xbf16> to vector<18x18x16xf32>
    %c0_3 = arith.constant 0 : index
    %c0_4 = arith.constant 0 : index
    %3 = vector.load %arg3[%c0_3, %c0_4] : memref<1x16xf32, #tpu.memory_space<vmem>>, vector<1x16xf32>
    %4 = vector.shape_cast %3 : vector<1x16xf32> to vector<1x1x16xf32>
    %5 = vector.broadcast %4 : vector<1x1x16xf32> to vector<18x18x16xf32>
    %6 = arith.mulf %2, %5 : vector<18x18x16xf32>
    %c0_5 = arith.constant 0 : index
    %c0_6 = arith.constant 0 : index
    %7 = vector.load %arg4[%c0_5, %c0_6] : memref<1x16xf32, #tpu.memory_space<vmem>>, vector<1x16xf32>
    %8 = vector.shape_cast %7 : vector<1x16xf32> to vector<1x1x16xf32>
    %9 = vector.broadcast %8 : vector<1x1x16xf32> to vector<18x18x16xf32>
    %10 = arith.addf %6, %9 : vector<18x18x16xf32>
    %cst = arith.constant 0.000000e+00 : f32
    %11 = vector.broadcast %cst : f32 to vector<18x18x16xf32>
    %12 = arith.cmpf oge, %10, %11 : vector<18x18x16xf32>
    %cst_7 = arith.constant 1.000000e-01 : f32
    %13 = vector.broadcast %cst_7 : f32 to vector<18x18x16xf32>
    %14 = arith.mulf %13, %10 : vector<18x18x16xf32>
    %15 = arith.select %12, %10, %14 : vector<18x18x16xi1>, vector<18x18x16xf32>
    %16 = tpu.iota {dimensions = array<i32: 0>} : vector<18x18x16xi32>
    %17 = tpu.iota {dimensions = array<i32: 1>} : vector<18x18x16xi32>
    %c1_i32 = arith.constant 1 : i32
    %18 = vector.broadcast %c1_i32 : i32 to vector<18x18x16xi32>
    %19 = arith.cmpi sge, %16, %18 : vector<18x18x16xi32>
    %c17_i32 = arith.constant 17 : i32
    %20 = vector.broadcast %c17_i32 : i32 to vector<18x18x16xi32>
    %21 = arith.cmpi slt, %16, %20 : vector<18x18x16xi32>
    %22 = arith.andi %19, %21 : vector<18x18x16xi1>
    %c1_i32_8 = arith.constant 1 : i32
    %23 = vector.broadcast %c1_i32_8 : i32 to vector<18x18x16xi32>
    %24 = arith.cmpi sge, %17, %23 : vector<18x18x16xi32>
    %25 = arith.andi %22, %24 : vector<18x18x16xi1>
    %c17_i32_9 = arith.constant 17 : i32
    %26 = vector.broadcast %c17_i32_9 : i32 to vector<18x18x16xi32>
    %27 = arith.cmpi slt, %17, %26 : vector<18x18x16xi32>
    %28 = arith.andi %25, %27 : vector<18x18x16xi1>
    %cst_10 = arith.constant 0.000000e+00 : f32
    %29 = vector.broadcast %cst_10 : f32 to vector<18x18x16xf32>
    %30 = arith.select %28, %15, %29 : vector<18x18x16xi1>, vector<18x18x16xf32>
    %31 = arith.truncf %30 : vector<18x18x16xf32> to vector<18x18x16xbf16>
    %cst_11 = arith.constant 0.000000e+00 : f32
    %32 = vector.broadcast %cst_11 : f32 to vector<256x16xf32>
    %33 = vector.extract_strided_slice %31 {offsets = [0, 0, 0], sizes = [16, 16, 16], strides = [1, 1, 1]} : vector<18x18x16xbf16> to vector<16x16x16xbf16>
    %34 = vector.shape_cast %33 : vector<16x16x16xbf16> to vector<256x16xbf16>
    %c0_12 = arith.constant 0 : index
    %c0_13 = arith.constant 0 : index
    %c0_14 = arith.constant 0 : index
    %35 = vector.load %arg2[%c0_12, %c0_13, %c0_14] : memref<9x16x16xbf16, #tpu.memory_space<vmem>>, vector<1x16x16xbf16>
    %36 = vector.shape_cast %35 : vector<1x16x16xbf16> to vector<16x16xbf16>
    %cst_15 = arith.constant dense<0.000000e+00> : vector<256x16xf32>
    %37 = tpu.matmul %34, %36, %cst_15 {dimension_numbers = #tpu.dot_dimension_numbers<[1], [0], [0], [1], [0, 0, 1, 1], [], []>} : vector<256x16xbf16>, vector<16x16xbf16>, vector<256x16xf32> -> vector<256x16xf32>
    %38 = arith.addf %32, %37 : vector<256x16xf32>
    %39 = vector.extract_strided_slice %31 {offsets = [0, 1, 0], sizes = [16, 16, 16], strides = [1, 1, 1]} : vector<18x18x16xbf16> to vector<16x16x16xbf16>
    %40 = vector.shape_cast %39 : vector<16x16x16xbf16> to vector<256x16xbf16>
    %c1 = arith.constant 1 : index
    %c0_16 = arith.constant 0 : index
    %c0_17 = arith.constant 0 : index
    %41 = vector.load %arg2[%c1, %c0_16, %c0_17] : memref<9x16x16xbf16, #tpu.memory_space<vmem>>, vector<1x16x16xbf16>
    %42 = vector.shape_cast %41 : vector<1x16x16xbf16> to vector<16x16xbf16>
    %cst_18 = arith.constant dense<0.000000e+00> : vector<256x16xf32>
    %43 = tpu.matmul %40, %42, %cst_18 {dimension_numbers = #tpu.dot_dimension_numbers<[1], [0], [0], [1], [0, 0, 1, 1], [], []>} : vector<256x16xbf16>, vector<16x16xbf16>, vector<256x16xf32> -> vector<256x16xf32>
    %44 = arith.addf %38, %43 : vector<256x16xf32>
    %45 = vector.extract_strided_slice %31 {offsets = [0, 2, 0], sizes = [16, 16, 16], strides = [1, 1, 1]} : vector<18x18x16xbf16> to vector<16x16x16xbf16>
    %46 = vector.shape_cast %45 : vector<16x16x16xbf16> to vector<256x16xbf16>
    %c2 = arith.constant 2 : index
    %c0_19 = arith.constant 0 : index
    %c0_20 = arith.constant 0 : index
    %47 = vector.load %arg2[%c2, %c0_19, %c0_20] : memref<9x16x16xbf16, #tpu.memory_space<vmem>>, vector<1x16x16xbf16>
    %48 = vector.shape_cast %47 : vector<1x16x16xbf16> to vector<16x16xbf16>
    %cst_21 = arith.constant dense<0.000000e+00> : vector<256x16xf32>
    %49 = tpu.matmul %46, %48, %cst_21 {dimension_numbers = #tpu.dot_dimension_numbers<[1], [0], [0], [1], [0, 0, 1, 1], [], []>} : vector<256x16xbf16>, vector<16x16xbf16>, vector<256x16xf32> -> vector<256x16xf32>
    %50 = arith.addf %44, %49 : vector<256x16xf32>
    %51 = vector.extract_strided_slice %31 {offsets = [1, 0, 0], sizes = [16, 16, 16], strides = [1, 1, 1]} : vector<18x18x16xbf16> to vector<16x16x16xbf16>
    %52 = vector.shape_cast %51 : vector<16x16x16xbf16> to vector<256x16xbf16>
    %c3 = arith.constant 3 : index
    %c0_22 = arith.constant 0 : index
    %c0_23 = arith.constant 0 : index
    %53 = vector.load %arg2[%c3, %c0_22, %c0_23] : memref<9x16x16xbf16, #tpu.memory_space<vmem>>, vector<1x16x16xbf16>
    %54 = vector.shape_cast %53 : vector<1x16x16xbf16> to vector<16x16xbf16>
    %cst_24 = arith.constant dense<0.000000e+00> : vector<256x16xf32>
    %55 = tpu.matmul %52, %54, %cst_24 {dimension_numbers = #tpu.dot_dimension_numbers<[1], [0], [0], [1], [0, 0, 1, 1], [], []>} : vector<256x16xbf16>, vector<16x16xbf16>, vector<256x16xf32> -> vector<256x16xf32>
    %56 = arith.addf %50, %55 : vector<256x16xf32>
    %57 = vector.extract_strided_slice %31 {offsets = [1, 1, 0], sizes = [16, 16, 16], strides = [1, 1, 1]} : vector<18x18x16xbf16> to vector<16x16x16xbf16>
    %58 = vector.shape_cast %57 : vector<16x16x16xbf16> to vector<256x16xbf16>
    %c4 = arith.constant 4 : index
    %c0_25 = arith.constant 0 : index
    %c0_26 = arith.constant 0 : index
    %59 = vector.load %arg2[%c4, %c0_25, %c0_26] : memref<9x16x16xbf16, #tpu.memory_space<vmem>>, vector<1x16x16xbf16>
    %60 = vector.shape_cast %59 : vector<1x16x16xbf16> to vector<16x16xbf16>
    %cst_27 = arith.constant dense<0.000000e+00> : vector<256x16xf32>
    %61 = tpu.matmul %58, %60, %cst_27 {dimension_numbers = #tpu.dot_dimension_numbers<[1], [0], [0], [1], [0, 0, 1, 1], [], []>} : vector<256x16xbf16>, vector<16x16xbf16>, vector<256x16xf32> -> vector<256x16xf32>
    %62 = arith.addf %56, %61 : vector<256x16xf32>
    %63 = vector.extract_strided_slice %31 {offsets = [1, 2, 0], sizes = [16, 16, 16], strides = [1, 1, 1]} : vector<18x18x16xbf16> to vector<16x16x16xbf16>
    %64 = vector.shape_cast %63 : vector<16x16x16xbf16> to vector<256x16xbf16>
    %c5 = arith.constant 5 : index
    %c0_28 = arith.constant 0 : index
    %c0_29 = arith.constant 0 : index
    %65 = vector.load %arg2[%c5, %c0_28, %c0_29] : memref<9x16x16xbf16, #tpu.memory_space<vmem>>, vector<1x16x16xbf16>
    %66 = vector.shape_cast %65 : vector<1x16x16xbf16> to vector<16x16xbf16>
    %cst_30 = arith.constant dense<0.000000e+00> : vector<256x16xf32>
    %67 = tpu.matmul %64, %66, %cst_30 {dimension_numbers = #tpu.dot_dimension_numbers<[1], [0], [0], [1], [0, 0, 1, 1], [], []>} : vector<256x16xbf16>, vector<16x16xbf16>, vector<256x16xf32> -> vector<256x16xf32>
    %68 = arith.addf %62, %67 : vector<256x16xf32>
    %69 = vector.extract_strided_slice %31 {offsets = [2, 0, 0], sizes = [16, 16, 16], strides = [1, 1, 1]} : vector<18x18x16xbf16> to vector<16x16x16xbf16>
    %70 = vector.shape_cast %69 : vector<16x16x16xbf16> to vector<256x16xbf16>
    %c6 = arith.constant 6 : index
    %c0_31 = arith.constant 0 : index
    %c0_32 = arith.constant 0 : index
    %71 = vector.load %arg2[%c6, %c0_31, %c0_32] : memref<9x16x16xbf16, #tpu.memory_space<vmem>>, vector<1x16x16xbf16>
    %72 = vector.shape_cast %71 : vector<1x16x16xbf16> to vector<16x16xbf16>
    %cst_33 = arith.constant dense<0.000000e+00> : vector<256x16xf32>
    %73 = tpu.matmul %70, %72, %cst_33 {dimension_numbers = #tpu.dot_dimension_numbers<[1], [0], [0], [1], [0, 0, 1, 1], [], []>} : vector<256x16xbf16>, vector<16x16xbf16>, vector<256x16xf32> -> vector<256x16xf32>
    %74 = arith.addf %68, %73 : vector<256x16xf32>
    %75 = vector.extract_strided_slice %31 {offsets = [2, 1, 0], sizes = [16, 16, 16], strides = [1, 1, 1]} : vector<18x18x16xbf16> to vector<16x16x16xbf16>
    %76 = vector.shape_cast %75 : vector<16x16x16xbf16> to vector<256x16xbf16>
    %c7 = arith.constant 7 : index
    %c0_34 = arith.constant 0 : index
    %c0_35 = arith.constant 0 : index
    %77 = vector.load %arg2[%c7, %c0_34, %c0_35] : memref<9x16x16xbf16, #tpu.memory_space<vmem>>, vector<1x16x16xbf16>
    %78 = vector.shape_cast %77 : vector<1x16x16xbf16> to vector<16x16xbf16>
    %cst_36 = arith.constant dense<0.000000e+00> : vector<256x16xf32>
    %79 = tpu.matmul %76, %78, %cst_36 {dimension_numbers = #tpu.dot_dimension_numbers<[1], [0], [0], [1], [0, 0, 1, 1], [], []>} : vector<256x16xbf16>, vector<16x16xbf16>, vector<256x16xf32> -> vector<256x16xf32>
    %80 = arith.addf %74, %79 : vector<256x16xf32>
    %81 = vector.extract_strided_slice %31 {offsets = [2, 2, 0], sizes = [16, 16, 16], strides = [1, 1, 1]} : vector<18x18x16xbf16> to vector<16x16x16xbf16>
    %82 = vector.shape_cast %81 : vector<16x16x16xbf16> to vector<256x16xbf16>
    %c8 = arith.constant 8 : index
    %c0_37 = arith.constant 0 : index
    %c0_38 = arith.constant 0 : index
    %83 = vector.load %arg2[%c8, %c0_37, %c0_38] : memref<9x16x16xbf16, #tpu.memory_space<vmem>>, vector<1x16x16xbf16>
    %84 = vector.shape_cast %83 : vector<1x16x16xbf16> to vector<16x16xbf16>
    %cst_39 = arith.constant dense<0.000000e+00> : vector<256x16xf32>
    %85 = tpu.matmul %82, %84, %cst_39 {dimension_numbers = #tpu.dot_dimension_numbers<[1], [0], [0], [1], [0, 0, 1, 1], [], []>} : vector<256x16xbf16>, vector<16x16xbf16>, vector<256x16xf32> -> vector<256x16xf32>
    %86 = arith.addf %80, %85 : vector<256x16xf32>
    %87 = arith.truncf %86 : vector<256x16xf32> to vector<256x16xbf16>
    %c0_40 = arith.constant 0 : index
    %c0_41 = arith.constant 0 : index
    %c0_42 = arith.constant 0 : index
    %88 = vector.load %arg5[%c0_40, %c0_41, %c0_42] : memref<1x256x16xbf16, #tpu.memory_space<vmem>>, vector<1x256x16xbf16>
    %89 = vector.shape_cast %88 : vector<1x256x16xbf16> to vector<256x16xbf16>
    %90 = vector.shape_cast %87 : vector<256x16xbf16> to vector<1x256x16xbf16>
    tpu.vector_store %arg5[%c0_40, %c0_41, %c0_42], %90 {strides = array<i32>} : memref<1x256x16xbf16, #tpu.memory_space<vmem>>, vector<1x256x16xbf16>,
    %cst_43 = arith.constant dense<0.000000e+00> : vector<16xf32>
    %91 = vector.multi_reduction <add>, %86, %cst_43 [0] : vector<256x16xf32> to vector<16xf32>
    %92 = vector.shape_cast %91 : vector<16xf32> to vector<1x16xf32>
    %93 = arith.mulf %86, %86 : vector<256x16xf32>
    %cst_44 = arith.constant dense<0.000000e+00> : vector<16xf32>
    %94 = vector.multi_reduction <add>, %93, %cst_44 [0] : vector<256x16xf32> to vector<16xf32>
    %95 = vector.shape_cast %94 : vector<16xf32> to vector<1x16xf32>
    %96 = tpu.concatenate %92, %95 in 0 : vector<1x16xf32>, vector<1x16xf32> -> vector<2x16xf32>
    %c0_45 = arith.constant 0 : index
    %c0_46 = arith.constant 0 : index
    %c0_47 = arith.constant 0 : index
    %97 = vector.load %arg6[%c0_45, %c0_46, %c0_47] : memref<1x2x16xf32, #tpu.memory_space<vmem>>, vector<1x2x16xf32>
    %98 = vector.shape_cast %97 : vector<1x2x16xf32> to vector<2x16xf32>
    %99 = vector.shape_cast %96 : vector<2x16xf32> to vector<1x2x16xf32>
    tpu.vector_store %arg6[%c0_45, %c0_46, %c0_47], %99 {strides = array<i32>} : memref<1x2x16xf32, #tpu.memory_space<vmem>>, vector<1x2x16xf32>,
    return
  }
  func.func @transform_0(%arg0: i32) -> (i32, i32, i32, i32) {
    %c0_i32 = arith.constant 0 : i32
    %c0_i32_0 = arith.constant 0 : i32
    %c0_i32_1 = arith.constant 0 : i32
    %c0_i32_2 = arith.constant 0 : i32
    return %arg0, %c0_i32, %c0_i32_0, %c0_i32_1 : i32, i32, i32, i32
  }
  func.func @transform_1(%arg0: i32) -> (i32, i32, i32) {
    %c0_i32 = arith.constant 0 : i32
    %c0_i32_0 = arith.constant 0 : i32
    %c0_i32_1 = arith.constant 0 : i32
    %c0_i32_2 = arith.constant 0 : i32
    return %c0_i32, %c0_i32_0, %c0_i32_1 : i32, i32, i32
  }
  func.func @transform_2(%arg0: i32) -> (i32, i32) {
    %c0_i32 = arith.constant 0 : i32
    %c0_i32_0 = arith.constant 0 : i32
    %c0_i32_1 = arith.constant 0 : i32
    return %c0_i32, %c0_i32_0 : i32, i32
  }
  func.func @transform_3(%arg0: i32) -> (i32, i32) {
    %c0_i32 = arith.constant 0 : i32
    %c0_i32_0 = arith.constant 0 : i32
    %c0_i32_1 = arith.constant 0 : i32
    return %c0_i32, %c0_i32_0 : i32, i32
  }
  func.func @transform_4(%arg0: i32) -> (i32, i32, i32) {
    %c0_i32 = arith.constant 0 : i32
    %c0_i32_0 = arith.constant 0 : i32
    %c0_i32_1 = arith.constant 0 : i32
    return %arg0, %c0_i32, %c0_i32_0 : i32, i32, i32
  }
  func.func @transform_5(%arg0: i32) -> (i32, i32, i32) {
    %c0_i32 = arith.constant 0 : i32
    %c0_i32_0 = arith.constant 0 : i32
    %c0_i32_1 = arith.constant 0 : i32
    return %arg0, %c0_i32, %c0_i32_0 : i32, i32, i32
  }
}

module attributes {stable_mosaic.version = 11 : i64} {
  func.func @_bn_act_matmul_stats_kernel(%arg0: i32, %arg1: memref<512x16xbf16, #tpu.memory_space<vmem>>, %arg2: memref<16x64xbf16, #tpu.memory_space<vmem>>, %arg3: memref<1x16xf32, #tpu.memory_space<vmem>>, %arg4: memref<1x16xf32, #tpu.memory_space<vmem>>, %arg5: memref<512x64xbf16, #tpu.memory_space<vmem>>, %arg6: memref<1x2x64xf32, #tpu.memory_space<vmem>>) attributes {dimension_semantics = [#tpu.dimension_semantics<parallel>], iteration_bounds = array<i64: 1>, scalar_prefetch = 0 : i64, scratch_operands = 0 : i64, tpu.core_type = #tpu.core_type<tc>, window_params = [{transform_indices = @transform_0, window_bounds = array<i64: 512, 16>}, {pipeline_mode = #tpu.pipeline_mode<synchronous>, transform_indices = @transform_1, window_bounds = array<i64: 16, 64>}, {pipeline_mode = #tpu.pipeline_mode<synchronous>, transform_indices = @transform_2, window_bounds = array<i64: 1, 16>}, {pipeline_mode = #tpu.pipeline_mode<synchronous>, transform_indices = @transform_3, window_bounds = array<i64: 1, 16>}, {transform_indices = @transform_4, window_bounds = array<i64: 512, 64>}, {transform_indices = @transform_5, window_bounds = array<i64: 1, 2, 64>}]} {
    %c0 = arith.constant 0 : index
    %c0_0 = arith.constant 0 : index
    %0 = vector.load %arg1[%c0, %c0_0] : memref<512x16xbf16, #tpu.memory_space<vmem>>, vector<512x16xbf16>
    %1 = arith.extf %0 : vector<512x16xbf16> to vector<512x16xf32>
    %c0_1 = arith.constant 0 : index
    %c0_2 = arith.constant 0 : index
    %2 = vector.load %arg3[%c0_1, %c0_2] : memref<1x16xf32, #tpu.memory_space<vmem>>, vector<1x16xf32>
    %3 = vector.broadcast %2 : vector<1x16xf32> to vector<512x16xf32>
    %4 = arith.mulf %1, %3 : vector<512x16xf32>
    %c0_3 = arith.constant 0 : index
    %c0_4 = arith.constant 0 : index
    %5 = vector.load %arg4[%c0_3, %c0_4] : memref<1x16xf32, #tpu.memory_space<vmem>>, vector<1x16xf32>
    %6 = vector.broadcast %5 : vector<1x16xf32> to vector<512x16xf32>
    %7 = arith.addf %4, %6 : vector<512x16xf32>
    %cst = arith.constant 0.000000e+00 : f32
    %8 = vector.broadcast %cst : f32 to vector<512x16xf32>
    %9 = arith.cmpf oge, %7, %8 : vector<512x16xf32>
    %cst_5 = arith.constant 1.000000e-01 : f32
    %10 = vector.broadcast %cst_5 : f32 to vector<512x16xf32>
    %11 = arith.mulf %10, %7 : vector<512x16xf32>
    %12 = arith.select %9, %7, %11 : vector<512x16xi1>, vector<512x16xf32>
    %13 = arith.truncf %12 : vector<512x16xf32> to vector<512x16xbf16>
    %c0_6 = arith.constant 0 : index
    %c0_7 = arith.constant 0 : index
    %14 = vector.load %arg2[%c0_6, %c0_7] : memref<16x64xbf16, #tpu.memory_space<vmem>>, vector<16x64xbf16>
    %cst_8 = arith.constant dense<0.000000e+00> : vector<512x64xf32>
    %15 = tpu.matmul %13, %14, %cst_8 {dimension_numbers = #tpu.dot_dimension_numbers<[1], [0], [0], [1], [0, 0, 1, 1], [], []>} : vector<512x16xbf16>, vector<16x64xbf16>, vector<512x64xf32> -> vector<512x64xf32>
    %16 = arith.truncf %15 : vector<512x64xf32> to vector<512x64xbf16>
    %c0_9 = arith.constant 0 : index
    %c0_10 = arith.constant 0 : index
    %17 = vector.load %arg5[%c0_9, %c0_10] : memref<512x64xbf16, #tpu.memory_space<vmem>>, vector<512x64xbf16>
    tpu.vector_store %arg5[%c0_9, %c0_10], %16 {strides = array<i32>} : memref<512x64xbf16, #tpu.memory_space<vmem>>, vector<512x64xbf16>,
    %cst_11 = arith.constant dense<0.000000e+00> : vector<64xf32>
    %18 = vector.multi_reduction <add>, %15, %cst_11 [0] : vector<512x64xf32> to vector<64xf32>
    %19 = vector.shape_cast %18 : vector<64xf32> to vector<1x64xf32>
    %20 = arith.mulf %15, %15 : vector<512x64xf32>
    %cst_12 = arith.constant dense<0.000000e+00> : vector<64xf32>
    %21 = vector.multi_reduction <add>, %20, %cst_12 [0] : vector<512x64xf32> to vector<64xf32>
    %22 = vector.shape_cast %21 : vector<64xf32> to vector<1x64xf32>
    %23 = tpu.concatenate %19, %22 in 0 : vector<1x64xf32>, vector<1x64xf32> -> vector<2x64xf32>
    %c0_13 = arith.constant 0 : index
    %c0_14 = arith.constant 0 : index
    %c0_15 = arith.constant 0 : index
    %24 = vector.load %arg6[%c0_13, %c0_14, %c0_15] : memref<1x2x64xf32, #tpu.memory_space<vmem>>, vector<1x2x64xf32>
    %25 = vector.shape_cast %24 : vector<1x2x64xf32> to vector<2x64xf32>
    %26 = vector.shape_cast %23 : vector<2x64xf32> to vector<1x2x64xf32>
    tpu.vector_store %arg6[%c0_13, %c0_14, %c0_15], %26 {strides = array<i32>} : memref<1x2x64xf32, #tpu.memory_space<vmem>>, vector<1x2x64xf32>,
    return
  }
  func.func @transform_0(%arg0: i32) -> (i32, i32) {
    %c0_i32 = arith.constant 0 : i32
    %c0_i32_0 = arith.constant 0 : i32
    return %arg0, %c0_i32 : i32, i32
  }
  func.func @transform_1(%arg0: i32) -> (i32, i32) {
    %c0_i32 = arith.constant 0 : i32
    %c0_i32_0 = arith.constant 0 : i32
    %c0_i32_1 = arith.constant 0 : i32
    return %c0_i32, %c0_i32_0 : i32, i32
  }
  func.func @transform_2(%arg0: i32) -> (i32, i32) {
    %c0_i32 = arith.constant 0 : i32
    %c0_i32_0 = arith.constant 0 : i32
    %c0_i32_1 = arith.constant 0 : i32
    return %c0_i32, %c0_i32_0 : i32, i32
  }
  func.func @transform_3(%arg0: i32) -> (i32, i32) {
    %c0_i32 = arith.constant 0 : i32
    %c0_i32_0 = arith.constant 0 : i32
    %c0_i32_1 = arith.constant 0 : i32
    return %c0_i32, %c0_i32_0 : i32, i32
  }
  func.func @transform_4(%arg0: i32) -> (i32, i32) {
    %c0_i32 = arith.constant 0 : i32
    %c0_i32_0 = arith.constant 0 : i32
    return %arg0, %c0_i32 : i32, i32
  }
  func.func @transform_5(%arg0: i32) -> (i32, i32, i32) {
    %c0_i32 = arith.constant 0 : i32
    %c0_i32_0 = arith.constant 0 : i32
    %c0_i32_1 = arith.constant 0 : i32
    return %arg0, %c0_i32, %c0_i32_0 : i32, i32, i32
  }
}

module attributes {stable_mosaic.version = 11 : i64} {
  func.func @_bn_residual_act_kernel(%arg0: i32, %arg1: memref<256x128xbf16, #tpu.memory_space<vmem>>, %arg2: memref<256x128xbf16, #tpu.memory_space<vmem>>, %arg3: memref<1x128xf32, #tpu.memory_space<vmem>>, %arg4: memref<1x128xf32, #tpu.memory_space<vmem>>, %arg5: memref<256x128xf32, #tpu.memory_space<vmem>>) attributes {dimension_semantics = [#tpu.dimension_semantics<parallel>], iteration_bounds = array<i64: 1>, scalar_prefetch = 0 : i64, scratch_operands = 0 : i64, tpu.core_type = #tpu.core_type<tc>, window_params = [{transform_indices = @transform_0, window_bounds = array<i64: 256, 128>}, {transform_indices = @transform_1, window_bounds = array<i64: 256, 128>}, {pipeline_mode = #tpu.pipeline_mode<synchronous>, transform_indices = @transform_2, window_bounds = array<i64: 1, 128>}, {pipeline_mode = #tpu.pipeline_mode<synchronous>, transform_indices = @transform_3, window_bounds = array<i64: 1, 128>}, {transform_indices = @transform_4, window_bounds = array<i64: 256, 128>}]} {
    %c0 = arith.constant 0 : index
    %c0_0 = arith.constant 0 : index
    %0 = vector.load %arg1[%c0, %c0_0] : memref<256x128xbf16, #tpu.memory_space<vmem>>, vector<256x128xbf16>
    %1 = arith.extf %0 : vector<256x128xbf16> to vector<256x128xf32>
    %c0_1 = arith.constant 0 : index
    %c0_2 = arith.constant 0 : index
    %2 = vector.load %arg3[%c0_1, %c0_2] : memref<1x128xf32, #tpu.memory_space<vmem>>, vector<1x128xf32>
    %3 = vector.broadcast %2 : vector<1x128xf32> to vector<256x128xf32>
    %4 = arith.mulf %1, %3 : vector<256x128xf32>
    %c0_3 = arith.constant 0 : index
    %c0_4 = arith.constant 0 : index
    %5 = vector.load %arg4[%c0_3, %c0_4] : memref<1x128xf32, #tpu.memory_space<vmem>>, vector<1x128xf32>
    %6 = vector.broadcast %5 : vector<1x128xf32> to vector<256x128xf32>
    %7 = arith.addf %4, %6 : vector<256x128xf32>
    %c0_5 = arith.constant 0 : index
    %c0_6 = arith.constant 0 : index
    %8 = vector.load %arg2[%c0_5, %c0_6] : memref<256x128xbf16, #tpu.memory_space<vmem>>, vector<256x128xbf16>
    %9 = arith.extf %8 : vector<256x128xbf16> to vector<256x128xf32>
    %10 = arith.addf %7, %9 : vector<256x128xf32>
    %cst = arith.constant 0.000000e+00 : f32
    %11 = vector.broadcast %cst : f32 to vector<256x128xf32>
    %12 = arith.cmpf oge, %10, %11 : vector<256x128xf32>
    %cst_7 = arith.constant 1.000000e-01 : f32
    %13 = vector.broadcast %cst_7 : f32 to vector<256x128xf32>
    %14 = arith.mulf %13, %10 : vector<256x128xf32>
    %15 = arith.select %12, %10, %14 : vector<256x128xi1>, vector<256x128xf32>
    %c0_8 = arith.constant 0 : index
    %c0_9 = arith.constant 0 : index
    %16 = vector.load %arg5[%c0_8, %c0_9] : memref<256x128xf32, #tpu.memory_space<vmem>>, vector<256x128xf32>
    tpu.vector_store %arg5[%c0_8, %c0_9], %15 {strides = array<i32>} : memref<256x128xf32, #tpu.memory_space<vmem>>, vector<256x128xf32>,
    return
  }
  func.func @transform_0(%arg0: i32) -> (i32, i32) {
    %c0_i32 = arith.constant 0 : i32
    %c0_i32_0 = arith.constant 0 : i32
    return %arg0, %c0_i32 : i32, i32
  }
  func.func @transform_1(%arg0: i32) -> (i32, i32) {
    %c0_i32 = arith.constant 0 : i32
    %c0_i32_0 = arith.constant 0 : i32
    return %arg0, %c0_i32 : i32, i32
  }
  func.func @transform_2(%arg0: i32) -> (i32, i32) {
    %c0_i32 = arith.constant 0 : i32
    %c0_i32_0 = arith.constant 0 : i32
    %c0_i32_1 = arith.constant 0 : i32
    return %c0_i32, %c0_i32_0 : i32, i32
  }
  func.func @transform_3(%arg0: i32) -> (i32, i32) {
    %c0_i32 = arith.constant 0 : i32
    %c0_i32_0 = arith.constant 0 : i32
    %c0_i32_1 = arith.constant 0 : i32
    return %c0_i32, %c0_i32_0 : i32, i32
  }
  func.func @transform_4(%arg0: i32) -> (i32, i32) {
    %c0_i32 = arith.constant 0 : i32
    %c0_i32_0 = arith.constant 0 : i32
    return %arg0, %c0_i32 : i32, i32
  }
}

</mosaic_0001>

<llo_original>
// kernel: bottleneck_forward.4
$region0: #{bottleneck_forward.4}
  #allocation0 [shape = 'u32[]', space=smem, size = 0x4, offset = 0x4, fixed_abs, tag = 'smem constant byte address 0x4 - core index']
  #allocation1 [shape = 'u32[144,128]{1,0:T(1,128)}', space=vmem, size = 0x12000, scoped, tag = 'internal scratch']
  %s0 = inlined_call_operand.vmem [shape: bf16[512,64], index: 0, kind: input, shape index: {}]
  %s1 = inlined_call_operand.vmem [shape: bf16[64,16], index: 1, kind: input, shape index: {}]
  %s2 = inlined_call_operand.vmem [shape: bf16[512,16], index: 2, kind: output, shape index: {0}]
  %s3 = inlined_call_operand.vmem [shape: f32[1,2,16], index: 3, kind: output, shape index: {1}]
  %4 = xla_tuple %s2, %s3
  %s5 = sld [smem:[#allocation0]]
  $region26: #{bottleneck_forward.4} parent=0
    _
  %s7 = ssub.s32 1, %s5
  %s8 = scalar_select 0, %s7, %s5
  // Predicated region
  $region2: #{bottleneck_forward.4} parent=0 // pred_check
    _
  $region3: #{bottleneck_forward.4} parent=0 // pred_check_branch
    %10 = sbr.rel (0) target = $region5
  $region4: #{bottleneck_forward.4} parent=0 // pred_region
    _
  $region5: #{bottleneck_forward.4} parent=0 // pred_fallthru
    _
  // Predicated region
  $region6: #{bottleneck_forward.4} parent=0 // pred_check
    _
  $region7: #{bottleneck_forward.4} parent=0 // pred_check_branch
    %12 = sbr.rel (0) target = $region9
  $region8: #{bottleneck_forward.4} parent=0 // pred_region
    _
  $region9: #{bottleneck_forward.4} parent=0 // pred_fallthru
    _
  %v14 = vld [vmem:[%s0] sm:$0xf]
  %v15 = vld [vmem:[%s0 + $0x4] sm:$0xf]
  %v16 = vld [vmem:[%s0 + $0x8] sm:$0xf]
  %v17 = vld [vmem:[%s0 + $0xc] sm:$0xf]
  %v18 = vld [vmem:[%s0 + $0x10] sm:$0xf]
  %v19 = vld [vmem:[%s0 + $0x14] sm:$0xf]
  %v20 = vld [vmem:[%s0 + $0x18] sm:$0xf]
  %v21 = vld [vmem:[%s0 + $0x1c] sm:$0xf]
  %v22 = vld [vmem:[%s0 + $0x20] sm:$0xf]
  %v23 = vld [vmem:[%s0 + $0x24] sm:$0xf]
  %v24 = vld [vmem:[%s0 + $0x28] sm:$0xf]
  %v25 = vld [vmem:[%s0 + $0x2c] sm:$0xf]
  %v26 = vld [vmem:[%s0 + $0x30] sm:$0xf]
  %v27 = vld [vmem:[%s0 + $0x34] sm:$0xf]
  %v28 = vld [vmem:[%s0 + $0x38] sm:$0xf]
  %v29 = vld [vmem:[%s0 + $0x3c] sm:$0xf]
  %v30 = vld [vmem:[%s0 + $0x40] sm:$0xf]
  %v31 = vld [vmem:[%s0 + $0x44] sm:$0xf]
  %v32 = vld [vmem:[%s0 + $0x48] sm:$0xf]
  %v33 = vld [vmem:[%s0 + $0x4c] sm:$0xf]
  %v34 = vld [vmem:[%s0 + $0x50] sm:$0xf]
  %v35 = vld [vmem:[%s0 + $0x54] sm:$0xf]
  %v36 = vld [vmem:[%s0 + $0x58] sm:$0xf]
  %v37 = vld [vmem:[%s0 + $0x5c] sm:$0xf]
  %v38 = vld [vmem:[%s0 + $0x60] sm:$0xf]
  %v39 = vld [vmem:[%s0 + $0x64] sm:$0xf]
  %v40 = vld [vmem:[%s0 + $0x68] sm:$0xf]
  %v41 = vld [vmem:[%s0 + $0x6c] sm:$0xf]
  %v42 = vld [vmem:[%s0 + $0x70] sm:$0xf]
  %v43 = vld [vmem:[%s0 + $0x74] sm:$0xf]
  %v44 = vld [vmem:[%s0 + $0x78] sm:$0xf]
  %v45 = vld [vmem:[%s0 + $0x7c] sm:$0xf]
  %v46 = vld [vmem:[%s0 + $0x80] sm:$0xf]
  %v47 = vld [vmem:[%s0 + $0x84] sm:$0xf]
  %v48 = vld [vmem:[%s0 + $0x88] sm:$0xf]
  %v49 = vld [vmem:[%s0 + $0x8c] sm:$0xf]
  %v50 = vld [vmem:[%s0 + $0x90] sm:$0xf]
  %v51 = vld [vmem:[%s0 + $0x94] sm:$0xf]
  %v52 = vld [vmem:[%s0 + $0x98] sm:$0xf]
  %v53 = vld [vmem:[%s0 + $0x9c] sm:$0xf]
  %v54 = vld [vmem:[%s0 + $0xa0] sm:$0xf]
  %v55 = vld [vmem:[%s0 + $0xa4] sm:$0xf]
  %v56 = vld [vmem:[%s0 + $0xa8] sm:$0xf]
  %v57 = vld [vmem:[%s0 + $0xac] sm:$0xf]
  %v58 = vld [vmem:[%s0 + $0xb0] sm:$0xf]
  %v59 = vld [vmem:[%s0 + $0xb4] sm:$0xf]
  %v60 = vld [vmem:[%s0 + $0xb8] sm:$0xf]
  %v61 = vld [vmem:[%s0 + $0xbc] sm:$0xf]
  %v62 = vld [vmem:[%s0 + $0xc0] sm:$0xf]
  %v63 = vld [vmem:[%s0 + $0xc4] sm:$0xf]
  %v64 = vld [vmem:[%s0 + $0xc8] sm:$0xf]
  %v65 = vld [vmem:[%s0 + $0xcc] sm:$0xf]
  %v66 = vld [vmem:[%s0 + $0xd0] sm:$0xf]
  %v67 = vld [vmem:[%s0 + $0xd4] sm:$0xf]
  %v68 = vld [vmem:[%s0 + $0xd8] sm:$0xf]
  %v69 = vld [vmem:[%s0 + $0xdc] sm:$0xf]
  %v70 = vld [vmem:[%s0 + $0xe0] sm:$0xf]
  %v71 = vld [vmem:[%s0 + $0xe4] sm:$0xf]
  %v72 = vld [vmem:[%s0 + $0xe8] sm:$0xf]
  %v73 = vld [vmem:[%s0 + $0xec] sm:$0xf]
  %v74 = vld [vmem:[%s0 + $0xf0] sm:$0xf]
  %v75 = vld [vmem:[%s0 + $0xf4] sm:$0xf]
  %v76 = vld [vmem:[%s0 + $0xf8] sm:$0xf]
  %v77 = vld [vmem:[%s0 + $0xfc] sm:$0xf]
  %v78 = vld [vmem:[%s1] sm:$0xf]
  %v79 = vld [vmem:[%s1 + $0x4] sm:$0xf]
  %v80 = vld [vmem:[%s1 + $0x8] sm:$0xf]
  %v81 = vld [vmem:[%s1 + $0xc] sm:$0xf]
  %v82 = vld [vmem:[%s1 + $0x10] sm:$0xf]
  %v83 = vld [vmem:[%s1 + $0x14] sm:$0xf]
  %v84 = vld [vmem:[%s1 + $0x18] sm:$0xf]
  %v85 = vld [vmem:[%s1 + $0x1c] sm:$0xf]
  %v150 = vunpack.c.l.b16 %v14
  %v151 = vunpack.c.l.b16 %v15
  %v152 = vunpack.c.l.b16 %v16
  %v153 = vunpack.c.l.b16 %v17
  %v154 = vunpack.c.l.b16 %v18
  %v155 = vunpack.c.l.b16 %v19
  %v156 = vunpack.c.l.b16 %v20
  %v157 = vunpack.c.l.b16 %v21
  %v158 = vunpack.c.l.b16 %v22
  %v159 = vunpack.c.l.b16 %v23
  %v160 = vunpack.c.l.b16 %v24
  %v161 = vunpack.c.l.b16 %v25
  %v162 = vunpack.c.l.b16 %v26
  %v163 = vunpack.c.l.b16 %v27
  %v164 = vunpack.c.l.b16 %v28
  %v165 = vunpack.c.l.b16 %v29
  %v166 = vunpack.c.l.b16 %v30
  %v167 = vunpack.c.l.b16 %v31
  %v168 = vunpack.c.l.b16 %v32
  %v169 = vunpack.c.l.b16 %v33
  %v170 = vunpack.c.l.b16 %v34
  %v171 = vunpack.c.l.b16 %v35
  %v172 = vunpack.c.l.b16 %v36
  %v173 = vunpack.c.l.b16 %v37
  %v174 = vunpack.c.l.b16 %v38
  %v175 = vunpack.c.l.b16 %v39
  %v176 = vunpack.c.l.b16 %v40
  %v177 = vunpack.c.l.b16 %v41
  %v178 = vunpack.c.l.b16 %v42
  %v179 = vunpack.c.l.b16 %v43
  %v180 = vunpack.c.l.b16 %v44
  %v181 = vunpack.c.l.b16 %v45
  %v182 = vunpack.c.l.b16 %v46
  %v183 = vunpack.c.l.b16 %v47
  %v184 = vunpack.c.l.b16 %v48
  %v185 = vunpack.c.l.b16 %v49
  %v186 = vunpack.c.l.b16 %v50
  %v187 = vunpack.c.l.b16 %v51
  %v188 = vunpack.c.l.b16 %v52
  %v189 = vunpack.c.l.b16 %v53
  %v190 = vunpack.c.l.b16 %v54
  %v191 = vunpack.c.l.b16 %v55
  %v192 = vunpack.c.l.b16 %v56
  %v193 = vunpack.c.l.b16 %v57
  %v194 = vunpack.c.l.b16 %v58
  %v195 = vunpack.c.l.b16 %v59
  %v196 = vunpack.c.l.b16 %v60
  %v197 = vunpack.c.l.b16 %v61
  %v198 = vunpack.c.l.b16 %v62
  %v199 = vunpack.c.l.b16 %v63
  %v200 = vunpack.c.l.b16 %v64
  %v201 = vunpack.c.l.b16 %v65
  %v202 = vunpack.c.l.b16 %v66
  %v203 = vunpack.c.l.b16 %v67
  %v204 = vunpack.c.l.b16 %v68
  %v205 = vunpack.c.l.b16 %v69
  %v206 = vunpack.c.l.b16 %v70
  %v207 = vunpack.c.l.b16 %v71
  %v208 = vunpack.c.l.b16 %v72
  %v209 = vunpack.c.l.b16 %v73
  %v210 = vunpack.c.l.b16 %v74
  %v211 = vunpack.c.l.b16 %v75
  %v212 = vunpack.c.l.b16 %v76
  %v213 = vunpack.c.l.b16 %v77
  %v214 = vpack.c.b16 %v151, %v150
  %v215 = vpack.c.b16 %v153, %v152
  %v216 = vpack.c.b16 %v155, %v154
  %v217 = vpack.c.b16 %v157, %v156
  %v218 = vpack.c.b16 %v159, %v158
  %v219 = vpack.c.b16 %v161, %v160
  %v220 = vpack.c.b16 %v163, %v162
  %v221 = vpack.c.b16 %v165, %v164
  %v222 = vpack.c.b16 %v167, %v166
  %v223 = vpack.c.b16 %v169, %v168
  %v224 = vpack.c.b16 %v171, %v170
  %v225 = vpack.c.b16 %v173, %v172
  %v226 = vpack.c.b16 %v175, %v174
  %v227 = vpack.c.b16 %v177, %v176
  %v228 = vpack.c.b16 %v179, %v178
  %v229 = vpack.c.b16 %v181, %v180
  %v230 = vpack.c.b16 %v183, %v182
  %v231 = vpack.c.b16 %v185, %v184
  %v232 = vpack.c.b16 %v187, %v186
  %v233 = vpack.c.b16 %v189, %v188
  %v234 = vpack.c.b16 %v191, %v190
  %v235 = vpack.c.b16 %v193, %v192
  %v236 = vpack.c.b16 %v195, %v194
  %v237 = vpack.c.b16 %v197, %v196
  %v238 = vpack.c.b16 %v199, %v198
  %v239 = vpack.c.b16 %v201, %v200
  %v240 = vpack.c.b16 %v203, %v202
  %v241 = vpack.c.b16 %v205, %v204
  %v242 = vpack.c.b16 %v207, %v206
  %v243 = vpack.c.b16 %v209, %v208
  %v244 = vpack.c.b16 %v211, %v210
  %v245 = vpack.c.b16 %v213, %v212
  %v254 = vunpack.c.l.b16 %v78
  %v255 = vunpack.c.l.b16 %v79
  %v256 = vunpack.c.l.b16 %v80
  %v257 = vunpack.c.l.b16 %v81
  %v258 = vunpack.c.l.b16 %v82
  %v259 = vunpack.c.l.b16 %v83
  %v260 = vunpack.c.l.b16 %v84
  %v261 = vunpack.c.l.b16 %v85
  %v262 = vpack.c.b16 %v255, %v254
  %v263 = vpack.c.b16 %v257, %v256
  %v264 = vpack.c.b16 %v259, %v258
  %v265 = vpack.c.b16 %v261, %v260
  %vm270 = vcmask 523264
  %v272 = vsel %vm270, %v214, 0
  %v275 = vsel %vm270, %v215, 0
  %v278 = vsel %vm270, %v216, 0
  %v281 = vsel %vm270, %v217, 0
  %v284 = vsel %vm270, %v218, 0
  %v287 = vsel %vm270, %v219, 0
  %v290 = vsel %vm270, %v220, 0
  %v293 = vsel %vm270, %v221, 0
  %v296 = vsel %vm270, %v222, 0
  %v299 = vsel %vm270, %v223, 0
  %v302 = vsel %vm270, %v224, 0
  %v305 = vsel %vm270, %v225, 0
  %v308 = vsel %vm270, %v226, 0
  %v311 = vsel %vm270, %v227, 0
  %v314 = vsel %vm270, %v228, 0
  %v317 = vsel %vm270, %v229, 0
  %v320 = vsel %vm270, %v230, 0
  %v323 = vsel %vm270, %v231, 0
  %v326 = vsel %vm270, %v232, 0
  %v329 = vsel %vm270, %v233, 0
  %v332 = vsel %vm270, %v234, 0
  %v335 = vsel %vm270, %v235, 0
  %v338 = vsel %vm270, %v236, 0
  %v341 = vsel %vm270, %v237, 0
  %v344 = vsel %vm270, %v238, 0
  %v347 = vsel %vm270, %v239, 0
  %v350 = vsel %vm270, %v240, 0
  %v353 = vsel %vm270, %v241, 0
  %v356 = vsel %vm270, %v242, 0
  %v359 = vsel %vm270, %v243, 0
  %v362 = vsel %vm270, %v244, 0
  %v365 = vsel %vm270, %v245, 0
  %367 = vmatprep.subr.bf16.mxu0 0
  %368 = vmatpush1.bf16.msra.mxu0 %v262
  %369 = vmatprep.subr.bf16.mxu0 0
  %370 = vmatpush1.bf16.msra.mxu0 %v263
  %371 = vmatprep.subr.bf16.mxu0 0
  %372 = vmatpush1.bf16.msra.mxu0 %v264
  %373 = vmatprep.subr.bf16.mxu0 0
  %374 = vmatpush1.bf16.msra.mxu0 %v265
  %375 = vmatprep.subr.bf16.mxu0 0
  %376 = vmatpush1.bf16.msra.mxu0 0
  %377 = vmatprep.subr.bf16.mxu0 0
  %378 = vmatpush1.bf16.msra.mxu0 0
  %379 = vmatprep.subr.bf16.mxu0 0
  %380 = vmatpush1.bf16.msra.mxu0 0
  %381 = vmatprep.subr.bf16.mxu0 0
  %382 = vmatpush1.bf16.msra.mxu0 0
  %383 = vmatprep.subr.bf16.mxu0 0
  %384 = vmatpush1.bf16.msra.mxu0 0
  %385 = vmatprep.subr.bf16.mxu0 0
  %386 = vmatpush1.bf16.msra.mxu0 0
  %387 = vmatprep.subr.bf16.mxu0 0
  %388 = vmatpush1.bf16.msra.mxu0 0
  %389 = vmatprep.subr.bf16.mxu0 0
  %390 = vmatpush1.bf16.msra.mxu0 0
  %391 = vmatprep.subr.bf16.mxu0 0
  %392 = vmatpush1.bf16.msra.mxu0 0
  %393 = vmatprep.subr.bf16.mxu0 0
  %394 = vmatpush1.bf16.msra.mxu0 0
  %395 = vmatprep.subr.bf16.mxu0 0
  %396 = vmatpush1.bf16.msra.mxu0 0
  %397 = vmatprep.subr.bf16.mxu0 0
  %398 = vmatpush1.bf16.msra.mxu0 0
  %399 = vmatprep.mubr.bf16.mxu0 0
  %400 = vmatmul.mubr.bf16.gmra.mrb[0].mxu0 %v272
  %v401 = vpop.f32.mrb[0].mxu0
  %v402 = vadd.f32 0.0, %v401
  %v403 = vpop.f32.mrb[0].mxu0
  %v404 = vpop.f32.mrb[0].mxu0
  %v405 = vadd.f32 0.0, %v404
  %v406 = vpop.f32.mrb[0].mxu0
  %407 = vmatprep.mubr.bf16.mxu0 0
  %408 = vmatmul.mubr.bf16.gmra.mrb[0].mxu0 %v275
  %v409 = vpop.f32.mrb[0].mxu0
  %v410 = vadd.f32 0.0, %v409
  %v411 = vpop.f32.mrb[0].mxu0
  %v412 = vpop.f32.mrb[0].mxu0
  %v413 = vadd.f32 0.0, %v412
  %v414 = vpop.f32.mrb[0].mxu0
  %415 = vmatprep.mubr.bf16.mxu0 0
  %416 = vmatmul.mubr.bf16.gmra.mrb[0].mxu0 %v278
  %v417 = vpop.f32.mrb[0].mxu0
  %v418 = vadd.f32 0.0, %v417
  %v419 = vpop.f32.mrb[0].mxu0
  %v420 = vpop.f32.mrb[0].mxu0
  %v421 = vadd.f32 0.0, %v420
  %v422 = vpop.f32.mrb[0].mxu0
  %423 = vmatprep.mubr.bf16.mxu0 0
  %424 = vmatmul.mubr.bf16.gmra.mrb[0].mxu0 %v281
  %v425 = vpop.f32.mrb[0].mxu0
  %v426 = vadd.f32 0.0, %v425
  %v427 = vpop.f32.mrb[0].mxu0
  %v428 = vpop.f32.mrb[0].mxu0
  %v429 = vadd.f32 0.0, %v428
  %v430 = vpop.f32.mrb[0].mxu0
  %431 = vmatprep.mubr.bf16.mxu0 0
  %432 = vmatmul.mubr.bf16.gmra.mrb[0].mxu0 %v284
  %v433 = vpop.f32.mrb[0].mxu0
  %v434 = vadd.f32 0.0, %v433
  %v435 = vpop.f32.mrb[0].mxu0
  %v436 = vpop.f32.mrb[0].mxu0
  %v437 = vadd.f32 0.0, %v436
  %v438 = vpop.f32.mrb[0].mxu0
  %439 = vmatprep.mubr.bf16.mxu0 0
  %440 = vmatmul.mubr.bf16.gmra.mrb[0].mxu0 %v287
  %v441 = vpop.f32.mrb[0].mxu0
  %v442 = vadd.f32 0.0, %v441
  %v443 = vpop.f32.mrb[0].mxu0
  %v444 = vpop.f32.mrb[0].mxu0
  %v445 = vadd.f32 0.0, %v444
  %v446 = vpop.f32.mrb[0].mxu0
  %447 = vmatprep.mubr.bf16.mxu0 0
  %448 = vmatmul.mubr.bf16.gmra.mrb[0].mxu0 %v290
  %v449 = vpop.f32.mrb[0].mxu0
  %v450 = vadd.f32 0.0, %v449
  %v451 = vpop.f32.mrb[0].mxu0
  %v452 = vpop.f32.mrb[0].mxu0
  %v453 = vadd.f32 0.0, %v452
  %v454 = vpop.f32.mrb[0].mxu0
  %455 = vmatprep.mubr.bf16.mxu0 0
  %456 = vmatmul.mubr.bf16.gmra.mrb[0].mxu0 %v293
  %v457 = vpop.f32.mrb[0].mxu0
  %v458 = vadd.f32 0.0, %v457
  %v459 = vpop.f32.mrb[0].mxu0
  %v460 = vpop.f32.mrb[0].mxu0
  %v461 = vadd.f32 0.0, %v460
  %v462 = vpop.f32.mrb[0].mxu0
  %463 = vmatprep.mubr.bf16.mxu0 0
  %464 = vmatmul.mubr.bf16.gmra.mrb[0].mxu0 %v296
  %v465 = vpop.f32.mrb[0].mxu0
  %v466 = vadd.f32 0.0, %v465
  %v467 = vpop.f32.mrb[0].mxu0
  %v468 = vpop.f32.mrb[0].mxu0
  %v469 = vadd.f32 0.0, %v468
  %v470 = vpop.f32.mrb[0].mxu0
  %471 = vmatprep.mubr.bf16.mxu0 0
  %472 = vmatmul.mubr.bf16.gmra.mrb[0].mxu0 %v299
  %v473 = vpop.f32.mrb[0].mxu0
  %v474 = vadd.f32 0.0, %v473
  %v475 = vpop.f32.mrb[0].mxu0
  %v476 = vpop.f32.mrb[0].mxu0
  %v477 = vadd.f32 0.0, %v476
  %v478 = vpop.f32.mrb[0].mxu0
  %479 = vmatprep.mubr.bf16.mxu0 0
  %480 = vmatmul.mubr.bf16.gmra.mrb[0].mxu0 %v302
  %v481 = vpop.f32.mrb[0].mxu0
  %v482 = vadd.f32 0.0, %v481
  %v483 = vpop.f32.mrb[0].mxu0
  %v484 = vpop.f32.mrb[0].mxu0
  %v485 = vadd.f32 0.0, %v484
  %v486 = vpop.f32.mrb[0].mxu0
  %487 = vmatprep.mubr.bf16.mxu0 0
  %488 = vmatmul.mubr.bf16.gmra.mrb[0].mxu0 %v305
  %v489 = vpop.f32.mrb[0].mxu0
  %v490 = vadd.f32 0.0, %v489
  %v491 = vpop.f32.mrb[0].mxu0
  %v492 = vpop.f32.mrb[0].mxu0
  %v493 = vadd.f32 0.0, %v492
  %v494 = vpop.f32.mrb[0].mxu0
  %495 = vmatprep.mubr.bf16.mxu0 0
  %496 = vmatmul.mubr.bf16.gmra.mrb[0].mxu0 %v308
  %v497 = vpop.f32.mrb[0].mxu0
  %v498 = vadd.f32 0.0, %v497
  %v499 = vpop.f32.mrb[0].mxu0
  %v500 = vpop.f32.mrb[0].mxu0
  %v501 = vadd.f32 0.0, %v500
  %v502 = vpop.f32.mrb[0].mxu0
  %503 = vmatprep.mubr.bf16.mxu0 0
  %504 = vmatmul.mubr.bf16.gmra.mrb[0].mxu0 %v311
  %v505 = vpop.f32.mrb[0].mxu0
  %v506 = vadd.f32 0.0, %v505
  %v507 = vpop.f32.mrb[0].mxu0
  %v508 = vpop.f32.mrb[0].mxu0
  %v509 = vadd.f32 0.0, %v508
  %v510 = vpop.f32.mrb[0].mxu0
  %511 = vmatprep.mubr.bf16.mxu0 0
  %512 = vmatmul.mubr.bf16.gmra.mrb[0].mxu0 %v314
  %v513 = vpop.f32.mrb[0].mxu0
  %v514 = vadd.f32 0.0, %v513
  %v515 = vpop.f32.mrb[0].mxu0
  %v516 = vpop.f32.mrb[0].mxu0
  %v517 = vadd.f32 0.0, %v516
  %v518 = vpop.f32.mrb[0].mxu0
  %519 = vmatprep.mubr.bf16.mxu0 0
  %520 = vmatmul.mubr.bf16.gmra.mrb[0].mxu0 %v317
  %v521 = vpop.f32.mrb[0].mxu0
  %v522 = vadd.f32 0.0, %v521
  %v523 = vpop.f32.mrb[0].mxu0
  %v524 = vpop.f32.mrb[0].mxu0
  %v525 = vadd.f32 0.0, %v524
  %v526 = vpop.f32.mrb[0].mxu0
  %527 = vmatprep.mubr.bf16.mxu0 0
  %528 = vmatmul.mubr.bf16.gmra.mrb[0].mxu0 %v320
  %v529 = vpop.f32.mrb[0].mxu0
  %v530 = vadd.f32 0.0, %v529
  %v531 = vpop.f32.mrb[0].mxu0
  %v532 = vpop.f32.mrb[0].mxu0
  %v533 = vadd.f32 0.0, %v532
  %v534 = vpop.f32.mrb[0].mxu0
  %535 = vmatprep.mubr.bf16.mxu0 0
  %536 = vmatmul.mubr.bf16.gmra.mrb[0].mxu0 %v323
  %v537 = vpop.f32.mrb[0].mxu0
  %v538 = vadd.f32 0.0, %v537
  %v539 = vpop.f32.mrb[0].mxu0
  %v540 = vpop.f32.mrb[0].mxu0
  %v541 = vadd.f32 0.0, %v540
  %v542 = vpop.f32.mrb[0].mxu0
  %543 = vmatprep.mubr.bf16.mxu0 0
  %544 = vmatmul.mubr.bf16.gmra.mrb[0].mxu0 %v326
  %v545 = vpop.f32.mrb[0].mxu0
  %v546 = vadd.f32 0.0, %v545
  %v547 = vpop.f32.mrb[0].mxu0
  %v548 = vpop.f32.mrb[0].mxu0
  %v549 = vadd.f32 0.0, %v548
  %v550 = vpop.f32.mrb[0].mxu0
  %551 = vmatprep.mubr.bf16.mxu0 0
  %552 = vmatmul.mubr.bf16.gmra.mrb[0].mxu0 %v329
  %v553 = vpop.f32.mrb[0].mxu0
  %v554 = vadd.f32 0.0, %v553
  %v555 = vpop.f32.mrb[0].mxu0
  %v556 = vpop.f32.mrb[0].mxu0
  %v557 = vadd.f32 0.0, %v556
  %v558 = vpop.f32.mrb[0].mxu0
  %559 = vmatprep.mubr.bf16.mxu0 0
  %560 = vmatmul.mubr.bf16.gmra.mrb[0].mxu0 %v332
  %v561 = vpop.f32.mrb[0].mxu0
  %v562 = vadd.f32 0.0, %v561
  %v563 = vpop.f32.mrb[0].mxu0
  %v564 = vpop.f32.mrb[0].mxu0
  %v565 = vadd.f32 0.0, %v564
  %v566 = vpop.f32.mrb[0].mxu0
  %567 = vmatprep.mubr.bf16.mxu0 0
  %568 = vmatmul.mubr.bf16.gmra.mrb[0].mxu0 %v335
  %v569 = vpop.f32.mrb[0].mxu0
  %v570 = vadd.f32 0.0, %v569
  %v571 = vpop.f32.mrb[0].mxu0
  %v572 = vpop.f32.mrb[0].mxu0
  %v573 = vadd.f32 0.0, %v572
  %v574 = vpop.f32.mrb[0].mxu0
  %575 = vmatprep.mubr.bf16.mxu0 0
  %576 = vmatmul.mubr.bf16.gmra.mrb[0].mxu0 %v338
  %v577 = vpop.f32.mrb[0].mxu0
  %v578 = vadd.f32 0.0, %v577
  %v579 = vpop.f32.mrb[0].mxu0
  %v580 = vpop.f32.mrb[0].mxu0
  %v581 = vadd.f32 0.0, %v580
  %v582 = vpop.f32.mrb[0].mxu0
  %583 = vmatprep.mubr.bf16.mxu0 0
  %584 = vmatmul.mubr.bf16.gmra.mrb[0].mxu0 %v341
  %v585 = vpop.f32.mrb[0].mxu0
  %v586 = vadd.f32 0.0, %v585
  %v587 = vpop.f32.mrb[0].mxu0
  %v588 = vpop.f32.mrb[0].mxu0
  %v589 = vadd.f32 0.0, %v588
  %v590 = vpop.f32.mrb[0].mxu0
  %591 = vmatprep.mubr.bf16.mxu0 0
  %592 = vmatmul.mubr.bf16.gmra.mrb[0].mxu0 %v344
  %v593 = vpop.f32.mrb[0].mxu0
  %v594 = vadd.f32 0.0, %v593
  %v595 = vpop.f32.mrb[0].mxu0
  %v596 = vpop.f32.mrb[0].mxu0
  %v597 = vadd.f32 0.0, %v596
  %v598 = vpop.f32.mrb[0].mxu0
  %599 = vmatprep.mubr.bf16.mxu0 0
  %600 = vmatmul.mubr.bf16.gmra.mrb[0].mxu0 %v347
  %v601 = vpop.f32.mrb[0].mxu0
  %v602 = vadd.f32 0.0, %v601
  %v603 = vpop.f32.mrb[0].mxu0
  %v604 = vpop.f32.mrb[0].mxu0
  %v605 = vadd.f32 0.0, %v604
  %v606 = vpop.f32.mrb[0].mxu0
  %607 = vmatprep.mubr.bf16.mxu0 0
  %608 = vmatmul.mubr.bf16.gmra.mrb[0].mxu0 %v350
  %v609 = vpop.f32.mrb[0].mxu0
  %v610 = vadd.f32 0.0, %v609
  %v611 = vpop.f32.mrb[0].mxu0
  %v612 = vpop.f32.mrb[0].mxu0
  %v613 = vadd.f32 0.0, %v612
  %v614 = vpop.f32.mrb[0].mxu0
  %615 = vmatprep.mubr.bf16.mxu0 0
  %616 = vmatmul.mubr.bf16.gmra.mrb[0].mxu0 %v353
  %v617 = vpop.f32.mrb[0].mxu0
  %v618 = vadd.f32 0.0, %v617
  %v619 = vpop.f32.mrb[0].mxu0
  %v620 = vpop.f32.mrb[0].mxu0
  %v621 = vadd.f32 0.0, %v620
  %v622 = vpop.f32.mrb[0].mxu0
  %623 = vmatprep.mubr.bf16.mxu0 0
  %624 = vmatmul.mubr.bf16.gmra.mrb[0].mxu0 %v356
  %v625 = vpop.f32.mrb[0].mxu0
  %v626 = vadd.f32 0.0, %v625
  %v627 = vpop.f32.mrb[0].mxu0
  %v628 = vpop.f32.mrb[0].mxu0
  %v629 = vadd.f32 0.0, %v628
  %v630 = vpop.f32.mrb[0].mxu0
  %631 = vmatprep.mubr.bf16.mxu0 0
  %632 = vmatmul.mubr.bf16.gmra.mrb[0].mxu0 %v359
  %v633 = vpop.f32.mrb[0].mxu0
  %v634 = vadd.f32 0.0, %v633
  %v635 = vpop.f32.mrb[0].mxu0
  %v636 = vpop.f32.mrb[0].mxu0
  %v637 = vadd.f32 0.0, %v636
  %v638 = vpop.f32.mrb[0].mxu0
  %639 = vmatprep.mubr.bf16.mxu0 0
  %640 = vmatmul.mubr.bf16.gmra.mrb[0].mxu0 %v362
  %v641 = vpop.f32.mrb[0].mxu0
  %v642 = vadd.f32 0.0, %v641
  %v643 = vpop.f32.mrb[0].mxu0
  %v644 = vpop.f32.mrb[0].mxu0
  %v645 = vadd.f32 0.0, %v644
  %v646 = vpop.f32.mrb[0].mxu0
  %647 = vmatprep.mubr.bf16.mxu0 0
  %648 = vmatmul.mubr.bf16.gmra.mrb[0].mxu0 %v365
  %v649 = vpop.f32.mrb[0].mxu0
  %v650 = vadd.f32 0.0, %v649
  %v651 = vpop.f32.mrb[0].mxu0
  %v652 = vpop.f32.mrb[0].mxu0
  %v653 = vadd.f32 0.0, %v652
  %v654 = vpop.f32.mrb[0].mxu0
  %655 = vdwg.mxu0
  %v656 = vpack.c.bf16 %v405, %v402
  %v657 = vpack.c.bf16 %v413, %v410
  %v658 = vpack.c.bf16 %v421, %v418
  %v659 = vpack.c.bf16 %v429, %v426
  %v660 = vpack.c.bf16 %v437, %v434
  %v661 = vpack.c.bf16 %v445, %v442
  %v662 = vpack.c.bf16 %v453, %v450
  %v663 = vpack.c.bf16 %v461, %v458
  %v664 = vpack.c.bf16 %v469, %v466
  %v665 = vpack.c.bf16 %v477, %v474
  %v666 = vpack.c.bf16 %v485, %v482
  %v667 = vpack.c.bf16 %v493, %v490
  %v668 = vpack.c.bf16 %v501, %v498
  %v669 = vpack.c.bf16 %v509, %v506
  %v670 = vpack.c.bf16 %v517, %v514
  %v671 = vpack.c.bf16 %v525, %v522
  %v672 = vpack.c.bf16 %v533, %v530
  %v673 = vpack.c.bf16 %v541, %v538
  %v674 = vpack.c.bf16 %v549, %v546
  %v675 = vpack.c.bf16 %v557, %v554
  %v676 = vpack.c.bf16 %v565, %v562
  %v677 = vpack.c.bf16 %v573, %v570
  %v678 = vpack.c.bf16 %v581, %v578
  %v679 = vpack.c.bf16 %v589, %v586
  %v680 = vpack.c.bf16 %v597, %v594
  %v681 = vpack.c.bf16 %v605, %v602
  %v682 = vpack.c.bf16 %v613, %v610
  %v683 = vpack.c.bf16 %v621, %v618
  %v684 = vpack.c.bf16 %v629, %v626
  %v685 = vpack.c.bf16 %v637, %v634
  %v686 = vpack.c.bf16 %v645, %v642
  %v687 = vpack.c.bf16 %v653, %v650
  %v720 = vunpack.c.l.b16 %v656
  %v721 = vunpack.c.h.b16 %v656
  %v722 = vunpack.c.l.b16 %v657
  %v723 = vunpack.c.h.b16 %v657
  %v724 = vunpack.c.l.b16 %v658
  %v725 = vunpack.c.h.b16 %v658
  %v726 = vunpack.c.l.b16 %v659
  %v727 = vunpack.c.h.b16 %v659
  %v728 = vunpack.c.l.b16 %v660
  %v729 = vunpack.c.h.b16 %v660
  %v730 = vunpack.c.l.b16 %v661
  %v731 = vunpack.c.h.b16 %v661
  %v732 = vunpack.c.l.b16 %v662
  %v733 = vunpack.c.h.b16 %v662
  %v734 = vunpack.c.l.b16 %v663
  %v735 = vunpack.c.h.b16 %v663
  %v736 = vunpack.c.l.b16 %v664
  %v737 = vunpack.c.h.b16 %v664
  %v738 = vunpack.c.l.b16 %v665
  %v739 = vunpack.c.h.b16 %v665
  %v740 = vunpack.c.l.b16 %v666
  %v741 = vunpack.c.h.b16 %v666
  %v742 = vunpack.c.l.b16 %v667
  %v743 = vunpack.c.h.b16 %v667
  %v744 = vunpack.c.l.b16 %v668
  %v745 = vunpack.c.h.b16 %v668
  %v746 = vunpack.c.l.b16 %v669
  %v747 = vunpack.c.h.b16 %v669
  %v748 = vunpack.c.l.b16 %v670
  %v749 = vunpack.c.h.b16 %v670
  %v750 = vunpack.c.l.b16 %v671
  %v751 = vunpack.c.h.b16 %v671
  %v752 = vunpack.c.l.b16 %v672
  %v753 = vunpack.c.h.b16 %v672
  %v754 = vunpack.c.l.b16 %v673
  %v755 = vunpack.c.h.b16 %v673
  %v756 = vunpack.c.l.b16 %v674
  %v757 = vunpack.c.h.b16 %v674
  %v758 = vunpack.c.l.b16 %v675
  %v759 = vunpack.c.h.b16 %v675
  %v760 = vunpack.c.l.b16 %v676
  %v761 = vunpack.c.h.b16 %v676
  %v762 = vunpack.c.l.b16 %v677
  %v763 = vunpack.c.h.b16 %v677
  %v764 = vunpack.c.l.b16 %v678
  %v765 = vunpack.c.h.b16 %v678
  %v766 = vunpack.c.l.b16 %v679
  %v767 = vunpack.c.h.b16 %v679
  %v768 = vunpack.c.l.b16 %v680
  %v769 = vunpack.c.h.b16 %v680
  %v770 = vunpack.c.l.b16 %v681
  %v771 = vunpack.c.h.b16 %v681
  %v772 = vunpack.c.l.b16 %v682
  %v773 = vunpack.c.h.b16 %v682
  %v774 = vunpack.c.l.b16 %v683
  %v775 = vunpack.c.h.b16 %v683
  %v776 = vunpack.c.l.b16 %v684
  %v777 = vunpack.c.h.b16 %v684
  %v778 = vunpack.c.l.b16 %v685
  %v779 = vunpack.c.h.b16 %v685
  %v780 = vunpack.c.l.b16 %v686
  %v781 = vunpack.c.h.b16 %v686
  %v782 = vunpack.c.l.b16 %v687
  %v783 = vunpack.c.h.b16 %v687
  %v784 = vpack.c.b16 %v720, %v720
  %v785 = vpack.c.b16 %v721, %v721
  %v786 = vpack.c.b16 %v722, %v722
  %v787 = vpack.c.b16 %v723, %v723
  %v788 = vpack.c.b16 %v724, %v724
  %v789 = vpack.c.b16 %v725, %v725
  %v790 = vpack.c.b16 %v726, %v726
  %v791 = vpack.c.b16 %v727, %v727
  %v792 = vpack.c.b16 %v728, %v728
  %v793 = vpack.c.b16 %v729, %v729
  %v794 = vpack.c.b16 %v730, %v730
  %v795 = vpack.c.b16 %v731, %v731
  %v796 = vpack.c.b16 %v732, %v732
  %v797 = vpack.c.b16 %v733, %v733
  %v798 = vpack.c.b16 %v734, %v734
  %v799 = vpack.c.b16 %v735, %v735
  %v800 = vpack.c.b16 %v736, %v736
  %v801 = vpack.c.b16 %v737, %v737
  %v802 = vpack.c.b16 %v738, %v738
  %v803 = vpack.c.b16 %v739, %v739
  %v804 = vpack.c.b16 %v740, %v740
  %v805 = vpack.c.b16 %v741, %v741
  %v806 = vpack.c.b16 %v742, %v742
  %v807 = vpack.c.b16 %v743, %v743
  %v808 = vpack.c.b16 %v744, %v744
  %v809 = vpack.c.b16 %v745, %v745
  %v810 = vpack.c.b16 %v746, %v746
  %v811 = vpack.c.b16 %v747, %v747
  %v812 = vpack.c.b16 %v748, %v748
  %v813 = vpack.c.b16 %v749, %v749
  %v814 = vpack.c.b16 %v750, %v750
  %v815 = vpack.c.b16 %v751, %v751
  %v816 = vpack.c.b16 %v752, %v752
  %v817 = vpack.c.b16 %v753, %v753
  %v818 = vpack.c.b16 %v754, %v754
  %v819 = vpack.c.b16 %v755, %v755
  %v820 = vpack.c.b16 %v756, %v756
  %v821 = vpack.c.b16 %v757, %v757
  %v822 = vpack.c.b16 %v758, %v758
  %v823 = vpack.c.b16 %v759, %v759
  %v824 = vpack.c.b16 %v760, %v760
  %v825 = vpack.c.b16 %v761, %v761
  %v826 = vpack.c.b16 %v762, %v762
  %v827 = vpack.c.b16 %v763, %v763
  %v828 = vpack.c.b16 %v764, %v764
  %v829 = vpack.c.b16 %v765, %v765
  %v830 = vpack.c.b16 %v766, %v766
  %v831 = vpack.c.b16 %v767, %v767
  %v832 = vpack.c.b16 %v768, %v768
  %v833 = vpack.c.b16 %v769, %v769
  %v834 = vpack.c.b16 %v770, %v770
  %v835 = vpack.c.b16 %v771, %v771
  %v836 = vpack.c.b16 %v772, %v772
  %v837 = vpack.c.b16 %v773, %v773
  %v838 = vpack.c.b16 %v774, %v774
  %v839 = vpack.c.b16 %v775, %v775
  %v840 = vpack.c.b16 %v776, %v776
  %v841 = vpack.c.b16 %v777, %v777
  %v842 = vpack.c.b16 %v778, %v778
  %v843 = vpack.c.b16 %v779, %v779
  %v844 = vpack.c.b16 %v780, %v780
  %v845 = vpack.c.b16 %v781, %v781
  %v846 = vpack.c.b16 %v782, %v782
  %v847 = vpack.c.b16 %v783, %v783
  %vm912 = vcmask 125952
  %913 = vst.msk [vmem:[%s2] sm:$0xf] %vm912, %v784
  %914 = vst.msk [vmem:[%s2 + $0x4] sm:$0xf] %vm912, %v785
  %915 = vst.msk [vmem:[%s2 + $0x8] sm:$0xf] %vm912, %v786
  %916 = vst.msk [vmem:[%s2 + $0xc] sm:$0xf] %vm912, %v787
  %917 = vst.msk [vmem:[%s2 + $0x10] sm:$0xf] %vm912, %v788
  %918 = vst.msk [vmem:[%s2 + $0x14] sm:$0xf] %vm912, %v789
  %919 = vst.msk [vmem:[%s2 + $0x18] sm:$0xf] %vm912, %v790
  %920 = vst.msk [vmem:[%s2 + $0x1c] sm:$0xf] %vm912, %v791
  %921 = vst.msk [vmem:[%s2 + $0x20] sm:$0xf] %vm912, %v792
  %922 = vst.msk [vmem:[%s2 + $0x24] sm:$0xf] %vm912, %v793
  %923 = vst.msk [vmem:[%s2 + $0x28] sm:$0xf] %vm912, %v794
  %924 = vst.msk [vmem:[%s2 + $0x2c] sm:$0xf] %vm912, %v795
  %925 = vst.msk [vmem:[%s2 + $0x30] sm:$0xf] %vm912, %v796
  %926 = vst.msk [vmem:[%s2 + $0x34] sm:$0xf] %vm912, %v797
  %927 = vst.msk [vmem:[%s2 + $0x38] sm:$0xf] %vm912, %v798
  %928 = vst.msk [vmem:[%s2 + $0x3c] sm:$0xf] %vm912, %v799
  %929 = vst.msk [vmem:[%s2 + $0x40] sm:$0xf] %vm912, %v800
  %930 = vst.msk [vmem:[%s2 + $0x44] sm:$0xf] %vm912, %v801
  %931 = vst.msk [vmem:[%s2 + $0x48] sm:$0xf] %vm912, %v802
  %932 = vst.msk [vmem:[%s2 + $0x4c] sm:$0xf] %vm912, %v803
  %933 = vst.msk [vmem:[%s2 + $0x50] sm:$0xf] %vm912, %v804
  %934 = vst.msk [vmem:[%s2 + $0x54] sm:$0xf] %vm912, %v805
  %935 = vst.msk [vmem:[%s2 + $0x58] sm:$0xf] %vm912, %v806
  %936 = vst.msk [vmem:[%s2 + $0x5c] sm:$0xf] %vm912, %v807
  %937 = vst.msk [vmem:[%s2 + $0x60] sm:$0xf] %vm912, %v808
  %938 = vst.msk [vmem:[%s2 + $0x64] sm:$0xf] %vm912, %v809
  %939 = vst.msk [vmem:[%s2 + $0x68] sm:$0xf] %vm912, %v810
  %940 = vst.msk [vmem:[%s2 + $0x6c] sm:$0xf] %vm912, %v811
  %941 = vst.msk [vmem:[%s2 + $0x70] sm:$0xf] %vm912, %v812
  %942 = vst.msk [vmem:[%s2 + $0x74] sm:$0xf] %vm912, %v813
  %943 = vst.msk [vmem:[%s2 + $0x78] sm:$0xf] %vm912, %v814
  %944 = vst.msk [vmem:[%s2 + $0x7c] sm:$0xf] %vm912, %v815
  %945 = vst.msk [vmem:[%s2 + $0x80] sm:$0xf] %vm912, %v816
  %946 = vst.msk [vmem:[%s2 + $0x84] sm:$0xf] %vm912, %v817
  %947 = vst.msk [vmem:[%s2 + $0x88] sm:$0xf] %vm912, %v818
  %948 = vst.msk [vmem:[%s2 + $0x8c] sm:$0xf] %vm912, %v819
  %949 = vst.msk [vmem:[%s2 + $0x90] sm:$0xf] %vm912, %v820
  %950 = vst.msk [vmem:[%s2 + $0x94] sm:$0xf] %vm912, %v821
  %951 = vst.msk [vmem:[%s2 + $0x98] sm:$0xf] %vm912, %v822
  %952 = vst.msk [vmem:[%s2 + $0x9c] sm:$0xf] %vm912, %v823
  %953 = vst.msk [vmem:[%s2 + $0xa0] sm:$0xf] %vm912, %v824
  %954 = vst.msk [vmem:[%s2 + $0xa4] sm:$0xf] %vm912, %v825
  %955 = vst.msk [vmem:[%s2 + $0xa8] sm:$0xf] %vm912, %v826
  %956 = vst.msk [vmem:[%s2 + $0xac] sm:$0xf] %vm912, %v827
  %957 = vst.msk [vmem:[%s2 + $0xb0] sm:$0xf] %vm912, %v828
  %958 = vst.msk [vmem:[%s2 + $0xb4] sm:$0xf] %vm912, %v829
  %959 = vst.msk [vmem:[%s2 + $0xb8] sm:$0xf] %vm912, %v830
  %960 = vst.msk [vmem:[%s2 + $0xbc] sm:$0xf] %vm912, %v831
  %961 = vst.msk [vmem:[%s2 + $0xc0] sm:$0xf] %vm912, %v832
  %962 = vst.msk [vmem:[%s2 + $0xc4] sm:$0xf] %vm912, %v833
  %963 = vst.msk [vmem:[%s2 + $0xc8] sm:$0xf] %vm912, %v834
  %964 = vst.msk [vmem:[%s2 + $0xcc] sm:$0xf] %vm912, %v835
  %965 = vst.msk [vmem:[%s2 + $0xd0] sm:$0xf] %vm912, %v836
  %966 = vst.msk [vmem:[%s2 + $0xd4] sm:$0xf] %vm912, %v837
  %967 = vst.msk [vmem:[%s2 + $0xd8] sm:$0xf] %vm912, %v838
  %968 = vst.msk [vmem:[%s2 + $0xdc] sm:$0xf] %vm912, %v839
  %969 = vst.msk [vmem:[%s2 + $0xe0] sm:$0xf] %vm912, %v840
  %970 = vst.msk [vmem:[%s2 + $0xe4] sm:$0xf] %vm912, %v841
  %971 = vst.msk [vmem:[%s2 + $0xe8] sm:$0xf] %vm912, %v842
  %972 = vst.msk [vmem:[%s2 + $0xec] sm:$0xf] %vm912, %v843
  %973 = vst.msk [vmem:[%s2 + $0xf0] sm:$0xf] %vm912, %v844
  %974 = vst.msk [vmem:[%s2 + $0xf4] sm:$0xf] %vm912, %v845
  %975 = vst.msk [vmem:[%s2 + $0xf8] sm:$0xf] %vm912, %v846
  %976 = vst.msk [vmem:[%s2 + $0xfc] sm:$0xf] %vm912, %v847
  %vm977 = vcmask 130048
  %v978 = vsel %vm977, %v402, 0.0
  %v979 = vsel %vm977, %v405, 0.0
  %v980 = vadd.f32 %v978, %v979
  %v981 = vsel %vm977, %v410, 0.0
  %v982 = vadd.f32 %v980, %v981
  %v983 = vsel %vm977, %v413, 0.0
  %v984 = vadd.f32 %v982, %v983
  %v985 = vsel %vm977, %v418, 0.0
  %v986 = vadd.f32 %v984, %v985
  %v987 = vsel %vm977, %v421, 0.0
  %v988 = vadd.f32 %v986, %v987
  %v989 = vsel %vm977, %v426, 0.0
  %v990 = vadd.f32 %v988, %v989
  %v991 = vsel %vm977, %v429, 0.0
  %v992 = vadd.f32 %v990, %v991
  %v993 = vsel %vm977, %v434, 0.0
  %v994 = vadd.f32 %v992, %v993
  %v995 = vsel %vm977, %v437, 0.0
  %v996 = vadd.f32 %v994, %v995
  %v997 = vsel %vm977, %v442, 0.0
  %v998 = vadd.f32 %v996, %v997
  %v999 = vsel %vm977, %v445, 0.0
  %v1000 = vadd.f32 %v998, %v999
  %v1001 = vsel %vm977, %v450, 0.0
  %v1002 = vadd.f32 %v1000, %v1001
  %v1003 = vsel %vm977, %v453, 0.0
  %v1004 = vadd.f32 %v1002, %v1003
  %v1005 = vsel %vm977, %v458, 0.0
  %v1006 = vadd.f32 %v1004, %v1005
  %v1007 = vsel %vm977, %v461, 0.0
  %v1008 = vadd.f32 %v1006, %v1007
  %v1009 = vsel %vm977, %v466, 0.0
  %v1010 = vadd.f32 %v1008, %v1009
  %v1011 = vsel %vm977, %v469, 0.0
  %v1012 = vadd.f32 %v1010, %v1011
  %v1013 = vsel %vm977, %v474, 0.0
  %v1014 = vadd.f32 %v1012, %v1013
  %v1015 = vsel %vm977, %v477, 0.0
  %v1016 = vadd.f32 %v1014, %v1015
  %v1017 = vsel %vm977, %v482, 0.0
  %v1018 = vadd.f32 %v1016, %v1017
  %v1019 = vsel %vm977, %v485, 0.0
  %v1020 = vadd.f32 %v1018, %v1019
  %v1021 = vsel %vm977, %v490, 0.0
  %v1022 = vadd.f32 %v1020, %v1021
  %v1023 = vsel %vm977, %v493, 0.0
  %v1024 = vadd.f32 %v1022, %v1023
  %v1025 = vsel %vm977, %v498, 0.0
  %v1026 = vadd.f32 %v1024, %v1025
  %v1027 = vsel %vm977, %v501, 0.0
  %v1028 = vadd.f32 %v1026, %v1027
  %v1029 = vsel %vm977, %v506, 0.0
  %v1030 = vadd.f32 %v1028, %v1029
  %v1031 = vsel %vm977, %v509, 0.0
  %v1032 = vadd.f32 %v1030, %v1031
  %v1033 = vsel %vm977, %v514, 0.0
  %v1034 = vadd.f32 %v1032, %v1033
  %v1035 = vsel %vm977, %v517, 0.0
  %v1036 = vadd.f32 %v1034, %v1035
  %v1037 = vsel %vm977, %v522, 0.0
  %v1038 = vadd.f32 %v1036, %v1037
  %v1039 = vsel %vm977, %v525, 0.0
  %v1040 = vadd.f32 %v1038, %v1039
  %v1041 = vsel %vm977, %v530, 0.0
  %v1042 = vadd.f32 %v1040, %v1041
  %v1043 = vsel %vm977, %v533, 0.0
  %v1044 = vadd.f32 %v1042, %v1043
  %v1045 = vsel %vm977, %v538, 0.0
  %v1046 = vadd.f32 %v1044, %v1045
  %v1047 = vsel %vm977, %v541, 0.0
  %v1048 = vadd.f32 %v1046, %v1047
  %v1049 = vsel %vm977, %v546, 0.0
  %v1050 = vadd.f32 %v1048, %v1049
  %v1051 = vsel %vm977, %v549, 0.0
  %v1052 = vadd.f32 %v1050, %v1051
  %v1053 = vsel %vm977, %v554, 0.0
  %v1054 = vadd.f32 %v1052, %v1053
  %v1055 = vsel %vm977, %v557, 0.0
  %v1056 = vadd.f32 %v1054, %v1055
  %v1057 = vsel %vm977, %v562, 0.0
  %v1058 = vadd.f32 %v1056, %v1057
  %v1059 = vsel %vm977, %v565, 0.0
  %v1060 = vadd.f32 %v1058, %v1059
  %v1061 = vsel %vm977, %v570, 0.0
  %v1062 = vadd.f32 %v1060, %v1061
  %v1063 = vsel %vm977, %v573, 0.0
  %v1064 = vadd.f32 %v1062, %v1063
  %v1065 = vsel %vm977, %v578, 0.0
  %v1066 = vadd.f32 %v1064, %v1065
  %v1067 = vsel %vm977, %v581, 0.0
  %v1068 = vadd.f32 %v1066, %v1067
  %v1069 = vsel %vm977, %v586, 0.0
  %v1070 = vadd.f32 %v1068, %v1069
  %v1071 = vsel %vm977, %v589, 0.0
  %v1072 = vadd.f32 %v1070, %v1071
  %v1073 = vsel %vm977, %v594, 0.0
  %v1074 = vadd.f32 %v1072, %v1073
  %v1075 = vsel %vm977, %v597, 0.0
  %v1076 = vadd.f32 %v1074, %v1075
  %v1077 = vsel %vm977, %v602, 0.0
  %v1078 = vadd.f32 %v1076, %v1077
  %v1079 = vsel %vm977, %v605, 0.0
  %v1080 = vadd.f32 %v1078, %v1079
  %v1081 = vsel %vm977, %v610, 0.0
  %v1082 = vadd.f32 %v1080, %v1081
  %v1083 = vsel %vm977, %v613, 0.0
  %v1084 = vadd.f32 %v1082, %v1083
  %v1085 = vsel %vm977, %v618, 0.0
  %v1086 = vadd.f32 %v1084, %v1085
  %v1087 = vsel %vm977, %v621, 0.0
  %v1088 = vadd.f32 %v1086, %v1087
  %v1089 = vsel %vm977, %v626, 0.0
  %v1090 = vadd.f32 %v1088, %v1089
  %v1091 = vsel %vm977, %v629, 0.0
  %v1092 = vadd.f32 %v1090, %v1091
  %v1093 = vsel %vm977, %v634, 0.0
  %v1094 = vadd.f32 %v1092, %v1093
  %v1095 = vsel %vm977, %v637, 0.0
  %v1096 = vadd.f32 %v1094, %v1095
  %v1097 = vsel %vm977, %v642, 0.0
  %v1098 = vadd.f32 %v1096, %v1097
  %v1099 = vsel %vm977, %v645, 0.0
  %v1100 = vadd.f32 %v1098, %v1099
  %v1101 = vsel %vm977, %v650, 0.0
  %v1102 = vadd.f32 %v1100, %v1101
  %v1103 = vsel %vm977, %v653, 0.0
  %v1104 = vadd.f32 %v1102, %v1103
  %v1105 = vrot.slane %v1104, 4
  %v1106 = vadd.f32 %v1104, %v1105
  %v1107 = vrot.slane %v1106, 2
  %v1108 = vadd.f32 %v1106, %v1107
  %v1109 = vrot.slane %v1108, 1
  %v1110 = vadd.f32 %v1108, %v1109
  %v1111 = vmul.f32 %v402, %v402
  %v1112 = vmul.f32 %v405, %v405
  %v1113 = vmul.f32 %v410, %v410
  %v1114 = vmul.f32 %v413, %v413
  %v1115 = vmul.f32 %v418, %v418
  %v1116 = vmul.f32 %v421, %v421
  %v1117 = vmul.f32 %v426, %v426
  %v1118 = vmul.f32 %v429, %v429
  %v1119 = vmul.f32 %v434, %v434
  %v1120 = vmul.f32 %v437, %v437
  %v1121 = vmul.f32 %v442, %v442
  %v1122 = vmul.f32 %v445, %v445
  %v1123 = vmul.f32 %v450, %v450
  %v1124 = vmul.f32 %v453, %v453
  %v1125 = vmul.f32 %v458, %v458
  %v1126 = vmul.f32 %v461, %v461
  %v1127 = vmul.f32 %v466, %v466
  %v1128 = vmul.f32 %v469, %v469
  %v1129 = vmul.f32 %v474, %v474
  %v1130 = vmul.f32 %v477, %v477
  %v1131 = vmul.f32 %v482, %v482
  %v1132 = vmul.f32 %v485, %v485
  %v1133 = vmul.f32 %v490, %v490
  %v1134 = vmul.f32 %v493, %v493
  %v1135 = vmul.f32 %v498, %v498
  %v1136 = vmul.f32 %v501, %v501
  %v1137 = vmul.f32 %v506, %v506
  %v1138 = vmul.f32 %v509, %v509
  %v1139 = vmul.f32 %v514, %v514
  %v1140 = vmul.f32 %v517, %v517
  %v1141 = vmul.f32 %v522, %v522
  %v1142 = vmul.f32 %v525, %v525
  %v1143 = vmul.f32 %v530, %v530
  %v1144 = vmul.f32 %v533, %v533
  %v1145 = vmul.f32 %v538, %v538
  %v1146 = vmul.f32 %v541, %v541
  %v1147 = vmul.f32 %v546, %v546
  %v1148 = vmul.f32 %v549, %v549
  %v1149 = vmul.f32 %v554, %v554
  %v1150 = vmul.f32 %v557, %v557
  %v1151 = vmul.f32 %v562, %v562
  %v1152 = vmul.f32 %v565, %v565
  %v1153 = vmul.f32 %v570, %v570
  %v1154 = vmul.f32 %v573, %v573
  %v1155 = vmul.f32 %v578, %v578
  %v1156 = vmul.f32 %v581, %v581
  %v1157 = vmul.f32 %v586, %v586
  %v1158 = vmul.f32 %v589, %v589
  %v1159 = vmul.f32 %v594, %v594
  %v1160 = vmul.f32 %v597, %v597
  %v1161 = vmul.f32 %v602, %v602
  %v1162 = vmul.f32 %v605, %v605
  %v1163 = vmul.f32 %v610, %v610
  %v1164 = vmul.f32 %v613, %v613
  %v1165 = vmul.f32 %v618, %v618
  %v1166 = vmul.f32 %v621, %v621
  %v1167 = vmul.f32 %v626, %v626
  %v1168 = vmul.f32 %v629, %v629
  %v1169 = vmul.f32 %v634, %v634
  %v1170 = vmul.f32 %v637, %v637
  %v1171 = vmul.f32 %v642, %v642
  %v1172 = vmul.f32 %v645, %v645
  %v1173 = vmul.f32 %v650, %v650
  %v1174 = vmul.f32 %v653, %v653
  %v1175 = vsel %vm977, %v1111, 0.0
  %v1176 = vsel %vm977, %v1112, 0.0
  %v1177 = vadd.f32 %v1175, %v1176
  %v1178 = vsel %vm977, %v1113, 0.0
  %v1179 = vadd.f32 %v1177, %v1178
  %v1180 = vsel %vm977, %v1114, 0.0
  %v1181 = vadd.f32 %v1179, %v1180
  %v1182 = vsel %vm977, %v1115, 0.0
  %v1183 = vadd.f32 %v1181, %v1182
  %v1184 = vsel %vm977, %v1116, 0.0
  %v1185 = vadd.f32 %v1183, %v1184
  %v1186 = vsel %vm977, %v1117, 0.0
  %v1187 = vadd.f32 %v1185, %v1186
  %v1188 = vsel %vm977, %v1118, 0.0
  %v1189 = vadd.f32 %v1187, %v1188
  %v1190 = vsel %vm977, %v1119, 0.0
  %v1191 = vadd.f32 %v1189, %v1190
  %v1192 = vsel %vm977, %v1120, 0.0
  %v1193 = vadd.f32 %v1191, %v1192
  %v1194 = vsel %vm977, %v1121, 0.0
  %v1195 = vadd.f32 %v1193, %v1194
  %v1196 = vsel %vm977, %v1122, 0.0
  %v1197 = vadd.f32 %v1195, %v1196
  %v1198 = vsel %vm977, %v1123, 0.0
  %v1199 = vadd.f32 %v1197, %v1198
  %v1200 = vsel %vm977, %v1124, 0.0
  %v1201 = vadd.f32 %v1199, %v1200
  %v1202 = vsel %vm977, %v1125, 0.0
  %v1203 = vadd.f32 %v1201, %v1202
  %v1204 = vsel %vm977, %v1126, 0.0
  %v1205 = vadd.f32 %v1203, %v1204
  %v1206 = vsel %vm977, %v1127, 0.0
  %v1207 = vadd.f32 %v1205, %v1206
  %v1208 = vsel %vm977, %v1128, 0.0
  %v1209 = vadd.f32 %v1207, %v1208
  %v1210 = vsel %vm977, %v1129, 0.0
  %v1211 = vadd.f32 %v1209, %v1210
  %v1212 = vsel %vm977, %v1130, 0.0
  %v1213 = vadd.f32 %v1211, %v1212
  %v1214 = vsel %vm977, %v1131, 0.0
  %v1215 = vadd.f32 %v1213, %v1214
  %v1216 = vsel %vm977, %v1132, 0.0
  %v1217 = vadd.f32 %v1215, %v1216
  %v1218 = vsel %vm977, %v1133, 0.0
  %v1219 = vadd.f32 %v1217, %v1218
  %v1220 = vsel %vm977, %v1134, 0.0
  %v1221 = vadd.f32 %v1219, %v1220
  %v1222 = vsel %vm977, %v1135, 0.0
  %v1223 = vadd.f32 %v1221, %v1222
  %v1224 = vsel %vm977, %v1136, 0.0
  %v1225 = vadd.f32 %v1223, %v1224
  %v1226 = vsel %vm977, %v1137, 0.0
  %v1227 = vadd.f32 %v1225, %v1226
  %v1228 = vsel %vm977, %v1138, 0.0
  %v1229 = vadd.f32 %v1227, %v1228
  %v1230 = vsel %vm977, %v1139, 0.0
  %v1231 = vadd.f32 %v1229, %v1230
  %v1232 = vsel %vm977, %v1140, 0.0
  %v1233 = vadd.f32 %v1231, %v1232
  %v1234 = vsel %vm977, %v1141, 0.0
  %v1235 = vadd.f32 %v1233, %v1234
  %v1236 = vsel %vm977, %v1142, 0.0
  %v1237 = vadd.f32 %v1235, %v1236
  %v1238 = vsel %vm977, %v1143, 0.0
  %v1239 = vadd.f32 %v1237, %v1238
  %v1240 = vsel %vm977, %v1144, 0.0
  %v1241 = vadd.f32 %v1239, %v1240
  %v1242 = vsel %vm977, %v1145, 0.0
  %v1243 = vadd.f32 %v1241, %v1242
  %v1244 = vsel %vm977, %v1146, 0.0
  %v1245 = vadd.f32 %v1243, %v1244
  %v1246 = vsel %vm977, %v1147, 0.0
  %v1247 = vadd.f32 %v1245, %v1246
  %v1248 = vsel %vm977, %v1148, 0.0
  %v1249 = vadd.f32 %v1247, %v1248
  %v1250 = vsel %vm977, %v1149, 0.0
  %v1251 = vadd.f32 %v1249, %v1250
  %v1252 = vsel %vm977, %v1150, 0.0
  %v1253 = vadd.f32 %v1251, %v1252
  %v1254 = vsel %vm977, %v1151, 0.0
  %v1255 = vadd.f32 %v1253, %v1254
  %v1256 = vsel %vm977, %v1152, 0.0
  %v1257 = vadd.f32 %v1255, %v1256
  %v1258 = vsel %vm977, %v1153, 0.0
  %v1259 = vadd.f32 %v1257, %v1258
  %v1260 = vsel %vm977, %v1154, 0.0
  %v1261 = vadd.f32 %v1259, %v1260
  %v1262 = vsel %vm977, %v1155, 0.0
  %v1263 = vadd.f32 %v1261, %v1262
  %v1264 = vsel %vm977, %v1156, 0.0
  %v1265 = vadd.f32 %v1263, %v1264
  %v1266 = vsel %vm977, %v1157, 0.0
  %v1267 = vadd.f32 %v1265, %v1266
  %v1268 = vsel %vm977, %v1158, 0.0
  %v1269 = vadd.f32 %v1267, %v1268
  %v1270 = vsel %vm977, %v1159, 0.0
  %v1271 = vadd.f32 %v1269, %v1270
  %v1272 = vsel %vm977, %v1160, 0.0
  %v1273 = vadd.f32 %v1271, %v1272
  %v1274 = vsel %vm977, %v1161, 0.0
  %v1275 = vadd.f32 %v1273, %v1274
  %v1276 = vsel %vm977, %v1162, 0.0
  %v1277 = vadd.f32 %v1275, %v1276
  %v1278 = vsel %vm977, %v1163, 0.0
  %v1279 = vadd.f32 %v1277, %v1278
  %v1280 = vsel %vm977, %v1164, 0.0
  %v1281 = vadd.f32 %v1279, %v1280
  %v1282 = vsel %vm977, %v1165, 0.0
  %v1283 = vadd.f32 %v1281, %v1282
  %v1284 = vsel %vm977, %v1166, 0.0
  %v1285 = vadd.f32 %v1283, %v1284
  %v1286 = vsel %vm977, %v1167, 0.0
  %v1287 = vadd.f32 %v1285, %v1286
  %v1288 = vsel %vm977, %v1168, 0.0
  %v1289 = vadd.f32 %v1287, %v1288
  %v1290 = vsel %vm977, %v1169, 0.0
  %v1291 = vadd.f32 %v1289, %v1290
  %v1292 = vsel %vm977, %v1170, 0.0
  %v1293 = vadd.f32 %v1291, %v1292
  %v1294 = vsel %vm977, %v1171, 0.0
  %v1295 = vadd.f32 %v1293, %v1294
  %v1296 = vsel %vm977, %v1172, 0.0
  %v1297 = vadd.f32 %v1295, %v1296
  %v1298 = vsel %vm977, %v1173, 0.0
  %v1299 = vadd.f32 %v1297, %v1298
  %v1300 = vsel %vm977, %v1174, 0.0
  %v1301 = vadd.f32 %v1299, %v1300
  %v1302 = vrot.slane %v1301, 4
  %v1303 = vadd.f32 %v1301, %v1302
  %v1304 = vrot.slane %v1303, 2
  %v1305 = vadd.f32 %v1303, %v1304
  %v1306 = vrot.slane %v1305, 1
  %v1307 = vadd.f32 %v1305, %v1306
  %vm1308 = vcmask 1040384
  %v1309 = vsel %vm1308, %v1110, %v1307
  %vm1310 = vcmask 123904
  %1311 = vst.msk [vmem:[%s3] sm:$0x3] %vm1310, %v1309
  // Predicated region
  $region10: #{bottleneck_forward.4} parent=0 // pred_check
    _
  $region11: #{bottleneck_forward.4} parent=0 // pred_check_branch
    %1313 = sbr.rel (0) target = $region13
  $region12: #{bottleneck_forward.4} parent=0 // pred_region
    _
  $region13: #{bottleneck_forward.4} parent=0 // pred_fallthru
    _
  // Predicated region
  $region14: #{bottleneck_forward.4} parent=0 // pred_check
    _
  $region15: #{bottleneck_forward.4} parent=0 // pred_check_branch
    %1315 = sbr.rel (0) target = $region17
  $region16: #{bottleneck_forward.4} parent=0 // pred_region
    _
  $region17: #{bottleneck_forward.4} parent=0 // pred_fallthru
    _
  // Predicated region
  $region18: #{bottleneck_forward.4} parent=0 // pred_check
    _
  $region19: #{bottleneck_forward.4} parent=0 // pred_check_branch
    %1317 = sbr.rel (0) target = $region21
  $region20: #{bottleneck_forward.4} parent=0 // pred_region
    _
  $region21: #{bottleneck_forward.4} parent=0 // pred_fallthru
    _
  // Predicated region
  $region22: #{bottleneck_forward.4} parent=0 // pred_check
    _
  $region23: #{bottleneck_forward.4} parent=0 // pred_check_branch
    %1319 = sbr.rel (0) target = $region25
  $region24: #{bottleneck_forward.4} parent=0 // pred_region
    _
  $region25: #{bottleneck_forward.4} parent=0 // pred_fallthru
    _

// kernel: bottleneck_forward.6
$region0: #{bottleneck_forward.6}
  #allocation0 [shape = 'u32[]', space=smem, size = 0x4, offset = 0x4, fixed_abs, tag = 'smem constant byte address 0x4 - core index']
  #allocation1 [shape = 'u32[144,128]{1,0:T(1,128)}', space=vmem, size = 0x12000, scoped, tag = 'internal scratch']
  %s0 = inlined_call_operand.vmem [shape: bf16[512,16], index: 0, kind: input, shape index: {}]
  %s1 = inlined_call_operand.vmem [shape: bf16[16,64], index: 1, kind: input, shape index: {}]
  %s2 = inlined_call_operand.vmem [shape: f32[1,16], index: 2, kind: input, shape index: {}]
  %s3 = inlined_call_operand.vmem [shape: f32[1,16], index: 3, kind: input, shape index: {}]
  %s4 = inlined_call_operand.vmem [shape: bf16[512,64], index: 4, kind: output, shape index: {0}]
  %s5 = inlined_call_operand.vmem [shape: f32[1,2,64], index: 5, kind: output, shape index: {1}]
  %6 = xla_tuple %s4, %s5
  %s7 = sld [smem:[#allocation0]]
  $region34: #{bottleneck_forward.6} parent=0
    _
  %s9 = ssub.s32 1, %s7
  %s10 = scalar_select 0, %s9, %s7
  // Predicated region
  $region2: #{bottleneck_forward.6} parent=0 // pred_check
    _
  $region3: #{bottleneck_forward.6} parent=0 // pred_check_branch
    %12 = sbr.rel (0) target = $region5
  $region4: #{bottleneck_forward.6} parent=0 // pred_region
    _
  $region5: #{bottleneck_forward.6} parent=0 // pred_fallthru
    _
  // Predicated region
  $region6: #{bottleneck_forward.6} parent=0 // pred_check
    _
  $region7: #{bottleneck_forward.6} parent=0 // pred_check_branch
    %14 = sbr.rel (0) target = $region9
  $region8: #{bottleneck_forward.6} parent=0 // pred_region
    _
  $region9: #{bottleneck_forward.6} parent=0 // pred_fallthru
    _
  // Predicated region
  $region10: #{bottleneck_forward.6} parent=0 // pred_check
    _
  $region11: #{bottleneck_forward.6} parent=0 // pred_check_branch
    %16 = sbr.rel (0) target = $region13
  $region12: #{bottleneck_forward.6} parent=0 // pred_region
    _
  $region13: #{bottleneck_forward.6} parent=0 // pred_fallthru
    _
  // Predicated region
  $region14: #{bottleneck_forward.6} parent=0 // pred_check
    _
  $region15: #{bottleneck_forward.6} parent=0 // pred_check_branch
    %18 = sbr.rel (0) target = $region17
  $region16: #{bottleneck_forward.6} parent=0 // pred_region
    _
  $region17: #{bottleneck_forward.6} parent=0 // pred_fallthru
    _
  %v20 = vld [vmem:[%s0] sm:$0xf]
  %v21 = vld [vmem:[%s0 + $0x4] sm:$0xf]
  %v22 = vld [vmem:[%s0 + $0x8] sm:$0xf]
  %v23 = vld [vmem:[%s0 + $0xc] sm:$0xf]
  %v24 = vld [vmem:[%s0 + $0x10] sm:$0xf]
  %v25 = vld [vmem:[%s0 + $0x14] sm:$0xf]
  %v26 = vld [vmem:[%s0 + $0x18] sm:$0xf]
  %v27 = vld [vmem:[%s0 + $0x1c] sm:$0xf]
  %v28 = vld [vmem:[%s0 + $0x20] sm:$0xf]
  %v29 = vld [vmem:[%s0 + $0x24] sm:$0xf]
  %v30 = vld [vmem:[%s0 + $0x28] sm:$0xf]
  %v31 = vld [vmem:[%s0 + $0x2c] sm:$0xf]
  %v32 = vld [vmem:[%s0 + $0x30] sm:$0xf]
  %v33 = vld [vmem:[%s0 + $0x34] sm:$0xf]
  %v34 = vld [vmem:[%s0 + $0x38] sm:$0xf]
  %v35 = vld [vmem:[%s0 + $0x3c] sm:$0xf]
  %v36 = vld [vmem:[%s0 + $0x40] sm:$0xf]
  %v37 = vld [vmem:[%s0 + $0x44] sm:$0xf]
  %v38 = vld [vmem:[%s0 + $0x48] sm:$0xf]
  %v39 = vld [vmem:[%s0 + $0x4c] sm:$0xf]
  %v40 = vld [vmem:[%s0 + $0x50] sm:$0xf]
  %v41 = vld [vmem:[%s0 + $0x54] sm:$0xf]
  %v42 = vld [vmem:[%s0 + $0x58] sm:$0xf]
  %v43 = vld [vmem:[%s0 + $0x5c] sm:$0xf]
  %v44 = vld [vmem:[%s0 + $0x60] sm:$0xf]
  %v45 = vld [vmem:[%s0 + $0x64] sm:$0xf]
  %v46 = vld [vmem:[%s0 + $0x68] sm:$0xf]
  %v47 = vld [vmem:[%s0 + $0x6c] sm:$0xf]
  %v48 = vld [vmem:[%s0 + $0x70] sm:$0xf]
  %v49 = vld [vmem:[%s0 + $0x74] sm:$0xf]
  %v50 = vld [vmem:[%s0 + $0x78] sm:$0xf]
  %v51 = vld [vmem:[%s0 + $0x7c] sm:$0xf]
  %v52 = vld [vmem:[%s0 + $0x80] sm:$0xf]
  %v53 = vld [vmem:[%s0 + $0x84] sm:$0xf]
  %v54 = vld [vmem:[%s0 + $0x88] sm:$0xf]
  %v55 = vld [vmem:[%s0 + $0x8c] sm:$0xf]
  %v56 = vld [vmem:[%s0 + $0x90] sm:$0xf]
  %v57 = vld [vmem:[%s0 + $0x94] sm:$0xf]
  %v58 = vld [vmem:[%s0 + $0x98] sm:$0xf]
  %v59 = vld [vmem:[%s0 + $0x9c] sm:$0xf]
  %v60 = vld [vmem:[%s0 + $0xa0] sm:$0xf]
  %v61 = vld [vmem:[%s0 + $0xa4] sm:$0xf]
  %v62 = vld [vmem:[%s0 + $0xa8] sm:$0xf]
  %v63 = vld [vmem:[%s0 + $0xac] sm:$0xf]
  %v64 = vld [vmem:[%s0 + $0xb0] sm:$0xf]
  %v65 = vld [vmem:[%s0 + $0xb4] sm:$0xf]
  %v66 = vld [vmem:[%s0 + $0xb8] sm:$0xf]
  %v67 = vld [vmem:[%s0 + $0xbc] sm:$0xf]
  %v68 = vld [vmem:[%s0 + $0xc0] sm:$0xf]
  %v69 = vld [vmem:[%s0 + $0xc4] sm:$0xf]
  %v70 = vld [vmem:[%s0 + $0xc8] sm:$0xf]
  %v71 = vld [vmem:[%s0 + $0xcc] sm:$0xf]
  %v72 = vld [vmem:[%s0 + $0xd0] sm:$0xf]
  %v73 = vld [vmem:[%s0 + $0xd4] sm:$0xf]
  %v74 = vld [vmem:[%s0 + $0xd8] sm:$0xf]
  %v75 = vld [vmem:[%s0 + $0xdc] sm:$0xf]
  %v76 = vld [vmem:[%s0 + $0xe0] sm:$0xf]
  %v77 = vld [vmem:[%s0 + $0xe4] sm:$0xf]
  %v78 = vld [vmem:[%s0 + $0xe8] sm:$0xf]
  %v79 = vld [vmem:[%s0 + $0xec] sm:$0xf]
  %v80 = vld [vmem:[%s0 + $0xf0] sm:$0xf]
  %v81 = vld [vmem:[%s0 + $0xf4] sm:$0xf]
  %v82 = vld [vmem:[%s0 + $0xf8] sm:$0xf]
  %v83 = vld [vmem:[%s0 + $0xfc] sm:$0xf]
  %v84 = vunpack.c.l.bf16 %v20
  %v85 = vunpack.c.l.bf16 %v21
  %v86 = vunpack.c.l.bf16 %v22
  %v87 = vunpack.c.l.bf16 %v23
  %v88 = vunpack.c.l.bf16 %v24
  %v89 = vunpack.c.l.bf16 %v25
  %v90 = vunpack.c.l.bf16 %v26
  %v91 = vunpack.c.l.bf16 %v27
  %v92 = vunpack.c.l.bf16 %v28
  %v93 = vunpack.c.l.bf16 %v29
  %v94 = vunpack.c.l.bf16 %v30
  %v95 = vunpack.c.l.bf16 %v31
  %v96 = vunpack.c.l.bf16 %v32
  %v97 = vunpack.c.l.bf16 %v33
  %v98 = vunpack.c.l.bf16 %v34
  %v99 = vunpack.c.l.bf16 %v35
  %v100 = vunpack.c.l.bf16 %v36
  %v101 = vunpack.c.l.bf16 %v37
  %v102 = vunpack.c.l.bf16 %v38
  %v103 = vunpack.c.l.bf16 %v39
  %v104 = vunpack.c.l.bf16 %v40
  %v105 = vunpack.c.l.bf16 %v41
  %v106 = vunpack.c.l.bf16 %v42
  %v107 = vunpack.c.l.bf16 %v43
  %v108 = vunpack.c.l.bf16 %v44
  %v109 = vunpack.c.l.bf16 %v45
  %v110 = vunpack.c.l.bf16 %v46
  %v111 = vunpack.c.l.bf16 %v47
  %v112 = vunpack.c.l.bf16 %v48
  %v113 = vunpack.c.l.bf16 %v49
  %v114 = vunpack.c.l.bf16 %v50
  %v115 = vunpack.c.l.bf16 %v51
  %v116 = vunpack.c.l.bf16 %v52
  %v117 = vunpack.c.l.bf16 %v53
  %v118 = vunpack.c.l.bf16 %v54
  %v119 = vunpack.c.l.bf16 %v55
  %v120 = vunpack.c.l.bf16 %v56
  %v121 = vunpack.c.l.bf16 %v57
  %v122 = vunpack.c.l.bf16 %v58
  %v123 = vunpack.c.l.bf16 %v59
  %v124 = vunpack.c.l.bf16 %v60
  %v125 = vunpack.c.l.bf16 %v61
  %v126 = vunpack.c.l.bf16 %v62
  %v127 = vunpack.c.l.bf16 %v63
  %v128 = vunpack.c.l.bf16 %v64
  %v129 = vunpack.c.l.bf16 %v65
  %v130 = vunpack.c.l.bf16 %v66
  %v131 = vunpack.c.l.bf16 %v67
  %v132 = vunpack.c.l.bf16 %v68
  %v133 = vunpack.c.l.bf16 %v69
  %v134 = vunpack.c.l.bf16 %v70
  %v135 = vunpack.c.l.bf16 %v71
  %v136 = vunpack.c.l.bf16 %v72
  %v137 = vunpack.c.l.bf16 %v73
  %v138 = vunpack.c.l.bf16 %v74
  %v139 = vunpack.c.l.bf16 %v75
  %v140 = vunpack.c.l.bf16 %v76
  %v141 = vunpack.c.l.bf16 %v77
  %v142 = vunpack.c.l.bf16 %v78
  %v143 = vunpack.c.l.bf16 %v79
  %v144 = vunpack.c.l.bf16 %v80
  %v145 = vunpack.c.l.bf16 %v81
  %v146 = vunpack.c.l.bf16 %v82
  %v147 = vunpack.c.l.bf16 %v83
  %v148 = vld [vmem:[%s2] sm:$0x1]
  %v150 = vlaneseq
  %v151 = vshrl.u32 %v150, 7
  %v152 = vsub.s32 0, %v151
  %v153 = vrot.slane %v148, %v152
  %v155 = vmul.f32 %v84, %v153
  %v156 = vmul.f32 %v85, %v153
  %v157 = vmul.f32 %v86, %v153
  %v158 = vmul.f32 %v87, %v153
  %v159 = vmul.f32 %v88, %v153
  %v160 = vmul.f32 %v89, %v153
  %v161 = vmul.f32 %v90, %v153
  %v162 = vmul.f32 %v91, %v153
  %v163 = vmul.f32 %v92, %v153
  %v164 = vmul.f32 %v93, %v153
  %v165 = vmul.f32 %v94, %v153
  %v166 = vmul.f32 %v95, %v153
  %v167 = vmul.f32 %v96, %v153
  %v168 = vmul.f32 %v97, %v153
  %v169 = vmul.f32 %v98, %v153
  %v170 = vmul.f32 %v99, %v153
  %v171 = vmul.f32 %v100, %v153
  %v172 = vmul.f32 %v101, %v153
  %v173 = vmul.f32 %v102, %v153
  %v174 = vmul.f32 %v103, %v153
  %v175 = vmul.f32 %v104, %v153
  %v176 = vmul.f32 %v105, %v153
  %v177 = vmul.f32 %v106, %v153
  %v178 = vmul.f32 %v107, %v153
  %v179 = vmul.f32 %v108, %v153
  %v180 = vmul.f32 %v109, %v153
  %v181 = vmul.f32 %v110, %v153
  %v182 = vmul.f32 %v111, %v153
  %v183 = vmul.f32 %v112, %v153
  %v184 = vmul.f32 %v113, %v153
  %v185 = vmul.f32 %v114, %v153
  %v186 = vmul.f32 %v115, %v153
  %v187 = vmul.f32 %v116, %v153
  %v188 = vmul.f32 %v117, %v153
  %v189 = vmul.f32 %v118, %v153
  %v190 = vmul.f32 %v119, %v153
  %v191 = vmul.f32 %v120, %v153
  %v192 = vmul.f32 %v121, %v153
  %v193 = vmul.f32 %v122, %v153
  %v194 = vmul.f32 %v123, %v153
  %v195 = vmul.f32 %v124, %v153
  %v196 = vmul.f32 %v125, %v153
  %v197 = vmul.f32 %v126, %v153
  %v198 = vmul.f32 %v127, %v153
  %v199 = vmul.f32 %v128, %v153
  %v200 = vmul.f32 %v129, %v153
  %v201 = vmul.f32 %v130, %v153
  %v202 = vmul.f32 %v131, %v153
  %v203 = vmul.f32 %v132, %v153
  %v204 = vmul.f32 %v133, %v153
  %v205 = vmul.f32 %v134, %v153
  %v206 = vmul.f32 %v135, %v153
  %v207 = vmul.f32 %v136, %v153
  %v208 = vmul.f32 %v137, %v153
  %v209 = vmul.f32 %v138, %v153
  %v210 = vmul.f32 %v139, %v153
  %v211 = vmul.f32 %v140, %v153
  %v212 = vmul.f32 %v141, %v153
  %v213 = vmul.f32 %v142, %v153
  %v214 = vmul.f32 %v143, %v153
  %v215 = vmul.f32 %v144, %v153
  %v216 = vmul.f32 %v145, %v153
  %v217 = vmul.f32 %v146, %v153
  %v218 = vmul.f32 %v147, %v153
  %v219 = vld [vmem:[%s3] sm:$0x1]
  %v221 = vlaneseq
  %v222 = vshrl.u32 %v221, 7
  %v223 = vsub.s32 0, %v222
  %v224 = vrot.slane %v219, %v223
  %v226 = vadd.f32 %v155, %v224
  %v227 = vadd.f32 %v156, %v224
  %v228 = vadd.f32 %v157, %v224
  %v229 = vadd.f32 %v158, %v224
  %v230 = vadd.f32 %v159, %v224
  %v231 = vadd.f32 %v160, %v224
  %v232 = vadd.f32 %v161, %v224
  %v233 = vadd.f32 %v162, %v224
  %v234 = vadd.f32 %v163, %v224
  %v235 = vadd.f32 %v164, %v224
  %v236 = vadd.f32 %v165, %v224
  %v237 = vadd.f32 %v166, %v224
  %v238 = vadd.f32 %v167, %v224
  %v239 = vadd.f32 %v168, %v224
  %v240 = vadd.f32 %v169, %v224
  %v241 = vadd.f32 %v170, %v224
  %v242 = vadd.f32 %v171, %v224
  %v243 = vadd.f32 %v172, %v224
  %v244 = vadd.f32 %v173, %v224
  %v245 = vadd.f32 %v174, %v224
  %v246 = vadd.f32 %v175, %v224
  %v247 = vadd.f32 %v176, %v224
  %v248 = vadd.f32 %v177, %v224
  %v249 = vadd.f32 %v178, %v224
  %v250 = vadd.f32 %v179, %v224
  %v251 = vadd.f32 %v180, %v224
  %v252 = vadd.f32 %v181, %v224
  %v253 = vadd.f32 %v182, %v224
  %v254 = vadd.f32 %v183, %v224
  %v255 = vadd.f32 %v184, %v224
  %v256 = vadd.f32 %v185, %v224
  %v257 = vadd.f32 %v186, %v224
  %v258 = vadd.f32 %v187, %v224
  %v259 = vadd.f32 %v188, %v224
  %v260 = vadd.f32 %v189, %v224
  %v261 = vadd.f32 %v190, %v224
  %v262 = vadd.f32 %v191, %v224
  %v263 = vadd.f32 %v192, %v224
  %v264 = vadd.f32 %v193, %v224
  %v265 = vadd.f32 %v194, %v224
  %v266 = vadd.f32 %v195, %v224
  %v267 = vadd.f32 %v196, %v224
  %v268 = vadd.f32 %v197, %v224
  %v269 = vadd.f32 %v198, %v224
  %v270 = vadd.f32 %v199, %v224
  %v271 = vadd.f32 %v200, %v224
  %v272 = vadd.f32 %v201, %v224
  %v273 = vadd.f32 %v202, %v224
  %v274 = vadd.f32 %v203, %v224
  %v275 = vadd.f32 %v204, %v224
  %v276 = vadd.f32 %v205, %v224
  %v277 = vadd.f32 %v206, %v224
  %v278 = vadd.f32 %v207, %v224
  %v279 = vadd.f32 %v208, %v224
  %v280 = vadd.f32 %v209, %v224
  %v281 = vadd.f32 %v210, %v224
  %v282 = vadd.f32 %v211, %v224
  %v283 = vadd.f32 %v212, %v224
  %v284 = vadd.f32 %v213, %v224
  %v285 = vadd.f32 %v214, %v224
  %v286 = vadd.f32 %v215, %v224
  %v287 = vadd.f32 %v216, %v224
  %v288 = vadd.f32 %v217, %v224
  %v289 = vadd.f32 %v218, %v224
  %vm290 = vcmp.ge.f32.partialorder %v226, 0.0
  %vm291 = vcmp.ge.f32.partialorder %v227, 0.0
  %vm292 = vcmp.ge.f32.partialorder %v228, 0.0
  %vm293 = vcmp.ge.f32.partialorder %v229, 0.0
  %vm294 = vcmp.ge.f32.partialorder %v230, 0.0
  %vm295 = vcmp.ge.f32.partialorder %v231, 0.0
  %vm296 = vcmp.ge.f32.partialorder %v232, 0.0
  %vm297 = vcmp.ge.f32.partialorder %v233, 0.0
  %vm298 = vcmp.ge.f32.partialorder %v234, 0.0
  %vm299 = vcmp.ge.f32.partialorder %v235, 0.0
  %vm300 = vcmp.ge.f32.partialorder %v236, 0.0
  %vm301 = vcmp.ge.f32.partialorder %v237, 0.0
  %vm302 = vcmp.ge.f32.partialorder %v238, 0.0
  %vm303 = vcmp.ge.f32.partialorder %v239, 0.0
  %vm304 = vcmp.ge.f32.partialorder %v240, 0.0
  %vm305 = vcmp.ge.f32.partialorder %v241, 0.0
  %vm306 = vcmp.ge.f32.partialorder %v242, 0.0
  %vm307 = vcmp.ge.f32.partialorder %v243, 0.0
  %vm308 = vcmp.ge.f32.partialorder %v244, 0.0
  %vm309 = vcmp.ge.f32.partialorder %v245, 0.0
  %vm310 = vcmp.ge.f32.partialorder %v246, 0.0
  %vm311 = vcmp.ge.f32.partialorder %v247, 0.0
  %vm312 = vcmp.ge.f32.partialorder %v248, 0.0
  %vm313 = vcmp.ge.f32.partialorder %v249, 0.0
  %vm314 = vcmp.ge.f32.partialorder %v250, 0.0
  %vm315 = vcmp.ge.f32.partialorder %v251, 0.0
  %vm316 = vcmp.ge.f32.partialorder %v252, 0.0
  %vm317 = vcmp.ge.f32.partialorder %v253, 0.0
  %vm318 = vcmp.ge.f32.partialorder %v254, 0.0
  %vm319 = vcmp.ge.f32.partialorder %v255, 0.0
  %vm320 = vcmp.ge.f32.partialorder %v256, 0.0
  %vm321 = vcmp.ge.f32.partialorder %v257, 0.0
  %vm322 = vcmp.ge.f32.partialorder %v258, 0.0
  %vm323 = vcmp.ge.f32.partialorder %v259, 0.0
  %vm324 = vcmp.ge.f32.partialorder %v260, 0.0
  %vm325 = vcmp.ge.f32.partialorder %v261, 0.0
  %vm326 = vcmp.ge.f32.partialorder %v262, 0.0
  %vm327 = vcmp.ge.f32.partialorder %v263, 0.0
  %vm328 = vcmp.ge.f32.partialorder %v264, 0.0
  %vm329 = vcmp.ge.f32.partialorder %v265, 0.0
  %vm330 = vcmp.ge.f32.partialorder %v266, 0.0
  %vm331 = vcmp.ge.f32.partialorder %v267, 0.0
  %vm332 = vcmp.ge.f32.partialorder %v268, 0.0
  %vm333 = vcmp.ge.f32.partialorder %v269, 0.0
  %vm334 = vcmp.ge.f32.partialorder %v270, 0.0
  %vm335 = vcmp.ge.f32.partialorder %v271, 0.0
  %vm336 = vcmp.ge.f32.partialorder %v272, 0.0
  %vm337 = vcmp.ge.f32.partialorder %v273, 0.0
  %vm338 = vcmp.ge.f32.partialorder %v274, 0.0
  %vm339 = vcmp.ge.f32.partialorder %v275, 0.0
  %vm340 = vcmp.ge.f32.partialorder %v276, 0.0
  %vm341 = vcmp.ge.f32.partialorder %v277, 0.0
  %vm342 = vcmp.ge.f32.partialorder %v278, 0.0
  %vm343 = vcmp.ge.f32.partialorder %v279, 0.0
  %vm344 = vcmp.ge.f32.partialorder %v280, 0.0
  %vm345 = vcmp.ge.f32.partialorder %v281, 0.0
  %vm346 = vcmp.ge.f32.partialorder %v282, 0.0
  %vm347 = vcmp.ge.f32.partialorder %v283, 0.0
  %vm348 = vcmp.ge.f32.partialorder %v284, 0.0
  %vm349 = vcmp.ge.f32.partialorder %v285, 0.0
  %vm350 = vcmp.ge.f32.partialorder %v286, 0.0
  %vm351 = vcmp.ge.f32.partialorder %v287, 0.0
  %vm352 = vcmp.ge.f32.partialorder %v288, 0.0
  %vm353 = vcmp.ge.f32.partialorder %v289, 0.0
  %v354 = vmul.f32 %v226, 0.1
  %v355 = vmul.f32 %v227, 0.1
  %v356 = vmul.f32 %v228, 0.1
  %v357 = vmul.f32 %v229, 0.1
  %v358 = vmul.f32 %v230, 0.1
  %v359 = vmul.f32 %v231, 0.1
  %v360 = vmul.f32 %v232, 0.1
  %v361 = vmul.f32 %v233, 0.1
  %v362 = vmul.f32 %v234, 0.1
  %v363 = vmul.f32 %v235, 0.1
  %v364 = vmul.f32 %v236, 0.1
  %v365 = vmul.f32 %v237, 0.1
  %v366 = vmul.f32 %v238, 0.1
  %v367 = vmul.f32 %v239, 0.1
  %v368 = vmul.f32 %v240, 0.1
  %v369 = vmul.f32 %v241, 0.1
  %v370 = vmul.f32 %v242, 0.1
  %v371 = vmul.f32 %v243, 0.1
  %v372 = vmul.f32 %v244, 0.1
  %v373 = vmul.f32 %v245, 0.1
  %v374 = vmul.f32 %v246, 0.1
  %v375 = vmul.f32 %v247, 0.1
  %v376 = vmul.f32 %v248, 0.1
  %v377 = vmul.f32 %v249, 0.1
  %v378 = vmul.f32 %v250, 0.1
  %v379 = vmul.f32 %v251, 0.1
  %v380 = vmul.f32 %v252, 0.1
  %v381 = vmul.f32 %v253, 0.1
  %v382 = vmul.f32 %v254, 0.1
  %v383 = vmul.f32 %v255, 0.1
  %v384 = vmul.f32 %v256, 0.1
  %v385 = vmul.f32 %v257, 0.1
  %v386 = vmul.f32 %v258, 0.1
  %v387 = vmul.f32 %v259, 0.1
  %v388 = vmul.f32 %v260, 0.1
  %v389 = vmul.f32 %v261, 0.1
  %v390 = vmul.f32 %v262, 0.1
  %v391 = vmul.f32 %v263, 0.1
  %v392 = vmul.f32 %v264, 0.1
  %v393 = vmul.f32 %v265, 0.1
  %v394 = vmul.f32 %v266, 0.1
  %v395 = vmul.f32 %v267, 0.1
  %v396 = vmul.f32 %v268, 0.1
  %v397 = vmul.f32 %v269, 0.1
  %v398 = vmul.f32 %v270, 0.1
  %v399 = vmul.f32 %v271, 0.1
  %v400 = vmul.f32 %v272, 0.1
  %v401 = vmul.f32 %v273, 0.1
  %v402 = vmul.f32 %v274, 0.1
  %v403 = vmul.f32 %v275, 0.1
  %v404 = vmul.f32 %v276, 0.1
  %v405 = vmul.f32 %v277, 0.1
  %v406 = vmul.f32 %v278, 0.1
  %v407 = vmul.f32 %v279, 0.1
  %v408 = vmul.f32 %v280, 0.1
  %v409 = vmul.f32 %v281, 0.1
  %v410 = vmul.f32 %v282, 0.1
  %v411 = vmul.f32 %v283, 0.1
  %v412 = vmul.f32 %v284, 0.1
  %v413 = vmul.f32 %v285, 0.1
  %v414 = vmul.f32 %v286, 0.1
  %v415 = vmul.f32 %v287, 0.1
  %v416 = vmul.f32 %v288, 0.1
  %v417 = vmul.f32 %v289, 0.1
  %v418 = vsel %vm290, %v226, %v354
  %v419 = vsel %vm291, %v227, %v355
  %v420 = vsel %vm292, %v228, %v356
  %v421 = vsel %vm293, %v229, %v357
  %v422 = vsel %vm294, %v230, %v358
  %v423 = vsel %vm295, %v231, %v359
  %v424 = vsel %vm296, %v232, %v360
  %v425 = vsel %vm297, %v233, %v361
  %v426 = vsel %vm298, %v234, %v362
  %v427 = vsel %vm299, %v235, %v363
  %v428 = vsel %vm300, %v236, %v364
  %v429 = vsel %vm301, %v237, %v365
  %v430 = vsel %vm302, %v238, %v366
  %v431 = vsel %vm303, %v239, %v367
  %v432 = vsel %vm304, %v240, %v368
  %v433 = vsel %vm305, %v241, %v369
  %v434 = vsel %vm306, %v242, %v370
  %v435 = vsel %vm307, %v243, %v371
  %v436 = vsel %vm308, %v244, %v372
  %v437 = vsel %vm309, %v245, %v373
  %v438 = vsel %vm310, %v246, %v374
  %v439 = vsel %vm311, %v247, %v375
  %v440 = vsel %vm312, %v248, %v376
  %v441 = vsel %vm313, %v249, %v377
  %v442 = vsel %vm314, %v250, %v378
  %v443 = vsel %vm315, %v251, %v379
  %v444 = vsel %vm316, %v252, %v380
  %v445 = vsel %vm317, %v253, %v381
  %v446 = vsel %vm318, %v254, %v382
  %v447 = vsel %vm319, %v255, %v383
  %v448 = vsel %vm320, %v256, %v384
  %v449 = vsel %vm321, %v257, %v385
  %v450 = vsel %vm322, %v258, %v386
  %v451 = vsel %vm323, %v259, %v387
  %v452 = vsel %vm324, %v260, %v388
  %v453 = vsel %vm325, %v261, %v389
  %v454 = vsel %vm326, %v262, %v390
  %v455 = vsel %vm327, %v263, %v391
  %v456 = vsel %vm328, %v264, %v392
  %v457 = vsel %vm329, %v265, %v393
  %v458 = vsel %vm330, %v266, %v394
  %v459 = vsel %vm331, %v267, %v395
  %v460 = vsel %vm332, %v268, %v396
  %v461 = vsel %vm333, %v269, %v397
  %v462 = vsel %vm334, %v270, %v398
  %v463 = vsel %vm335, %v271, %v399
  %v464 = vsel %vm336, %v272, %v400
  %v465 = vsel %vm337, %v273, %v401
  %v466 = vsel %vm338, %v274, %v402
  %v467 = vsel %vm339, %v275, %v403
  %v468 = vsel %vm340, %v276, %v404
  %v469 = vsel %vm341, %v277, %v405
  %v470 = vsel %vm342, %v278, %v406
  %v471 = vsel %vm343, %v279, %v407
  %v472 = vsel %vm344, %v280, %v408
  %v473 = vsel %vm345, %v281, %v409
  %v474 = vsel %vm346, %v282, %v410
  %v475 = vsel %vm347, %v283, %v411
  %v476 = vsel %vm348, %v284, %v412
  %v477 = vsel %vm349, %v285, %v413
  %v478 = vsel %vm350, %v286, %v414
  %v479 = vsel %vm351, %v287, %v415
  %v480 = vsel %vm352, %v288, %v416
  %v481 = vsel %vm353, %v289, %v417
  %v482 = vpack.c.bf16 %v419, %v418
  %v483 = vpack.c.bf16 %v421, %v420
  %v484 = vpack.c.bf16 %v423, %v422
  %v485 = vpack.c.bf16 %v425, %v424
  %v486 = vpack.c.bf16 %v427, %v426
  %v487 = vpack.c.bf16 %v429, %v428
  %v488 = vpack.c.bf16 %v431, %v430
  %v489 = vpack.c.bf16 %v433, %v432
  %v490 = vpack.c.bf16 %v435, %v434
  %v491 = vpack.c.bf16 %v437, %v436
  %v492 = vpack.c.bf16 %v439, %v438
  %v493 = vpack.c.bf16 %v441, %v440
  %v494 = vpack.c.bf16 %v443, %v442
  %v495 = vpack.c.bf16 %v445, %v444
  %v496 = vpack.c.bf16 %v447, %v446
  %v497 = vpack.c.bf16 %v449, %v448
  %v498 = vpack.c.bf16 %v451, %v450
  %v499 = vpack.c.bf16 %v453, %v452
  %v500 = vpack.c.bf16 %v455, %v454
  %v501 = vpack.c.bf16 %v457, %v456
  %v502 = vpack.c.bf16 %v459, %v458
  %v503 = vpack.c.bf16 %v461, %v460
  %v504 = vpack.c.bf16 %v463, %v462
  %v505 = vpack.c.bf16 %v465, %v464
  %v506 = vpack.c.bf16 %v467, %v466
  %v507 = vpack.c.bf16 %v469, %v468
  %v508 = vpack.c.bf16 %v471, %v470
  %v509 = vpack.c.bf16 %v473, %v472
  %v510 = vpack.c.bf16 %v475, %v474
  %v511 = vpack.c.bf16 %v477, %v476
  %v512 = vpack.c.bf16 %v479, %v478
  %v513 = vpack.c.bf16 %v481, %v480
  %v514 = vld [vmem:[%s1] sm:$0xf]
  %v515 = vld [vmem:[%s1 + $0x4] sm:$0xf]
  %v518 = vunpack.c.l.b16 %v514
  %v519 = vunpack.c.l.b16 %v515
  %v520 = vpack.c.b16 %v519, %v518
  %vm522 = vcmask 130048
  %v524 = vsel %vm522, %v482, 0
  %v527 = vsel %vm522, %v483, 0
  %v530 = vsel %vm522, %v484, 0
  %v533 = vsel %vm522, %v485, 0
  %v536 = vsel %vm522, %v486, 0
  %v539 = vsel %vm522, %v487, 0
  %v542 = vsel %vm522, %v488, 0
  %v545 = vsel %vm522, %v489, 0
  %v548 = vsel %vm522, %v490, 0
  %v551 = vsel %vm522, %v491, 0
  %v554 = vsel %vm522, %v492, 0
  %v557 = vsel %vm522, %v493, 0
  %v560 = vsel %vm522, %v494, 0
  %v563 = vsel %vm522, %v495, 0
  %v566 = vsel %vm522, %v496, 0
  %v569 = vsel %vm522, %v497, 0
  %v572 = vsel %vm522, %v498, 0
  %v575 = vsel %vm522, %v499, 0
  %v578 = vsel %vm522, %v500, 0
  %v581 = vsel %vm522, %v501, 0
  %v584 = vsel %vm522, %v502, 0
  %v587 = vsel %vm522, %v503, 0
  %v590 = vsel %vm522, %v504, 0
  %v593 = vsel %vm522, %v505, 0
  %v596 = vsel %vm522, %v506, 0
  %v599 = vsel %vm522, %v507, 0
  %v602 = vsel %vm522, %v508, 0
  %v605 = vsel %vm522, %v509, 0
  %v608 = vsel %vm522, %v510, 0
  %v611 = vsel %vm522, %v511, 0
  %v614 = vsel %vm522, %v512, 0
  %v617 = vsel %vm522, %v513, 0
  %619 = vmatprep.subr.bf16.mxu0 0
  %620 = vmatpush1.bf16.msra.mxu0 %v520
  %621 = vmatprep.subr.bf16.mxu0 0
  %622 = vmatpush1.bf16.msra.mxu0 0
  %623 = vmatprep.subr.bf16.mxu0 0
  %624 = vmatpush1.bf16.msra.mxu0 0
  %625 = vmatprep.subr.bf16.mxu0 0
  %626 = vmatpush1.bf16.msra.mxu0 0
  %627 = vmatprep.subr.bf16.mxu0 0
  %628 = vmatpush1.bf16.msra.mxu0 0
  %629 = vmatprep.subr.bf16.mxu0 0
  %630 = vmatpush1.bf16.msra.mxu0 0
  %631 = vmatprep.subr.bf16.mxu0 0
  %632 = vmatpush1.bf16.msra.mxu0 0
  %633 = vmatprep.subr.bf16.mxu0 0
  %634 = vmatpush1.bf16.msra.mxu0 0
  %635 = vmatprep.subr.bf16.mxu0 0
  %636 = vmatpush1.bf16.msra.mxu0 0
  %637 = vmatprep.subr.bf16.mxu0 0
  %638 = vmatpush1.bf16.msra.mxu0 0
  %639 = vmatprep.subr.bf16.mxu0 0
  %640 = vmatpush1.bf16.msra.mxu0 0
  %641 = vmatprep.subr.bf16.mxu0 0
  %642 = vmatpush1.bf16.msra.mxu0 0
  %643 = vmatprep.subr.bf16.mxu0 0
  %644 = vmatpush1.bf16.msra.mxu0 0
  %645 = vmatprep.subr.bf16.mxu0 0
  %646 = vmatpush1.bf16.msra.mxu0 0
  %647 = vmatprep.subr.bf16.mxu0 0
  %648 = vmatpush1.bf16.msra.mxu0 0
  %649 = vmatprep.subr.bf16.mxu0 0
  %650 = vmatpush1.bf16.msra.mxu0 0
  %651 = vmatprep.mubr.bf16.mxu0 0
  %652 = vmatmul.mubr.bf16.gmra.mrb[0].mxu0 %v524
  %v653 = vpop.f32.mrb[0].mxu0
  %v654 = vadd.f32 0.0, %v653
  %v655 = vpop.f32.mrb[0].mxu0
  %v656 = vpop.f32.mrb[0].mxu0
  %v657 = vadd.f32 0.0, %v656
  %v658 = vpop.f32.mrb[0].mxu0
  %659 = vmatprep.mubr.bf16.mxu0 0
  %660 = vmatmul.mubr.bf16.gmra.mrb[0].mxu0 %v527
  %v661 = vpop.f32.mrb[0].mxu0
  %v662 = vadd.f32 0.0, %v661
  %v663 = vpop.f32.mrb[0].mxu0
  %v664 = vpop.f32.mrb[0].mxu0
  %v665 = vadd.f32 0.0, %v664
  %v666 = vpop.f32.mrb[0].mxu0
  %667 = vmatprep.mubr.bf16.mxu0 0
  %668 = vmatmul.mubr.bf16.gmra.mrb[0].mxu0 %v530
  %v669 = vpop.f32.mrb[0].mxu0
  %v670 = vadd.f32 0.0, %v669
  %v671 = vpop.f32.mrb[0].mxu0
  %v672 = vpop.f32.mrb[0].mxu0
  %v673 = vadd.f32 0.0, %v672
  %v674 = vpop.f32.mrb[0].mxu0
  %675 = vmatprep.mubr.bf16.mxu0 0
  %676 = vmatmul.mubr.bf16.gmra.mrb[0].mxu0 %v533
  %v677 = vpop.f32.mrb[0].mxu0
  %v678 = vadd.f32 0.0, %v677
  %v679 = vpop.f32.mrb[0].mxu0
  %v680 = vpop.f32.mrb[0].mxu0
  %v681 = vadd.f32 0.0, %v680
  %v682 = vpop.f32.mrb[0].mxu0
  %683 = vmatprep.mubr.bf16.mxu0 0
  %684 = vmatmul.mubr.bf16.gmra.mrb[0].mxu0 %v536
  %v685 = vpop.f32.mrb[0].mxu0
  %v686 = vadd.f32 0.0, %v685
  %v687 = vpop.f32.mrb[0].mxu0
  %v688 = vpop.f32.mrb[0].mxu0
  %v689 = vadd.f32 0.0, %v688
  %v690 = vpop.f32.mrb[0].mxu0
  %691 = vmatprep.mubr.bf16.mxu0 0
  %692 = vmatmul.mubr.bf16.gmra.mrb[0].mxu0 %v539
  %v693 = vpop.f32.mrb[0].mxu0
  %v694 = vadd.f32 0.0, %v693
  %v695 = vpop.f32.mrb[0].mxu0
  %v696 = vpop.f32.mrb[0].mxu0
  %v697 = vadd.f32 0.0, %v696
  %v698 = vpop.f32.mrb[0].mxu0
  %699 = vmatprep.mubr.bf16.mxu0 0
  %700 = vmatmul.mubr.bf16.gmra.mrb[0].mxu0 %v542
  %v701 = vpop.f32.mrb[0].mxu0
  %v702 = vadd.f32 0.0, %v701
  %v703 = vpop.f32.mrb[0].mxu0
  %v704 = vpop.f32.mrb[0].mxu0
  %v705 = vadd.f32 0.0, %v704
  %v706 = vpop.f32.mrb[0].mxu0
  %707 = vmatprep.mubr.bf16.mxu0 0
  %708 = vmatmul.mubr.bf16.gmra.mrb[0].mxu0 %v545
  %v709 = vpop.f32.mrb[0].mxu0
  %v710 = vadd.f32 0.0, %v709
  %v711 = vpop.f32.mrb[0].mxu0
  %v712 = vpop.f32.mrb[0].mxu0
  %v713 = vadd.f32 0.0, %v712
  %v714 = vpop.f32.mrb[0].mxu0
  %715 = vmatprep.mubr.bf16.mxu0 0
  %716 = vmatmul.mubr.bf16.gmra.mrb[0].mxu0 %v548
  %v717 = vpop.f32.mrb[0].mxu0
  %v718 = vadd.f32 0.0, %v717
  %v719 = vpop.f32.mrb[0].mxu0
  %v720 = vpop.f32.mrb[0].mxu0
  %v721 = vadd.f32 0.0, %v720
  %v722 = vpop.f32.mrb[0].mxu0
  %723 = vmatprep.mubr.bf16.mxu0 0
  %724 = vmatmul.mubr.bf16.gmra.mrb[0].mxu0 %v551
  %v725 = vpop.f32.mrb[0].mxu0
  %v726 = vadd.f32 0.0, %v725
  %v727 = vpop.f32.mrb[0].mxu0
  %v728 = vpop.f32.mrb[0].mxu0
  %v729 = vadd.f32 0.0, %v728
  %v730 = vpop.f32.mrb[0].mxu0
  %731 = vmatprep.mubr.bf16.mxu0 0
  %732 = vmatmul.mubr.bf16.gmra.mrb[0].mxu0 %v554
  %v733 = vpop.f32.mrb[0].mxu0
  %v734 = vadd.f32 0.0, %v733
  %v735 = vpop.f32.mrb[0].mxu0
  %v736 = vpop.f32.mrb[0].mxu0
  %v737 = vadd.f32 0.0, %v736
  %v738 = vpop.f32.mrb[0].mxu0
  %739 = vmatprep.mubr.bf16.mxu0 0
  %740 = vmatmul.mubr.bf16.gmra.mrb[0].mxu0 %v557
  %v741 = vpop.f32.mrb[0].mxu0
  %v742 = vadd.f32 0.0, %v741
  %v743 = vpop.f32.mrb[0].mxu0
  %v744 = vpop.f32.mrb[0].mxu0
  %v745 = vadd.f32 0.0, %v744
  %v746 = vpop.f32.mrb[0].mxu0
  %747 = vmatprep.mubr.bf16.mxu0 0
  %748 = vmatmul.mubr.bf16.gmra.mrb[0].mxu0 %v560
  %v749 = vpop.f32.mrb[0].mxu0
  %v750 = vadd.f32 0.0, %v749
  %v751 = vpop.f32.mrb[0].mxu0
  %v752 = vpop.f32.mrb[0].mxu0
  %v753 = vadd.f32 0.0, %v752
  %v754 = vpop.f32.mrb[0].mxu0
  %755 = vmatprep.mubr.bf16.mxu0 0
  %756 = vmatmul.mubr.bf16.gmra.mrb[0].mxu0 %v563
  %v757 = vpop.f32.mrb[0].mxu0
  %v758 = vadd.f32 0.0, %v757
  %v759 = vpop.f32.mrb[0].mxu0
  %v760 = vpop.f32.mrb[0].mxu0
  %v761 = vadd.f32 0.0, %v760
  %v762 = vpop.f32.mrb[0].mxu0
  %763 = vmatprep.mubr.bf16.mxu0 0
  %764 = vmatmul.mubr.bf16.gmra.mrb[0].mxu0 %v566
  %v765 = vpop.f32.mrb[0].mxu0
  %v766 = vadd.f32 0.0, %v765
  %v767 = vpop.f32.mrb[0].mxu0
  %v768 = vpop.f32.mrb[0].mxu0
  %v769 = vadd.f32 0.0, %v768
  %v770 = vpop.f32.mrb[0].mxu0
  %771 = vmatprep.mubr.bf16.mxu0 0
  %772 = vmatmul.mubr.bf16.gmra.mrb[0].mxu0 %v569
  %v773 = vpop.f32.mrb[0].mxu0
  %v774 = vadd.f32 0.0, %v773
  %v775 = vpop.f32.mrb[0].mxu0
  %v776 = vpop.f32.mrb[0].mxu0
  %v777 = vadd.f32 0.0, %v776
  %v778 = vpop.f32.mrb[0].mxu0
  %779 = vmatprep.mubr.bf16.mxu0 0
  %780 = vmatmul.mubr.bf16.gmra.mrb[0].mxu0 %v572
  %v781 = vpop.f32.mrb[0].mxu0
  %v782 = vadd.f32 0.0, %v781
  %v783 = vpop.f32.mrb[0].mxu0
  %v784 = vpop.f32.mrb[0].mxu0
  %v785 = vadd.f32 0.0, %v784
  %v786 = vpop.f32.mrb[0].mxu0
  %787 = vmatprep.mubr.bf16.mxu0 0
  %788 = vmatmul.mubr.bf16.gmra.mrb[0].mxu0 %v575
  %v789 = vpop.f32.mrb[0].mxu0
  %v790 = vadd.f32 0.0, %v789
  %v791 = vpop.f32.mrb[0].mxu0
  %v792 = vpop.f32.mrb[0].mxu0
  %v793 = vadd.f32 0.0, %v792
  %v794 = vpop.f32.mrb[0].mxu0
  %795 = vmatprep.mubr.bf16.mxu0 0
  %796 = vmatmul.mubr.bf16.gmra.mrb[0].mxu0 %v578
  %v797 = vpop.f32.mrb[0].mxu0
  %v798 = vadd.f32 0.0, %v797
  %v799 = vpop.f32.mrb[0].mxu0
  %v800 = vpop.f32.mrb[0].mxu0
  %v801 = vadd.f32 0.0, %v800
  %v802 = vpop.f32.mrb[0].mxu0
  %803 = vmatprep.mubr.bf16.mxu0 0
  %804 = vmatmul.mubr.bf16.gmra.mrb[0].mxu0 %v581
  %v805 = vpop.f32.mrb[0].mxu0
  %v806 = vadd.f32 0.0, %v805
  %v807 = vpop.f32.mrb[0].mxu0
  %v808 = vpop.f32.mrb[0].mxu0
  %v809 = vadd.f32 0.0, %v808
  %v810 = vpop.f32.mrb[0].mxu0
  %811 = vmatprep.mubr.bf16.mxu0 0
  %812 = vmatmul.mubr.bf16.gmra.mrb[0].mxu0 %v584
  %v813 = vpop.f32.mrb[0].mxu0
  %v814 = vadd.f32 0.0, %v813
  %v815 = vpop.f32.mrb[0].mxu0
  %v816 = vpop.f32.mrb[0].mxu0
  %v817 = vadd.f32 0.0, %v816
  %v818 = vpop.f32.mrb[0].mxu0
  %819 = vmatprep.mubr.bf16.mxu0 0
  %820 = vmatmul.mubr.bf16.gmra.mrb[0].mxu0 %v587
  %v821 = vpop.f32.mrb[0].mxu0
  %v822 = vadd.f32 0.0, %v821
  %v823 = vpop.f32.mrb[0].mxu0
  %v824 = vpop.f32.mrb[0].mxu0
  %v825 = vadd.f32 0.0, %v824
  %v826 = vpop.f32.mrb[0].mxu0
  %827 = vmatprep.mubr.bf16.mxu0 0
  %828 = vmatmul.mubr.bf16.gmra.mrb[0].mxu0 %v590
  %v829 = vpop.f32.mrb[0].mxu0
  %v830 = vadd.f32 0.0, %v829
  %v831 = vpop.f32.mrb[0].mxu0
  %v832 = vpop.f32.mrb[0].mxu0
  %v833 = vadd.f32 0.0, %v832
  %v834 = vpop.f32.mrb[0].mxu0
  %835 = vmatprep.mubr.bf16.mxu0 0
  %836 = vmatmul.mubr.bf16.gmra.mrb[0].mxu0 %v593
  %v837 = vpop.f32.mrb[0].mxu0
  %v838 = vadd.f32 0.0, %v837
  %v839 = vpop.f32.mrb[0].mxu0
  %v840 = vpop.f32.mrb[0].mxu0
  %v841 = vadd.f32 0.0, %v840
  %v842 = vpop.f32.mrb[0].mxu0
  %843 = vmatprep.mubr.bf16.mxu0 0
  %844 = vmatmul.mubr.bf16.gmra.mrb[0].mxu0 %v596
  %v845 = vpop.f32.mrb[0].mxu0
  %v846 = vadd.f32 0.0, %v845
  %v847 = vpop.f32.mrb[0].mxu0
  %v848 = vpop.f32.mrb[0].mxu0
  %v849 = vadd.f32 0.0, %v848
  %v850 = vpop.f32.mrb[0].mxu0
  %851 = vmatprep.mubr.bf16.mxu0 0
  %852 = vmatmul.mubr.bf16.gmra.mrb[0].mxu0 %v599
  %v853 = vpop.f32.mrb[0].mxu0
  %v854 = vadd.f32 0.0, %v853
  %v855 = vpop.f32.mrb[0].mxu0
  %v856 = vpop.f32.mrb[0].mxu0
  %v857 = vadd.f32 0.0, %v856
  %v858 = vpop.f32.mrb[0].mxu0
  %859 = vmatprep.mubr.bf16.mxu0 0
  %860 = vmatmul.mubr.bf16.gmra.mrb[0].mxu0 %v602
  %v861 = vpop.f32.mrb[0].mxu0
  %v862 = vadd.f32 0.0, %v861
  %v863 = vpop.f32.mrb[0].mxu0
  %v864 = vpop.f32.mrb[0].mxu0
  %v865 = vadd.f32 0.0, %v864
  %v866 = vpop.f32.mrb[0].mxu0
  %867 = vmatprep.mubr.bf16.mxu0 0
  %868 = vmatmul.mubr.bf16.gmra.mrb[0].mxu0 %v605
  %v869 = vpop.f32.mrb[0].mxu0
  %v870 = vadd.f32 0.0, %v869
  %v871 = vpop.f32.mrb[0].mxu0
  %v872 = vpop.f32.mrb[0].mxu0
  %v873 = vadd.f32 0.0, %v872
  %v874 = vpop.f32.mrb[0].mxu0
  %875 = vmatprep.mubr.bf16.mxu0 0
  %876 = vmatmul.mubr.bf16.gmra.mrb[0].mxu0 %v608
  %v877 = vpop.f32.mrb[0].mxu0
  %v878 = vadd.f32 0.0, %v877
  %v879 = vpop.f32.mrb[0].mxu0
  %v880 = vpop.f32.mrb[0].mxu0
  %v881 = vadd.f32 0.0, %v880
  %v882 = vpop.f32.mrb[0].mxu0
  %883 = vmatprep.mubr.bf16.mxu0 0
  %884 = vmatmul.mubr.bf16.gmra.mrb[0].mxu0 %v611
  %v885 = vpop.f32.mrb[0].mxu0
  %v886 = vadd.f32 0.0, %v885
  %v887 = vpop.f32.mrb[0].mxu0
  %v888 = vpop.f32.mrb[0].mxu0
  %v889 = vadd.f32 0.0, %v888
  %v890 = vpop.f32.mrb[0].mxu0
  %891 = vmatprep.mubr.bf16.mxu0 0
  %892 = vmatmul.mubr.bf16.gmra.mrb[0].mxu0 %v614
  %v893 = vpop.f32.mrb[0].mxu0
  %v894 = vadd.f32 0.0, %v893
  %v895 = vpop.f32.mrb[0].mxu0
  %v896 = vpop.f32.mrb[0].mxu0
  %v897 = vadd.f32 0.0, %v896
  %v898 = vpop.f32.mrb[0].mxu0
  %899 = vmatprep.mubr.bf16.mxu0 0
  %900 = vmatmul.mubr.bf16.gmra.mrb[0].mxu0 %v617
  %v901 = vpop.f32.mrb[0].mxu0
  %v902 = vadd.f32 0.0, %v901
  %v903 = vpop.f32.mrb[0].mxu0
  %v904 = vpop.f32.mrb[0].mxu0
  %v905 = vadd.f32 0.0, %v904
  %v906 = vpop.f32.mrb[0].mxu0
  %907 = vdwg.mxu0
  %v908 = vpack.c.bf16 %v657, %v654
  %v909 = vpack.c.bf16 %v665, %v662
  %v910 = vpack.c.bf16 %v673, %v670
  %v911 = vpack.c.bf16 %v681, %v678
  %v912 = vpack.c.bf16 %v689, %v686
  %v913 = vpack.c.bf16 %v697, %v694
  %v914 = vpack.c.bf16 %v705, %v702
  %v915 = vpack.c.bf16 %v713, %v710
  %v916 = vpack.c.bf16 %v721, %v718
  %v917 = vpack.c.bf16 %v729, %v726
  %v918 = vpack.c.bf16 %v737, %v734
  %v919 = vpack.c.bf16 %v745, %v742
  %v920 = vpack.c.bf16 %v753, %v750
  %v921 = vpack.c.bf16 %v761, %v758
  %v922 = vpack.c.bf16 %v769, %v766
  %v923 = vpack.c.bf16 %v777, %v774
  %v924 = vpack.c.bf16 %v785, %v782
  %v925 = vpack.c.bf16 %v793, %v790
  %v926 = vpack.c.bf16 %v801, %v798
  %v927 = vpack.c.bf16 %v809, %v806
  %v928 = vpack.c.bf16 %v817, %v814
  %v929 = vpack.c.bf16 %v825, %v822
  %v930 = vpack.c.bf16 %v833, %v830
  %v931 = vpack.c.bf16 %v841, %v838
  %v932 = vpack.c.bf16 %v849, %v846
  %v933 = vpack.c.bf16 %v857, %v854
  %v934 = vpack.c.bf16 %v865, %v862
  %v935 = vpack.c.bf16 %v873, %v870
  %v936 = vpack.c.bf16 %v881, %v878
  %v937 = vpack.c.bf16 %v889, %v886
  %v938 = vpack.c.bf16 %v897, %v894
  %v939 = vpack.c.bf16 %v905, %v902
  %v972 = vunpack.c.l.b16 %v908
  %v973 = vunpack.c.h.b16 %v908
  %v974 = vunpack.c.l.b16 %v909
  %v975 = vunpack.c.h.b16 %v909
  %v976 = vunpack.c.l.b16 %v910
  %v977 = vunpack.c.h.b16 %v910
  %v978 = vunpack.c.l.b16 %v911
  %v979 = vunpack.c.h.b16 %v911
  %v980 = vunpack.c.l.b16 %v912
  %v981 = vunpack.c.h.b16 %v912
  %v982 = vunpack.c.l.b16 %v913
  %v983 = vunpack.c.h.b16 %v913
  %v984 = vunpack.c.l.b16 %v914
  %v985 = vunpack.c.h.b16 %v914
  %v986 = vunpack.c.l.b16 %v915
  %v987 = vunpack.c.h.b16 %v915
  %v988 = vunpack.c.l.b16 %v916
  %v989 = vunpack.c.h.b16 %v916
  %v990 = vunpack.c.l.b16 %v917
  %v991 = vunpack.c.h.b16 %v917
  %v992 = vunpack.c.l.b16 %v918
  %v993 = vunpack.c.h.b16 %v918
  %v994 = vunpack.c.l.b16 %v919
  %v995 = vunpack.c.h.b16 %v919
  %v996 = vunpack.c.l.b16 %v920
  %v997 = vunpack.c.h.b16 %v920
  %v998 = vunpack.c.l.b16 %v921
  %v999 = vunpack.c.h.b16 %v921
  %v1000 = vunpack.c.l.b16 %v922
  %v1001 = vunpack.c.h.b16 %v922
  %v1002 = vunpack.c.l.b16 %v923
  %v1003 = vunpack.c.h.b16 %v923
  %v1004 = vunpack.c.l.b16 %v924
  %v1005 = vunpack.c.h.b16 %v924
  %v1006 = vunpack.c.l.b16 %v925
  %v1007 = vunpack.c.h.b16 %v925
  %v1008 = vunpack.c.l.b16 %v926
  %v1009 = vunpack.c.h.b16 %v926
  %v1010 = vunpack.c.l.b16 %v927
  %v1011 = vunpack.c.h.b16 %v927
  %v1012 = vunpack.c.l.b16 %v928
  %v1013 = vunpack.c.h.b16 %v928
  %v1014 = vunpack.c.l.b16 %v929
  %v1015 = vunpack.c.h.b16 %v929
  %v1016 = vunpack.c.l.b16 %v930
  %v1017 = vunpack.c.h.b16 %v930
  %v1018 = vunpack.c.l.b16 %v931
  %v1019 = vunpack.c.h.b16 %v931
  %v1020 = vunpack.c.l.b16 %v932
  %v1021 = vunpack.c.h.b16 %v932
  %v1022 = vunpack.c.l.b16 %v933
  %v1023 = vunpack.c.h.b16 %v933
  %v1024 = vunpack.c.l.b16 %v934
  %v1025 = vunpack.c.h.b16 %v934
  %v1026 = vunpack.c.l.b16 %v935
  %v1027 = vunpack.c.h.b16 %v935
  %v1028 = vunpack.c.l.b16 %v936
  %v1029 = vunpack.c.h.b16 %v936
  %v1030 = vunpack.c.l.b16 %v937
  %v1031 = vunpack.c.h.b16 %v937
  %v1032 = vunpack.c.l.b16 %v938
  %v1033 = vunpack.c.h.b16 %v938
  %v1034 = vunpack.c.l.b16 %v939
  %v1035 = vunpack.c.h.b16 %v939
  %v1036 = vpack.c.b16 %v972, %v972
  %v1037 = vpack.c.b16 %v973, %v973
  %v1038 = vpack.c.b16 %v974, %v974
  %v1039 = vpack.c.b16 %v975, %v975
  %v1040 = vpack.c.b16 %v976, %v976
  %v1041 = vpack.c.b16 %v977, %v977
  %v1042 = vpack.c.b16 %v978, %v978
  %v1043 = vpack.c.b16 %v979, %v979
  %v1044 = vpack.c.b16 %v980, %v980
  %v1045 = vpack.c.b16 %v981, %v981
  %v1046 = vpack.c.b16 %v982, %v982
  %v1047 = vpack.c.b16 %v983, %v983
  %v1048 = vpack.c.b16 %v984, %v984
  %v1049 = vpack.c.b16 %v985, %v985
  %v1050 = vpack.c.b16 %v986, %v986
  %v1051 = vpack.c.b16 %v987, %v987
  %v1052 = vpack.c.b16 %v988, %v988
  %v1053 = vpack.c.b16 %v989, %v989
  %v1054 = vpack.c.b16 %v990, %v990
  %v1055 = vpack.c.b16 %v991, %v991
  %v1056 = vpack.c.b16 %v992, %v992
  %v1057 = vpack.c.b16 %v993, %v993
  %v1058 = vpack.c.b16 %v994, %v994
  %v1059 = vpack.c.b16 %v995, %v995
  %v1060 = vpack.c.b16 %v996, %v996
  %v1061 = vpack.c.b16 %v997, %v997
  %v1062 = vpack.c.b16 %v998, %v998
  %v1063 = vpack.c.b16 %v999, %v999
  %v1064 = vpack.c.b16 %v1000, %v1000
  %v1065 = vpack.c.b16 %v1001, %v1001
  %v1066 = vpack.c.b16 %v1002, %v1002
  %v1067 = vpack.c.b16 %v1003, %v1003
  %v1068 = vpack.c.b16 %v1004, %v1004
  %v1069 = vpack.c.b16 %v1005, %v1005
  %v1070 = vpack.c.b16 %v1006, %v1006
  %v1071 = vpack.c.b16 %v1007, %v1007
  %v1072 = vpack.c.b16 %v1008, %v1008
  %v1073 = vpack.c.b16 %v1009, %v1009
  %v1074 = vpack.c.b16 %v1010, %v1010
  %v1075 = vpack.c.b16 %v1011, %v1011
  %v1076 = vpack.c.b16 %v1012, %v1012
  %v1077 = vpack.c.b16 %v1013, %v1013
  %v1078 = vpack.c.b16 %v1014, %v1014
  %v1079 = vpack.c.b16 %v1015, %v1015
  %v1080 = vpack.c.b16 %v1016, %v1016
  %v1081 = vpack.c.b16 %v1017, %v1017
  %v1082 = vpack.c.b16 %v1018, %v1018
  %v1083 = vpack.c.b16 %v1019, %v1019
  %v1084 = vpack.c.b16 %v1020, %v1020
  %v1085 = vpack.c.b16 %v1021, %v1021
  %v1086 = vpack.c.b16 %v1022, %v1022
  %v1087 = vpack.c.b16 %v1023, %v1023
  %v1088 = vpack.c.b16 %v1024, %v1024
  %v1089 = vpack.c.b16 %v1025, %v1025
  %v1090 = vpack.c.b16 %v1026, %v1026
  %v1091 = vpack.c.b16 %v1027, %v1027
  %v1092 = vpack.c.b16 %v1028, %v1028
  %v1093 = vpack.c.b16 %v1029, %v1029
  %v1094 = vpack.c.b16 %v1030, %v1030
  %v1095 = vpack.c.b16 %v1031, %v1031
  %v1096 = vpack.c.b16 %v1032, %v1032
  %v1097 = vpack.c.b16 %v1033, %v1033
  %v1098 = vpack.c.b16 %v1034, %v1034
  %v1099 = vpack.c.b16 %v1035, %v1035
  %vm1164 = vcmask 519168
  %1165 = vst.msk [vmem:[%s4] sm:$0xf] %vm1164, %v1036
  %1166 = vst.msk [vmem:[%s4 + $0x4] sm:$0xf] %vm1164, %v1037
  %1167 = vst.msk [vmem:[%s4 + $0x8] sm:$0xf] %vm1164, %v1038
  %1168 = vst.msk [vmem:[%s4 + $0xc] sm:$0xf] %vm1164, %v1039
  %1169 = vst.msk [vmem:[%s4 + $0x10] sm:$0xf] %vm1164, %v1040
  %1170 = vst.msk [vmem:[%s4 + $0x14] sm:$0xf] %vm1164, %v1041
  %1171 = vst.msk [vmem:[%s4 + $0x18] sm:$0xf] %vm1164, %v1042
  %1172 = vst.msk [vmem:[%s4 + $0x1c] sm:$0xf] %vm1164, %v1043
  %1173 = vst.msk [vmem:[%s4 + $0x20] sm:$0xf] %vm1164, %v1044
  %1174 = vst.msk [vmem:[%s4 + $0x24] sm:$0xf] %vm1164, %v1045
  %1175 = vst.msk [vmem:[%s4 + $0x28] sm:$0xf] %vm1164, %v1046
  %1176 = vst.msk [vmem:[%s4 + $0x2c] sm:$0xf] %vm1164, %v1047
  %1177 = vst.msk [vmem:[%s4 + $0x30] sm:$0xf] %vm1164, %v1048
  %1178 = vst.msk [vmem:[%s4 + $0x34] sm:$0xf] %vm1164, %v1049
  %1179 = vst.msk [vmem:[%s4 + $0x38] sm:$0xf] %vm1164, %v1050
  %1180 = vst.msk [vmem:[%s4 + $0x3c] sm:$0xf] %vm1164, %v1051
  %1181 = vst.msk [vmem:[%s4 + $0x40] sm:$0xf] %vm1164, %v1052
  %1182 = vst.msk [vmem:[%s4 + $0x44] sm:$0xf] %vm1164, %v1053
  %1183 = vst.msk [vmem:[%s4 + $0x48] sm:$0xf] %vm1164, %v1054
  %1184 = vst.msk [vmem:[%s4 + $0x4c] sm:$0xf] %vm1164, %v1055
  %1185 = vst.msk [vmem:[%s4 + $0x50] sm:$0xf] %vm1164, %v1056
  %1186 = vst.msk [vmem:[%s4 + $0x54] sm:$0xf] %vm1164, %v1057
  %1187 = vst.msk [vmem:[%s4 + $0x58] sm:$0xf] %vm1164, %v1058
  %1188 = vst.msk [vmem:[%s4 + $0x5c] sm:$0xf] %vm1164, %v1059
  %1189 = vst.msk [vmem:[%s4 + $0x60] sm:$0xf] %vm1164, %v1060
  %1190 = vst.msk [vmem:[%s4 + $0x64] sm:$0xf] %vm1164, %v1061
  %1191 = vst.msk [vmem:[%s4 + $0x68] sm:$0xf] %vm1164, %v1062
  %1192 = vst.msk [vmem:[%s4 + $0x6c] sm:$0xf] %vm1164, %v1063
  %1193 = vst.msk [vmem:[%s4 + $0x70] sm:$0xf] %vm1164, %v1064
  %1194 = vst.msk [vmem:[%s4 + $0x74] sm:$0xf] %vm1164, %v1065
  %1195 = vst.msk [vmem:[%s4 + $0x78] sm:$0xf] %vm1164, %v1066
  %1196 = vst.msk [vmem:[%s4 + $0x7c] sm:$0xf] %vm1164, %v1067
  %1197 = vst.msk [vmem:[%s4 + $0x80] sm:$0xf] %vm1164, %v1068
  %1198 = vst.msk [vmem:[%s4 + $0x84] sm:$0xf] %vm1164, %v1069
  %1199 = vst.msk [vmem:[%s4 + $0x88] sm:$0xf] %vm1164, %v1070
  %1200 = vst.msk [vmem:[%s4 + $0x8c] sm:$0xf] %vm1164, %v1071
  %1201 = vst.msk [vmem:[%s4 + $0x90] sm:$0xf] %vm1164, %v1072
  %1202 = vst.msk [vmem:[%s4 + $0x94] sm:$0xf] %vm1164, %v1073
  %1203 = vst.msk [vmem:[%s4 + $0x98] sm:$0xf] %vm1164, %v1074
  %1204 = vst.msk [vmem:[%s4 + $0x9c] sm:$0xf] %vm1164, %v1075
  %1205 = vst.msk [vmem:[%s4 + $0xa0] sm:$0xf] %vm1164, %v1076
  %1206 = vst.msk [vmem:[%s4 + $0xa4] sm:$0xf] %vm1164, %v1077
  %1207 = vst.msk [vmem:[%s4 + $0xa8] sm:$0xf] %vm1164, %v1078
  %1208 = vst.msk [vmem:[%s4 + $0xac] sm:$0xf] %vm1164, %v1079
  %1209 = vst.msk [vmem:[%s4 + $0xb0] sm:$0xf] %vm1164, %v1080
  %1210 = vst.msk [vmem:[%s4 + $0xb4] sm:$0xf] %vm1164, %v1081
  %1211 = vst.msk [vmem:[%s4 + $0xb8] sm:$0xf] %vm1164, %v1082
  %1212 = vst.msk [vmem:[%s4 + $0xbc] sm:$0xf] %vm1164, %v1083
  %1213 = vst.msk [vmem:[%s4 + $0xc0] sm:$0xf] %vm1164, %v1084
  %1214 = vst.msk [vmem:[%s4 + $0xc4] sm:$0xf] %vm1164, %v1085
  %1215 = vst.msk [vmem:[%s4 + $0xc8] sm:$0xf] %vm1164, %v1086
  %1216 = vst.msk [vmem:[%s4 + $0xcc] sm:$0xf] %vm1164, %v1087
  %1217 = vst.msk [vmem:[%s4 + $0xd0] sm:$0xf] %vm1164, %v1088
  %1218 = vst.msk [vmem:[%s4 + $0xd4] sm:$0xf] %vm1164, %v1089
  %1219 = vst.msk [vmem:[%s4 + $0xd8] sm:$0xf] %vm1164, %v1090
  %1220 = vst.msk [vmem:[%s4 + $0xdc] sm:$0xf] %vm1164, %v1091
  %1221 = vst.msk [vmem:[%s4 + $0xe0] sm:$0xf] %vm1164, %v1092
  %1222 = vst.msk [vmem:[%s4 + $0xe4] sm:$0xf] %vm1164, %v1093
  %1223 = vst.msk [vmem:[%s4 + $0xe8] sm:$0xf] %vm1164, %v1094
  %1224 = vst.msk [vmem:[%s4 + $0xec] sm:$0xf] %vm1164, %v1095
  %1225 = vst.msk [vmem:[%s4 + $0xf0] sm:$0xf] %vm1164, %v1096
  %1226 = vst.msk [vmem:[%s4 + $0xf4] sm:$0xf] %vm1164, %v1097
  %1227 = vst.msk [vmem:[%s4 + $0xf8] sm:$0xf] %vm1164, %v1098
  %1228 = vst.msk [vmem:[%s4 + $0xfc] sm:$0xf] %vm1164, %v1099
  %vm1229 = vcmask 523264
  %v1230 = vsel %vm1229, %v654, 0.0
  %v1231 = vsel %vm1229, %v657, 0.0
  %v1232 = vadd.f32 %v1230, %v1231
  %v1233 = vsel %vm1229, %v662, 0.0
  %v1234 = vadd.f32 %v1232, %v1233
  %v1235 = vsel %vm1229, %v665, 0.0
  %v1236 = vadd.f32 %v1234, %v1235
  %v1237 = vsel %vm1229, %v670, 0.0
  %v1238 = vadd.f32 %v1236, %v1237
  %v1239 = vsel %vm1229, %v673, 0.0
  %v1240 = vadd.f32 %v1238, %v1239
  %v1241 = vsel %vm1229, %v678, 0.0
  %v1242 = vadd.f32 %v1240, %v1241
  %v1243 = vsel %vm1229, %v681, 0.0
  %v1244 = vadd.f32 %v1242, %v1243
  %v1245 = vsel %vm1229, %v686, 0.0
  %v1246 = vadd.f32 %v1244, %v1245
  %v1247 = vsel %vm1229, %v689, 0.0
  %v1248 = vadd.f32 %v1246, %v1247
  %v1249 = vsel %vm1229, %v694, 0.0
  %v1250 = vadd.f32 %v1248, %v1249
  %v1251 = vsel %vm1229, %v697, 0.0
  %v1252 = vadd.f32 %v1250, %v1251
  %v1253 = vsel %vm1229, %v702, 0.0
  %v1254 = vadd.f32 %v1252, %v1253
  %v1255 = vsel %vm1229, %v705, 0.0
  %v1256 = vadd.f32 %v1254, %v1255
  %v1257 = vsel %vm1229, %v710, 0.0
  %v1258 = vadd.f32 %v1256, %v1257
  %v1259 = vsel %vm1229, %v713, 0.0
  %v1260 = vadd.f32 %v1258, %v1259
  %v1261 = vsel %vm1229, %v718, 0.0
  %v1262 = vadd.f32 %v1260, %v1261
  %v1263 = vsel %vm1229, %v721, 0.0
  %v1264 = vadd.f32 %v1262, %v1263
  %v1265 = vsel %vm1229, %v726, 0.0
  %v1266 = vadd.f32 %v1264, %v1265
  %v1267 = vsel %vm1229, %v729, 0.0
  %v1268 = vadd.f32 %v1266, %v1267
  %v1269 = vsel %vm1229, %v734, 0.0
  %v1270 = vadd.f32 %v1268, %v1269
  %v1271 = vsel %vm1229, %v737, 0.0
  %v1272 = vadd.f32 %v1270, %v1271
  %v1273 = vsel %vm1229, %v742, 0.0
  %v1274 = vadd.f32 %v1272, %v1273
  %v1275 = vsel %vm1229, %v745, 0.0
  %v1276 = vadd.f32 %v1274, %v1275
  %v1277 = vsel %vm1229, %v750, 0.0
  %v1278 = vadd.f32 %v1276, %v1277
  %v1279 = vsel %vm1229, %v753, 0.0
  %v1280 = vadd.f32 %v1278, %v1279
  %v1281 = vsel %vm1229, %v758, 0.0
  %v1282 = vadd.f32 %v1280, %v1281
  %v1283 = vsel %vm1229, %v761, 0.0
  %v1284 = vadd.f32 %v1282, %v1283
  %v1285 = vsel %vm1229, %v766, 0.0
  %v1286 = vadd.f32 %v1284, %v1285
  %v1287 = vsel %vm1229, %v769, 0.0
  %v1288 = vadd.f32 %v1286, %v1287
  %v1289 = vsel %vm1229, %v774, 0.0
  %v1290 = vadd.f32 %v1288, %v1289
  %v1291 = vsel %vm1229, %v777, 0.0
  %v1292 = vadd.f32 %v1290, %v1291
  %v1293 = vsel %vm1229, %v782, 0.0
  %v1294 = vadd.f32 %v1292, %v1293
  %v1295 = vsel %vm1229, %v785, 0.0
  %v1296 = vadd.f32 %v1294, %v1295
  %v1297 = vsel %vm1229, %v790, 0.0
  %v1298 = vadd.f32 %v1296, %v1297
  %v1299 = vsel %vm1229, %v793, 0.0
  %v1300 = vadd.f32 %v1298, %v1299
  %v1301 = vsel %vm1229, %v798, 0.0
  %v1302 = vadd.f32 %v1300, %v1301
  %v1303 = vsel %vm1229, %v801, 0.0
  %v1304 = vadd.f32 %v1302, %v1303
  %v1305 = vsel %vm1229, %v806, 0.0
  %v1306 = vadd.f32 %v1304, %v1305
  %v1307 = vsel %vm1229, %v809, 0.0
  %v1308 = vadd.f32 %v1306, %v1307
  %v1309 = vsel %vm1229, %v814, 0.0
  %v1310 = vadd.f32 %v1308, %v1309
  %v1311 = vsel %vm1229, %v817, 0.0
  %v1312 = vadd.f32 %v1310, %v1311
  %v1313 = vsel %vm1229, %v822, 0.0
  %v1314 = vadd.f32 %v1312, %v1313
  %v1315 = vsel %vm1229, %v825, 0.0
  %v1316 = vadd.f32 %v1314, %v1315
  %v1317 = vsel %vm1229, %v830, 0.0
  %v1318 = vadd.f32 %v1316, %v1317
  %v1319 = vsel %vm1229, %v833, 0.0
  %v1320 = vadd.f32 %v1318, %v1319
  %v1321 = vsel %vm1229, %v838, 0.0
  %v1322 = vadd.f32 %v1320, %v1321
  %v1323 = vsel %vm1229, %v841, 0.0
  %v1324 = vadd.f32 %v1322, %v1323
  %v1325 = vsel %vm1229, %v846, 0.0
  %v1326 = vadd.f32 %v1324, %v1325
  %v1327 = vsel %vm1229, %v849, 0.0
  %v1328 = vadd.f32 %v1326, %v1327
  %v1329 = vsel %vm1229, %v854, 0.0
  %v1330 = vadd.f32 %v1328, %v1329
  %v1331 = vsel %vm1229, %v857, 0.0
  %v1332 = vadd.f32 %v1330, %v1331
  %v1333 = vsel %vm1229, %v862, 0.0
  %v1334 = vadd.f32 %v1332, %v1333
  %v1335 = vsel %vm1229, %v865, 0.0
  %v1336 = vadd.f32 %v1334, %v1335
  %v1337 = vsel %vm1229, %v870, 0.0
  %v1338 = vadd.f32 %v1336, %v1337
  %v1339 = vsel %vm1229, %v873, 0.0
  %v1340 = vadd.f32 %v1338, %v1339
  %v1341 = vsel %vm1229, %v878, 0.0
  %v1342 = vadd.f32 %v1340, %v1341
  %v1343 = vsel %vm1229, %v881, 0.0
  %v1344 = vadd.f32 %v1342, %v1343
  %v1345 = vsel %vm1229, %v886, 0.0
  %v1346 = vadd.f32 %v1344, %v1345
  %v1347 = vsel %vm1229, %v889, 0.0
  %v1348 = vadd.f32 %v1346, %v1347
  %v1349 = vsel %vm1229, %v894, 0.0
  %v1350 = vadd.f32 %v1348, %v1349
  %v1351 = vsel %vm1229, %v897, 0.0
  %v1352 = vadd.f32 %v1350, %v1351
  %v1353 = vsel %vm1229, %v902, 0.0
  %v1354 = vadd.f32 %v1352, %v1353
  %v1355 = vsel %vm1229, %v905, 0.0
  %v1356 = vadd.f32 %v1354, %v1355
  %v1357 = vrot.slane %v1356, 4
  %v1358 = vadd.f32 %v1356, %v1357
  %v1359 = vrot.slane %v1358, 2
  %v1360 = vadd.f32 %v1358, %v1359
  %v1361 = vrot.slane %v1360, 1
  %v1362 = vadd.f32 %v1360, %v1361
  %v1363 = vmul.f32 %v654, %v654
  %v1364 = vmul.f32 %v657, %v657
  %v1365 = vmul.f32 %v662, %v662
  %v1366 = vmul.f32 %v665, %v665
  %v1367 = vmul.f32 %v670, %v670
  %v1368 = vmul.f32 %v673, %v673
  %v1369 = vmul.f32 %v678, %v678
  %v1370 = vmul.f32 %v681, %v681
  %v1371 = vmul.f32 %v686, %v686
  %v1372 = vmul.f32 %v689, %v689
  %v1373 = vmul.f32 %v694, %v694
  %v1374 = vmul.f32 %v697, %v697
  %v1375 = vmul.f32 %v702, %v702
  %v1376 = vmul.f32 %v705, %v705
  %v1377 = vmul.f32 %v710, %v710
  %v1378 = vmul.f32 %v713, %v713
  %v1379 = vmul.f32 %v718, %v718
  %v1380 = vmul.f32 %v721, %v721
  %v1381 = vmul.f32 %v726, %v726
  %v1382 = vmul.f32 %v729, %v729
  %v1383 = vmul.f32 %v734, %v734
  %v1384 = vmul.f32 %v737, %v737
  %v1385 = vmul.f32 %v742, %v742
  %v1386 = vmul.f32 %v745, %v745
  %v1387 = vmul.f32 %v750, %v750
  %v1388 = vmul.f32 %v753, %v753
  %v1389 = vmul.f32 %v758, %v758
  %v1390 = vmul.f32 %v761, %v761
  %v1391 = vmul.f32 %v766, %v766
  %v1392 = vmul.f32 %v769, %v769
  %v1393 = vmul.f32 %v774, %v774
  %v1394 = vmul.f32 %v777, %v777
  %v1395 = vmul.f32 %v782, %v782
  %v1396 = vmul.f32 %v785, %v785
  %v1397 = vmul.f32 %v790, %v790
  %v1398 = vmul.f32 %v793, %v793
  %v1399 = vmul.f32 %v798, %v798
  %v1400 = vmul.f32 %v801, %v801
  %v1401 = vmul.f32 %v806, %v806
  %v1402 = vmul.f32 %v809, %v809
  %v1403 = vmul.f32 %v814, %v814
  %v1404 = vmul.f32 %v817, %v817
  %v1405 = vmul.f32 %v822, %v822
  %v1406 = vmul.f32 %v825, %v825
  %v1407 = vmul.f32 %v830, %v830
  %v1408 = vmul.f32 %v833, %v833
  %v1409 = vmul.f32 %v838, %v838
  %v1410 = vmul.f32 %v841, %v841
  %v1411 = vmul.f32 %v846, %v846
  %v1412 = vmul.f32 %v849, %v849
  %v1413 = vmul.f32 %v854, %v854
  %v1414 = vmul.f32 %v857, %v857
  %v1415 = vmul.f32 %v862, %v862
  %v1416 = vmul.f32 %v865, %v865
  %v1417 = vmul.f32 %v870, %v870
  %v1418 = vmul.f32 %v873, %v873
  %v1419 = vmul.f32 %v878, %v878
  %v1420 = vmul.f32 %v881, %v881
  %v1421 = vmul.f32 %v886, %v886
  %v1422 = vmul.f32 %v889, %v889
  %v1423 = vmul.f32 %v894, %v894
  %v1424 = vmul.f32 %v897, %v897
  %v1425 = vmul.f32 %v902, %v902
  %v1426 = vmul.f32 %v905, %v905
  %v1427 = vsel %vm1229, %v1363, 0.0
  %v1428 = vsel %vm1229, %v1364, 0.0
  %v1429 = vadd.f32 %v1427, %v1428
  %v1430 = vsel %vm1229, %v1365, 0.0
  %v1431 = vadd.f32 %v1429, %v1430
  %v1432 = vsel %vm1229, %v1366, 0.0
  %v1433 = vadd.f32 %v1431, %v1432
  %v1434 = vsel %vm1229, %v1367, 0.0
  %v1435 = vadd.f32 %v1433, %v1434
  %v1436 = vsel %vm1229, %v1368, 0.0
  %v1437 = vadd.f32 %v1435, %v1436
  %v1438 = vsel %vm1229, %v1369, 0.0
  %v1439 = vadd.f32 %v1437, %v1438
  %v1440 = vsel %vm1229, %v1370, 0.0
  %v1441 = vadd.f32 %v1439, %v1440
  %v1442 = vsel %vm1229, %v1371, 0.0
  %v1443 = vadd.f32 %v1441, %v1442
  %v1444 = vsel %vm1229, %v1372, 0.0
  %v1445 = vadd.f32 %v1443, %v1444
  %v1446 = vsel %vm1229, %v1373, 0.0
  %v1447 = vadd.f32 %v1445, %v1446
  %v1448 = vsel %vm1229, %v1374, 0.0
  %v1449 = vadd.f32 %v1447, %v1448
  %v1450 = vsel %vm1229, %v1375, 0.0
  %v1451 = vadd.f32 %v1449, %v1450
  %v1452 = vsel %vm1229, %v1376, 0.0
  %v1453 = vadd.f32 %v1451, %v1452
  %v1454 = vsel %vm1229, %v1377, 0.0
  %v1455 = vadd.f32 %v1453, %v1454
  %v1456 = vsel %vm1229, %v1378, 0.0
  %v1457 = vadd.f32 %v1455, %v1456
  %v1458 = vsel %vm1229, %v1379, 0.0
  %v1459 = vadd.f32 %v1457, %v1458
  %v1460 = vsel %vm1229, %v1380, 0.0
  %v1461 = vadd.f32 %v1459, %v1460
  %v1462 = vsel %vm1229, %v1381, 0.0
  %v1463 = vadd.f32 %v1461, %v1462
  %v1464 = vsel %vm1229, %v1382, 0.0
  %v1465 = vadd.f32 %v1463, %v1464
  %v1466 = vsel %vm1229, %v1383, 0.0
  %v1467 = vadd.f32 %v1465, %v1466
  %v1468 = vsel %vm1229, %v1384, 0.0
  %v1469 = vadd.f32 %v1467, %v1468
  %v1470 = vsel %vm1229, %v1385, 0.0
  %v1471 = vadd.f32 %v1469, %v1470
  %v1472 = vsel %vm1229, %v1386, 0.0
  %v1473 = vadd.f32 %v1471, %v1472
  %v1474 = vsel %vm1229, %v1387, 0.0
  %v1475 = vadd.f32 %v1473, %v1474
  %v1476 = vsel %vm1229, %v1388, 0.0
  %v1477 = vadd.f32 %v1475, %v1476
  %v1478 = vsel %vm1229, %v1389, 0.0
  %v1479 = vadd.f32 %v1477, %v1478
  %v1480 = vsel %vm1229, %v1390, 0.0
  %v1481 = vadd.f32 %v1479, %v1480
  %v1482 = vsel %vm1229, %v1391, 0.0
  %v1483 = vadd.f32 %v1481, %v1482
  %v1484 = vsel %vm1229, %v1392, 0.0
  %v1485 = vadd.f32 %v1483, %v1484
  %v1486 = vsel %vm1229, %v1393, 0.0
  %v1487 = vadd.f32 %v1485, %v1486
  %v1488 = vsel %vm1229, %v1394, 0.0
  %v1489 = vadd.f32 %v1487, %v1488
  %v1490 = vsel %vm1229, %v1395, 0.0
  %v1491 = vadd.f32 %v1489, %v1490
  %v1492 = vsel %vm1229, %v1396, 0.0
  %v1493 = vadd.f32 %v1491, %v1492
  %v1494 = vsel %vm1229, %v1397, 0.0
  %v1495 = vadd.f32 %v1493, %v1494
  %v1496 = vsel %vm1229, %v1398, 0.0
  %v1497 = vadd.f32 %v1495, %v1496
  %v1498 = vsel %vm1229, %v1399, 0.0
  %v1499 = vadd.f32 %v1497, %v1498
  %v1500 = vsel %vm1229, %v1400, 0.0
  %v1501 = vadd.f32 %v1499, %v1500
  %v1502 = vsel %vm1229, %v1401, 0.0
  %v1503 = vadd.f32 %v1501, %v1502
  %v1504 = vsel %vm1229, %v1402, 0.0
  %v1505 = vadd.f32 %v1503, %v1504
  %v1506 = vsel %vm1229, %v1403, 0.0
  %v1507 = vadd.f32 %v1505, %v1506
  %v1508 = vsel %vm1229, %v1404, 0.0
  %v1509 = vadd.f32 %v1507, %v1508
  %v1510 = vsel %vm1229, %v1405, 0.0
  %v1511 = vadd.f32 %v1509, %v1510
  %v1512 = vsel %vm1229, %v1406, 0.0
  %v1513 = vadd.f32 %v1511, %v1512
  %v1514 = vsel %vm1229, %v1407, 0.0
  %v1515 = vadd.f32 %v1513, %v1514
  %v1516 = vsel %vm1229, %v1408, 0.0
  %v1517 = vadd.f32 %v1515, %v1516
  %v1518 = vsel %vm1229, %v1409, 0.0
  %v1519 = vadd.f32 %v1517, %v1518
  %v1520 = vsel %vm1229, %v1410, 0.0
  %v1521 = vadd.f32 %v1519, %v1520
  %v1522 = vsel %vm1229, %v1411, 0.0
  %v1523 = vadd.f32 %v1521, %v1522
  %v1524 = vsel %vm1229, %v1412, 0.0
  %v1525 = vadd.f32 %v1523, %v1524
  %v1526 = vsel %vm1229, %v1413, 0.0
  %v1527 = vadd.f32 %v1525, %v1526
  %v1528 = vsel %vm1229, %v1414, 0.0
  %v1529 = vadd.f32 %v1527, %v1528
  %v1530 = vsel %vm1229, %v1415, 0.0
  %v1531 = vadd.f32 %v1529, %v1530
  %v1532 = vsel %vm1229, %v1416, 0.0
  %v1533 = vadd.f32 %v1531, %v1532
  %v1534 = vsel %vm1229, %v1417, 0.0
  %v1535 = vadd.f32 %v1533, %v1534
  %v1536 = vsel %vm1229, %v1418, 0.0
  %v1537 = vadd.f32 %v1535, %v1536
  %v1538 = vsel %vm1229, %v1419, 0.0
  %v1539 = vadd.f32 %v1537, %v1538
  %v1540 = vsel %vm1229, %v1420, 0.0
  %v1541 = vadd.f32 %v1539, %v1540
  %v1542 = vsel %vm1229, %v1421, 0.0
  %v1543 = vadd.f32 %v1541, %v1542
  %v1544 = vsel %vm1229, %v1422, 0.0
  %v1545 = vadd.f32 %v1543, %v1544
  %v1546 = vsel %vm1229, %v1423, 0.0
  %v1547 = vadd.f32 %v1545, %v1546
  %v1548 = vsel %vm1229, %v1424, 0.0
  %v1549 = vadd.f32 %v1547, %v1548
  %v1550 = vsel %vm1229, %v1425, 0.0
  %v1551 = vadd.f32 %v1549, %v1550
  %v1552 = vsel %vm1229, %v1426, 0.0
  %v1553 = vadd.f32 %v1551, %v1552
  %v1554 = vrot.slane %v1553, 4
  %v1555 = vadd.f32 %v1553, %v1554
  %v1556 = vrot.slane %v1555, 2
  %v1557 = vadd.f32 %v1555, %v1556
  %v1558 = vrot.slane %v1557, 1
  %v1559 = vadd.f32 %v1557, %v1558
  %vm1560 = vcmask 1040384
  %v1561 = vsel %vm1560, %v1362, %v1559
  %vm1562 = vcmask 517120
  %1563 = vst.msk [vmem:[%s5] sm:$0x3] %vm1562, %v1561
  // Predicated region
  $region18: #{bottleneck_forward.6} parent=0 // pred_check
    _
  $region19: #{bottleneck_forward.6} parent=0 // pred_check_branch
    %1565 = sbr.rel (0) target = $region21
  $region20: #{bottleneck_forward.6} parent=0 // pred_region
    _
  $region21: #{bottleneck_forward.6} parent=0 // pred_fallthru
    _
  // Predicated region
  $region22: #{bottleneck_forward.6} parent=0 // pred_check
    _
  $region23: #{bottleneck_forward.6} parent=0 // pred_check_branch
    %1567 = sbr.rel (0) target = $region25
  $region24: #{bottleneck_forward.6} parent=0 // pred_region
    _
  $region25: #{bottleneck_forward.6} parent=0 // pred_fallthru
    _
  // Predicated region
  $region26: #{bottleneck_forward.6} parent=0 // pred_check
    _
  $region27: #{bottleneck_forward.6} parent=0 // pred_check_branch
    %1569 = sbr.rel (0) target = $region29
  $region28: #{bottleneck_forward.6} parent=0 // pred_region
    _
  $region29: #{bottleneck_forward.6} parent=0 // pred_fallthru
    _
  // Predicated region
  $region30: #{bottleneck_forward.6} parent=0 // pred_check
    _
  $region31: #{bottleneck_forward.6} parent=0 // pred_check_branch
    %1571 = sbr.rel (0) target = $region33
  $region32: #{bottleneck_forward.6} parent=0 // pred_region
    _
  $region33: #{bottleneck_forward.6} parent=0 // pred_fallthru
    _

// kernel: bottleneck_forward.5
$region0: #{bottleneck_forward.5}
  #allocation0 [shape = 'u32[]', space=smem, size = 0x4, offset = 0x4, fixed_abs, tag = 'smem constant byte address 0x4 - core index']
  #allocation1 [shape = 'u32[144,128]{1,0:T(1,128)}', space=vmem, size = 0x12000, scoped, tag = 'internal scratch']
  %s0 = inlined_call_operand.vmem [shape: bf16[2,18,18,16], index: 0, kind: input, shape index: {}]
  %s1 = inlined_call_operand.vmem [shape: bf16[9,16,16], index: 1, kind: input, shape index: {}]
  %s2 = inlined_call_operand.vmem [shape: f32[1,16], index: 2, kind: input, shape index: {}]
  %s3 = inlined_call_operand.vmem [shape: f32[1,16], index: 3, kind: input, shape index: {}]
  %s4 = inlined_call_operand.vmem [shape: bf16[2,256,16], index: 4, kind: output, shape index: {0}]
  %s5 = inlined_call_operand.vmem [shape: f32[2,2,16], index: 5, kind: output, shape index: {1}]
  %6 = xla_tuple %s4, %s5
  %s7 = sld [smem:[#allocation0]]
  $region57: #{bottleneck_forward.5} parent=0
    _
  %s9 = ssub.s32 1, %s7
  %s10 = scalar_select 0, %s9, %s7
  loop: start=0, step=1, limit=4
  $region2: #{bottleneck_forward.5} parent=0 // loop_pre_header
    _
  $region3: #{bottleneck_forward.5} parent=0 // loop_header
    %s12 = sphi 0, %s16
    %p13 = scmp.ge.s32.totalorder %s12, 4
    %s22 = sphi 0, %s24
    %s25 = sphi 0, %s22
    %s26 = sphi 0, %s25
    %s42 = sphi 0, %s26
    %s46 = sphi 0, %s46
    %s48 = sphi 0, %s46
    %s49 = sphi 0, %s48
    %s63 = sphi 0, %s49
    %s67 = sphi 0, %s67
    %s69 = sphi 0, %s67
    %s70 = sphi 0, %s69
    %s84 = sphi 0, %s70
    %s88 = sphi 0, %s88
    %s90 = sphi 0, %s88
    %s91 = sphi 0, %s90
    %s105 = sphi 0, %s91
    %s111 = sphi 0, %s113
    %s114 = sphi 0, %s111
    %s115 = sphi 0, %s114
    %s131 = sphi 0, %s115
    %s137 = sphi 0, %s139
    %s140 = sphi 0, %s137
    %s141 = sphi 0, %s140
    %s157 = sphi 0, %s141
  $region4: #{bottleneck_forward.5} parent=0 // loop_header_branch
    %15 = sbr.rel (%p13) target = $region8
  $region5: #{bottleneck_forward.5} parent=0 // loop_body
    %s17 = ssub.s32 %s12, 1
    %s18 = ssub.s32 %s12, 2
    %s19 = sadd.s32 %s12, 1
    %s20 = ssub.s32 %s12, %s19
    %p21 = scmp.eq.s32.totalorder %s20, 0
    %s23 = sadd.s32 %s22, 1
    %s24 = scalar_select %p21, %s22, %s23
    %p27 = pneg %p21
    %p28 = scmp.eq.s32.totalorder %s12, 1
    %p29 = por %p27, %p28
    %p30 = scmp.ne.s32.totalorder %s22, %s25
    %p31 = scmp.eq.s32.totalorder %s12, 0
    %p32 = por %p30, %p31
    %p33 = scmp.ne.s32.totalorder %s22, %s25
    %p34 = scmp.eq.s32.totalorder %s17, 1
    %p35 = por %p33, %p34
    %p36 = scmp.ne.s32.totalorder %s25, %s26
    %p37 = scmp.eq.s32.totalorder %s17, 0
    %p38 = por %p36, %p37
    %p39 = scmp.ne.s32.totalorder %s25, %s26
    %p40 = scmp.eq.s32.totalorder %s18, 1
    %p41 = por %p39, %p40
    %p43 = scmp.ne.s32.totalorder %s26, %s42
    %p44 = scmp.eq.s32.totalorder %s18, 0
    %p45 = por %p43, %p44
    %s47 = sadd.s32 %s46, 1
    %p50 = scmp.eq.s32.totalorder %s12, 1
    %p51 = scmp.ne.s32.totalorder %s46, %s48
    %p52 = scmp.eq.s32.totalorder %s12, 0
    %p53 = por %p51, %p52
    %p54 = scmp.ne.s32.totalorder %s46, %s48
    %p55 = scmp.eq.s32.totalorder %s17, 1
    %p56 = por %p54, %p55
    %p57 = scmp.ne.s32.totalorder %s48, %s49
    %p58 = scmp.eq.s32.totalorder %s17, 0
    %p59 = por %p57, %p58
    %p60 = scmp.ne.s32.totalorder %s48, %s49
    %p61 = scmp.eq.s32.totalorder %s18, 1
    %p62 = por %p60, %p61
    %p64 = scmp.ne.s32.totalorder %s49, %s63
    %p65 = scmp.eq.s32.totalorder %s18, 0
    %p66 = por %p64, %p65
    %s68 = sadd.s32 %s67, 1
    %p71 = scmp.eq.s32.totalorder %s12, 1
    %p72 = scmp.ne.s32.totalorder %s67, %s69
    %p73 = scmp.eq.s32.totalorder %s12, 0
    %p74 = por %p72, %p73
    %p75 = scmp.ne.s32.totalorder %s67, %s69
    %p76 = scmp.eq.s32.totalorder %s17, 1
    %p77 = por %p75, %p76
    %p78 = scmp.ne.s32.totalorder %s69, %s70
    %p79 = scmp.eq.s32.totalorder %s17, 0
    %p80 = por %p78, %p79
    %p81 = scmp.ne.s32.totalorder %s69, %s70
    %p82 = scmp.eq.s32.totalorder %s18, 1
    %p83 = por %p81, %p82
    %p85 = scmp.ne.s32.totalorder %s70, %s84
    %p86 = scmp.eq.s32.totalorder %s18, 0
    %p87 = por %p85, %p86
    %s89 = sadd.s32 %s88, 1
    %p92 = scmp.eq.s32.totalorder %s12, 1
    %p93 = scmp.ne.s32.totalorder %s88, %s90
    %p94 = scmp.eq.s32.totalorder %s12, 0
    %p95 = por %p93, %p94
    %p96 = scmp.ne.s32.totalorder %s88, %s90
    %p97 = scmp.eq.s32.totalorder %s17, 1
    %p98 = por %p96, %p97
    %p99 = scmp.ne.s32.totalorder %s90, %s91
    %p100 = scmp.eq.s32.totalorder %s17, 0
    %p101 = por %p99, %p100
    %p102 = scmp.ne.s32.totalorder %s90, %s91
    %p103 = scmp.eq.s32.totalorder %s18, 1
    %p104 = por %p102, %p103
    %p106 = scmp.ne.s32.totalorder %s91, %s105
    %p107 = scmp.eq.s32.totalorder %s18, 0
    %p108 = por %p106, %p107
    %s109 = ssub.s32 %s12, %s19
    %p110 = scmp.eq.s32.totalorder %s109, 0
    %s112 = sadd.s32 %s111, 1
    %s113 = scalar_select %p110, %s111, %s112
    %p116 = pneg %p110
    %p117 = scmp.eq.s32.totalorder %s12, 1
    %p118 = por %p116, %p117
    %p119 = scmp.ne.s32.totalorder %s111, %s114
    %p120 = scmp.eq.s32.totalorder %s12, 0
    %p121 = por %p119, %p120
    %p122 = scmp.ne.s32.totalorder %s111, %s114
    %p123 = scmp.eq.s32.totalorder %s17, 1
    %p124 = por %p122, %p123
    %p125 = scmp.ne.s32.totalorder %s114, %s115
    %p126 = scmp.eq.s32.totalorder %s17, 0
    %p127 = por %p125, %p126
    %p128 = scmp.ne.s32.totalorder %s114, %s115
    %p129 = scmp.eq.s32.totalorder %s18, 1
    %p130 = por %p128, %p129
    %p132 = scmp.ne.s32.totalorder %s115, %s131
    %p133 = scmp.eq.s32.totalorder %s18, 0
    %p134 = por %p132, %p133
    %s135 = ssub.s32 %s12, %s19
    %p136 = scmp.eq.s32.totalorder %s135, 0
    %s138 = sadd.s32 %s137, 1
    %s139 = scalar_select %p136, %s137, %s138
    %p142 = pneg %p136
    %p143 = scmp.eq.s32.totalorder %s12, 1
    %p144 = por %p142, %p143
    %p145 = scmp.ne.s32.totalorder %s137, %s140
    %p146 = scmp.eq.s32.totalorder %s12, 0
    %p147 = por %p145, %p146
    %p148 = scmp.ne.s32.totalorder %s137, %s140
    %p149 = scmp.eq.s32.totalorder %s17, 1
    %p150 = por %p148, %p149
    %p151 = scmp.ne.s32.totalorder %s140, %s141
    %p152 = scmp.eq.s32.totalorder %s17, 0
    %p153 = por %p151, %p152
    %p154 = scmp.ne.s32.totalorder %s140, %s141
    %p155 = scmp.eq.s32.totalorder %s18, 1
    %p156 = por %p154, %p155
    %p158 = scmp.ne.s32.totalorder %s141, %s157
    %p159 = scmp.eq.s32.totalorder %s18, 0
    %p160 = por %p158, %p159
    %p161 = scmp.le.s32.totalorder 1, %s12
    %p162 = scmp.lt.s32.totalorder %s12, 3
    %p163 = pnand %p161, %p162
    %p164 = pneg %p163
    // Predicated region
    $region9: #{bottleneck_forward.5} parent=5 // pred_check
      _
    $region10: #{bottleneck_forward.5} parent=5 // pred_check_branch
      %166 = sbr.rel (%p163) target = $region12
    $region11: #{bottleneck_forward.5} parent=5 // pred_region
      %s167 = ssub.s32 %s12, 1
      // Predicated region
      $region13: #{bottleneck_forward.5} parent=11 // pred_check
        %p168 = pneg %p59
      $region14: #{bottleneck_forward.5} parent=11 // pred_check_branch
        %170 = sbr.rel (%p168) target = $region16
      $region15: #{bottleneck_forward.5} parent=11 // pred_region
        _
      $region16: #{bottleneck_forward.5} parent=11 // pred_fallthru
        _
      // Predicated region
      $region17: #{bottleneck_forward.5} parent=11 // pred_check
        %p171 = pneg %p80
      $region18: #{bottleneck_forward.5} parent=11 // pred_check_branch
        %173 = sbr.rel (%p171) target = $region20
      $region19: #{bottleneck_forward.5} parent=11 // pred_region
        _
      $region20: #{bottleneck_forward.5} parent=11 // pred_fallthru
        _
      // Predicated region
      $region21: #{bottleneck_forward.5} parent=11 // pred_check
        %p174 = pneg %p101
      $region22: #{bottleneck_forward.5} parent=11 // pred_check_branch
        %176 = sbr.rel (%p174) target = $region24
      $region23: #{bottleneck_forward.5} parent=11 // pred_region
        _
      $region24: #{bottleneck_forward.5} parent=11 // pred_fallthru
        _
    $region12: #{bottleneck_forward.5} parent=5 // pred_fallthru
      _
    %p177 = scmp.lt.s32.totalorder %s12, 2
    // Predicated region
    $region25: #{bottleneck_forward.5} parent=5 // pred_check
      %p178 = pneg %p177
    $region26: #{bottleneck_forward.5} parent=5 // pred_check_branch
      %180 = sbr.rel (%p178) target = $region28
    $region27: #{bottleneck_forward.5} parent=5 // pred_region
      // Predicated region
      $region29: #{bottleneck_forward.5} parent=27 // pred_check
        %p181 = pneg %p32
      $region30: #{bottleneck_forward.5} parent=27 // pred_check_branch
        %183 = sbr.rel (%p181) target = $region32
      $region31: #{bottleneck_forward.5} parent=27 // pred_region
        %p184 = scmp.lt.s32.totalorder %s12, 1
        %s185 = scalar_select %p184, %s12, 1
        %s186 = smul.addr %s185, 54
        %s187 = smul.addr %s186, 4
        %s188 = scalar_lea.vmem %s0, %s187
      $region32: #{bottleneck_forward.5} parent=27 // pred_fallthru
        _
    $region28: #{bottleneck_forward.5} parent=5 // pred_fallthru
      _
    %p189 = scmp.le.s32.totalorder 1, %s12
    %p190 = scmp.lt.s32.totalorder %s12, 3
    %p191 = pnand %p189, %p190
    %p192 = pneg %p191
    // Predicated region
    $region33: #{bottleneck_forward.5} parent=5 // pred_check
      _
    $region34: #{bottleneck_forward.5} parent=5 // pred_check_branch
      %194 = sbr.rel (%p191) target = $region36
    $region35: #{bottleneck_forward.5} parent=5 // pred_region
      %s195 = ssub.s32 %s12, 1
      %p196 = scmp.lt.s32.totalorder %s17, 1
      %s197 = scalar_select %p196, %s17, 1
      %s198 = smul.addr %s197, 54
      %s199 = smul.addr %s198, 4
      %s200 = scalar_lea.vmem %s0, %s199
      %p201 = pneg %p38
      %p202 = pneg %p35
      %p203 = pneg %p59
      %p204 = pneg %p56
      %p205 = pneg %p80
      %p206 = pneg %p77
      %p207 = pneg %p101
      %p208 = pneg %p98
      %p209 = pneg %p127
      %p210 = pneg %p124
      %p211 = scmp.lt.s32.totalorder %s17, 1
      %s212 = scalar_select %p211, %s17, 1
      %s213 = smul.addr %s212, 32
      %s214 = smul.addr %s213, 4
      %s215 = scalar_lea.vmem %s4, %s214
      %p216 = pneg %p153
      %p217 = pneg %p150
      %p218 = scmp.lt.s32.totalorder %s17, 1
      %s219 = scalar_select %p218, %s17, 1
      %s220 = smul.addr %s219, 2
      %s221 = scalar_lea.vmem %s5, %s220
      %p222 = scmp.lt.s32.totalorder %s17, 1
      %s223 = scalar_select %p222, %s17, 1
      %s224 = smul.addr %s223, 54
      %s225 = smul.addr %s224, 4
      %s226 = scalar_lea.vmem %s0, %s225
      %p227 = scmp.lt.s32.totalorder %s17, 1
      %s228 = scalar_select %p227, %s17, 1
      %s229 = smul.addr %s228, 32
      %s230 = smul.addr %s229, 4
      %s231 = scalar_lea.vmem %s4, %s230
      %p232 = scmp.lt.s32.totalorder %s17, 1
      %s233 = scalar_select %p232, %s17, 1
      %s234 = smul.addr %s233, 2
      %s235 = scalar_lea.vmem %s5, %s234
      %v237 = vld [vmem:[%s226] sm:$0xf]
      %v238 = vld [vmem:[%s226 + $0x4] sm:$0xf]
      %v239 = vld [vmem:[%s226 + $0x8] sm:$0x1]
      %v240 = vld [vmem:[%s226 + $0xc] sm:$0xf]
      %v241 = vld [vmem:[%s226 + $0x10] sm:$0xf]
      %v242 = vld [vmem:[%s226 + $0x14] sm:$0x1]
      %v243 = vld [vmem:[%s226 + $0x18] sm:$0xf]
      %v244 = vld [vmem:[%s226 + $0x1c] sm:$0xf]
      %v245 = vld [vmem:[%s226 + $0x20] sm:$0x1]
      %v246 = vld [vmem:[%s226 + $0x24] sm:$0xf]
      %v247 = vld [vmem:[%s226 + $0x28] sm:$0xf]
      %v248 = vld [vmem:[%s226 + $0x2c] sm:$0x1]
      %v249 = vld [vmem:[%s226 + $0x30] sm:$0xf]
      %v250 = vld [vmem:[%s226 + $0x34] sm:$0xf]
      %v251 = vld [vmem:[%s226 + $0x38] sm:$0x1]
      %v252 = vld [vmem:[%s226 + $0x3c] sm:$0xf]
      %v253 = vld [vmem:[%s226 + $0x40] sm:$0xf]
      %v254 = vld [vmem:[%s226 + $0x44] sm:$0x1]
      %v255 = vld [vmem:[%s226 + $0x48] sm:$0xf]
      %v256 = vld [vmem:[%s226 + $0x4c] sm:$0xf]
      %v257 = vld [vmem:[%s226 + $0x50] sm:$0x1]
      %v258 = vld [vmem:[%s226 + $0x54] sm:$0xf]
      %v259 = vld [vmem:[%s226 + $0x58] sm:$0xf]
      %v260 = vld [vmem:[%s226 + $0x5c] sm:$0x1]
      %v261 = vld [vmem:[%s226 + $0x60] sm:$0xf]
      %v262 = vld [vmem:[%s226 + $0x64] sm:$0xf]
      %v263 = vld [vmem:[%s226 + $0x68] sm:$0x1]
      %v264 = vld [vmem:[%s226 + $0x6c] sm:$0xf]
      %v265 = vld [vmem:[%s226 + $0x70] sm:$0xf]
      %v266 = vld [vmem:[%s226 + $0x74] sm:$0x1]
      %v267 = vld [vmem:[%s226 + $0x78] sm:$0xf]
      %v268 = vld [vmem:[%s226 + $0x7c] sm:$0xf]
      %v269 = vld [vmem:[%s226 + $0x80] sm:$0x1]
      %v270 = vld [vmem:[%s226 + $0x84] sm:$0xf]
      %v271 = vld [vmem:[%s226 + $0x88] sm:$0xf]
      %v272 = vld [vmem:[%s226 + $0x8c] sm:$0x1]
      %v273 = vld [vmem:[%s226 + $0x90] sm:$0xf]
      %v274 = vld [vmem:[%s226 + $0x94] sm:$0xf]
      %v275 = vld [vmem:[%s226 + $0x98] sm:$0x1]
      %v276 = vld [vmem:[%s226 + $0x9c] sm:$0xf]
      %v277 = vld [vmem:[%s226 + $0xa0] sm:$0xf]
      %v278 = vld [vmem:[%s226 + $0xa4] sm:$0x1]
      %v279 = vld [vmem:[%s226 + $0xa8] sm:$0xf]
      %v280 = vld [vmem:[%s226 + $0xac] sm:$0xf]
      %v281 = vld [vmem:[%s226 + $0xb0] sm:$0x1]
      %v282 = vld [vmem:[%s226 + $0xb4] sm:$0xf]
      %v283 = vld [vmem:[%s226 + $0xb8] sm:$0xf]
      %v284 = vld [vmem:[%s226 + $0xbc] sm:$0x1]
      %v285 = vld [vmem:[%s226 + $0xc0] sm:$0xf]
      %v286 = vld [vmem:[%s226 + $0xc4] sm:$0xf]
      %v287 = vld [vmem:[%s226 + $0xc8] sm:$0x1]
      %v288 = vld [vmem:[%s226 + $0xcc] sm:$0xf]
      %v289 = vld [vmem:[%s226 + $0xd0] sm:$0xf]
      %v290 = vld [vmem:[%s226 + $0xd4] sm:$0x1]
      %v291 = vunpack.c.l.bf16 %v237
      %v292 = vunpack.c.l.bf16 %v238
      %v293 = vunpack.c.l.bf16 %v239
      %v294 = vunpack.c.l.bf16 %v240
      %v295 = vunpack.c.l.bf16 %v241
      %v296 = vunpack.c.l.bf16 %v242
      %v297 = vunpack.c.l.bf16 %v243
      %v298 = vunpack.c.l.bf16 %v244
      %v299 = vunpack.c.l.bf16 %v245
      %v300 = vunpack.c.l.bf16 %v246
      %v301 = vunpack.c.l.bf16 %v247
      %v302 = vunpack.c.l.bf16 %v248
      %v303 = vunpack.c.l.bf16 %v249
      %v304 = vunpack.c.l.bf16 %v250
      %v305 = vunpack.c.l.bf16 %v251
      %v306 = vunpack.c.l.bf16 %v252
      %v307 = vunpack.c.l.bf16 %v253
      %v308 = vunpack.c.l.bf16 %v254
      %v309 = vunpack.c.l.bf16 %v255
      %v310 = vunpack.c.l.bf16 %v256
      %v311 = vunpack.c.l.bf16 %v257
      %v312 = vunpack.c.l.bf16 %v258
      %v313 = vunpack.c.l.bf16 %v259
      %v314 = vunpack.c.l.bf16 %v260
      %v315 = vunpack.c.l.bf16 %v261
      %v316 = vunpack.c.l.bf16 %v262
      %v317 = vunpack.c.l.bf16 %v263
      %v318 = vunpack.c.l.bf16 %v264
      %v319 = vunpack.c.l.bf16 %v265
      %v320 = vunpack.c.l.bf16 %v266
      %v321 = vunpack.c.l.bf16 %v267
      %v322 = vunpack.c.l.bf16 %v268
      %v323 = vunpack.c.l.bf16 %v269
      %v324 = vunpack.c.l.bf16 %v270
      %v325 = vunpack.c.l.bf16 %v271
      %v326 = vunpack.c.l.bf16 %v272
      %v327 = vunpack.c.l.bf16 %v273
      %v328 = vunpack.c.l.bf16 %v274
      %v329 = vunpack.c.l.bf16 %v275
      %v330 = vunpack.c.l.bf16 %v276
      %v331 = vunpack.c.l.bf16 %v277
      %v332 = vunpack.c.l.bf16 %v278
      %v333 = vunpack.c.l.bf16 %v279
      %v334 = vunpack.c.l.bf16 %v280
      %v335 = vunpack.c.l.bf16 %v281
      %v336 = vunpack.c.l.bf16 %v282
      %v337 = vunpack.c.l.bf16 %v283
      %v338 = vunpack.c.l.bf16 %v284
      %v339 = vunpack.c.l.bf16 %v285
      %v340 = vunpack.c.l.bf16 %v286
      %v341 = vunpack.c.l.bf16 %v287
      %v342 = vunpack.c.l.bf16 %v288
      %v343 = vunpack.c.l.bf16 %v289
      %v344 = vunpack.c.l.bf16 %v290
      %v345 = vld [vmem:[%s2] sm:$0x1]
      %v347 = vlaneseq
      %v348 = vshrl.u32 %v347, 7
      %v349 = vsub.s32 0, %v348
      %v350 = vrot.slane %v345, %v349
      %v352 = vmul.f32 %v291, %v350
      %v353 = vmul.f32 %v292, %v350
      %v354 = vmul.f32 %v293, %v350
      %v355 = vmul.f32 %v294, %v350
      %v356 = vmul.f32 %v295, %v350
      %v357 = vmul.f32 %v296, %v350
      %v358 = vmul.f32 %v297, %v350
      %v359 = vmul.f32 %v298, %v350
      %v360 = vmul.f32 %v299, %v350
      %v361 = vmul.f32 %v300, %v350
      %v362 = vmul.f32 %v301, %v350
      %v363 = vmul.f32 %v302, %v350
      %v364 = vmul.f32 %v303, %v350
      %v365 = vmul.f32 %v304, %v350
      %v366 = vmul.f32 %v305, %v350
      %v367 = vmul.f32 %v306, %v350
      %v368 = vmul.f32 %v307, %v350
      %v369 = vmul.f32 %v308, %v350
      %v370 = vmul.f32 %v309, %v350
      %v371 = vmul.f32 %v310, %v350
      %v372 = vmul.f32 %v311, %v350
      %v373 = vmul.f32 %v312, %v350
      %v374 = vmul.f32 %v313, %v350
      %v375 = vmul.f32 %v314, %v350
      %v376 = vmul.f32 %v315, %v350
      %v377 = vmul.f32 %v316, %v350
      %v378 = vmul.f32 %v317, %v350
      %v379 = vmul.f32 %v318, %v350
      %v380 = vmul.f32 %v319, %v350
      %v381 = vmul.f32 %v320, %v350
      %v382 = vmul.f32 %v321, %v350
      %v383 = vmul.f32 %v322, %v350
      %v384 = vmul.f32 %v323, %v350
      %v385 = vmul.f32 %v324, %v350
      %v386 = vmul.f32 %v325, %v350
      %v387 = vmul.f32 %v326, %v350
      %v388 = vmul.f32 %v327, %v350
      %v389 = vmul.f32 %v328, %v350
      %v390 = vmul.f32 %v329, %v350
      %v391 = vmul.f32 %v330, %v350
      %v392 = vmul.f32 %v331, %v350
      %v393 = vmul.f32 %v332, %v350
      %v394 = vmul.f32 %v333, %v350
      %v395 = vmul.f32 %v334, %v350
      %v396 = vmul.f32 %v335, %v350
      %v397 = vmul.f32 %v336, %v350
      %v398 = vmul.f32 %v337, %v350
      %v399 = vmul.f32 %v338, %v350
      %v400 = vmul.f32 %v339, %v350
      %v401 = vmul.f32 %v340, %v350
      %v402 = vmul.f32 %v341, %v350
      %v403 = vmul.f32 %v342, %v350
      %v404 = vmul.f32 %v343, %v350
      %v405 = vmul.f32 %v344, %v350
      %v406 = vld [vmem:[%s3] sm:$0x1]
      %v408 = vlaneseq
      %v409 = vshrl.u32 %v408, 7
      %v410 = vsub.s32 0, %v409
      %v411 = vrot.slane %v406, %v410
      %v413 = vadd.f32 %v352, %v411
      %v414 = vadd.f32 %v353, %v411
      %v415 = vadd.f32 %v354, %v411
      %v416 = vadd.f32 %v355, %v411
      %v417 = vadd.f32 %v356, %v411
      %v418 = vadd.f32 %v357, %v411
      %v419 = vadd.f32 %v358, %v411
      %v420 = vadd.f32 %v359, %v411
      %v421 = vadd.f32 %v360, %v411
      %v422 = vadd.f32 %v361, %v411
      %v423 = vadd.f32 %v362, %v411
      %v424 = vadd.f32 %v363, %v411
      %v425 = vadd.f32 %v364, %v411
      %v426 = vadd.f32 %v365, %v411
      %v427 = vadd.f32 %v366, %v411
      %v428 = vadd.f32 %v367, %v411
      %v429 = vadd.f32 %v368, %v411
      %v430 = vadd.f32 %v369, %v411
      %v431 = vadd.f32 %v370, %v411
      %v432 = vadd.f32 %v371, %v411
      %v433 = vadd.f32 %v372, %v411
      %v434 = vadd.f32 %v373, %v411
      %v435 = vadd.f32 %v374, %v411
      %v436 = vadd.f32 %v375, %v411
      %v437 = vadd.f32 %v376, %v411
      %v438 = vadd.f32 %v377, %v411
      %v439 = vadd.f32 %v378, %v411
      %v440 = vadd.f32 %v379, %v411
      %v441 = vadd.f32 %v380, %v411
      %v442 = vadd.f32 %v381, %v411
      %v443 = vadd.f32 %v382, %v411
      %v444 = vadd.f32 %v383, %v411
      %v445 = vadd.f32 %v384, %v411
      %v446 = vadd.f32 %v385, %v411
      %v447 = vadd.f32 %v386, %v411
      %v448 = vadd.f32 %v387, %v411
      %v449 = vadd.f32 %v388, %v411
      %v450 = vadd.f32 %v389, %v411
      %v451 = vadd.f32 %v390, %v411
      %v452 = vadd.f32 %v391, %v411
      %v453 = vadd.f32 %v392, %v411
      %v454 = vadd.f32 %v393, %v411
      %v455 = vadd.f32 %v394, %v411
      %v456 = vadd.f32 %v395, %v411
      %v457 = vadd.f32 %v396, %v411
      %v458 = vadd.f32 %v397, %v411
      %v459 = vadd.f32 %v398, %v411
      %v460 = vadd.f32 %v399, %v411
      %v461 = vadd.f32 %v400, %v411
      %v462 = vadd.f32 %v401, %v411
      %v463 = vadd.f32 %v402, %v411
      %v464 = vadd.f32 %v403, %v411
      %v465 = vadd.f32 %v404, %v411
      %v466 = vadd.f32 %v405, %v411
      %vm467 = vcmp.ge.f32.partialorder %v413, 0.0
      %vm468 = vcmp.ge.f32.partialorder %v414, 0.0
      %vm469 = vcmp.ge.f32.partialorder %v415, 0.0
      %vm470 = vcmp.ge.f32.partialorder %v416, 0.0
      %vm471 = vcmp.ge.f32.partialorder %v417, 0.0
      %vm472 = vcmp.ge.f32.partialorder %v418, 0.0
      %vm473 = vcmp.ge.f32.partialorder %v419, 0.0
      %vm474 = vcmp.ge.f32.partialorder %v420, 0.0
      %vm475 = vcmp.ge.f32.partialorder %v421, 0.0
      %vm476 = vcmp.ge.f32.partialorder %v422, 0.0
      %vm477 = vcmp.ge.f32.partialorder %v423, 0.0
      %vm478 = vcmp.ge.f32.partialorder %v424, 0.0
      %vm479 = vcmp.ge.f32.partialorder %v425, 0.0
      %vm480 = vcmp.ge.f32.partialorder %v426, 0.0
      %vm481 = vcmp.ge.f32.partialorder %v427, 0.0
      %vm482 = vcmp.ge.f32.partialorder %v428, 0.0
      %vm483 = vcmp.ge.f32.partialorder %v429, 0.0
      %vm484 = vcmp.ge.f32.partialorder %v430, 0.0
      %vm485 = vcmp.ge.f32.partialorder %v431, 0.0
      %vm486 = vcmp.ge.f32.partialorder %v432, 0.0
      %vm487 = vcmp.ge.f32.partialorder %v433, 0.0
      %vm488 = vcmp.ge.f32.partialorder %v434, 0.0
      %vm489 = vcmp.ge.f32.partialorder %v435, 0.0
      %vm490 = vcmp.ge.f32.partialorder %v436, 0.0
      %vm491 = vcmp.ge.f32.partialorder %v437, 0.0
      %vm492 = vcmp.ge.f32.partialorder %v438, 0.0
      %vm493 = vcmp.ge.f32.partialorder %v439, 0.0
      %vm494 = vcmp.ge.f32.partialorder %v440, 0.0
      %vm495 = vcmp.ge.f32.partialorder %v441, 0.0
      %vm496 = vcmp.ge.f32.partialorder %v442, 0.0
      %vm497 = vcmp.ge.f32.partialorder %v443, 0.0
      %vm498 = vcmp.ge.f32.partialorder %v444, 0.0
      %vm499 = vcmp.ge.f32.partialorder %v445, 0.0
      %vm500 = vcmp.ge.f32.partialorder %v446, 0.0
      %vm501 = vcmp.ge.f32.partialorder %v447, 0.0
      %vm502 = vcmp.ge.f32.partialorder %v448, 0.0
      %vm503 = vcmp.ge.f32.partialorder %v449, 0.0
      %vm504 = vcmp.ge.f32.partialorder %v450, 0.0
      %vm505 = vcmp.ge.f32.partialorder %v451, 0.0
      %vm506 = vcmp.ge.f32.partialorder %v452, 0.0
      %vm507 = vcmp.ge.f32.partialorder %v453, 0.0
      %vm508 = vcmp.ge.f32.partialorder %v454, 0.0
      %vm509 = vcmp.ge.f32.partialorder %v455, 0.0
      %vm510 = vcmp.ge.f32.partialorder %v456, 0.0
      %vm511 = vcmp.ge.f32.partialorder %v457, 0.0
      %vm512 = vcmp.ge.f32.partialorder %v458, 0.0
      %vm513 = vcmp.ge.f32.partialorder %v459, 0.0
      %vm514 = vcmp.ge.f32.partialorder %v460, 0.0
      %vm515 = vcmp.ge.f32.partialorder %v461, 0.0
      %vm516 = vcmp.ge.f32.partialorder %v462, 0.0
      %vm517 = vcmp.ge.f32.partialorder %v463, 0.0
      %vm518 = vcmp.ge.f32.partialorder %v464, 0.0
      %vm519 = vcmp.ge.f32.partialorder %v465, 0.0
      %vm520 = vcmp.ge.f32.partialorder %v466, 0.0
      %v521 = vmul.f32 %v413, 0.1
      %v522 = vmul.f32 %v414, 0.1
      %v523 = vmul.f32 %v415, 0.1
      %v524 = vmul.f32 %v416, 0.1
      %v525 = vmul.f32 %v417, 0.1
      %v526 = vmul.f32 %v418, 0.1
      %v527 = vmul.f32 %v419, 0.1
      %v528 = vmul.f32 %v420, 0.1
      %v529 = vmul.f32 %v421, 0.1
      %v530 = vmul.f32 %v422, 0.1
      %v531 = vmul.f32 %v423, 0.1
      %v532 = vmul.f32 %v424, 0.1
      %v533 = vmul.f32 %v425, 0.1
      %v534 = vmul.f32 %v426, 0.1
      %v535 = vmul.f32 %v427, 0.1
      %v536 = vmul.f32 %v428, 0.1
      %v537 = vmul.f32 %v429, 0.1
      %v538 = vmul.f32 %v430, 0.1
      %v539 = vmul.f32 %v431, 0.1
      %v540 = vmul.f32 %v432, 0.1
      %v541 = vmul.f32 %v433, 0.1
      %v542 = vmul.f32 %v434, 0.1
      %v543 = vmul.f32 %v435, 0.1
      %v544 = vmul.f32 %v436, 0.1
      %v545 = vmul.f32 %v437, 0.1
      %v546 = vmul.f32 %v438, 0.1
      %v547 = vmul.f32 %v439, 0.1
      %v548 = vmul.f32 %v440, 0.1
      %v549 = vmul.f32 %v441, 0.1
      %v550 = vmul.f32 %v442, 0.1
      %v551 = vmul.f32 %v443, 0.1
      %v552 = vmul.f32 %v444, 0.1
      %v553 = vmul.f32 %v445, 0.1
      %v554 = vmul.f32 %v446, 0.1
      %v555 = vmul.f32 %v447, 0.1
      %v556 = vmul.f32 %v448, 0.1
      %v557 = vmul.f32 %v449, 0.1
      %v558 = vmul.f32 %v450, 0.1
      %v559 = vmul.f32 %v451, 0.1
      %v560 = vmul.f32 %v452, 0.1
      %v561 = vmul.f32 %v453, 0.1
      %v562 = vmul.f32 %v454, 0.1
      %v563 = vmul.f32 %v455, 0.1
      %v564 = vmul.f32 %v456, 0.1
      %v565 = vmul.f32 %v457, 0.1
      %v566 = vmul.f32 %v458, 0.1
      %v567 = vmul.f32 %v459, 0.1
      %v568 = vmul.f32 %v460, 0.1
      %v569 = vmul.f32 %v461, 0.1
      %v570 = vmul.f32 %v462, 0.1
      %v571 = vmul.f32 %v463, 0.1
      %v572 = vmul.f32 %v464, 0.1
      %v573 = vmul.f32 %v465, 0.1
      %v574 = vmul.f32 %v466, 0.1
      %v575 = vsel %vm467, %v413, %v521
      %v576 = vsel %vm468, %v414, %v522
      %v577 = vsel %vm469, %v415, %v523
      %v578 = vsel %vm470, %v416, %v524
      %v579 = vsel %vm471, %v417, %v525
      %v580 = vsel %vm472, %v418, %v526
      %v581 = vsel %vm473, %v419, %v527
      %v582 = vsel %vm474, %v420, %v528
      %v583 = vsel %vm475, %v421, %v529
      %v584 = vsel %vm476, %v422, %v530
      %v585 = vsel %vm477, %v423, %v531
      %v586 = vsel %vm478, %v424, %v532
      %v587 = vsel %vm479, %v425, %v533
      %v588 = vsel %vm480, %v426, %v534
      %v589 = vsel %vm481, %v427, %v535
      %v590 = vsel %vm482, %v428, %v536
      %v591 = vsel %vm483, %v429, %v537
      %v592 = vsel %vm484, %v430, %v538
      %v593 = vsel %vm485, %v431, %v539
      %v594 = vsel %vm486, %v432, %v540
      %v595 = vsel %vm487, %v433, %v541
      %v596 = vsel %vm488, %v434, %v542
      %v597 = vsel %vm489, %v435, %v543
      %v598 = vsel %vm490, %v436, %v544
      %v599 = vsel %vm491, %v437, %v545
      %v600 = vsel %vm492, %v438, %v546
      %v601 = vsel %vm493, %v439, %v547
      %v602 = vsel %vm494, %v440, %v548
      %v603 = vsel %vm495, %v441, %v549
      %v604 = vsel %vm496, %v442, %v550
      %v605 = vsel %vm497, %v443, %v551
      %v606 = vsel %vm498, %v444, %v552
      %v607 = vsel %vm499, %v445, %v553
      %v608 = vsel %vm500, %v446, %v554
      %v609 = vsel %vm501, %v447, %v555
      %v610 = vsel %vm502, %v448, %v556
      %v611 = vsel %vm503, %v449, %v557
      %v612 = vsel %vm504, %v450, %v558
      %v613 = vsel %vm505, %v451, %v559
      %v614 = vsel %vm506, %v452, %v560
      %v615 = vsel %vm507, %v453, %v561
      %v616 = vsel %vm508, %v454, %v562
      %v617 = vsel %vm509, %v455, %v563
      %v618 = vsel %vm510, %v456, %v564
      %v619 = vsel %vm511, %v457, %v565
      %v620 = vsel %vm512, %v458, %v566
      %v621 = vsel %vm513, %v459, %v567
      %v622 = vsel %vm514, %v460, %v568
      %v623 = vsel %vm515, %v461, %v569
      %v624 = vsel %vm516, %v462, %v570
      %v625 = vsel %vm517, %v463, %v571
      %v626 = vsel %vm518, %v464, %v572
      %v627 = vsel %vm519, %v465, %v573
      %v628 = vsel %vm520, %v466, %v574
      %v629 = vlaneseq
      %v630 = vshrl.u32 %v629, 7
      %v631 = vadd.s32 %v630, 8
      %v632 = vadd.s32 %v630, 16
      %vm633 = vcmp.ge.s32.totalorder %v630, 1
      %vm634 = vcmp.ge.s32.totalorder %v631, 1
      %vm635 = vcmp.ge.s32.totalorder %v632, 1
      %vm636 = vmand 0, %vm633
      %vm637 = vmand 0, %vm634
      %vm638 = vmand 0, %vm635
      %vm639 = vmand 1, %vm633
      %vm640 = vmand 1, %vm634
      %vm641 = vmand 1, %vm635
      %vm642 = vcmp.lt.s32.totalorder %v630, 17
      %vm643 = vcmp.lt.s32.totalorder %v631, 17
      %vm644 = vcmp.lt.s32.totalorder %v632, 17
      %vm645 = vmand %vm636, %vm642
      %vm646 = vmand %vm637, %vm643
      %vm647 = vmand %vm638, %vm644
      %vm648 = vmand %vm639, %vm642
      %vm649 = vmand %vm640, %vm643
      %vm650 = vmand %vm641, %vm644
      %v651 = vsel %vm645, %v575, 0.0
      %v652 = vsel %vm646, %v576, 0.0
      %v653 = vsel %vm647, %v577, 0.0
      %v654 = vsel %vm648, %v578, 0.0
      %v655 = vsel %vm649, %v579, 0.0
      %v656 = vsel %vm650, %v580, 0.0
      %v657 = vsel %vm648, %v581, 0.0
      %v658 = vsel %vm649, %v582, 0.0
      %v659 = vsel %vm650, %v583, 0.0
      %v660 = vsel %vm648, %v584, 0.0
      %v661 = vsel %vm649, %v585, 0.0
      %v662 = vsel %vm650, %v586, 0.0
      %v663 = vsel %vm648, %v587, 0.0
      %v664 = vsel %vm649, %v588, 0.0
      %v665 = vsel %vm650, %v589, 0.0
      %v666 = vsel %vm648, %v590, 0.0
      %v667 = vsel %vm649, %v591, 0.0
      %v668 = vsel %vm650, %v592, 0.0
      %v669 = vsel %vm648, %v593, 0.0
      %v670 = vsel %vm649, %v594, 0.0
      %v671 = vsel %vm650, %v595, 0.0
      %v672 = vsel %vm648, %v596, 0.0
      %v673 = vsel %vm649, %v597, 0.0
      %v674 = vsel %vm650, %v598, 0.0
      %v675 = vsel %vm648, %v599, 0.0
      %v676 = vsel %vm649, %v600, 0.0
      %v677 = vsel %vm650, %v601, 0.0
      %v678 = vsel %vm648, %v602, 0.0
      %v679 = vsel %vm649, %v603, 0.0
      %v680 = vsel %vm650, %v604, 0.0
      %v681 = vsel %vm648, %v605, 0.0
      %v682 = vsel %vm649, %v606, 0.0
      %v683 = vsel %vm650, %v607, 0.0
      %v684 = vsel %vm648, %v608, 0.0
      %v685 = vsel %vm649, %v609, 0.0
      %v686 = vsel %vm650, %v610, 0.0
      %v687 = vsel %vm648, %v611, 0.0
      %v688 = vsel %vm649, %v612, 0.0
      %v689 = vsel %vm650, %v613, 0.0
      %v690 = vsel %vm648, %v614, 0.0
      %v691 = vsel %vm649, %v615, 0.0
      %v692 = vsel %vm650, %v616, 0.0
      %v693 = vsel %vm648, %v617, 0.0
      %v694 = vsel %vm649, %v618, 0.0
      %v695 = vsel %vm650, %v619, 0.0
      %v696 = vsel %vm648, %v620, 0.0
      %v697 = vsel %vm649, %v621, 0.0
      %v698 = vsel %vm650, %v622, 0.0
      %v699 = vsel %vm648, %v623, 0.0
      %v700 = vsel %vm649, %v624, 0.0
      %v701 = vsel %vm650, %v625, 0.0
      %v702 = vsel %vm645, %v626, 0.0
      %v703 = vsel %vm646, %v627, 0.0
      %v704 = vsel %vm647, %v628, 0.0
      %v705 = vpack.c.bf16 %v652, %v651
      %v706 = vpack.c.bf16 %v653, %v653
      %v707 = vpack.c.bf16 %v655, %v654
      %v708 = vpack.c.bf16 %v656, %v656
      %v709 = vpack.c.bf16 %v658, %v657
      %v710 = vpack.c.bf16 %v659, %v659
      %v711 = vpack.c.bf16 %v661, %v660
      %v712 = vpack.c.bf16 %v662, %v662
      %v713 = vpack.c.bf16 %v664, %v663
      %v714 = vpack.c.bf16 %v665, %v665
      %v715 = vpack.c.bf16 %v667, %v666
      %v716 = vpack.c.bf16 %v668, %v668
      %v717 = vpack.c.bf16 %v670, %v669
      %v718 = vpack.c.bf16 %v671, %v671
      %v719 = vpack.c.bf16 %v673, %v672
      %v720 = vpack.c.bf16 %v674, %v674
      %v721 = vpack.c.bf16 %v676, %v675
      %v722 = vpack.c.bf16 %v677, %v677
      %v723 = vpack.c.bf16 %v679, %v678
      %v724 = vpack.c.bf16 %v680, %v680
      %v725 = vpack.c.bf16 %v682, %v681
      %v726 = vpack.c.bf16 %v683, %v683
      %v727 = vpack.c.bf16 %v685, %v684
      %v728 = vpack.c.bf16 %v686, %v686
      %v729 = vpack.c.bf16 %v688, %v687
      %v730 = vpack.c.bf16 %v689, %v689
      %v731 = vpack.c.bf16 %v691, %v690
      %v732 = vpack.c.bf16 %v692, %v692
      %v733 = vpack.c.bf16 %v694, %v693
      %v734 = vpack.c.bf16 %v695, %v695
      %v735 = vpack.c.bf16 %v697, %v696
      %v736 = vpack.c.bf16 %v698, %v698
      %v737 = vpack.c.bf16 %v700, %v699
      %v738 = vpack.c.bf16 %v701, %v701
      %v739 = vpack.c.bf16 %v703, %v702
      %v740 = vpack.c.bf16 %v704, %v704
      %v741 = vld [vmem:[%s1] sm:$0xf]
      %v742 = vld [vmem:[%s1 + $0x4] sm:$0xf]
      %vm743 = vsmask.f32 7424
      %v745 = vshrl.u32 %v705, 16
      %v747 = vshll.u32 %v705, 16
      %v749 = vrot.slane %v747, 1
      %v750 = vor.u32 %v745, %v749
      %v752 = vshll.u32 %v706, 16
      %v754 = vrot.slane %v752, 1
      %v755 = vsel %vm743, %v750, %v754
      %v757 = vshrl.u32 %v707, 16
      %v759 = vshll.u32 %v707, 16
      %v761 = vrot.slane %v759, 1
      %v762 = vor.u32 %v757, %v761
      %v764 = vshll.u32 %v708, 16
      %v766 = vrot.slane %v764, 1
      %v767 = vsel %vm743, %v762, %v766
      %v769 = vshrl.u32 %v709, 16
      %v771 = vshll.u32 %v709, 16
      %v773 = vrot.slane %v771, 1
      %v774 = vor.u32 %v769, %v773
      %v776 = vshll.u32 %v710, 16
      %v778 = vrot.slane %v776, 1
      %v779 = vsel %vm743, %v774, %v778
      %v781 = vshrl.u32 %v711, 16
      %v783 = vshll.u32 %v711, 16
      %v785 = vrot.slane %v783, 1
      %v786 = vor.u32 %v781, %v785
      %v788 = vshll.u32 %v712, 16
      %v790 = vrot.slane %v788, 1
      %v791 = vsel %vm743, %v786, %v790
      %v793 = vshrl.u32 %v713, 16
      %v795 = vshll.u32 %v713, 16
      %v797 = vrot.slane %v795, 1
      %v798 = vor.u32 %v793, %v797
      %v800 = vshll.u32 %v714, 16
      %v802 = vrot.slane %v800, 1
      %v803 = vsel %vm743, %v798, %v802
      %v805 = vshrl.u32 %v715, 16
      %v807 = vshll.u32 %v715, 16
      %v809 = vrot.slane %v807, 1
      %v810 = vor.u32 %v805, %v809
      %v812 = vshll.u32 %v716, 16
      %v814 = vrot.slane %v812, 1
      %v815 = vsel %vm743, %v810, %v814
      %v817 = vshrl.u32 %v717, 16
      %v819 = vshll.u32 %v717, 16
      %v821 = vrot.slane %v819, 1
      %v822 = vor.u32 %v817, %v821
      %v824 = vshll.u32 %v718, 16
      %v826 = vrot.slane %v824, 1
      %v827 = vsel %vm743, %v822, %v826
      %v829 = vshrl.u32 %v719, 16
      %v831 = vshll.u32 %v719, 16
      %v833 = vrot.slane %v831, 1
      %v834 = vor.u32 %v829, %v833
      %v836 = vshll.u32 %v720, 16
      %v838 = vrot.slane %v836, 1
      %v839 = vsel %vm743, %v834, %v838
      %v841 = vshrl.u32 %v721, 16
      %v843 = vshll.u32 %v721, 16
      %v845 = vrot.slane %v843, 1
      %v846 = vor.u32 %v841, %v845
      %v848 = vshll.u32 %v722, 16
      %v850 = vrot.slane %v848, 1
      %v851 = vsel %vm743, %v846, %v850
      %v853 = vshrl.u32 %v723, 16
      %v855 = vshll.u32 %v723, 16
      %v857 = vrot.slane %v855, 1
      %v858 = vor.u32 %v853, %v857
      %v860 = vshll.u32 %v724, 16
      %v862 = vrot.slane %v860, 1
      %v863 = vsel %vm743, %v858, %v862
      %v865 = vshrl.u32 %v725, 16
      %v867 = vshll.u32 %v725, 16
      %v869 = vrot.slane %v867, 1
      %v870 = vor.u32 %v865, %v869
      %v872 = vshll.u32 %v726, 16
      %v874 = vrot.slane %v872, 1
      %v875 = vsel %vm743, %v870, %v874
      %v877 = vshrl.u32 %v727, 16
      %v879 = vshll.u32 %v727, 16
      %v881 = vrot.slane %v879, 1
      %v882 = vor.u32 %v877, %v881
      %v884 = vshll.u32 %v728, 16
      %v886 = vrot.slane %v884, 1
      %v887 = vsel %vm743, %v882, %v886
      %v889 = vshrl.u32 %v729, 16
      %v891 = vshll.u32 %v729, 16
      %v893 = vrot.slane %v891, 1
      %v894 = vor.u32 %v889, %v893
      %v896 = vshll.u32 %v730, 16
      %v898 = vrot.slane %v896, 1
      %v899 = vsel %vm743, %v894, %v898
      %v901 = vshrl.u32 %v731, 16
      %v903 = vshll.u32 %v731, 16
      %v905 = vrot.slane %v903, 1
      %v906 = vor.u32 %v901, %v905
      %v908 = vshll.u32 %v732, 16
      %v910 = vrot.slane %v908, 1
      %v911 = vsel %vm743, %v906, %v910
      %v913 = vshrl.u32 %v733, 16
      %v915 = vshll.u32 %v733, 16
      %v917 = vrot.slane %v915, 1
      %v918 = vor.u32 %v913, %v917
      %v920 = vshll.u32 %v734, 16
      %v922 = vrot.slane %v920, 1
      %v923 = vsel %vm743, %v918, %v922
      %v925 = vshrl.u32 %v735, 16
      %v927 = vshll.u32 %v735, 16
      %v929 = vrot.slane %v927, 1
      %v930 = vor.u32 %v925, %v929
      %v932 = vshll.u32 %v736, 16
      %v934 = vrot.slane %v932, 1
      %v935 = vsel %vm743, %v930, %v934
      %s936 = scalar_lea.vmem %s1, 8
      %v937 = vld [vmem:[%s936] sm:$0xf]
      %v938 = vld [vmem:[%s936 + $0x4] sm:$0xf]
      %v941 = vunpack.c.l.b16 %v937
      %v942 = vunpack.c.l.b16 %v938
      %v943 = vpack.c.b16 %v942, %v941
      %vm945 = vcmask 130048
      %v947 = vsel %vm945, %v755, 0
      %v950 = vsel %vm945, %v767, 0
      %v953 = vsel %vm945, %v779, 0
      %v956 = vsel %vm945, %v791, 0
      %v959 = vsel %vm945, %v803, 0
      %v962 = vsel %vm945, %v815, 0
      %v965 = vsel %vm945, %v827, 0
      %v968 = vsel %vm945, %v839, 0
      %v971 = vsel %vm945, %v851, 0
      %v974 = vsel %vm945, %v863, 0
      %v977 = vsel %vm945, %v875, 0
      %v980 = vsel %vm945, %v887, 0
      %v983 = vsel %vm945, %v899, 0
      %v986 = vsel %vm945, %v911, 0
      %v989 = vsel %vm945, %v923, 0
      %v992 = vsel %vm945, %v935, 0
      %994 = vmatprep.subr.bf16.mxu0 0
      %995 = vmatpush1.bf16.msra.mxu0 %v943
      %996 = vmatprep.subr.bf16.mxu0 0
      %997 = vmatpush1.bf16.msra.mxu0 0
      %998 = vmatprep.subr.bf16.mxu0 0
      %999 = vmatpush1.bf16.msra.mxu0 0
      %1000 = vmatprep.subr.bf16.mxu0 0
      %1001 = vmatpush1.bf16.msra.mxu0 0
      %1002 = vmatprep.subr.bf16.mxu0 0
      %1003 = vmatpush1.bf16.msra.mxu0 0
      %1004 = vmatprep.subr.bf16.mxu0 0
      %1005 = vmatpush1.bf16.msra.mxu0 0
      %1006 = vmatprep.subr.bf16.mxu0 0
      %1007 = vmatpush1.bf16.msra.mxu0 0
      %1008 = vmatprep.subr.bf16.mxu0 0
      %1009 = vmatpush1.bf16.msra.mxu0 0
      %1010 = vmatprep.subr.bf16.mxu0 0
      %1011 = vmatpush1.bf16.msra.mxu0 0
      %1012 = vmatprep.subr.bf16.mxu0 0
      %1013 = vmatpush1.bf16.msra.mxu0 0
      %1014 = vmatprep.subr.bf16.mxu0 0
      %1015 = vmatpush1.bf16.msra.mxu0 0
      %1016 = vmatprep.subr.bf16.mxu0 0
      %1017 = vmatpush1.bf16.msra.mxu0 0
      %1018 = vmatprep.subr.bf16.mxu0 0
      %1019 = vmatpush1.bf16.msra.mxu0 0
      %1020 = vmatprep.subr.bf16.mxu0 0
      %1021 = vmatpush1.bf16.msra.mxu0 0
      %1022 = vmatprep.subr.bf16.mxu0 0
      %1023 = vmatpush1.bf16.msra.mxu0 0
      %1024 = vmatprep.subr.bf16.mxu0 0
      %1025 = vmatpush1.bf16.msra.mxu0 0
      %1026 = vmatprep.mubr.bf16.mxu0 0
      %1027 = vmatmul.mubr.bf16.gmra.mrb[0].mxu0 %v947
      %v1028 = vpop.f32.mrb[0].mxu0
      %v1029 = vadd.f32 0.0, %v1028
      %v1030 = vpop.f32.mrb[0].mxu0
      %v1031 = vpop.f32.mrb[0].mxu0
      %v1032 = vadd.f32 0.0, %v1031
      %v1033 = vpop.f32.mrb[0].mxu0
      %1034 = vmatprep.mubr.bf16.mxu0 0
      %1035 = vmatmul.mubr.bf16.gmra.mrb[0].mxu0 %v950
      %v1036 = vpop.f32.mrb[0].mxu0
      %v1037 = vadd.f32 0.0, %v1036
      %v1038 = vpop.f32.mrb[0].mxu0
      %v1039 = vpop.f32.mrb[0].mxu0
      %v1040 = vadd.f32 0.0, %v1039
      %v1041 = vpop.f32.mrb[0].mxu0
      %1042 = vmatprep.mubr.bf16.mxu0 0
      %1043 = vmatmul.mubr.bf16.gmra.mrb[0].mxu0 %v953
      %v1044 = vpop.f32.mrb[0].mxu0
      %v1045 = vadd.f32 0.0, %v1044
      %v1046 = vpop.f32.mrb[0].mxu0
      %v1047 = vpop.f32.mrb[0].mxu0
      %v1048 = vadd.f32 0.0, %v1047
      %v1049 = vpop.f32.mrb[0].mxu0
      %1050 = vmatprep.mubr.bf16.mxu0 0
      %1051 = vmatmul.mubr.bf16.gmra.mrb[0].mxu0 %v956
      %v1052 = vpop.f32.mrb[0].mxu0
      %v1053 = vadd.f32 0.0, %v1052
      %v1054 = vpop.f32.mrb[0].mxu0
      %v1055 = vpop.f32.mrb[0].mxu0
      %v1056 = vadd.f32 0.0, %v1055
      %v1057 = vpop.f32.mrb[0].mxu0
      %1058 = vmatprep.mubr.bf16.mxu0 0
      %1059 = vmatmul.mubr.bf16.gmra.mrb[0].mxu0 %v959
      %v1060 = vpop.f32.mrb[0].mxu0
      %v1061 = vadd.f32 0.0, %v1060
      %v1062 = vpop.f32.mrb[0].mxu0
      %v1063 = vpop.f32.mrb[0].mxu0
      %v1064 = vadd.f32 0.0, %v1063
      %v1065 = vpop.f32.mrb[0].mxu0
      %1066 = vmatprep.mubr.bf16.mxu0 0
      %1067 = vmatmul.mubr.bf16.gmra.mrb[0].mxu0 %v962
      %v1068 = vpop.f32.mrb[0].mxu0
      %v1069 = vadd.f32 0.0, %v1068
      %v1070 = vpop.f32.mrb[0].mxu0
      %v1071 = vpop.f32.mrb[0].mxu0
      %v1072 = vadd.f32 0.0, %v1071
      %v1073 = vpop.f32.mrb[0].mxu0
      %1074 = vmatprep.mubr.bf16.mxu0 0
      %1075 = vmatmul.mubr.bf16.gmra.mrb[0].mxu0 %v965
      %v1076 = vpop.f32.mrb[0].mxu0
      %v1077 = vadd.f32 0.0, %v1076
      %v1078 = vpop.f32.mrb[0].mxu0
      %v1079 = vpop.f32.mrb[0].mxu0
      %v1080 = vadd.f32 0.0, %v1079
      %v1081 = vpop.f32.mrb[0].mxu0
      %1082 = vmatprep.mubr.bf16.mxu0 0
      %1083 = vmatmul.mubr.bf16.gmra.mrb[0].mxu0 %v968
      %v1084 = vpop.f32.mrb[0].mxu0
      %v1085 = vadd.f32 0.0, %v1084
      %v1086 = vpop.f32.mrb[0].mxu0
      %v1087 = vpop.f32.mrb[0].mxu0
      %v1088 = vadd.f32 0.0, %v1087
      %v1089 = vpop.f32.mrb[0].mxu0
      %1090 = vmatprep.mubr.bf16.mxu0 0
      %1091 = vmatmul.mubr.bf16.gmra.mrb[0].mxu0 %v971
      %v1092 = vpop.f32.mrb[0].mxu0
      %v1093 = vadd.f32 0.0, %v1092
      %v1094 = vpop.f32.mrb[0].mxu0
      %v1095 = vpop.f32.mrb[0].mxu0
      %v1096 = vadd.f32 0.0, %v1095
      %v1097 = vpop.f32.mrb[0].mxu0
      %1098 = vmatprep.mubr.bf16.mxu0 0
      %1099 = vmatmul.mubr.bf16.gmra.mrb[0].mxu0 %v974
      %v1100 = vpop.f32.mrb[0].mxu0
      %v1101 = vadd.f32 0.0, %v1100
      %v1102 = vpop.f32.mrb[0].mxu0
      %v1103 = vpop.f32.mrb[0].mxu0
      %v1104 = vadd.f32 0.0, %v1103
      %v1105 = vpop.f32.mrb[0].mxu0
      %1106 = vmatprep.mubr.bf16.mxu0 0
      %1107 = vmatmul.mubr.bf16.gmra.mrb[0].mxu0 %v977
      %v1108 = vpop.f32.mrb[0].mxu0
      %v1109 = vadd.f32 0.0, %v1108
      %v1110 = vpop.f32.mrb[0].mxu0
      %v1111 = vpop.f32.mrb[0].mxu0
      %v1112 = vadd.f32 0.0, %v1111
      %v1113 = vpop.f32.mrb[0].mxu0
      %1114 = vmatprep.mubr.bf16.mxu0 0
      %1115 = vmatmul.mubr.bf16.gmra.mrb[0].mxu0 %v980
      %v1116 = vpop.f32.mrb[0].mxu0
      %v1117 = vadd.f32 0.0, %v1116
      %v1118 = vpop.f32.mrb[0].mxu0
      %v1119 = vpop.f32.mrb[0].mxu0
      %v1120 = vadd.f32 0.0, %v1119
      %v1121 = vpop.f32.mrb[0].mxu0
      %1122 = vmatprep.mubr.bf16.mxu0 0
      %1123 = vmatmul.mubr.bf16.gmra.mrb[0].mxu0 %v983
      %v1124 = vpop.f32.mrb[0].mxu0
      %v1125 = vadd.f32 0.0, %v1124
      %v1126 = vpop.f32.mrb[0].mxu0
      %v1127 = vpop.f32.mrb[0].mxu0
      %v1128 = vadd.f32 0.0, %v1127
      %v1129 = vpop.f32.mrb[0].mxu0
      %1130 = vmatprep.mubr.bf16.mxu0 0
      %1131 = vmatmul.mubr.bf16.gmra.mrb[0].mxu0 %v986
      %v1132 = vpop.f32.mrb[0].mxu0
      %v1133 = vadd.f32 0.0, %v1132
      %v1134 = vpop.f32.mrb[0].mxu0
      %v1135 = vpop.f32.mrb[0].mxu0
      %v1136 = vadd.f32 0.0, %v1135
      %v1137 = vpop.f32.mrb[0].mxu0
      %1138 = vmatprep.mubr.bf16.mxu0 0
      %1139 = vmatmul.mubr.bf16.gmra.mrb[0].mxu0 %v989
      %v1140 = vpop.f32.mrb[0].mxu0
      %v1141 = vadd.f32 0.0, %v1140
      %v1142 = vpop.f32.mrb[0].mxu0
      %v1143 = vpop.f32.mrb[0].mxu0
      %v1144 = vadd.f32 0.0, %v1143
      %v1145 = vpop.f32.mrb[0].mxu0
      %1146 = vmatprep.mubr.bf16.mxu0 0
      %1147 = vmatmul.mubr.bf16.gmra.mrb[0].mxu0 %v992
      %v1148 = vpop.f32.mrb[0].mxu0
      %v1149 = vadd.f32 0.0, %v1148
      %v1150 = vpop.f32.mrb[0].mxu0
      %v1151 = vpop.f32.mrb[0].mxu0
      %v1152 = vadd.f32 0.0, %v1151
      %v1153 = vpop.f32.mrb[0].mxu0
      %1154 = vdwg.mxu0
      %v1157 = vunpack.c.l.b16 %v741
      %v1158 = vunpack.c.l.b16 %v742
      %v1159 = vpack.c.b16 %v1158, %v1157
      %v1161 = vsel %vm945, %v705, 0
      %v1163 = vsel %vm945, %v707, 0
      %v1165 = vsel %vm945, %v709, 0
      %v1167 = vsel %vm945, %v711, 0
      %v1169 = vsel %vm945, %v713, 0
      %v1171 = vsel %vm945, %v715, 0
      %v1173 = vsel %vm945, %v717, 0
      %v1175 = vsel %vm945, %v719, 0
      %v1177 = vsel %vm945, %v721, 0
      %v1179 = vsel %vm945, %v723, 0
      %v1181 = vsel %vm945, %v725, 0
      %v1183 = vsel %vm945, %v727, 0
      %v1185 = vsel %vm945, %v729, 0
      %v1187 = vsel %vm945, %v731, 0
      %v1189 = vsel %vm945, %v733, 0
      %v1191 = vsel %vm945, %v735, 0
      %1193 = vmatprep.subr.bf16.mxu0 0
      %1194 = vmatpush1.bf16.msra.mxu0 %v1159
      %1195 = vmatprep.subr.bf16.mxu0 0
      %1196 = vmatpush1.bf16.msra.mxu0 0
      %1197 = vmatprep.subr.bf16.mxu0 0
      %1198 = vmatpush1.bf16.msra.mxu0 0
      %1199 = vmatprep.subr.bf16.mxu0 0
      %1200 = vmatpush1.bf16.msra.mxu0 0
      %1201 = vmatprep.subr.bf16.mxu0 0
      %1202 = vmatpush1.bf16.msra.mxu0 0
      %1203 = vmatprep.subr.bf16.mxu0 0
      %1204 = vmatpush1.bf16.msra.mxu0 0
      %1205 = vmatprep.subr.bf16.mxu0 0
      %1206 = vmatpush1.bf16.msra.mxu0 0
      %1207 = vmatprep.subr.bf16.mxu0 0
      %1208 = vmatpush1.bf16.msra.mxu0 0
      %1209 = vmatprep.subr.bf16.mxu0 0
      %1210 = vmatpush1.bf16.msra.mxu0 0
      %1211 = vmatprep.subr.bf16.mxu0 0
      %1212 = vmatpush1.bf16.msra.mxu0 0
      %1213 = vmatprep.subr.bf16.mxu0 0
      %1214 = vmatpush1.bf16.msra.mxu0 0
      %1215 = vmatprep.subr.bf16.mxu0 0
      %1216 = vmatpush1.bf16.msra.mxu0 0
      %1217 = vmatprep.subr.bf16.mxu0 0
      %1218 = vmatpush1.bf16.msra.mxu0 0
      %1219 = vmatprep.subr.bf16.mxu0 0
      %1220 = vmatpush1.bf16.msra.mxu0 0
      %1221 = vmatprep.subr.bf16.mxu0 0
      %1222 = vmatpush1.bf16.msra.mxu0 0
      %1223 = vmatprep.subr.bf16.mxu0 0
      %1224 = vmatpush1.bf16.msra.mxu0 0
      %1225 = vmatprep.mubr.bf16.mxu0 0
      %1226 = vmatmul.mubr.bf16.gmra.mrb[0].mxu0 %v1161
      %v1227 = vpop.f32.mrb[0].mxu0
      %v1228 = vadd.f32 %v1029, %v1227
      %v1229 = vpop.f32.mrb[0].mxu0
      %v1230 = vpop.f32.mrb[0].mxu0
      %v1231 = vadd.f32 %v1032, %v1230
      %v1232 = vpop.f32.mrb[0].mxu0
      %1233 = vmatprep.mubr.bf16.mxu0 0
      %1234 = vmatmul.mubr.bf16.gmra.mrb[0].mxu0 %v1163
      %v1235 = vpop.f32.mrb[0].mxu0
      %v1236 = vadd.f32 %v1037, %v1235
      %v1237 = vpop.f32.mrb[0].mxu0
      %v1238 = vpop.f32.mrb[0].mxu0
      %v1239 = vadd.f32 %v1040, %v1238
      %v1240 = vpop.f32.mrb[0].mxu0
      %1241 = vmatprep.mubr.bf16.mxu0 0
      %1242 = vmatmul.mubr.bf16.gmra.mrb[0].mxu0 %v1165
      %v1243 = vpop.f32.mrb[0].mxu0
      %v1244 = vadd.f32 %v1045, %v1243
      %v1245 = vpop.f32.mrb[0].mxu0
      %v1246 = vpop.f32.mrb[0].mxu0
      %v1247 = vadd.f32 %v1048, %v1246
      %v1248 = vpop.f32.mrb[0].mxu0
      %1249 = vmatprep.mubr.bf16.mxu0 0
      %1250 = vmatmul.mubr.bf16.gmra.mrb[0].mxu0 %v1167
      %v1251 = vpop.f32.mrb[0].mxu0
      %v1252 = vadd.f32 %v1053, %v1251
      %v1253 = vpop.f32.mrb[0].mxu0
      %v1254 = vpop.f32.mrb[0].mxu0
      %v1255 = vadd.f32 %v1056, %v1254
      %v1256 = vpop.f32.mrb[0].mxu0
      %1257 = vmatprep.mubr.bf16.mxu0 0
      %1258 = vmatmul.mubr.bf16.gmra.mrb[0].mxu0 %v1169
      %v1259 = vpop.f32.mrb[0].mxu0
      %v1260 = vadd.f32 %v1061, %v1259
      %v1261 = vpop.f32.mrb[0].mxu0
      %v1262 = vpop.f32.mrb[0].mxu0
      %v1263 = vadd.f32 %v1064, %v1262
      %v1264 = vpop.f32.mrb[0].mxu0
      %1265 = vmatprep.mubr.bf16.mxu0 0
      %1266 = vmatmul.mubr.bf16.gmra.mrb[0].mxu0 %v1171
      %v1267 = vpop.f32.mrb[0].mxu0
      %v1268 = vadd.f32 %v1069, %v1267
      %v1269 = vpop.f32.mrb[0].mxu0
      %v1270 = vpop.f32.mrb[0].mxu0
      %v1271 = vadd.f32 %v1072, %v1270
      %v1272 = vpop.f32.mrb[0].mxu0
      %1273 = vmatprep.mubr.bf16.mxu0 0
      %1274 = vmatmul.mubr.bf16.gmra.mrb[0].mxu0 %v1173
      %v1275 = vpop.f32.mrb[0].mxu0
      %v1276 = vadd.f32 %v1077, %v1275
      %v1277 = vpop.f32.mrb[0].mxu0
      %v1278 = vpop.f32.mrb[0].mxu0
      %v1279 = vadd.f32 %v1080, %v1278
      %v1280 = vpop.f32.mrb[0].mxu0
      %1281 = vmatprep.mubr.bf16.mxu0 0
      %1282 = vmatmul.mubr.bf16.gmra.mrb[0].mxu0 %v1175
      %v1283 = vpop.f32.mrb[0].mxu0
      %v1284 = vadd.f32 %v1085, %v1283
      %v1285 = vpop.f32.mrb[0].mxu0
      %v1286 = vpop.f32.mrb[0].mxu0
      %v1287 = vadd.f32 %v1088, %v1286
      %v1288 = vpop.f32.mrb[0].mxu0
      %1289 = vmatprep.mubr.bf16.mxu0 0
      %1290 = vmatmul.mubr.bf16.gmra.mrb[0].mxu0 %v1177
      %v1291 = vpop.f32.mrb[0].mxu0
      %v1292 = vadd.f32 %v1093, %v1291
      %v1293 = vpop.f32.mrb[0].mxu0
      %v1294 = vpop.f32.mrb[0].mxu0
      %v1295 = vadd.f32 %v1096, %v1294
      %v1296 = vpop.f32.mrb[0].mxu0
      %1297 = vmatprep.mubr.bf16.mxu0 0
      %1298 = vmatmul.mubr.bf16.gmra.mrb[0].mxu0 %v1179
      %v1299 = vpop.f32.mrb[0].mxu0
      %v1300 = vadd.f32 %v1101, %v1299
      %v1301 = vpop.f32.mrb[0].mxu0
      %v1302 = vpop.f32.mrb[0].mxu0
      %v1303 = vadd.f32 %v1104, %v1302
      %v1304 = vpop.f32.mrb[0].mxu0
      %1305 = vmatprep.mubr.bf16.mxu0 0
      %1306 = vmatmul.mubr.bf16.gmra.mrb[0].mxu0 %v1181
      %v1307 = vpop.f32.mrb[0].mxu0
      %v1308 = vadd.f32 %v1109, %v1307
      %v1309 = vpop.f32.mrb[0].mxu0
      %v1310 = vpop.f32.mrb[0].mxu0
      %v1311 = vadd.f32 %v1112, %v1310
      %v1312 = vpop.f32.mrb[0].mxu0
      %1313 = vmatprep.mubr.bf16.mxu0 0
      %1314 = vmatmul.mubr.bf16.gmra.mrb[0].mxu0 %v1183
      %v1315 = vpop.f32.mrb[0].mxu0
      %v1316 = vadd.f32 %v1117, %v1315
      %v1317 = vpop.f32.mrb[0].mxu0
      %v1318 = vpop.f32.mrb[0].mxu0
      %v1319 = vadd.f32 %v1120, %v1318
      %v1320 = vpop.f32.mrb[0].mxu0
      %1321 = vmatprep.mubr.bf16.mxu0 0
      %1322 = vmatmul.mubr.bf16.gmra.mrb[0].mxu0 %v1185
      %v1323 = vpop.f32.mrb[0].mxu0
      %v1324 = vadd.f32 %v1125, %v1323
      %v1325 = vpop.f32.mrb[0].mxu0
      %v1326 = vpop.f32.mrb[0].mxu0
      %v1327 = vadd.f32 %v1128, %v1326
      %v1328 = vpop.f32.mrb[0].mxu0
      %1329 = vmatprep.mubr.bf16.mxu0 0
      %1330 = vmatmul.mubr.bf16.gmra.mrb[0].mxu0 %v1187
      %v1331 = vpop.f32.mrb[0].mxu0
      %v1332 = vadd.f32 %v1133, %v1331
      %v1333 = vpop.f32.mrb[0].mxu0
      %v1334 = vpop.f32.mrb[0].mxu0
      %v1335 = vadd.f32 %v1136, %v1334
      %v1336 = vpop.f32.mrb[0].mxu0
      %1337 = vmatprep.mubr.bf16.mxu0 0
      %1338 = vmatmul.mubr.bf16.gmra.mrb[0].mxu0 %v1189
      %v1339 = vpop.f32.mrb[0].mxu0
      %v1340 = vadd.f32 %v1141, %v1339
      %v1341 = vpop.f32.mrb[0].mxu0
      %v1342 = vpop.f32.mrb[0].mxu0
      %v1343 = vadd.f32 %v1144, %v1342
      %v1344 = vpop.f32.mrb[0].mxu0
      %1345 = vmatprep.mubr.bf16.mxu0 0
      %1346 = vmatmul.mubr.bf16.gmra.mrb[0].mxu0 %v1191
      %v1347 = vpop.f32.mrb[0].mxu0
      %v1348 = vadd.f32 %v1149, %v1347
      %v1349 = vpop.f32.mrb[0].mxu0
      %v1350 = vpop.f32.mrb[0].mxu0
      %v1351 = vadd.f32 %v1152, %v1350
      %v1352 = vpop.f32.mrb[0].mxu0
      %1353 = vdwg.mxu0
      %vm1386 = vcmask 1046528
      %v1387 = vrot.slane %v705, 1
      %v1388 = vrot.slane %v706, 1
      %v1389 = vsel %vm1386, %v1387, %v1388
      %v1390 = vrot.slane %v707, 1
      %v1391 = vrot.slane %v708, 1
      %v1392 = vsel %vm1386, %v1390, %v1391
      %v1393 = vrot.slane %v709, 1
      %v1394 = vrot.slane %v710, 1
      %v1395 = vsel %vm1386, %v1393, %v1394
      %v1396 = vrot.slane %v711, 1
      %v1397 = vrot.slane %v712, 1
      %v1398 = vsel %vm1386, %v1396, %v1397
      %v1399 = vrot.slane %v713, 1
      %v1400 = vrot.slane %v714, 1
      %v1401 = vsel %vm1386, %v1399, %v1400
      %v1402 = vrot.slane %v715, 1
      %v1403 = vrot.slane %v716, 1
      %v1404 = vsel %vm1386, %v1402, %v1403
      %v1405 = vrot.slane %v717, 1
      %v1406 = vrot.slane %v718, 1
      %v1407 = vsel %vm1386, %v1405, %v1406
      %v1408 = vrot.slane %v719, 1
      %v1409 = vrot.slane %v720, 1
      %v1410 = vsel %vm1386, %v1408, %v1409
      %v1411 = vrot.slane %v721, 1
      %v1412 = vrot.slane %v722, 1
      %v1413 = vsel %vm1386, %v1411, %v1412
      %v1414 = vrot.slane %v723, 1
      %v1415 = vrot.slane %v724, 1
      %v1416 = vsel %vm1386, %v1414, %v1415
      %v1417 = vrot.slane %v725, 1
      %v1418 = vrot.slane %v726, 1
      %v1419 = vsel %vm1386, %v1417, %v1418
      %v1420 = vrot.slane %v727, 1
      %v1421 = vrot.slane %v728, 1
      %v1422 = vsel %vm1386, %v1420, %v1421
      %v1423 = vrot.slane %v729, 1
      %v1424 = vrot.slane %v730, 1
      %v1425 = vsel %vm1386, %v1423, %v1424
      %v1426 = vrot.slane %v731, 1
      %v1427 = vrot.slane %v732, 1
      %v1428 = vsel %vm1386, %v1426, %v1427
      %v1429 = vrot.slane %v733, 1
      %v1430 = vrot.slane %v734, 1
      %v1431 = vsel %vm1386, %v1429, %v1430
      %v1432 = vrot.slane %v735, 1
      %v1433 = vrot.slane %v736, 1
      %v1434 = vsel %vm1386, %v1432, %v1433
      %s1435 = scalar_lea.vmem %s1, 16
      %v1436 = vld [vmem:[%s1435] sm:$0xf]
      %v1437 = vld [vmem:[%s1435 + $0x4] sm:$0xf]
      %v1440 = vunpack.c.l.b16 %v1436
      %v1441 = vunpack.c.l.b16 %v1437
      %v1442 = vpack.c.b16 %v1441, %v1440
      %v1445 = vsel %vm945, %v1389, 0
      %v1448 = vsel %vm945, %v1392, 0
      %v1451 = vsel %vm945, %v1395, 0
      %v1454 = vsel %vm945, %v1398, 0
      %v1457 = vsel %vm945, %v1401, 0
      %v1460 = vsel %vm945, %v1404, 0
      %v1463 = vsel %vm945, %v1407, 0
      %v1466 = vsel %vm945, %v1410, 0
      %v1469 = vsel %vm945, %v1413, 0
      %v1472 = vsel %vm945, %v1416, 0
      %v1475 = vsel %vm945, %v1419, 0
      %v1478 = vsel %vm945, %v1422, 0
      %v1481 = vsel %vm945, %v1425, 0
      %v1484 = vsel %vm945, %v1428, 0
      %v1487 = vsel %vm945, %v1431, 0
      %v1490 = vsel %vm945, %v1434, 0
      %1492 = vmatprep.subr.bf16.mxu0 0
      %1493 = vmatpush1.bf16.msra.mxu0 %v1442
      %1494 = vmatprep.subr.bf16.mxu0 0
      %1495 = vmatpush1.bf16.msra.mxu0 0
      %1496 = vmatprep.subr.bf16.mxu0 0
      %1497 = vmatpush1.bf16.msra.mxu0 0
      %1498 = vmatprep.subr.bf16.mxu0 0
      %1499 = vmatpush1.bf16.msra.mxu0 0
      %1500 = vmatprep.subr.bf16.mxu0 0
      %1501 = vmatpush1.bf16.msra.mxu0 0
      %1502 = vmatprep.subr.bf16.mxu0 0
      %1503 = vmatpush1.bf16.msra.mxu0 0
      %1504 = vmatprep.subr.bf16.mxu0 0
      %1505 = vmatpush1.bf16.msra.mxu0 0
      %1506 = vmatprep.subr.bf16.mxu0 0
      %1507 = vmatpush1.bf16.msra.mxu0 0
      %1508 = vmatprep.subr.bf16.mxu0 0
      %1509 = vmatpush1.bf16.msra.mxu0 0
      %1510 = vmatprep.subr.bf16.mxu0 0
      %1511 = vmatpush1.bf16.msra.mxu0 0
      %1512 = vmatprep.subr.bf16.mxu0 0
      %1513 = vmatpush1.bf16.msra.mxu0 0
      %1514 = vmatprep.subr.bf16.mxu0 0
      %1515 = vmatpush1.bf16.msra.mxu0 0
      %1516 = vmatprep.subr.bf16.mxu0 0
      %1517 = vmatpush1.bf16.msra.mxu0 0
      %1518 = vmatprep.subr.bf16.mxu0 0
      %1519 = vmatpush1.bf16.msra.mxu0 0
      %1520 = vmatprep.subr.bf16.mxu0 0
      %1521 = vmatpush1.bf16.msra.mxu0 0
      %1522 = vmatprep.subr.bf16.mxu0 0
      %1523 = vmatpush1.bf16.msra.mxu0 0
      %1524 = vmatprep.mubr.bf16.mxu0 0
      %1525 = vmatmul.mubr.bf16.gmra.mrb[0].mxu0 %v1445
      %v1526 = vpop.f32.mrb[0].mxu0
      %v1527 = vadd.f32 0.0, %v1526
      %v1528 = vpop.f32.mrb[0].mxu0
      %v1529 = vpop.f32.mrb[0].mxu0
      %v1530 = vadd.f32 0.0, %v1529
      %v1531 = vpop.f32.mrb[0].mxu0
      %1532 = vmatprep.mubr.bf16.mxu0 0
      %1533 = vmatmul.mubr.bf16.gmra.mrb[0].mxu0 %v1448
      %v1534 = vpop.f32.mrb[0].mxu0
      %v1535 = vadd.f32 0.0, %v1534
      %v1536 = vpop.f32.mrb[0].mxu0
      %v1537 = vpop.f32.mrb[0].mxu0
      %v1538 = vadd.f32 0.0, %v1537
      %v1539 = vpop.f32.mrb[0].mxu0
      %1540 = vmatprep.mubr.bf16.mxu0 0
      %1541 = vmatmul.mubr.bf16.gmra.mrb[0].mxu0 %v1451
      %v1542 = vpop.f32.mrb[0].mxu0
      %v1543 = vadd.f32 0.0, %v1542
      %v1544 = vpop.f32.mrb[0].mxu0
      %v1545 = vpop.f32.mrb[0].mxu0
      %v1546 = vadd.f32 0.0, %v1545
      %v1547 = vpop.f32.mrb[0].mxu0
      %1548 = vmatprep.mubr.bf16.mxu0 0
      %1549 = vmatmul.mubr.bf16.gmra.mrb[0].mxu0 %v1454
      %v1550 = vpop.f32.mrb[0].mxu0
      %v1551 = vadd.f32 0.0, %v1550
      %v1552 = vpop.f32.mrb[0].mxu0
      %v1553 = vpop.f32.mrb[0].mxu0
      %v1554 = vadd.f32 0.0, %v1553
      %v1555 = vpop.f32.mrb[0].mxu0
      %1556 = vmatprep.mubr.bf16.mxu0 0
      %1557 = vmatmul.mubr.bf16.gmra.mrb[0].mxu0 %v1457
      %v1558 = vpop.f32.mrb[0].mxu0
      %v1559 = vadd.f32 0.0, %v1558
      %v1560 = vpop.f32.mrb[0].mxu0
      %v1561 = vpop.f32.mrb[0].mxu0
      %v1562 = vadd.f32 0.0, %v1561
      %v1563 = vpop.f32.mrb[0].mxu0
      %1564 = vmatprep.mubr.bf16.mxu0 0
      %1565 = vmatmul.mubr.bf16.gmra.mrb[0].mxu0 %v1460
      %v1566 = vpop.f32.mrb[0].mxu0
      %v1567 = vadd.f32 0.0, %v1566
      %v1568 = vpop.f32.mrb[0].mxu0
      %v1569 = vpop.f32.mrb[0].mxu0
      %v1570 = vadd.f32 0.0, %v1569
      %v1571 = vpop.f32.mrb[0].mxu0
      %1572 = vmatprep.mubr.bf16.mxu0 0
      %1573 = vmatmul.mubr.bf16.gmra.mrb[0].mxu0 %v1463
      %v1574 = vpop.f32.mrb[0].mxu0
      %v1575 = vadd.f32 0.0, %v1574
      %v1576 = vpop.f32.mrb[0].mxu0
      %v1577 = vpop.f32.mrb[0].mxu0
      %v1578 = vadd.f32 0.0, %v1577
      %v1579 = vpop.f32.mrb[0].mxu0
      %1580 = vmatprep.mubr.bf16.mxu0 0
      %1581 = vmatmul.mubr.bf16.gmra.mrb[0].mxu0 %v1466
      %v1582 = vpop.f32.mrb[0].mxu0
      %v1583 = vadd.f32 0.0, %v1582
      %v1584 = vpop.f32.mrb[0].mxu0
      %v1585 = vpop.f32.mrb[0].mxu0
      %v1586 = vadd.f32 0.0, %v1585
      %v1587 = vpop.f32.mrb[0].mxu0
      %1588 = vmatprep.mubr.bf16.mxu0 0
      %1589 = vmatmul.mubr.bf16.gmra.mrb[0].mxu0 %v1469
      %v1590 = vpop.f32.mrb[0].mxu0
      %v1591 = vadd.f32 0.0, %v1590
      %v1592 = vpop.f32.mrb[0].mxu0
      %v1593 = vpop.f32.mrb[0].mxu0
      %v1594 = vadd.f32 0.0, %v1593
      %v1595 = vpop.f32.mrb[0].mxu0
      %1596 = vmatprep.mubr.bf16.mxu0 0
      %1597 = vmatmul.mubr.bf16.gmra.mrb[0].mxu0 %v1472
      %v1598 = vpop.f32.mrb[0].mxu0
      %v1599 = vadd.f32 0.0, %v1598
      %v1600 = vpop.f32.mrb[0].mxu0
      %v1601 = vpop.f32.mrb[0].mxu0
      %v1602 = vadd.f32 0.0, %v1601
      %v1603 = vpop.f32.mrb[0].mxu0
      %1604 = vmatprep.mubr.bf16.mxu0 0
      %1605 = vmatmul.mubr.bf16.gmra.mrb[0].mxu0 %v1475
      %v1606 = vpop.f32.mrb[0].mxu0
      %v1607 = vadd.f32 0.0, %v1606
      %v1608 = vpop.f32.mrb[0].mxu0
      %v1609 = vpop.f32.mrb[0].mxu0
      %v1610 = vadd.f32 0.0, %v1609
      %v1611 = vpop.f32.mrb[0].mxu0
      %1612 = vmatprep.mubr.bf16.mxu0 0
      %1613 = vmatmul.mubr.bf16.gmra.mrb[0].mxu0 %v1478
      %v1614 = vpop.f32.mrb[0].mxu0
      %v1615 = vadd.f32 0.0, %v1614
      %v1616 = vpop.f32.mrb[0].mxu0
      %v1617 = vpop.f32.mrb[0].mxu0
      %v1618 = vadd.f32 0.0, %v1617
      %v1619 = vpop.f32.mrb[0].mxu0
      %1620 = vmatprep.mubr.bf16.mxu0 0
      %1621 = vmatmul.mubr.bf16.gmra.mrb[0].mxu0 %v1481
      %v1622 = vpop.f32.mrb[0].mxu0
      %v1623 = vadd.f32 0.0, %v1622
      %v1624 = vpop.f32.mrb[0].mxu0
      %v1625 = vpop.f32.mrb[0].mxu0
      %v1626 = vadd.f32 0.0, %v1625
      %v1627 = vpop.f32.mrb[0].mxu0
      %1628 = vmatprep.mubr.bf16.mxu0 0
      %1629 = vmatmul.mubr.bf16.gmra.mrb[0].mxu0 %v1484
      %v1630 = vpop.f32.mrb[0].mxu0
      %v1631 = vadd.f32 0.0, %v1630
      %v1632 = vpop.f32.mrb[0].mxu0
      %v1633 = vpop.f32.mrb[0].mxu0
      %v1634 = vadd.f32 0.0, %v1633
      %v1635 = vpop.f32.mrb[0].mxu0
      %1636 = vmatprep.mubr.bf16.mxu0 0
      %1637 = vmatmul.mubr.bf16.gmra.mrb[0].mxu0 %v1487
      %v1638 = vpop.f32.mrb[0].mxu0
      %v1639 = vadd.f32 0.0, %v1638
      %v1640 = vpop.f32.mrb[0].mxu0
      %v1641 = vpop.f32.mrb[0].mxu0
      %v1642 = vadd.f32 0.0, %v1641
      %v1643 = vpop.f32.mrb[0].mxu0
      %1644 = vmatprep.mubr.bf16.mxu0 0
      %1645 = vmatmul.mubr.bf16.gmra.mrb[0].mxu0 %v1490
      %v1646 = vpop.f32.mrb[0].mxu0
      %v1647 = vadd.f32 0.0, %v1646
      %v1648 = vpop.f32.mrb[0].mxu0
      %v1649 = vpop.f32.mrb[0].mxu0
      %v1650 = vadd.f32 0.0, %v1649
      %v1651 = vpop.f32.mrb[0].mxu0
      %1652 = vdwg.mxu0
      %v1653 = vadd.f32 %v1228, %v1527
      %v1654 = vadd.f32 %v1231, %v1530
      %v1655 = vadd.f32 %v1236, %v1535
      %v1656 = vadd.f32 %v1239, %v1538
      %v1657 = vadd.f32 %v1244, %v1543
      %v1658 = vadd.f32 %v1247, %v1546
      %v1659 = vadd.f32 %v1252, %v1551
      %v1660 = vadd.f32 %v1255, %v1554
      %v1661 = vadd.f32 %v1260, %v1559
      %v1662 = vadd.f32 %v1263, %v1562
      %v1663 = vadd.f32 %v1268, %v1567
      %v1664 = vadd.f32 %v1271, %v1570
      %v1665 = vadd.f32 %v1276, %v1575
      %v1666 = vadd.f32 %v1279, %v1578
      %v1667 = vadd.f32 %v1284, %v1583
      %v1668 = vadd.f32 %v1287, %v1586
      %v1669 = vadd.f32 %v1292, %v1591
      %v1670 = vadd.f32 %v1295, %v1594
      %v1671 = vadd.f32 %v1300, %v1599
      %v1672 = vadd.f32 %v1303, %v1602
      %v1673 = vadd.f32 %v1308, %v1607
      %v1674 = vadd.f32 %v1311, %v1610
      %v1675 = vadd.f32 %v1316, %v1615
      %v1676 = vadd.f32 %v1319, %v1618
      %v1677 = vadd.f32 %v1324, %v1623
      %v1678 = vadd.f32 %v1327, %v1626
      %v1679 = vadd.f32 %v1332, %v1631
      %v1680 = vadd.f32 %v1335, %v1634
      %v1681 = vadd.f32 %v1340, %v1639
      %v1682 = vadd.f32 %v1343, %v1642
      %v1683 = vadd.f32 %v1348, %v1647
      %v1684 = vadd.f32 %v1351, %v1650
      %s1685 = scalar_lea.vmem %s1, 24
      %v1686 = vld [vmem:[%s1685] sm:$0xf]
      %v1687 = vld [vmem:[%s1685 + $0x4] sm:$0xf]
      %v1690 = vunpack.c.l.b16 %v1686
      %v1691 = vunpack.c.l.b16 %v1687
      %v1692 = vpack.c.b16 %v1691, %v1690
      %v1695 = vsel %vm945, %v737, 0
      %1697 = vmatprep.subr.bf16.mxu0 0
      %1698 = vmatpush1.bf16.msra.mxu0 %v1692
      %1699 = vmatprep.subr.bf16.mxu0 0
      %1700 = vmatpush1.bf16.msra.mxu0 0
      %1701 = vmatprep.subr.bf16.mxu0 0
      %1702 = vmatpush1.bf16.msra.mxu0 0
      %1703 = vmatprep.subr.bf16.mxu0 0
      %1704 = vmatpush1.bf16.msra.mxu0 0
      %1705 = vmatprep.subr.bf16.mxu0 0
      %1706 = vmatpush1.bf16.msra.mxu0 0
      %1707 = vmatprep.subr.bf16.mxu0 0
      %1708 = vmatpush1.bf16.msra.mxu0 0
      %1709 = vmatprep.subr.bf16.mxu0 0
      %1710 = vmatpush1.bf16.msra.mxu0 0
      %1711 = vmatprep.subr.bf16.mxu0 0
      %1712 = vmatpush1.bf16.msra.mxu0 0
      %1713 = vmatprep.subr.bf16.mxu0 0
      %1714 = vmatpush1.bf16.msra.mxu0 0
      %1715 = vmatprep.subr.bf16.mxu0 0
      %1716 = vmatpush1.bf16.msra.mxu0 0
      %1717 = vmatprep.subr.bf16.mxu0 0
      %1718 = vmatpush1.bf16.msra.mxu0 0
      %1719 = vmatprep.subr.bf16.mxu0 0
      %1720 = vmatpush1.bf16.msra.mxu0 0
      %1721 = vmatprep.subr.bf16.mxu0 0
      %1722 = vmatpush1.bf16.msra.mxu0 0
      %1723 = vmatprep.subr.bf16.mxu0 0
      %1724 = vmatpush1.bf16.msra.mxu0 0
      %1725 = vmatprep.subr.bf16.mxu0 0
      %1726 = vmatpush1.bf16.msra.mxu0 0
      %1727 = vmatprep.subr.bf16.mxu0 0
      %1728 = vmatpush1.bf16.msra.mxu0 0
      %1729 = vmatprep.mubr.bf16.mxu0 0
      %1730 = vmatmul.mubr.bf16.gmra.mrb[0].mxu0 %v1163
      %v1731 = vpop.f32.mrb[0].mxu0
      %v1732 = vadd.f32 0.0, %v1731
      %v1733 = vpop.f32.mrb[0].mxu0
      %v1734 = vpop.f32.mrb[0].mxu0
      %v1735 = vadd.f32 0.0, %v1734
      %v1736 = vpop.f32.mrb[0].mxu0
      %1737 = vmatprep.mubr.bf16.mxu0 0
      %1738 = vmatmul.mubr.bf16.gmra.mrb[0].mxu0 %v1165
      %v1739 = vpop.f32.mrb[0].mxu0
      %v1740 = vadd.f32 0.0, %v1739
      %v1741 = vpop.f32.mrb[0].mxu0
      %v1742 = vpop.f32.mrb[0].mxu0
      %v1743 = vadd.f32 0.0, %v1742
      %v1744 = vpop.f32.mrb[0].mxu0
      %1745 = vmatprep.mubr.bf16.mxu0 0
      %1746 = vmatmul.mubr.bf16.gmra.mrb[0].mxu0 %v1167
      %v1747 = vpop.f32.mrb[0].mxu0
      %v1748 = vadd.f32 0.0, %v1747
      %v1749 = vpop.f32.mrb[0].mxu0
      %v1750 = vpop.f32.mrb[0].mxu0
      %v1751 = vadd.f32 0.0, %v1750
      %v1752 = vpop.f32.mrb[0].mxu0
      %1753 = vmatprep.mubr.bf16.mxu0 0
      %1754 = vmatmul.mubr.bf16.gmra.mrb[0].mxu0 %v1169
      %v1755 = vpop.f32.mrb[0].mxu0
      %v1756 = vadd.f32 0.0, %v1755
      %v1757 = vpop.f32.mrb[0].mxu0
      %v1758 = vpop.f32.mrb[0].mxu0
      %v1759 = vadd.f32 0.0, %v1758
      %v1760 = vpop.f32.mrb[0].mxu0
      %1761 = vmatprep.mubr.bf16.mxu0 0
      %1762 = vmatmul.mubr.bf16.gmra.mrb[0].mxu0 %v1171
      %v1763 = vpop.f32.mrb[0].mxu0
      %v1764 = vadd.f32 0.0, %v1763
      %v1765 = vpop.f32.mrb[0].mxu0
      %v1766 = vpop.f32.mrb[0].mxu0
      %v1767 = vadd.f32 0.0, %v1766
      %v1768 = vpop.f32.mrb[0].mxu0
      %1769 = vmatprep.mubr.bf16.mxu0 0
      %1770 = vmatmul.mubr.bf16.gmra.mrb[0].mxu0 %v1173
      %v1771 = vpop.f32.mrb[0].mxu0
      %v1772 = vadd.f32 0.0, %v1771
      %v1773 = vpop.f32.mrb[0].mxu0
      %v1774 = vpop.f32.mrb[0].mxu0
      %v1775 = vadd.f32 0.0, %v1774
      %v1776 = vpop.f32.mrb[0].mxu0
      %1777 = vmatprep.mubr.bf16.mxu0 0
      %1778 = vmatmul.mubr.bf16.gmra.mrb[0].mxu0 %v1175
      %v1779 = vpop.f32.mrb[0].mxu0
      %v1780 = vadd.f32 0.0, %v1779
      %v1781 = vpop.f32.mrb[0].mxu0
      %v1782 = vpop.f32.mrb[0].mxu0
      %v1783 = vadd.f32 0.0, %v1782
      %v1784 = vpop.f32.mrb[0].mxu0
      %1785 = vmatprep.mubr.bf16.mxu0 0
      %1786 = vmatmul.mubr.bf16.gmra.mrb[0].mxu0 %v1177
      %v1787 = vpop.f32.mrb[0].mxu0
      %v1788 = vadd.f32 0.0, %v1787
      %v1789 = vpop.f32.mrb[0].mxu0
      %v1790 = vpop.f32.mrb[0].mxu0
      %v1791 = vadd.f32 0.0, %v1790
      %v1792 = vpop.f32.mrb[0].mxu0
      %1793 = vmatprep.mubr.bf16.mxu0 0
      %1794 = vmatmul.mubr.bf16.gmra.mrb[0].mxu0 %v1179
      %v1795 = vpop.f32.mrb[0].mxu0
      %v1796 = vadd.f32 0.0, %v1795
      %v1797 = vpop.f32.mrb[0].mxu0
      %v1798 = vpop.f32.mrb[0].mxu0
      %v1799 = vadd.f32 0.0, %v1798
      %v1800 = vpop.f32.mrb[0].mxu0
      %1801 = vmatprep.mubr.bf16.mxu0 0
      %1802 = vmatmul.mubr.bf16.gmra.mrb[0].mxu0 %v1181
      %v1803 = vpop.f32.mrb[0].mxu0
      %v1804 = vadd.f32 0.0, %v1803
      %v1805 = vpop.f32.mrb[0].mxu0
      %v1806 = vpop.f32.mrb[0].mxu0
      %v1807 = vadd.f32 0.0, %v1806
      %v1808 = vpop.f32.mrb[0].mxu0
      %1809 = vmatprep.mubr.bf16.mxu0 0
      %1810 = vmatmul.mubr.bf16.gmra.mrb[0].mxu0 %v1183
      %v1811 = vpop.f32.mrb[0].mxu0
      %v1812 = vadd.f32 0.0, %v1811
      %v1813 = vpop.f32.mrb[0].mxu0
      %v1814 = vpop.f32.mrb[0].mxu0
      %v1815 = vadd.f32 0.0, %v1814
      %v1816 = vpop.f32.mrb[0].mxu0
      %1817 = vmatprep.mubr.bf16.mxu0 0
      %1818 = vmatmul.mubr.bf16.gmra.mrb[0].mxu0 %v1185
      %v1819 = vpop.f32.mrb[0].mxu0
      %v1820 = vadd.f32 0.0, %v1819
      %v1821 = vpop.f32.mrb[0].mxu0
      %v1822 = vpop.f32.mrb[0].mxu0
      %v1823 = vadd.f32 0.0, %v1822
      %v1824 = vpop.f32.mrb[0].mxu0
      %1825 = vmatprep.mubr.bf16.mxu0 0
      %1826 = vmatmul.mubr.bf16.gmra.mrb[0].mxu0 %v1187
      %v1827 = vpop.f32.mrb[0].mxu0
      %v1828 = vadd.f32 0.0, %v1827
      %v1829 = vpop.f32.mrb[0].mxu0
      %v1830 = vpop.f32.mrb[0].mxu0
      %v1831 = vadd.f32 0.0, %v1830
      %v1832 = vpop.f32.mrb[0].mxu0
      %1833 = vmatprep.mubr.bf16.mxu0 0
      %1834 = vmatmul.mubr.bf16.gmra.mrb[0].mxu0 %v1189
      %v1835 = vpop.f32.mrb[0].mxu0
      %v1836 = vadd.f32 0.0, %v1835
      %v1837 = vpop.f32.mrb[0].mxu0
      %v1838 = vpop.f32.mrb[0].mxu0
      %v1839 = vadd.f32 0.0, %v1838
      %v1840 = vpop.f32.mrb[0].mxu0
      %1841 = vmatprep.mubr.bf16.mxu0 0
      %1842 = vmatmul.mubr.bf16.gmra.mrb[0].mxu0 %v1191
      %v1843 = vpop.f32.mrb[0].mxu0
      %v1844 = vadd.f32 0.0, %v1843
      %v1845 = vpop.f32.mrb[0].mxu0
      %v1846 = vpop.f32.mrb[0].mxu0
      %v1847 = vadd.f32 0.0, %v1846
      %v1848 = vpop.f32.mrb[0].mxu0
      %1849 = vmatprep.mubr.bf16.mxu0 0
      %1850 = vmatmul.mubr.bf16.gmra.mrb[0].mxu0 %v1695
      %v1851 = vpop.f32.mrb[0].mxu0
      %v1852 = vadd.f32 0.0, %v1851
      %v1853 = vpop.f32.mrb[0].mxu0
      %v1854 = vpop.f32.mrb[0].mxu0
      %v1855 = vadd.f32 0.0, %v1854
      %v1856 = vpop.f32.mrb[0].mxu0
      %1857 = vdwg.mxu0
      %v1858 = vadd.f32 %v1653, %v1732
      %v1859 = vadd.f32 %v1654, %v1735
      %v1860 = vadd.f32 %v1655, %v1740
      %v1861 = vadd.f32 %v1656, %v1743
      %v1862 = vadd.f32 %v1657, %v1748
      %v1863 = vadd.f32 %v1658, %v1751
      %v1864 = vadd.f32 %v1659, %v1756
      %v1865 = vadd.f32 %v1660, %v1759
      %v1866 = vadd.f32 %v1661, %v1764
      %v1867 = vadd.f32 %v1662, %v1767
      %v1868 = vadd.f32 %v1663, %v1772
      %v1869 = vadd.f32 %v1664, %v1775
      %v1870 = vadd.f32 %v1665, %v1780
      %v1871 = vadd.f32 %v1666, %v1783
      %v1872 = vadd.f32 %v1667, %v1788
      %v1873 = vadd.f32 %v1668, %v1791
      %v1874 = vadd.f32 %v1669, %v1796
      %v1875 = vadd.f32 %v1670, %v1799
      %v1876 = vadd.f32 %v1671, %v1804
      %v1877 = vadd.f32 %v1672, %v1807
      %v1878 = vadd.f32 %v1673, %v1812
      %v1879 = vadd.f32 %v1674, %v1815
      %v1880 = vadd.f32 %v1675, %v1820
      %v1881 = vadd.f32 %v1676, %v1823
      %v1882 = vadd.f32 %v1677, %v1828
      %v1883 = vadd.f32 %v1678, %v1831
      %v1884 = vadd.f32 %v1679, %v1836
      %v1885 = vadd.f32 %v1680, %v1839
      %v1886 = vadd.f32 %v1681, %v1844
      %v1887 = vadd.f32 %v1682, %v1847
      %v1888 = vadd.f32 %v1683, %v1852
      %v1889 = vadd.f32 %v1684, %v1855
      %v1890 = vshrl.u32 %v737, 16
      %v1892 = vshll.u32 %v737, 16
      %v1894 = vrot.slane %v1892, 1
      %v1895 = vor.u32 %v1890, %v1894
      %v1897 = vshll.u32 %v738, 16
      %v1899 = vrot.slane %v1897, 1
      %v1900 = vsel %vm743, %v1895, %v1899
      %s1901 = scalar_lea.vmem %s1, 32
      %v1902 = vld [vmem:[%s1901] sm:$0xf]
      %v1903 = vld [vmem:[%s1901 + $0x4] sm:$0xf]
      %v1906 = vunpack.c.l.b16 %v1902
      %v1907 = vunpack.c.l.b16 %v1903
      %v1908 = vpack.c.b16 %v1907, %v1906
      %v1911 = vsel %vm945, %v1900, 0
      %1913 = vmatprep.subr.bf16.mxu0 0
      %1914 = vmatpush1.bf16.msra.mxu0 %v1908
      %1915 = vmatprep.subr.bf16.mxu0 0
      %1916 = vmatpush1.bf16.msra.mxu0 0
      %1917 = vmatprep.subr.bf16.mxu0 0
      %1918 = vmatpush1.bf16.msra.mxu0 0
      %1919 = vmatprep.subr.bf16.mxu0 0
      %1920 = vmatpush1.bf16.msra.mxu0 0
      %1921 = vmatprep.subr.bf16.mxu0 0
      %1922 = vmatpush1.bf16.msra.mxu0 0
      %1923 = vmatprep.subr.bf16.mxu0 0
      %1924 = vmatpush1.bf16.msra.mxu0 0
      %1925 = vmatprep.subr.bf16.mxu0 0
      %1926 = vmatpush1.bf16.msra.mxu0 0
      %1927 = vmatprep.subr.bf16.mxu0 0
      %1928 = vmatpush1.bf16.msra.mxu0 0
      %1929 = vmatprep.subr.bf16.mxu0 0
      %1930 = vmatpush1.bf16.msra.mxu0 0
      %1931 = vmatprep.subr.bf16.mxu0 0
      %1932 = vmatpush1.bf16.msra.mxu0 0
      %1933 = vmatprep.subr.bf16.mxu0 0
      %1934 = vmatpush1.bf16.msra.mxu0 0
      %1935 = vmatprep.subr.bf16.mxu0 0
      %1936 = vmatpush1.bf16.msra.mxu0 0
      %1937 = vmatprep.subr.bf16.mxu0 0
      %1938 = vmatpush1.bf16.msra.mxu0 0
      %1939 = vmatprep.subr.bf16.mxu0 0
      %1940 = vmatpush1.bf16.msra.mxu0 0
      %1941 = vmatprep.subr.bf16.mxu0 0
      %1942 = vmatpush1.bf16.msra.mxu0 0
      %1943 = vmatprep.subr.bf16.mxu0 0
      %1944 = vmatpush1.bf16.msra.mxu0 0
      %1945 = vmatprep.mubr.bf16.mxu0 0
      %1946 = vmatmul.mubr.bf16.gmra.mrb[0].mxu0 %v950
      %v1947 = vpop.f32.mrb[0].mxu0
      %v1948 = vadd.f32 0.0, %v1947
      %v1949 = vpop.f32.mrb[0].mxu0
      %v1950 = vpop.f32.mrb[0].mxu0
      %v1951 = vadd.f32 0.0, %v1950
      %v1952 = vpop.f32.mrb[0].mxu0
      %1953 = vmatprep.mubr.bf16.mxu0 0
      %1954 = vmatmul.mubr.bf16.gmra.mrb[0].mxu0 %v953
      %v1955 = vpop.f32.mrb[0].mxu0
      %v1956 = vadd.f32 0.0, %v1955
      %v1957 = vpop.f32.mrb[0].mxu0
      %v1958 = vpop.f32.mrb[0].mxu0
      %v1959 = vadd.f32 0.0, %v1958
      %v1960 = vpop.f32.mrb[0].mxu0
      %1961 = vmatprep.mubr.bf16.mxu0 0
      %1962 = vmatmul.mubr.bf16.gmra.mrb[0].mxu0 %v956
      %v1963 = vpop.f32.mrb[0].mxu0
      %v1964 = vadd.f32 0.0, %v1963
      %v1965 = vpop.f32.mrb[0].mxu0
      %v1966 = vpop.f32.mrb[0].mxu0
      %v1967 = vadd.f32 0.0, %v1966
      %v1968 = vpop.f32.mrb[0].mxu0
      %1969 = vmatprep.mubr.bf16.mxu0 0
      %1970 = vmatmul.mubr.bf16.gmra.mrb[0].mxu0 %v959
      %v1971 = vpop.f32.mrb[0].mxu0
      %v1972 = vadd.f32 0.0, %v1971
      %v1973 = vpop.f32.mrb[0].mxu0
      %v1974 = vpop.f32.mrb[0].mxu0
      %v1975 = vadd.f32 0.0, %v1974
      %v1976 = vpop.f32.mrb[0].mxu0
      %1977 = vmatprep.mubr.bf16.mxu0 0
      %1978 = vmatmul.mubr.bf16.gmra.mrb[0].mxu0 %v962
      %v1979 = vpop.f32.mrb[0].mxu0
      %v1980 = vadd.f32 0.0, %v1979
      %v1981 = vpop.f32.mrb[0].mxu0
      %v1982 = vpop.f32.mrb[0].mxu0
      %v1983 = vadd.f32 0.0, %v1982
      %v1984 = vpop.f32.mrb[0].mxu0
      %1985 = vmatprep.mubr.bf16.mxu0 0
      %1986 = vmatmul.mubr.bf16.gmra.mrb[0].mxu0 %v965
      %v1987 = vpop.f32.mrb[0].mxu0
      %v1988 = vadd.f32 0.0, %v1987
      %v1989 = vpop.f32.mrb[0].mxu0
      %v1990 = vpop.f32.mrb[0].mxu0
      %v1991 = vadd.f32 0.0, %v1990
      %v1992 = vpop.f32.mrb[0].mxu0
      %1993 = vmatprep.mubr.bf16.mxu0 0
      %1994 = vmatmul.mubr.bf16.gmra.mrb[0].mxu0 %v968
      %v1995 = vpop.f32.mrb[0].mxu0
      %v1996 = vadd.f32 0.0, %v1995
      %v1997 = vpop.f32.mrb[0].mxu0
      %v1998 = vpop.f32.mrb[0].mxu0
      %v1999 = vadd.f32 0.0, %v1998
      %v2000 = vpop.f32.mrb[0].mxu0
      %2001 = vmatprep.mubr.bf16.mxu0 0
      %2002 = vmatmul.mubr.bf16.gmra.mrb[0].mxu0 %v971
      %v2003 = vpop.f32.mrb[0].mxu0
      %v2004 = vadd.f32 0.0, %v2003
      %v2005 = vpop.f32.mrb[0].mxu0
      %v2006 = vpop.f32.mrb[0].mxu0
      %v2007 = vadd.f32 0.0, %v2006
      %v2008 = vpop.f32.mrb[0].mxu0
      %2009 = vmatprep.mubr.bf16.mxu0 0
      %2010 = vmatmul.mubr.bf16.gmra.mrb[0].mxu0 %v974
      %v2011 = vpop.f32.mrb[0].mxu0
      %v2012 = vadd.f32 0.0, %v2011
      %v2013 = vpop.f32.mrb[0].mxu0
      %v2014 = vpop.f32.mrb[0].mxu0
      %v2015 = vadd.f32 0.0, %v2014
      %v2016 = vpop.f32.mrb[0].mxu0
      %2017 = vmatprep.mubr.bf16.mxu0 0
      %2018 = vmatmul.mubr.bf16.gmra.mrb[0].mxu0 %v977
      %v2019 = vpop.f32.mrb[0].mxu0
      %v2020 = vadd.f32 0.0, %v2019
      %v2021 = vpop.f32.mrb[0].mxu0
      %v2022 = vpop.f32.mrb[0].mxu0
      %v2023 = vadd.f32 0.0, %v2022
      %v2024 = vpop.f32.mrb[0].mxu0
      %2025 = vmatprep.mubr.bf16.mxu0 0
      %2026 = vmatmul.mubr.bf16.gmra.mrb[0].mxu0 %v980
      %v2027 = vpop.f32.mrb[0].mxu0
      %v2028 = vadd.f32 0.0, %v2027
      %v2029 = vpop.f32.mrb[0].mxu0
      %v2030 = vpop.f32.mrb[0].mxu0
      %v2031 = vadd.f32 0.0, %v2030
      %v2032 = vpop.f32.mrb[0].mxu0
      %2033 = vmatprep.mubr.bf16.mxu0 0
      %2034 = vmatmul.mubr.bf16.gmra.mrb[0].mxu0 %v983
      %v2035 = vpop.f32.mrb[0].mxu0
      %v2036 = vadd.f32 0.0, %v2035
      %v2037 = vpop.f32.mrb[0].mxu0
      %v2038 = vpop.f32.mrb[0].mxu0
      %v2039 = vadd.f32 0.0, %v2038
      %v2040 = vpop.f32.mrb[0].mxu0
      %2041 = vmatprep.mubr.bf16.mxu0 0
      %2042 = vmatmul.mubr.bf16.gmra.mrb[0].mxu0 %v986
      %v2043 = vpop.f32.mrb[0].mxu0
      %v2044 = vadd.f32 0.0, %v2043
      %v2045 = vpop.f32.mrb[0].mxu0
      %v2046 = vpop.f32.mrb[0].mxu0
      %v2047 = vadd.f32 0.0, %v2046
      %v2048 = vpop.f32.mrb[0].mxu0
      %2049 = vmatprep.mubr.bf16.mxu0 0
      %2050 = vmatmul.mubr.bf16.gmra.mrb[0].mxu0 %v989
      %v2051 = vpop.f32.mrb[0].mxu0
      %v2052 = vadd.f32 0.0, %v2051
      %v2053 = vpop.f32.mrb[0].mxu0
      %v2054 = vpop.f32.mrb[0].mxu0
      %v2055 = vadd.f32 0.0, %v2054
      %v2056 = vpop.f32.mrb[0].mxu0
      %2057 = vmatprep.mubr.bf16.mxu0 0
      %2058 = vmatmul.mubr.bf16.gmra.mrb[0].mxu0 %v992
      %v2059 = vpop.f32.mrb[0].mxu0
      %v2060 = vadd.f32 0.0, %v2059
      %v2061 = vpop.f32.mrb[0].mxu0
      %v2062 = vpop.f32.mrb[0].mxu0
      %v2063 = vadd.f32 0.0, %v2062
      %v2064 = vpop.f32.mrb[0].mxu0
      %2065 = vmatprep.mubr.bf16.mxu0 0
      %2066 = vmatmul.mubr.bf16.gmra.mrb[0].mxu0 %v1911
      %v2067 = vpop.f32.mrb[0].mxu0
      %v2068 = vadd.f32 0.0, %v2067
      %v2069 = vpop.f32.mrb[0].mxu0
      %v2070 = vpop.f32.mrb[0].mxu0
      %v2071 = vadd.f32 0.0, %v2070
      %v2072 = vpop.f32.mrb[0].mxu0
      %2073 = vdwg.mxu0
      %v2074 = vadd.f32 %v1858, %v1948
      %v2075 = vadd.f32 %v1859, %v1951
      %v2076 = vadd.f32 %v1860, %v1956
      %v2077 = vadd.f32 %v1861, %v1959
      %v2078 = vadd.f32 %v1862, %v1964
      %v2079 = vadd.f32 %v1863, %v1967
      %v2080 = vadd.f32 %v1864, %v1972
      %v2081 = vadd.f32 %v1865, %v1975
      %v2082 = vadd.f32 %v1866, %v1980
      %v2083 = vadd.f32 %v1867, %v1983
      %v2084 = vadd.f32 %v1868, %v1988
      %v2085 = vadd.f32 %v1869, %v1991
      %v2086 = vadd.f32 %v1870, %v1996
      %v2087 = vadd.f32 %v1871, %v1999
      %v2088 = vadd.f32 %v1872, %v2004
      %v2089 = vadd.f32 %v1873, %v2007
      %v2090 = vadd.f32 %v1874, %v2012
      %v2091 = vadd.f32 %v1875, %v2015
      %v2092 = vadd.f32 %v1876, %v2020
      %v2093 = vadd.f32 %v1877, %v2023
      %v2094 = vadd.f32 %v1878, %v2028
      %v2095 = vadd.f32 %v1879, %v2031
      %v2096 = vadd.f32 %v1880, %v2036
      %v2097 = vadd.f32 %v1881, %v2039
      %v2098 = vadd.f32 %v1882, %v2044
      %v2099 = vadd.f32 %v1883, %v2047
      %v2100 = vadd.f32 %v1884, %v2052
      %v2101 = vadd.f32 %v1885, %v2055
      %v2102 = vadd.f32 %v1886, %v2060
      %v2103 = vadd.f32 %v1887, %v2063
      %v2104 = vadd.f32 %v1888, %v2068
      %v2105 = vadd.f32 %v1889, %v2071
      %v2108 = vrot.slane %v737, 1
      %v2109 = vrot.slane %v738, 1
      %v2110 = vsel %vm1386, %v2108, %v2109
      %s2111 = scalar_lea.vmem %s1, 40
      %v2112 = vld [vmem:[%s2111] sm:$0xf]
      %v2113 = vld [vmem:[%s2111 + $0x4] sm:$0xf]
      %v2116 = vunpack.c.l.b16 %v2112
      %v2117 = vunpack.c.l.b16 %v2113
      %v2118 = vpack.c.b16 %v2117, %v2116
      %v2121 = vsel %vm945, %v2110, 0
      %2123 = vmatprep.subr.bf16.mxu0 0
      %2124 = vmatpush1.bf16.msra.mxu0 %v2118
      %2125 = vmatprep.subr.bf16.mxu0 0
      %2126 = vmatpush1.bf16.msra.mxu0 0
      %2127 = vmatprep.subr.bf16.mxu0 0
      %2128 = vmatpush1.bf16.msra.mxu0 0
      %2129 = vmatprep.subr.bf16.mxu0 0
      %2130 = vmatpush1.bf16.msra.mxu0 0
      %2131 = vmatprep.subr.bf16.mxu0 0
      %2132 = vmatpush1.bf16.msra.mxu0 0
      %2133 = vmatprep.subr.bf16.mxu0 0
      %2134 = vmatpush1.bf16.msra.mxu0 0
      %2135 = vmatprep.subr.bf16.mxu0 0
      %2136 = vmatpush1.bf16.msra.mxu0 0
      %2137 = vmatprep.subr.bf16.mxu0 0
      %2138 = vmatpush1.bf16.msra.mxu0 0
      %2139 = vmatprep.subr.bf16.mxu0 0
      %2140 = vmatpush1.bf16.msra.mxu0 0
      %2141 = vmatprep.subr.bf16.mxu0 0
      %2142 = vmatpush1.bf16.msra.mxu0 0
      %2143 = vmatprep.subr.bf16.mxu0 0
      %2144 = vmatpush1.bf16.msra.mxu0 0
      %2145 = vmatprep.subr.bf16.mxu0 0
      %2146 = vmatpush1.bf16.msra.mxu0 0
      %2147 = vmatprep.subr.bf16.mxu0 0
      %2148 = vmatpush1.bf16.msra.mxu0 0
      %2149 = vmatprep.subr.bf16.mxu0 0
      %2150 = vmatpush1.bf16.msra.mxu0 0
      %2151 = vmatprep.subr.bf16.mxu0 0
      %2152 = vmatpush1.bf16.msra.mxu0 0
      %2153 = vmatprep.subr.bf16.mxu0 0
      %2154 = vmatpush1.bf16.msra.mxu0 0
      %2155 = vmatprep.mubr.bf16.mxu0 0
      %2156 = vmatmul.mubr.bf16.gmra.mrb[0].mxu0 %v1448
      %v2157 = vpop.f32.mrb[0].mxu0
      %v2158 = vadd.f32 0.0, %v2157
      %v2159 = vpop.f32.mrb[0].mxu0
      %v2160 = vpop.f32.mrb[0].mxu0
      %v2161 = vadd.f32 0.0, %v2160
      %v2162 = vpop.f32.mrb[0].mxu0
      %2163 = vmatprep.mubr.bf16.mxu0 0
      %2164 = vmatmul.mubr.bf16.gmra.mrb[0].mxu0 %v1451
      %v2165 = vpop.f32.mrb[0].mxu0
      %v2166 = vadd.f32 0.0, %v2165
      %v2167 = vpop.f32.mrb[0].mxu0
      %v2168 = vpop.f32.mrb[0].mxu0
      %v2169 = vadd.f32 0.0, %v2168
      %v2170 = vpop.f32.mrb[0].mxu0
      %2171 = vmatprep.mubr.bf16.mxu0 0
      %2172 = vmatmul.mubr.bf16.gmra.mrb[0].mxu0 %v1454
      %v2173 = vpop.f32.mrb[0].mxu0
      %v2174 = vadd.f32 0.0, %v2173
      %v2175 = vpop.f32.mrb[0].mxu0
      %v2176 = vpop.f32.mrb[0].mxu0
      %v2177 = vadd.f32 0.0, %v2176
      %v2178 = vpop.f32.mrb[0].mxu0
      %2179 = vmatprep.mubr.bf16.mxu0 0
      %2180 = vmatmul.mubr.bf16.gmra.mrb[0].mxu0 %v1457
      %v2181 = vpop.f32.mrb[0].mxu0
      %v2182 = vadd.f32 0.0, %v2181
      %v2183 = vpop.f32.mrb[0].mxu0
      %v2184 = vpop.f32.mrb[0].mxu0
      %v2185 = vadd.f32 0.0, %v2184
      %v2186 = vpop.f32.mrb[0].mxu0
      %2187 = vmatprep.mubr.bf16.mxu0 0
      %2188 = vmatmul.mubr.bf16.gmra.mrb[0].mxu0 %v1460
      %v2189 = vpop.f32.mrb[0].mxu0
      %v2190 = vadd.f32 0.0, %v2189
      %v2191 = vpop.f32.mrb[0].mxu0
      %v2192 = vpop.f32.mrb[0].mxu0
      %v2193 = vadd.f32 0.0, %v2192
      %v2194 = vpop.f32.mrb[0].mxu0
      %2195 = vmatprep.mubr.bf16.mxu0 0
      %2196 = vmatmul.mubr.bf16.gmra.mrb[0].mxu0 %v1463
      %v2197 = vpop.f32.mrb[0].mxu0
      %v2198 = vadd.f32 0.0, %v2197
      %v2199 = vpop.f32.mrb[0].mxu0
      %v2200 = vpop.f32.mrb[0].mxu0
      %v2201 = vadd.f32 0.0, %v2200
      %v2202 = vpop.f32.mrb[0].mxu0
      %2203 = vmatprep.mubr.bf16.mxu0 0
      %2204 = vmatmul.mubr.bf16.gmra.mrb[0].mxu0 %v1466
      %v2205 = vpop.f32.mrb[0].mxu0
      %v2206 = vadd.f32 0.0, %v2205
      %v2207 = vpop.f32.mrb[0].mxu0
      %v2208 = vpop.f32.mrb[0].mxu0
      %v2209 = vadd.f32 0.0, %v2208
      %v2210 = vpop.f32.mrb[0].mxu0
      %2211 = vmatprep.mubr.bf16.mxu0 0
      %2212 = vmatmul.mubr.bf16.gmra.mrb[0].mxu0 %v1469
      %v2213 = vpop.f32.mrb[0].mxu0
      %v2214 = vadd.f32 0.0, %v2213
      %v2215 = vpop.f32.mrb[0].mxu0
      %v2216 = vpop.f32.mrb[0].mxu0
      %v2217 = vadd.f32 0.0, %v2216
      %v2218 = vpop.f32.mrb[0].mxu0
      %2219 = vmatprep.mubr.bf16.mxu0 0
      %2220 = vmatmul.mubr.bf16.gmra.mrb[0].mxu0 %v1472
      %v2221 = vpop.f32.mrb[0].mxu0
      %v2222 = vadd.f32 0.0, %v2221
      %v2223 = vpop.f32.mrb[0].mxu0
      %v2224 = vpop.f32.mrb[0].mxu0
      %v2225 = vadd.f32 0.0, %v2224
      %v2226 = vpop.f32.mrb[0].mxu0
      %2227 = vmatprep.mubr.bf16.mxu0 0
      %2228 = vmatmul.mubr.bf16.gmra.mrb[0].mxu0 %v1475
      %v2229 = vpop.f32.mrb[0].mxu0
      %v2230 = vadd.f32 0.0, %v2229
      %v2231 = vpop.f32.mrb[0].mxu0
      %v2232 = vpop.f32.mrb[0].mxu0
      %v2233 = vadd.f32 0.0, %v2232
      %v2234 = vpop.f32.mrb[0].mxu0
      %2235 = vmatprep.mubr.bf16.mxu0 0
      %2236 = vmatmul.mubr.bf16.gmra.mrb[0].mxu0 %v1478
      %v2237 = vpop.f32.mrb[0].mxu0
      %v2238 = vadd.f32 0.0, %v2237
      %v2239 = vpop.f32.mrb[0].mxu0
      %v2240 = vpop.f32.mrb[0].mxu0
      %v2241 = vadd.f32 0.0, %v2240
      %v2242 = vpop.f32.mrb[0].mxu0
      %2243 = vmatprep.mubr.bf16.mxu0 0
      %2244 = vmatmul.mubr.bf16.gmra.mrb[0].mxu0 %v1481
      %v2245 = vpop.f32.mrb[0].mxu0
      %v2246 = vadd.f32 0.0, %v2245
      %v2247 = vpop.f32.mrb[0].mxu0
      %v2248 = vpop.f32.mrb[0].mxu0
      %v2249 = vadd.f32 0.0, %v2248
      %v2250 = vpop.f32.mrb[0].mxu0
      %2251 = vmatprep.mubr.bf16.mxu0 0
      %2252 = vmatmul.mubr.bf16.gmra.mrb[0].mxu0 %v1484
      %v2253 = vpop.f32.mrb[0].mxu0
      %v2254 = vadd.f32 0.0, %v2253
      %v2255 = vpop.f32.mrb[0].mxu0
      %v2256 = vpop.f32.mrb[0].mxu0
      %v2257 = vadd.f32 0.0, %v2256
      %v2258 = vpop.f32.mrb[0].mxu0
      %2259 = vmatprep.mubr.bf16.mxu0 0
      %2260 = vmatmul.mubr.bf16.gmra.mrb[0].mxu0 %v1487
      %v2261 = vpop.f32.mrb[0].mxu0
      %v2262 = vadd.f32 0.0, %v2261
      %v2263 = vpop.f32.mrb[0].mxu0
      %v2264 = vpop.f32.mrb[0].mxu0
      %v2265 = vadd.f32 0.0, %v2264
      %v2266 = vpop.f32.mrb[0].mxu0
      %2267 = vmatprep.mubr.bf16.mxu0 0
      %2268 = vmatmul.mubr.bf16.gmra.mrb[0].mxu0 %v1490
      %v2269 = vpop.f32.mrb[0].mxu0
      %v2270 = vadd.f32 0.0, %v2269
      %v2271 = vpop.f32.mrb[0].mxu0
      %v2272 = vpop.f32.mrb[0].mxu0
      %v2273 = vadd.f32 0.0, %v2272
      %v2274 = vpop.f32.mrb[0].mxu0
      %2275 = vmatprep.mubr.bf16.mxu0 0
      %2276 = vmatmul.mubr.bf16.gmra.mrb[0].mxu0 %v2121
      %v2277 = vpop.f32.mrb[0].mxu0
      %v2278 = vadd.f32 0.0, %v2277
      %v2279 = vpop.f32.mrb[0].mxu0
      %v2280 = vpop.f32.mrb[0].mxu0
      %v2281 = vadd.f32 0.0, %v2280
      %v2282 = vpop.f32.mrb[0].mxu0
      %2283 = vdwg.mxu0
      %v2284 = vadd.f32 %v2074, %v2158
      %v2285 = vadd.f32 %v2075, %v2161
      %v2286 = vadd.f32 %v2076, %v2166
      %v2287 = vadd.f32 %v2077, %v2169
      %v2288 = vadd.f32 %v2078, %v2174
      %v2289 = vadd.f32 %v2079, %v2177
      %v2290 = vadd.f32 %v2080, %v2182
      %v2291 = vadd.f32 %v2081, %v2185
      %v2292 = vadd.f32 %v2082, %v2190
      %v2293 = vadd.f32 %v2083, %v2193
      %v2294 = vadd.f32 %v2084, %v2198
      %v2295 = vadd.f32 %v2085, %v2201
      %v2296 = vadd.f32 %v2086, %v2206
      %v2297 = vadd.f32 %v2087, %v2209
      %v2298 = vadd.f32 %v2088, %v2214
      %v2299 = vadd.f32 %v2089, %v2217
      %v2300 = vadd.f32 %v2090, %v2222
      %v2301 = vadd.f32 %v2091, %v2225
      %v2302 = vadd.f32 %v2092, %v2230
      %v2303 = vadd.f32 %v2093, %v2233
      %v2304 = vadd.f32 %v2094, %v2238
      %v2305 = vadd.f32 %v2095, %v2241
      %v2306 = vadd.f32 %v2096, %v2246
      %v2307 = vadd.f32 %v2097, %v2249
      %v2308 = vadd.f32 %v2098, %v2254
      %v2309 = vadd.f32 %v2099, %v2257
      %v2310 = vadd.f32 %v2100, %v2262
      %v2311 = vadd.f32 %v2101, %v2265
      %v2312 = vadd.f32 %v2102, %v2270
      %v2313 = vadd.f32 %v2103, %v2273
      %v2314 = vadd.f32 %v2104, %v2278
      %v2315 = vadd.f32 %v2105, %v2281
      %s2316 = scalar_lea.vmem %s1, 48
      %v2317 = vld [vmem:[%s2316] sm:$0xf]
      %v2318 = vld [vmem:[%s2316 + $0x4] sm:$0xf]
      %v2321 = vunpack.c.l.b16 %v2317
      %v2322 = vunpack.c.l.b16 %v2318
      %v2323 = vpack.c.b16 %v2322, %v2321
      %v2326 = vsel %vm945, %v739, 0
      %2328 = vmatprep.subr.bf16.mxu0 0
      %2329 = vmatpush1.bf16.msra.mxu0 %v2323
      %2330 = vmatprep.subr.bf16.mxu0 0
      %2331 = vmatpush1.bf16.msra.mxu0 0
      %2332 = vmatprep.subr.bf16.mxu0 0
      %2333 = vmatpush1.bf16.msra.mxu0 0
      %2334 = vmatprep.subr.bf16.mxu0 0
      %2335 = vmatpush1.bf16.msra.mxu0 0
      %2336 = vmatprep.subr.bf16.mxu0 0
      %2337 = vmatpush1.bf16.msra.mxu0 0
      %2338 = vmatprep.subr.bf16.mxu0 0
      %2339 = vmatpush1.bf16.msra.mxu0 0
      %2340 = vmatprep.subr.bf16.mxu0 0
      %2341 = vmatpush1.bf16.msra.mxu0 0
      %2342 = vmatprep.subr.bf16.mxu0 0
      %2343 = vmatpush1.bf16.msra.mxu0 0
      %2344 = vmatprep.subr.bf16.mxu0 0
      %2345 = vmatpush1.bf16.msra.mxu0 0
      %2346 = vmatprep.subr.bf16.mxu0 0
      %2347 = vmatpush1.bf16.msra.mxu0 0
      %2348 = vmatprep.subr.bf16.mxu0 0
      %2349 = vmatpush1.bf16.msra.mxu0 0
      %2350 = vmatprep.subr.bf16.mxu0 0
      %2351 = vmatpush1.bf16.msra.mxu0 0
      %2352 = vmatprep.subr.bf16.mxu0 0
      %2353 = vmatpush1.bf16.msra.mxu0 0
      %2354 = vmatprep.subr.bf16.mxu0 0
      %2355 = vmatpush1.bf16.msra.mxu0 0
      %2356 = vmatprep.subr.bf16.mxu0 0
      %2357 = vmatpush1.bf16.msra.mxu0 0
      %2358 = vmatprep.subr.bf16.mxu0 0
      %2359 = vmatpush1.bf16.msra.mxu0 0
      %2360 = vmatprep.mubr.bf16.mxu0 0
      %2361 = vmatmul.mubr.bf16.gmra.mrb[0].mxu0 %v1165
      %v2362 = vpop.f32.mrb[0].mxu0
      %v2363 = vadd.f32 0.0, %v2362
      %v2364 = vpop.f32.mrb[0].mxu0
      %v2365 = vpop.f32.mrb[0].mxu0
      %v2366 = vadd.f32 0.0, %v2365
      %v2367 = vpop.f32.mrb[0].mxu0
      %2368 = vmatprep.mubr.bf16.mxu0 0
      %2369 = vmatmul.mubr.bf16.gmra.mrb[0].mxu0 %v1167
      %v2370 = vpop.f32.mrb[0].mxu0
      %v2371 = vadd.f32 0.0, %v2370
      %v2372 = vpop.f32.mrb[0].mxu0
      %v2373 = vpop.f32.mrb[0].mxu0
      %v2374 = vadd.f32 0.0, %v2373
      %v2375 = vpop.f32.mrb[0].mxu0
      %2376 = vmatprep.mubr.bf16.mxu0 0
      %2377 = vmatmul.mubr.bf16.gmra.mrb[0].mxu0 %v1169
      %v2378 = vpop.f32.mrb[0].mxu0
      %v2379 = vadd.f32 0.0, %v2378
      %v2380 = vpop.f32.mrb[0].mxu0
      %v2381 = vpop.f32.mrb[0].mxu0
      %v2382 = vadd.f32 0.0, %v2381
      %v2383 = vpop.f32.mrb[0].mxu0
      %2384 = vmatprep.mubr.bf16.mxu0 0
      %2385 = vmatmul.mubr.bf16.gmra.mrb[0].mxu0 %v1171
      %v2386 = vpop.f32.mrb[0].mxu0
      %v2387 = vadd.f32 0.0, %v2386
      %v2388 = vpop.f32.mrb[0].mxu0
      %v2389 = vpop.f32.mrb[0].mxu0
      %v2390 = vadd.f32 0.0, %v2389
      %v2391 = vpop.f32.mrb[0].mxu0
      %2392 = vmatprep.mubr.bf16.mxu0 0
      %2393 = vmatmul.mubr.bf16.gmra.mrb[0].mxu0 %v1173
      %v2394 = vpop.f32.mrb[0].mxu0
      %v2395 = vadd.f32 0.0, %v2394
      %v2396 = vpop.f32.mrb[0].mxu0
      %v2397 = vpop.f32.mrb[0].mxu0
      %v2398 = vadd.f32 0.0, %v2397
      %v2399 = vpop.f32.mrb[0].mxu0
      %2400 = vmatprep.mubr.bf16.mxu0 0
      %2401 = vmatmul.mubr.bf16.gmra.mrb[0].mxu0 %v1175
      %v2402 = vpop.f32.mrb[0].mxu0
      %v2403 = vadd.f32 0.0, %v2402
      %v2404 = vpop.f32.mrb[0].mxu0
      %v2405 = vpop.f32.mrb[0].mxu0
      %v2406 = vadd.f32 0.0, %v2405
      %v2407 = vpop.f32.mrb[0].mxu0
      %2408 = vmatprep.mubr.bf16.mxu0 0
      %2409 = vmatmul.mubr.bf16.gmra.mrb[0].mxu0 %v1177
      %v2410 = vpop.f32.mrb[0].mxu0
      %v2411 = vadd.f32 0.0, %v2410
      %v2412 = vpop.f32.mrb[0].mxu0
      %v2413 = vpop.f32.mrb[0].mxu0
      %v2414 = vadd.f32 0.0, %v2413
      %v2415 = vpop.f32.mrb[0].mxu0
      %2416 = vmatprep.mubr.bf16.mxu0 0
      %2417 = vmatmul.mubr.bf16.gmra.mrb[0].mxu0 %v1179
      %v2418 = vpop.f32.mrb[0].mxu0
      %v2419 = vadd.f32 0.0, %v2418
      %v2420 = vpop.f32.mrb[0].mxu0
      %v2421 = vpop.f32.mrb[0].mxu0
      %v2422 = vadd.f32 0.0, %v2421
      %v2423 = vpop.f32.mrb[0].mxu0
      %2424 = vmatprep.mubr.bf16.mxu0 0
      %2425 = vmatmul.mubr.bf16.gmra.mrb[0].mxu0 %v1181
      %v2426 = vpop.f32.mrb[0].mxu0
      %v2427 = vadd.f32 0.0, %v2426
      %v2428 = vpop.f32.mrb[0].mxu0
      %v2429 = vpop.f32.mrb[0].mxu0
      %v2430 = vadd.f32 0.0, %v2429
      %v2431 = vpop.f32.mrb[0].mxu0
      %2432 = vmatprep.mubr.bf16.mxu0 0
      %2433 = vmatmul.mubr.bf16.gmra.mrb[0].mxu0 %v1183
      %v2434 = vpop.f32.mrb[0].mxu0
      %v2435 = vadd.f32 0.0, %v2434
      %v2436 = vpop.f32.mrb[0].mxu0
      %v2437 = vpop.f32.mrb[0].mxu0
      %v2438 = vadd.f32 0.0, %v2437
      %v2439 = vpop.f32.mrb[0].mxu0
      %2440 = vmatprep.mubr.bf16.mxu0 0
      %2441 = vmatmul.mubr.bf16.gmra.mrb[0].mxu0 %v1185
      %v2442 = vpop.f32.mrb[0].mxu0
      %v2443 = vadd.f32 0.0, %v2442
      %v2444 = vpop.f32.mrb[0].mxu0
      %v2445 = vpop.f32.mrb[0].mxu0
      %v2446 = vadd.f32 0.0, %v2445
      %v2447 = vpop.f32.mrb[0].mxu0
      %2448 = vmatprep.mubr.bf16.mxu0 0
      %2449 = vmatmul.mubr.bf16.gmra.mrb[0].mxu0 %v1187
      %v2450 = vpop.f32.mrb[0].mxu0
      %v2451 = vadd.f32 0.0, %v2450
      %v2452 = vpop.f32.mrb[0].mxu0
      %v2453 = vpop.f32.mrb[0].mxu0
      %v2454 = vadd.f32 0.0, %v2453
      %v2455 = vpop.f32.mrb[0].mxu0
      %2456 = vmatprep.mubr.bf16.mxu0 0
      %2457 = vmatmul.mubr.bf16.gmra.mrb[0].mxu0 %v1189
      %v2458 = vpop.f32.mrb[0].mxu0
      %v2459 = vadd.f32 0.0, %v2458
      %v2460 = vpop.f32.mrb[0].mxu0
      %v2461 = vpop.f32.mrb[0].mxu0
      %v2462 = vadd.f32 0.0, %v2461
      %v2463 = vpop.f32.mrb[0].mxu0
      %2464 = vmatprep.mubr.bf16.mxu0 0
      %2465 = vmatmul.mubr.bf16.gmra.mrb[0].mxu0 %v1191
      %v2466 = vpop.f32.mrb[0].mxu0
      %v2467 = vadd.f32 0.0, %v2466
      %v2468 = vpop.f32.mrb[0].mxu0
      %v2469 = vpop.f32.mrb[0].mxu0
      %v2470 = vadd.f32 0.0, %v2469
      %v2471 = vpop.f32.mrb[0].mxu0
      %2472 = vmatprep.mubr.bf16.mxu0 0
      %2473 = vmatmul.mubr.bf16.gmra.mrb[0].mxu0 %v1695
      %v2474 = vpop.f32.mrb[0].mxu0
      %v2475 = vadd.f32 0.0, %v2474
      %v2476 = vpop.f32.mrb[0].mxu0
      %v2477 = vpop.f32.mrb[0].mxu0
      %v2478 = vadd.f32 0.0, %v2477
      %v2479 = vpop.f32.mrb[0].mxu0
      %2480 = vmatprep.mubr.bf16.mxu0 0
      %2481 = vmatmul.mubr.bf16.gmra.mrb[0].mxu0 %v2326
      %v2482 = vpop.f32.mrb[0].mxu0
      %v2483 = vadd.f32 0.0, %v2482
      %v2484 = vpop.f32.mrb[0].mxu0
      %v2485 = vpop.f32.mrb[0].mxu0
      %v2486 = vadd.f32 0.0, %v2485
      %v2487 = vpop.f32.mrb[0].mxu0
      %2488 = vdwg.mxu0
      %v2489 = vadd.f32 %v2284, %v2363
      %v2490 = vadd.f32 %v2285, %v2366
      %v2491 = vadd.f32 %v2286, %v2371
      %v2492 = vadd.f32 %v2287, %v2374
      %v2493 = vadd.f32 %v2288, %v2379
      %v2494 = vadd.f32 %v2289, %v2382
      %v2495 = vadd.f32 %v2290, %v2387
      %v2496 = vadd.f32 %v2291, %v2390
      %v2497 = vadd.f32 %v2292, %v2395
      %v2498 = vadd.f32 %v2293, %v2398
      %v2499 = vadd.f32 %v2294, %v2403
      %v2500 = vadd.f32 %v2295, %v2406
      %v2501 = vadd.f32 %v2296, %v2411
      %v2502 = vadd.f32 %v2297, %v2414
      %v2503 = vadd.f32 %v2298, %v2419
      %v2504 = vadd.f32 %v2299, %v2422
      %v2505 = vadd.f32 %v2300, %v2427
      %v2506 = vadd.f32 %v2301, %v2430
      %v2507 = vadd.f32 %v2302, %v2435
      %v2508 = vadd.f32 %v2303, %v2438
      %v2509 = vadd.f32 %v2304, %v2443
      %v2510 = vadd.f32 %v2305, %v2446
      %v2511 = vadd.f32 %v2306, %v2451
      %v2512 = vadd.f32 %v2307, %v2454
      %v2513 = vadd.f32 %v2308, %v2459
      %v2514 = vadd.f32 %v2309, %v2462
      %v2515 = vadd.f32 %v2310, %v2467
      %v2516 = vadd.f32 %v2311, %v2470
      %v2517 = vadd.f32 %v2312, %v2475
      %v2518 = vadd.f32 %v2313, %v2478
      %v2519 = vadd.f32 %v2314, %v2483
      %v2520 = vadd.f32 %v2315, %v2486
      %v2521 = vshrl.u32 %v739, 16
      %v2523 = vshll.u32 %v739, 16
      %v2525 = vrot.slane %v2523, 1
      %v2526 = vor.u32 %v2521, %v2525
      %v2528 = vshll.u32 %v740, 16
      %v2530 = vrot.slane %v2528, 1
      %v2531 = vsel %vm743, %v2526, %v2530
      %s2532 = scalar_lea.vmem %s1, 56
      %v2533 = vld [vmem:[%s2532] sm:$0xf]
      %v2534 = vld [vmem:[%s2532 + $0x4] sm:$0xf]
      %v2537 = vunpack.c.l.b16 %v2533
      %v2538 = vunpack.c.l.b16 %v2534
      %v2539 = vpack.c.b16 %v2538, %v2537
      %v2542 = vsel %vm945, %v2531, 0
      %2544 = vmatprep.subr.bf16.mxu0 0
      %2545 = vmatpush1.bf16.msra.mxu0 %v2539
      %2546 = vmatprep.subr.bf16.mxu0 0
      %2547 = vmatpush1.bf16.msra.mxu0 0
      %2548 = vmatprep.subr.bf16.mxu0 0
      %2549 = vmatpush1.bf16.msra.mxu0 0
      %2550 = vmatprep.subr.bf16.mxu0 0
      %2551 = vmatpush1.bf16.msra.mxu0 0
      %2552 = vmatprep.subr.bf16.mxu0 0
      %2553 = vmatpush1.bf16.msra.mxu0 0
      %2554 = vmatprep.subr.bf16.mxu0 0
      %2555 = vmatpush1.bf16.msra.mxu0 0
      %2556 = vmatprep.subr.bf16.mxu0 0
      %2557 = vmatpush1.bf16.msra.mxu0 0
      %2558 = vmatprep.subr.bf16.mxu0 0
      %2559 = vmatpush1.bf16.msra.mxu0 0
      %2560 = vmatprep.subr.bf16.mxu0 0
      %2561 = vmatpush1.bf16.msra.mxu0 0
      %2562 = vmatprep.subr.bf16.mxu0 0
      %2563 = vmatpush1.bf16.msra.mxu0 0
      %2564 = vmatprep.subr.bf16.mxu0 0
      %2565 = vmatpush1.bf16.msra.mxu0 0
      %2566 = vmatprep.subr.bf16.mxu0 0
      %2567 = vmatpush1.bf16.msra.mxu0 0
      %2568 = vmatprep.subr.bf16.mxu0 0
      %2569 = vmatpush1.bf16.msra.mxu0 0
      %2570 = vmatprep.subr.bf16.mxu0 0
      %2571 = vmatpush1.bf16.msra.mxu0 0
      %2572 = vmatprep.subr.bf16.mxu0 0
      %2573 = vmatpush1.bf16.msra.mxu0 0
      %2574 = vmatprep.subr.bf16.mxu0 0
      %2575 = vmatpush1.bf16.msra.mxu0 0
      %2576 = vmatprep.mubr.bf16.mxu0 0
      %2577 = vmatmul.mubr.bf16.gmra.mrb[0].mxu0 %v953
      %v2578 = vpop.f32.mrb[0].mxu0
      %v2579 = vadd.f32 0.0, %v2578
      %v2580 = vpop.f32.mrb[0].mxu0
      %v2581 = vpop.f32.mrb[0].mxu0
      %v2582 = vadd.f32 0.0, %v2581
      %v2583 = vpop.f32.mrb[0].mxu0
      %2584 = vmatprep.mubr.bf16.mxu0 0
      %2585 = vmatmul.mubr.bf16.gmra.mrb[0].mxu0 %v956
      %v2586 = vpop.f32.mrb[0].mxu0
      %v2587 = vadd.f32 0.0, %v2586
      %v2588 = vpop.f32.mrb[0].mxu0
      %v2589 = vpop.f32.mrb[0].mxu0
      %v2590 = vadd.f32 0.0, %v2589
      %v2591 = vpop.f32.mrb[0].mxu0
      %2592 = vmatprep.mubr.bf16.mxu0 0
      %2593 = vmatmul.mubr.bf16.gmra.mrb[0].mxu0 %v959
      %v2594 = vpop.f32.mrb[0].mxu0
      %v2595 = vadd.f32 0.0, %v2594
      %v2596 = vpop.f32.mrb[0].mxu0
      %v2597 = vpop.f32.mrb[0].mxu0
      %v2598 = vadd.f32 0.0, %v2597
      %v2599 = vpop.f32.mrb[0].mxu0
      %2600 = vmatprep.mubr.bf16.mxu0 0
      %2601 = vmatmul.mubr.bf16.gmra.mrb[0].mxu0 %v962
      %v2602 = vpop.f32.mrb[0].mxu0
      %v2603 = vadd.f32 0.0, %v2602
      %v2604 = vpop.f32.mrb[0].mxu0
      %v2605 = vpop.f32.mrb[0].mxu0
      %v2606 = vadd.f32 0.0, %v2605
      %v2607 = vpop.f32.mrb[0].mxu0
      %2608 = vmatprep.mubr.bf16.mxu0 0
      %2609 = vmatmul.mubr.bf16.gmra.mrb[0].mxu0 %v965
      %v2610 = vpop.f32.mrb[0].mxu0
      %v2611 = vadd.f32 0.0, %v2610
      %v2612 = vpop.f32.mrb[0].mxu0
      %v2613 = vpop.f32.mrb[0].mxu0
      %v2614 = vadd.f32 0.0, %v2613
      %v2615 = vpop.f32.mrb[0].mxu0
      %2616 = vmatprep.mubr.bf16.mxu0 0
      %2617 = vmatmul.mubr.bf16.gmra.mrb[0].mxu0 %v968
      %v2618 = vpop.f32.mrb[0].mxu0
      %v2619 = vadd.f32 0.0, %v2618
      %v2620 = vpop.f32.mrb[0].mxu0
      %v2621 = vpop.f32.mrb[0].mxu0
      %v2622 = vadd.f32 0.0, %v2621
      %v2623 = vpop.f32.mrb[0].mxu0
      %2624 = vmatprep.mubr.bf16.mxu0 0
      %2625 = vmatmul.mubr.bf16.gmra.mrb[0].mxu0 %v971
      %v2626 = vpop.f32.mrb[0].mxu0
      %v2627 = vadd.f32 0.0, %v2626
      %v2628 = vpop.f32.mrb[0].mxu0
      %v2629 = vpop.f32.mrb[0].mxu0
      %v2630 = vadd.f32 0.0, %v2629
      %v2631 = vpop.f32.mrb[0].mxu0
      %2632 = vmatprep.mubr.bf16.mxu0 0
      %2633 = vmatmul.mubr.bf16.gmra.mrb[0].mxu0 %v974
      %v2634 = vpop.f32.mrb[0].mxu0
      %v2635 = vadd.f32 0.0, %v2634
      %v2636 = vpop.f32.mrb[0].mxu0
      %v2637 = vpop.f32.mrb[0].mxu0
      %v2638 = vadd.f32 0.0, %v2637
      %v2639 = vpop.f32.mrb[0].mxu0
      %2640 = vmatprep.mubr.bf16.mxu0 0
      %2641 = vmatmul.mubr.bf16.gmra.mrb[0].mxu0 %v977
      %v2642 = vpop.f32.mrb[0].mxu0
      %v2643 = vadd.f32 0.0, %v2642
      %v2644 = vpop.f32.mrb[0].mxu0
      %v2645 = vpop.f32.mrb[0].mxu0
      %v2646 = vadd.f32 0.0, %v2645
      %v2647 = vpop.f32.mrb[0].mxu0
      %2648 = vmatprep.mubr.bf16.mxu0 0
      %2649 = vmatmul.mubr.bf16.gmra.mrb[0].mxu0 %v980
      %v2650 = vpop.f32.mrb[0].mxu0
      %v2651 = vadd.f32 0.0, %v2650
      %v2652 = vpop.f32.mrb[0].mxu0
      %v2653 = vpop.f32.mrb[0].mxu0
      %v2654 = vadd.f32 0.0, %v2653
      %v2655 = vpop.f32.mrb[0].mxu0
      %2656 = vmatprep.mubr.bf16.mxu0 0
      %2657 = vmatmul.mubr.bf16.gmra.mrb[0].mxu0 %v983
      %v2658 = vpop.f32.mrb[0].mxu0
      %v2659 = vadd.f32 0.0, %v2658
      %v2660 = vpop.f32.mrb[0].mxu0
      %v2661 = vpop.f32.mrb[0].mxu0
      %v2662 = vadd.f32 0.0, %v2661
      %v2663 = vpop.f32.mrb[0].mxu0
      %2664 = vmatprep.mubr.bf16.mxu0 0
      %2665 = vmatmul.mubr.bf16.gmra.mrb[0].mxu0 %v986
      %v2666 = vpop.f32.mrb[0].mxu0
      %v2667 = vadd.f32 0.0, %v2666
      %v2668 = vpop.f32.mrb[0].mxu0
      %v2669 = vpop.f32.mrb[0].mxu0
      %v2670 = vadd.f32 0.0, %v2669
      %v2671 = vpop.f32.mrb[0].mxu0
      %2672 = vmatprep.mubr.bf16.mxu0 0
      %2673 = vmatmul.mubr.bf16.gmra.mrb[0].mxu0 %v989
      %v2674 = vpop.f32.mrb[0].mxu0
      %v2675 = vadd.f32 0.0, %v2674
      %v2676 = vpop.f32.mrb[0].mxu0
      %v2677 = vpop.f32.mrb[0].mxu0
      %v2678 = vadd.f32 0.0, %v2677
      %v2679 = vpop.f32.mrb[0].mxu0
      %2680 = vmatprep.mubr.bf16.mxu0 0
      %2681 = vmatmul.mubr.bf16.gmra.mrb[0].mxu0 %v992
      %v2682 = vpop.f32.mrb[0].mxu0
      %v2683 = vadd.f32 0.0, %v2682
      %v2684 = vpop.f32.mrb[0].mxu0
      %v2685 = vpop.f32.mrb[0].mxu0
      %v2686 = vadd.f32 0.0, %v2685
      %v2687 = vpop.f32.mrb[0].mxu0
      %2688 = vmatprep.mubr.bf16.mxu0 0
      %2689 = vmatmul.mubr.bf16.gmra.mrb[0].mxu0 %v1911
      %v2690 = vpop.f32.mrb[0].mxu0
      %v2691 = vadd.f32 0.0, %v2690
      %v2692 = vpop.f32.mrb[0].mxu0
      %v2693 = vpop.f32.mrb[0].mxu0
      %v2694 = vadd.f32 0.0, %v2693
      %v2695 = vpop.f32.mrb[0].mxu0
      %2696 = vmatprep.mubr.bf16.mxu0 0
      %2697 = vmatmul.mubr.bf16.gmra.mrb[0].mxu0 %v2542
      %v2698 = vpop.f32.mrb[0].mxu0
      %v2699 = vadd.f32 0.0, %v2698
      %v2700 = vpop.f32.mrb[0].mxu0
      %v2701 = vpop.f32.mrb[0].mxu0
      %v2702 = vadd.f32 0.0, %v2701
      %v2703 = vpop.f32.mrb[0].mxu0
      %2704 = vdwg.mxu0
      %v2705 = vadd.f32 %v2489, %v2579
      %v2706 = vadd.f32 %v2490, %v2582
      %v2707 = vadd.f32 %v2491, %v2587
      %v2708 = vadd.f32 %v2492, %v2590
      %v2709 = vadd.f32 %v2493, %v2595
      %v2710 = vadd.f32 %v2494, %v2598
      %v2711 = vadd.f32 %v2495, %v2603
      %v2712 = vadd.f32 %v2496, %v2606
      %v2713 = vadd.f32 %v2497, %v2611
      %v2714 = vadd.f32 %v2498, %v2614
      %v2715 = vadd.f32 %v2499, %v2619
      %v2716 = vadd.f32 %v2500, %v2622
      %v2717 = vadd.f32 %v2501, %v2627
      %v2718 = vadd.f32 %v2502, %v2630
      %v2719 = vadd.f32 %v2503, %v2635
      %v2720 = vadd.f32 %v2504, %v2638
      %v2721 = vadd.f32 %v2505, %v2643
      %v2722 = vadd.f32 %v2506, %v2646
      %v2723 = vadd.f32 %v2507, %v2651
      %v2724 = vadd.f32 %v2508, %v2654
      %v2725 = vadd.f32 %v2509, %v2659
      %v2726 = vadd.f32 %v2510, %v2662
      %v2727 = vadd.f32 %v2511, %v2667
      %v2728 = vadd.f32 %v2512, %v2670
      %v2729 = vadd.f32 %v2513, %v2675
      %v2730 = vadd.f32 %v2514, %v2678
      %v2731 = vadd.f32 %v2515, %v2683
      %v2732 = vadd.f32 %v2516, %v2686
      %v2733 = vadd.f32 %v2517, %v2691
      %v2734 = vadd.f32 %v2518, %v2694
      %v2735 = vadd.f32 %v2519, %v2699
      %v2736 = vadd.f32 %v2520, %v2702
      %v2739 = vrot.slane %v739, 1
      %v2740 = vrot.slane %v740, 1
      %v2741 = vsel %vm1386, %v2739, %v2740
      %s2742 = scalar_lea.vmem %s1, 64
      %v2743 = vld [vmem:[%s2742] sm:$0xf]
      %v2744 = vld [vmem:[%s2742 + $0x4] sm:$0xf]
      %v2747 = vunpack.c.l.b16 %v2743
      %v2748 = vunpack.c.l.b16 %v2744
      %v2749 = vpack.c.b16 %v2748, %v2747
      %v2752 = vsel %vm945, %v2741, 0
      %2754 = vmatprep.subr.bf16.mxu0 0
      %2755 = vmatpush1.bf16.msra.mxu0 %v2749
      %2756 = vmatprep.subr.bf16.mxu0 0
      %2757 = vmatpush1.bf16.msra.mxu0 0
      %2758 = vmatprep.subr.bf16.mxu0 0
      %2759 = vmatpush1.bf16.msra.mxu0 0
      %2760 = vmatprep.subr.bf16.mxu0 0
      %2761 = vmatpush1.bf16.msra.mxu0 0
      %2762 = vmatprep.subr.bf16.mxu0 0
      %2763 = vmatpush1.bf16.msra.mxu0 0
      %2764 = vmatprep.subr.bf16.mxu0 0
      %2765 = vmatpush1.bf16.msra.mxu0 0
      %2766 = vmatprep.subr.bf16.mxu0 0
      %2767 = vmatpush1.bf16.msra.mxu0 0
      %2768 = vmatprep.subr.bf16.mxu0 0
      %2769 = vmatpush1.bf16.msra.mxu0 0
      %2770 = vmatprep.subr.bf16.mxu0 0
      %2771 = vmatpush1.bf16.msra.mxu0 0
      %2772 = vmatprep.subr.bf16.mxu0 0
      %2773 = vmatpush1.bf16.msra.mxu0 0
      %2774 = vmatprep.subr.bf16.mxu0 0
      %2775 = vmatpush1.bf16.msra.mxu0 0
      %2776 = vmatprep.subr.bf16.mxu0 0
      %2777 = vmatpush1.bf16.msra.mxu0 0
      %2778 = vmatprep.subr.bf16.mxu0 0
      %2779 = vmatpush1.bf16.msra.mxu0 0
      %2780 = vmatprep.subr.bf16.mxu0 0
      %2781 = vmatpush1.bf16.msra.mxu0 0
      %2782 = vmatprep.subr.bf16.mxu0 0
      %2783 = vmatpush1.bf16.msra.mxu0 0
      %2784 = vmatprep.subr.bf16.mxu0 0
      %2785 = vmatpush1.bf16.msra.mxu0 0
      %2786 = vmatprep.mubr.bf16.mxu0 0
      %2787 = vmatmul.mubr.bf16.gmra.mrb[0].mxu0 %v1451
      %v2788 = vpop.f32.mrb[0].mxu0
      %v2789 = vadd.f32 0.0, %v2788
      %v2790 = vpop.f32.mrb[0].mxu0
      %v2791 = vpop.f32.mrb[0].mxu0
      %v2792 = vadd.f32 0.0, %v2791
      %v2793 = vpop.f32.mrb[0].mxu0
      %2794 = vmatprep.mubr.bf16.mxu0 0
      %2795 = vmatmul.mubr.bf16.gmra.mrb[0].mxu0 %v1454
      %v2796 = vpop.f32.mrb[0].mxu0
      %v2797 = vadd.f32 0.0, %v2796
      %v2798 = vpop.f32.mrb[0].mxu0
      %v2799 = vpop.f32.mrb[0].mxu0
      %v2800 = vadd.f32 0.0, %v2799
      %v2801 = vpop.f32.mrb[0].mxu0
      %2802 = vmatprep.mubr.bf16.mxu0 0
      %2803 = vmatmul.mubr.bf16.gmra.mrb[0].mxu0 %v1457
      %v2804 = vpop.f32.mrb[0].mxu0
      %v2805 = vadd.f32 0.0, %v2804
      %v2806 = vpop.f32.mrb[0].mxu0
      %v2807 = vpop.f32.mrb[0].mxu0
      %v2808 = vadd.f32 0.0, %v2807
      %v2809 = vpop.f32.mrb[0].mxu0
      %2810 = vmatprep.mubr.bf16.mxu0 0
      %2811 = vmatmul.mubr.bf16.gmra.mrb[0].mxu0 %v1460
      %v2812 = vpop.f32.mrb[0].mxu0
      %v2813 = vadd.f32 0.0, %v2812
      %v2814 = vpop.f32.mrb[0].mxu0
      %v2815 = vpop.f32.mrb[0].mxu0
      %v2816 = vadd.f32 0.0, %v2815
      %v2817 = vpop.f32.mrb[0].mxu0
      %2818 = vmatprep.mubr.bf16.mxu0 0
      %2819 = vmatmul.mubr.bf16.gmra.mrb[0].mxu0 %v1463
      %v2820 = vpop.f32.mrb[0].mxu0
      %v2821 = vadd.f32 0.0, %v2820
      %v2822 = vpop.f32.mrb[0].mxu0
      %v2823 = vpop.f32.mrb[0].mxu0
      %v2824 = vadd.f32 0.0, %v2823
      %v2825 = vpop.f32.mrb[0].mxu0
      %2826 = vmatprep.mubr.bf16.mxu0 0
      %2827 = vmatmul.mubr.bf16.gmra.mrb[0].mxu0 %v1466
      %v2828 = vpop.f32.mrb[0].mxu0
      %v2829 = vadd.f32 0.0, %v2828
      %v2830 = vpop.f32.mrb[0].mxu0
      %v2831 = vpop.f32.mrb[0].mxu0
      %v2832 = vadd.f32 0.0, %v2831
      %v2833 = vpop.f32.mrb[0].mxu0
      %2834 = vmatprep.mubr.bf16.mxu0 0
      %2835 = vmatmul.mubr.bf16.gmra.mrb[0].mxu0 %v1469
      %v2836 = vpop.f32.mrb[0].mxu0
      %v2837 = vadd.f32 0.0, %v2836
      %v2838 = vpop.f32.mrb[0].mxu0
      %v2839 = vpop.f32.mrb[0].mxu0
      %v2840 = vadd.f32 0.0, %v2839
      %v2841 = vpop.f32.mrb[0].mxu0
      %2842 = vmatprep.mubr.bf16.mxu0 0
      %2843 = vmatmul.mubr.bf16.gmra.mrb[0].mxu0 %v1472
      %v2844 = vpop.f32.mrb[0].mxu0
      %v2845 = vadd.f32 0.0, %v2844
      %v2846 = vpop.f32.mrb[0].mxu0
      %v2847 = vpop.f32.mrb[0].mxu0
      %v2848 = vadd.f32 0.0, %v2847
      %v2849 = vpop.f32.mrb[0].mxu0
      %2850 = vmatprep.mubr.bf16.mxu0 0
      %2851 = vmatmul.mubr.bf16.gmra.mrb[0].mxu0 %v1475
      %v2852 = vpop.f32.mrb[0].mxu0
      %v2853 = vadd.f32 0.0, %v2852
      %v2854 = vpop.f32.mrb[0].mxu0
      %v2855 = vpop.f32.mrb[0].mxu0
      %v2856 = vadd.f32 0.0, %v2855
      %v2857 = vpop.f32.mrb[0].mxu0
      %2858 = vmatprep.mubr.bf16.mxu0 0
      %2859 = vmatmul.mubr.bf16.gmra.mrb[0].mxu0 %v1478
      %v2860 = vpop.f32.mrb[0].mxu0
      %v2861 = vadd.f32 0.0, %v2860
      %v2862 = vpop.f32.mrb[0].mxu0
      %v2863 = vpop.f32.mrb[0].mxu0
      %v2864 = vadd.f32 0.0, %v2863
      %v2865 = vpop.f32.mrb[0].mxu0
      %2866 = vmatprep.mubr.bf16.mxu0 0
      %2867 = vmatmul.mubr.bf16.gmra.mrb[0].mxu0 %v1481
      %v2868 = vpop.f32.mrb[0].mxu0
      %v2869 = vadd.f32 0.0, %v2868
      %v2870 = vpop.f32.mrb[0].mxu0
      %v2871 = vpop.f32.mrb[0].mxu0
      %v2872 = vadd.f32 0.0, %v2871
      %v2873 = vpop.f32.mrb[0].mxu0
      %2874 = vmatprep.mubr.bf16.mxu0 0
      %2875 = vmatmul.mubr.bf16.gmra.mrb[0].mxu0 %v1484
      %v2876 = vpop.f32.mrb[0].mxu0
      %v2877 = vadd.f32 0.0, %v2876
      %v2878 = vpop.f32.mrb[0].mxu0
      %v2879 = vpop.f32.mrb[0].mxu0
      %v2880 = vadd.f32 0.0, %v2879
      %v2881 = vpop.f32.mrb[0].mxu0
      %2882 = vmatprep.mubr.bf16.mxu0 0
      %2883 = vmatmul.mubr.bf16.gmra.mrb[0].mxu0 %v1487
      %v2884 = vpop.f32.mrb[0].mxu0
      %v2885 = vadd.f32 0.0, %v2884
      %v2886 = vpop.f32.mrb[0].mxu0
      %v2887 = vpop.f32.mrb[0].mxu0
      %v2888 = vadd.f32 0.0, %v2887
      %v2889 = vpop.f32.mrb[0].mxu0
      %2890 = vmatprep.mubr.bf16.mxu0 0
      %2891 = vmatmul.mubr.bf16.gmra.mrb[0].mxu0 %v1490
      %v2892 = vpop.f32.mrb[0].mxu0
      %v2893 = vadd.f32 0.0, %v2892
      %v2894 = vpop.f32.mrb[0].mxu0
      %v2895 = vpop.f32.mrb[0].mxu0
      %v2896 = vadd.f32 0.0, %v2895
      %v2897 = vpop.f32.mrb[0].mxu0
      %2898 = vmatprep.mubr.bf16.mxu0 0
      %2899 = vmatmul.mubr.bf16.gmra.mrb[0].mxu0 %v2121
      %v2900 = vpop.f32.mrb[0].mxu0
      %v2901 = vadd.f32 0.0, %v2900
      %v2902 = vpop.f32.mrb[0].mxu0
      %v2903 = vpop.f32.mrb[0].mxu0
      %v2904 = vadd.f32 0.0, %v2903
      %v2905 = vpop.f32.mrb[0].mxu0
      %2906 = vmatprep.mubr.bf16.mxu0 0
      %2907 = vmatmul.mubr.bf16.gmra.mrb[0].mxu0 %v2752
      %v2908 = vpop.f32.mrb[0].mxu0
      %v2909 = vadd.f32 0.0, %v2908
      %v2910 = vpop.f32.mrb[0].mxu0
      %v2911 = vpop.f32.mrb[0].mxu0
      %v2912 = vadd.f32 0.0, %v2911
      %v2913 = vpop.f32.mrb[0].mxu0
      %2914 = vdwg.mxu0
      %v2915 = vadd.f32 %v2705, %v2789
      %v2916 = vadd.f32 %v2706, %v2792
      %v2917 = vadd.f32 %v2707, %v2797
      %v2918 = vadd.f32 %v2708, %v2800
      %v2919 = vadd.f32 %v2709, %v2805
      %v2920 = vadd.f32 %v2710, %v2808
      %v2921 = vadd.f32 %v2711, %v2813
      %v2922 = vadd.f32 %v2712, %v2816
      %v2923 = vadd.f32 %v2713, %v2821
      %v2924 = vadd.f32 %v2714, %v2824
      %v2925 = vadd.f32 %v2715, %v2829
      %v2926 = vadd.f32 %v2716, %v2832
      %v2927 = vadd.f32 %v2717, %v2837
      %v2928 = vadd.f32 %v2718, %v2840
      %v2929 = vadd.f32 %v2719, %v2845
      %v2930 = vadd.f32 %v2720, %v2848
      %v2931 = vadd.f32 %v2721, %v2853
      %v2932 = vadd.f32 %v2722, %v2856
      %v2933 = vadd.f32 %v2723, %v2861
      %v2934 = vadd.f32 %v2724, %v2864
      %v2935 = vadd.f32 %v2725, %v2869
      %v2936 = vadd.f32 %v2726, %v2872
      %v2937 = vadd.f32 %v2727, %v2877
      %v2938 = vadd.f32 %v2728, %v2880
      %v2939 = vadd.f32 %v2729, %v2885
      %v2940 = vadd.f32 %v2730, %v2888
      %v2941 = vadd.f32 %v2731, %v2893
      %v2942 = vadd.f32 %v2732, %v2896
      %v2943 = vadd.f32 %v2733, %v2901
      %v2944 = vadd.f32 %v2734, %v2904
      %v2945 = vadd.f32 %v2735, %v2909
      %v2946 = vadd.f32 %v2736, %v2912
      %v2947 = vpack.c.bf16 %v2916, %v2915
      %v2948 = vpack.c.bf16 %v2918, %v2917
      %v2949 = vpack.c.bf16 %v2920, %v2919
      %v2950 = vpack.c.bf16 %v2922, %v2921
      %v2951 = vpack.c.bf16 %v2924, %v2923
      %v2952 = vpack.c.bf16 %v2926, %v2925
      %v2953 = vpack.c.bf16 %v2928, %v2927
      %v2954 = vpack.c.bf16 %v2930, %v2929
      %v2955 = vpack.c.bf16 %v2932, %v2931
      %v2956 = vpack.c.bf16 %v2934, %v2933
      %v2957 = vpack.c.bf16 %v2936, %v2935
      %v2958 = vpack.c.bf16 %v2938, %v2937
      %v2959 = vpack.c.bf16 %v2940, %v2939
      %v2960 = vpack.c.bf16 %v2942, %v2941
      %v2961 = vpack.c.bf16 %v2944, %v2943
      %v2962 = vpack.c.bf16 %v2946, %v2945
      %v2979 = vunpack.c.l.b16 %v2947
      %v2980 = vunpack.c.h.b16 %v2947
      %v2981 = vunpack.c.l.b16 %v2948
      %v2982 = vunpack.c.h.b16 %v2948
      %v2983 = vunpack.c.l.b16 %v2949
      %v2984 = vunpack.c.h.b16 %v2949
      %v2985 = vunpack.c.l.b16 %v2950
      %v2986 = vunpack.c.h.b16 %v2950
      %v2987 = vunpack.c.l.b16 %v2951
      %v2988 = vunpack.c.h.b16 %v2951
      %v2989 = vunpack.c.l.b16 %v2952
      %v2990 = vunpack.c.h.b16 %v2952
      %v2991 = vunpack.c.l.b16 %v2953
      %v2992 = vunpack.c.h.b16 %v2953
      %v2993 = vunpack.c.l.b16 %v2954
      %v2994 = vunpack.c.h.b16 %v2954
      %v2995 = vunpack.c.l.b16 %v2955
      %v2996 = vunpack.c.h.b16 %v2955
      %v2997 = vunpack.c.l.b16 %v2956
      %v2998 = vunpack.c.h.b16 %v2956
      %v2999 = vunpack.c.l.b16 %v2957
      %v3000 = vunpack.c.h.b16 %v2957
      %v3001 = vunpack.c.l.b16 %v2958
      %v3002 = vunpack.c.h.b16 %v2958
      %v3003 = vunpack.c.l.b16 %v2959
      %v3004 = vunpack.c.h.b16 %v2959
      %v3005 = vunpack.c.l.b16 %v2960
      %v3006 = vunpack.c.h.b16 %v2960
      %v3007 = vunpack.c.l.b16 %v2961
      %v3008 = vunpack.c.h.b16 %v2961
      %v3009 = vunpack.c.l.b16 %v2962
      %v3010 = vunpack.c.h.b16 %v2962
      %v3011 = vpack.c.b16 %v2979, %v2979
      %v3012 = vpack.c.b16 %v2980, %v2980
      %v3013 = vpack.c.b16 %v2981, %v2981
      %v3014 = vpack.c.b16 %v2982, %v2982
      %v3015 = vpack.c.b16 %v2983, %v2983
      %v3016 = vpack.c.b16 %v2984, %v2984
      %v3017 = vpack.c.b16 %v2985, %v2985
      %v3018 = vpack.c.b16 %v2986, %v2986
      %v3019 = vpack.c.b16 %v2987, %v2987
      %v3020 = vpack.c.b16 %v2988, %v2988
      %v3021 = vpack.c.b16 %v2989, %v2989
      %v3022 = vpack.c.b16 %v2990, %v2990
      %v3023 = vpack.c.b16 %v2991, %v2991
      %v3024 = vpack.c.b16 %v2992, %v2992
      %v3025 = vpack.c.b16 %v2993, %v2993
      %v3026 = vpack.c.b16 %v2994, %v2994
      %v3027 = vpack.c.b16 %v2995, %v2995
      %v3028 = vpack.c.b16 %v2996, %v2996
      %v3029 = vpack.c.b16 %v2997, %v2997
      %v3030 = vpack.c.b16 %v2998, %v2998
      %v3031 = vpack.c.b16 %v2999, %v2999
      %v3032 = vpack.c.b16 %v3000, %v3000
      %v3033 = vpack.c.b16 %v3001, %v3001
      %v3034 = vpack.c.b16 %v3002, %v3002
      %v3035 = vpack.c.b16 %v3003, %v3003
      %v3036 = vpack.c.b16 %v3004, %v3004
      %v3037 = vpack.c.b16 %v3005, %v3005
      %v3038 = vpack.c.b16 %v3006, %v3006
      %v3039 = vpack.c.b16 %v3007, %v3007
      %v3040 = vpack.c.b16 %v3008, %v3008
      %v3041 = vpack.c.b16 %v3009, %v3009
      %v3042 = vpack.c.b16 %v3010, %v3010
      %vm3075 = vcmask 125952
      %3076 = vst.msk [vmem:[%s231] sm:$0xf] %vm3075, %v3011
      %3077 = vst.msk [vmem:[%s231 + $0x4] sm:$0xf] %vm3075, %v3012
      %3078 = vst.msk [vmem:[%s231 + $0x8] sm:$0xf] %vm3075, %v3013
      %3079 = vst.msk [vmem:[%s231 + $0xc] sm:$0xf] %vm3075, %v3014
      %3080 = vst.msk [vmem:[%s231 + $0x10] sm:$0xf] %vm3075, %v3015
      %3081 = vst.msk [vmem:[%s231 + $0x14] sm:$0xf] %vm3075, %v3016
      %3082 = vst.msk [vmem:[%s231 + $0x18] sm:$0xf] %vm3075, %v3017
      %3083 = vst.msk [vmem:[%s231 + $0x1c] sm:$0xf] %vm3075, %v3018
      %3084 = vst.msk [vmem:[%s231 + $0x20] sm:$0xf] %vm3075, %v3019
      %3085 = vst.msk [vmem:[%s231 + $0x24] sm:$0xf] %vm3075, %v3020
      %3086 = vst.msk [vmem:[%s231 + $0x28] sm:$0xf] %vm3075, %v3021
      %3087 = vst.msk [vmem:[%s231 + $0x2c] sm:$0xf] %vm3075, %v3022
      %3088 = vst.msk [vmem:[%s231 + $0x30] sm:$0xf] %vm3075, %v3023
      %3089 = vst.msk [vmem:[%s231 + $0x34] sm:$0xf] %vm3075, %v3024
      %3090 = vst.msk [vmem:[%s231 + $0x38] sm:$0xf] %vm3075, %v3025
      %3091 = vst.msk [vmem:[%s231 + $0x3c] sm:$0xf] %vm3075, %v3026
      %3092 = vst.msk [vmem:[%s231 + $0x40] sm:$0xf] %vm3075, %v3027
      %3093 = vst.msk [vmem:[%s231 + $0x44] sm:$0xf] %vm3075, %v3028
      %3094 = vst.msk [vmem:[%s231 + $0x48] sm:$0xf] %vm3075, %v3029
      %3095 = vst.msk [vmem:[%s231 + $0x4c] sm:$0xf] %vm3075, %v3030
      %3096 = vst.msk [vmem:[%s231 + $0x50] sm:$0xf] %vm3075, %v3031
      %3097 = vst.msk [vmem:[%s231 + $0x54] sm:$0xf] %vm3075, %v3032
      %3098 = vst.msk [vmem:[%s231 + $0x58] sm:$0xf] %vm3075, %v3033
      %3099 = vst.msk [vmem:[%s231 + $0x5c] sm:$0xf] %vm3075, %v3034
      %3100 = vst.msk [vmem:[%s231 + $0x60] sm:$0xf] %vm3075, %v3035
      %3101 = vst.msk [vmem:[%s231 + $0x64] sm:$0xf] %vm3075, %v3036
      %3102 = vst.msk [vmem:[%s231 + $0x68] sm:$0xf] %vm3075, %v3037
      %3103 = vst.msk [vmem:[%s231 + $0x6c] sm:$0xf] %vm3075, %v3038
      %3104 = vst.msk [vmem:[%s231 + $0x70] sm:$0xf] %vm3075, %v3039
      %3105 = vst.msk [vmem:[%s231 + $0x74] sm:$0xf] %vm3075, %v3040
      %3106 = vst.msk [vmem:[%s231 + $0x78] sm:$0xf] %vm3075, %v3041
      %3107 = vst.msk [vmem:[%s231 + $0x7c] sm:$0xf] %vm3075, %v3042
      %v3108 = vsel %vm945, %v2915, 0.0
      %v3109 = vsel %vm945, %v2916, 0.0
      %v3110 = vadd.f32 %v3108, %v3109
      %v3111 = vsel %vm945, %v2917, 0.0
      %v3112 = vadd.f32 %v3110, %v3111
      %v3113 = vsel %vm945, %v2918, 0.0
      %v3114 = vadd.f32 %v3112, %v3113
      %v3115 = vsel %vm945, %v2919, 0.0
      %v3116 = vadd.f32 %v3114, %v3115
      %v3117 = vsel %vm945, %v2920, 0.0
      %v3118 = vadd.f32 %v3116, %v3117
      %v3119 = vsel %vm945, %v2921, 0.0
      %v3120 = vadd.f32 %v3118, %v3119
      %v3121 = vsel %vm945, %v2922, 0.0
      %v3122 = vadd.f32 %v3120, %v3121
      %v3123 = vsel %vm945, %v2923, 0.0
      %v3124 = vadd.f32 %v3122, %v3123
      %v3125 = vsel %vm945, %v2924, 0.0
      %v3126 = vadd.f32 %v3124, %v3125
      %v3127 = vsel %vm945, %v2925, 0.0
      %v3128 = vadd.f32 %v3126, %v3127
      %v3129 = vsel %vm945, %v2926, 0.0
      %v3130 = vadd.f32 %v3128, %v3129
      %v3131 = vsel %vm945, %v2927, 0.0
      %v3132 = vadd.f32 %v3130, %v3131
      %v3133 = vsel %vm945, %v2928, 0.0
      %v3134 = vadd.f32 %v3132, %v3133
      %v3135 = vsel %vm945, %v2929, 0.0
      %v3136 = vadd.f32 %v3134, %v3135
      %v3137 = vsel %vm945, %v2930, 0.0
      %v3138 = vadd.f32 %v3136, %v3137
      %v3139 = vsel %vm945, %v2931, 0.0
      %v3140 = vadd.f32 %v3138, %v3139
      %v3141 = vsel %vm945, %v2932, 0.0
      %v3142 = vadd.f32 %v3140, %v3141
      %v3143 = vsel %vm945, %v2933, 0.0
      %v3144 = vadd.f32 %v3142, %v3143
      %v3145 = vsel %vm945, %v2934, 0.0
      %v3146 = vadd.f32 %v3144, %v3145
      %v3147 = vsel %vm945, %v2935, 0.0
      %v3148 = vadd.f32 %v3146, %v3147
      %v3149 = vsel %vm945, %v2936, 0.0
      %v3150 = vadd.f32 %v3148, %v3149
      %v3151 = vsel %vm945, %v2937, 0.0
      %v3152 = vadd.f32 %v3150, %v3151
      %v3153 = vsel %vm945, %v2938, 0.0
      %v3154 = vadd.f32 %v3152, %v3153
      %v3155 = vsel %vm945, %v2939, 0.0
      %v3156 = vadd.f32 %v3154, %v3155
      %v3157 = vsel %vm945, %v2940, 0.0
      %v3158 = vadd.f32 %v3156, %v3157
      %v3159 = vsel %vm945, %v2941, 0.0
      %v3160 = vadd.f32 %v3158, %v3159
      %v3161 = vsel %vm945, %v2942, 0.0
      %v3162 = vadd.f32 %v3160, %v3161
      %v3163 = vsel %vm945, %v2943, 0.0
      %v3164 = vadd.f32 %v3162, %v3163
      %v3165 = vsel %vm945, %v2944, 0.0
      %v3166 = vadd.f32 %v3164, %v3165
      %v3167 = vsel %vm945, %v2945, 0.0
      %v3168 = vadd.f32 %v3166, %v3167
      %v3169 = vsel %vm945, %v2946, 0.0
      %v3170 = vadd.f32 %v3168, %v3169
      %v3171 = vrot.slane %v3170, 4
      %v3172 = vadd.f32 %v3170, %v3171
      %v3173 = vrot.slane %v3172, 2
      %v3174 = vadd.f32 %v3172, %v3173
      %v3175 = vrot.slane %v3174, 1
      %v3176 = vadd.f32 %v3174, %v3175
      %v3177 = vmul.f32 %v2915, %v2915
      %v3178 = vmul.f32 %v2916, %v2916
      %v3179 = vmul.f32 %v2917, %v2917
      %v3180 = vmul.f32 %v2918, %v2918
      %v3181 = vmul.f32 %v2919, %v2919
      %v3182 = vmul.f32 %v2920, %v2920
      %v3183 = vmul.f32 %v2921, %v2921
      %v3184 = vmul.f32 %v2922, %v2922
      %v3185 = vmul.f32 %v2923, %v2923
      %v3186 = vmul.f32 %v2924, %v2924
      %v3187 = vmul.f32 %v2925, %v2925
      %v3188 = vmul.f32 %v2926, %v2926
      %v3189 = vmul.f32 %v2927, %v2927
      %v3190 = vmul.f32 %v2928, %v2928
      %v3191 = vmul.f32 %v2929, %v2929
      %v3192 = vmul.f32 %v2930, %v2930
      %v3193 = vmul.f32 %v2931, %v2931
      %v3194 = vmul.f32 %v2932, %v2932
      %v3195 = vmul.f32 %v2933, %v2933
      %v3196 = vmul.f32 %v2934, %v2934
      %v3197 = vmul.f32 %v2935, %v2935
      %v3198 = vmul.f32 %v2936, %v2936
      %v3199 = vmul.f32 %v2937, %v2937
      %v3200 = vmul.f32 %v2938, %v2938
      %v3201 = vmul.f32 %v2939, %v2939
      %v3202 = vmul.f32 %v2940, %v2940
      %v3203 = vmul.f32 %v2941, %v2941
      %v3204 = vmul.f32 %v2942, %v2942
      %v3205 = vmul.f32 %v2943, %v2943
      %v3206 = vmul.f32 %v2944, %v2944
      %v3207 = vmul.f32 %v2945, %v2945
      %v3208 = vmul.f32 %v2946, %v2946
      %v3209 = vsel %vm945, %v3177, 0.0
      %v3210 = vsel %vm945, %v3178, 0.0
      %v3211 = vadd.f32 %v3209, %v3210
      %v3212 = vsel %vm945, %v3179, 0.0
      %v3213 = vadd.f32 %v3211, %v3212
      %v3214 = vsel %vm945, %v3180, 0.0
      %v3215 = vadd.f32 %v3213, %v3214
      %v3216 = vsel %vm945, %v3181, 0.0
      %v3217 = vadd.f32 %v3215, %v3216
      %v3218 = vsel %vm945, %v3182, 0.0
      %v3219 = vadd.f32 %v3217, %v3218
      %v3220 = vsel %vm945, %v3183, 0.0
      %v3221 = vadd.f32 %v3219, %v3220
      %v3222 = vsel %vm945, %v3184, 0.0
      %v3223 = vadd.f32 %v3221, %v3222
      %v3224 = vsel %vm945, %v3185, 0.0
      %v3225 = vadd.f32 %v3223, %v3224
      %v3226 = vsel %vm945, %v3186, 0.0
      %v3227 = vadd.f32 %v3225, %v3226
      %v3228 = vsel %vm945, %v3187, 0.0
      %v3229 = vadd.f32 %v3227, %v3228
      %v3230 = vsel %vm945, %v3188, 0.0
      %v3231 = vadd.f32 %v3229, %v3230
      %v3232 = vsel %vm945, %v3189, 0.0
      %v3233 = vadd.f32 %v3231, %v3232
      %v3234 = vsel %vm945, %v3190, 0.0
      %v3235 = vadd.f32 %v3233, %v3234
      %v3236 = vsel %vm945, %v3191, 0.0
      %v3237 = vadd.f32 %v3235, %v3236
      %v3238 = vsel %vm945, %v3192, 0.0
      %v3239 = vadd.f32 %v3237, %v3238
      %v3240 = vsel %vm945, %v3193, 0.0
      %v3241 = vadd.f32 %v3239, %v3240
      %v3242 = vsel %vm945, %v3194, 0.0
      %v3243 = vadd.f32 %v3241, %v3242
      %v3244 = vsel %vm945, %v3195, 0.0
      %v3245 = vadd.f32 %v3243, %v3244
      %v3246 = vsel %vm945, %v3196, 0.0
      %v3247 = vadd.f32 %v3245, %v3246
      %v3248 = vsel %vm945, %v3197, 0.0
      %v3249 = vadd.f32 %v3247, %v3248
      %v3250 = vsel %vm945, %v3198, 0.0
      %v3251 = vadd.f32 %v3249, %v3250
      %v3252 = vsel %vm945, %v3199, 0.0
      %v3253 = vadd.f32 %v3251, %v3252
      %v3254 = vsel %vm945, %v3200, 0.0
      %v3255 = vadd.f32 %v3253, %v3254
      %v3256 = vsel %vm945, %v3201, 0.0
      %v3257 = vadd.f32 %v3255, %v3256
      %v3258 = vsel %vm945, %v3202, 0.0
      %v3259 = vadd.f32 %v3257, %v3258
      %v3260 = vsel %vm945, %v3203, 0.0
      %v3261 = vadd.f32 %v3259, %v3260
      %v3262 = vsel %vm945, %v3204, 0.0
      %v3263 = vadd.f32 %v3261, %v3262
      %v3264 = vsel %vm945, %v3205, 0.0
      %v3265 = vadd.f32 %v3263, %v3264
      %v3266 = vsel %vm945, %v3206, 0.0
      %v3267 = vadd.f32 %v3265, %v3266
      %v3268 = vsel %vm945, %v3207, 0.0
      %v3269 = vadd.f32 %v3267, %v3268
      %v3270 = vsel %vm945, %v3208, 0.0
      %v3271 = vadd.f32 %v3269, %v3270
      %v3272 = vrot.slane %v3271, 4
      %v3273 = vadd.f32 %v3271, %v3272
      %v3274 = vrot.slane %v3273, 2
      %v3275 = vadd.f32 %v3273, %v3274
      %v3276 = vrot.slane %v3275, 1
      %v3277 = vadd.f32 %v3275, %v3276
      %vm3278 = vcmask 1040384
      %v3279 = vsel %vm3278, %v3176, %v3277
      %vm3280 = vcmask 123904
      %3281 = vst.msk [vmem:[%s235] sm:$0x3] %vm3280, %v3279
      %p3282 = scmp.lt.s32.totalorder %s17, 1
      %s3283 = scalar_select %p3282, %s17, 1
      %s3284 = smul.addr %s3283, 32
      %s3285 = smul.addr %s3284, 4
      %s3286 = scalar_lea.vmem %s4, %s3285
      %p3287 = scmp.lt.s32.totalorder %s17, 1
      %s3288 = scalar_select %p3287, %s17, 1
      %s3289 = smul.addr %s3288, 2
      %s3290 = scalar_lea.vmem %s5, %s3289
      // Predicated region
      $region37: #{bottleneck_forward.5} parent=35 // pred_check
        %p3291 = pneg %p124
      $region38: #{bottleneck_forward.5} parent=35 // pred_check_branch
        %3293 = sbr.rel (%p3291) target = $region40
      $region39: #{bottleneck_forward.5} parent=35 // pred_region
        _
      $region40: #{bottleneck_forward.5} parent=35 // pred_fallthru
        _
      // Predicated region
      $region41: #{bottleneck_forward.5} parent=35 // pred_check
        %p3294 = pneg %p150
      $region42: #{bottleneck_forward.5} parent=35 // pred_check_branch
        %3296 = sbr.rel (%p3294) target = $region44
      $region43: #{bottleneck_forward.5} parent=35 // pred_region
        _
      $region44: #{bottleneck_forward.5} parent=35 // pred_fallthru
        _
    $region36: #{bottleneck_forward.5} parent=5 // pred_fallthru
      _
    %p3297 = scmp.le.s32.totalorder 2, %s12
    // Predicated region
    $region45: #{bottleneck_forward.5} parent=5 // pred_check
      %p3298 = pneg %p3297
    $region46: #{bottleneck_forward.5} parent=5 // pred_check_branch
      %3300 = sbr.rel (%p3298) target = $region48
    $region47: #{bottleneck_forward.5} parent=5 // pred_region
      %s3301 = ssub.s32 %s12, 2
      // Predicated region
      $region49: #{bottleneck_forward.5} parent=47 // pred_check
        %p3302 = pneg %p130
      $region50: #{bottleneck_forward.5} parent=47 // pred_check_branch
        %3304 = sbr.rel (%p3302) target = $region52
      $region51: #{bottleneck_forward.5} parent=47 // pred_region
        %p3305 = scmp.lt.s32.totalorder %s18, 1
        %s3306 = scalar_select %p3305, %s18, 1
        %s3307 = smul.addr %s3306, 32
        %s3308 = smul.addr %s3307, 4
        %s3309 = scalar_lea.vmem %s4, %s3308
      $region52: #{bottleneck_forward.5} parent=47 // pred_fallthru
        _
      // Predicated region
      $region53: #{bottleneck_forward.5} parent=47 // pred_check
        %p3310 = pneg %p156
      $region54: #{bottleneck_forward.5} parent=47 // pred_check_branch
        %3312 = sbr.rel (%p3310) target = $region56
      $region55: #{bottleneck_forward.5} parent=47 // pred_region
        %p3313 = scmp.lt.s32.totalorder %s18, 1
        %s3314 = scalar_select %p3313, %s18, 1
        %s3315 = smul.addr %s3314, 2
        %s3316 = scalar_lea.vmem %s5, %s3315
      $region56: #{bottleneck_forward.5} parent=47 // pred_fallthru
        _
    $region48: #{bottleneck_forward.5} parent=5 // pred_fallthru
      _
  $region6: #{bottleneck_forward.5} parent=0 // loop_footer
    %s16 = sadd.s32 1, %s12
  $region7: #{bottleneck_forward.5} parent=0 // loop_footer_branch
    %11 = sbr.rel target = $region3
  $region8: #{bottleneck_forward.5} parent=0 // loop_exit
    _

// kernel: bottleneck_forward.7
$region0: #{bottleneck_forward.7}
  #allocation0 [shape = 'u32[]', space=smem, size = 0x4, offset = 0x4, fixed_abs, tag = 'smem constant byte address 0x4 - core index']
  #allocation1 [shape = 'u32[144,128]{1,0:T(1,128)}', space=vmem, size = 0x12000, scoped, tag = 'internal scratch']
  %s0 = inlined_call_operand.vmem [shape: bf16[256,128], index: 0, kind: input, shape index: {}]
  %s1 = inlined_call_operand.vmem [shape: bf16[256,128], index: 1, kind: input, shape index: {}]
  %s2 = inlined_call_operand.vmem [shape: f32[1,128], index: 2, kind: input, shape index: {}]
  %s3 = inlined_call_operand.vmem [shape: f32[1,128], index: 3, kind: input, shape index: {}]
  %s4 = inlined_call_operand.vmem [shape: f32[256,128], index: 4, kind: output, shape index: {}]
  %s5 = sld [smem:[#allocation0]]
  $region26: #{bottleneck_forward.7} parent=0
    _
  %s7 = ssub.s32 1, %s5
  %s8 = scalar_select 0, %s7, %s5
  // Predicated region
  $region2: #{bottleneck_forward.7} parent=0 // pred_check
    _
  $region3: #{bottleneck_forward.7} parent=0 // pred_check_branch
    %10 = sbr.rel (0) target = $region5
  $region4: #{bottleneck_forward.7} parent=0 // pred_region
    _
  $region5: #{bottleneck_forward.7} parent=0 // pred_fallthru
    _
  // Predicated region
  $region6: #{bottleneck_forward.7} parent=0 // pred_check
    _
  $region7: #{bottleneck_forward.7} parent=0 // pred_check_branch
    %12 = sbr.rel (0) target = $region9
  $region8: #{bottleneck_forward.7} parent=0 // pred_region
    _
  $region9: #{bottleneck_forward.7} parent=0 // pred_fallthru
    _
  // Predicated region
  $region10: #{bottleneck_forward.7} parent=0 // pred_check
    _
  $region11: #{bottleneck_forward.7} parent=0 // pred_check_branch
    %14 = sbr.rel (0) target = $region13
  $region12: #{bottleneck_forward.7} parent=0 // pred_region
    _
  $region13: #{bottleneck_forward.7} parent=0 // pred_fallthru
    _
  // Predicated region
  $region14: #{bottleneck_forward.7} parent=0 // pred_check
    _
  $region15: #{bottleneck_forward.7} parent=0 // pred_check_branch
    %16 = sbr.rel (0) target = $region17
  $region16: #{bottleneck_forward.7} parent=0 // pred_region
    _
  $region17: #{bottleneck_forward.7} parent=0 // pred_fallthru
    _
  %v17 = vld [vmem:[%s0] sm:$0xf]
  %v18 = vld [vmem:[%s0 + $0x4] sm:$0xf]
  %v19 = vld [vmem:[%s0 + $0x8] sm:$0xf]
  %v20 = vld [vmem:[%s0 + $0xc] sm:$0xf]
  %v21 = vld [vmem:[%s0 + $0x10] sm:$0xf]
  %v22 = vld [vmem:[%s0 + $0x14] sm:$0xf]
  %v23 = vld [vmem:[%s0 + $0x18] sm:$0xf]
  %v24 = vld [vmem:[%s0 + $0x1c] sm:$0xf]
  %v25 = vld [vmem:[%s0 + $0x20] sm:$0xf]
  %v26 = vld [vmem:[%s0 + $0x24] sm:$0xf]
  %v27 = vld [vmem:[%s0 + $0x28] sm:$0xf]
  %v28 = vld [vmem:[%s0 + $0x2c] sm:$0xf]
  %v29 = vld [vmem:[%s0 + $0x30] sm:$0xf]
  %v30 = vld [vmem:[%s0 + $0x34] sm:$0xf]
  %v31 = vld [vmem:[%s0 + $0x38] sm:$0xf]
  %v32 = vld [vmem:[%s0 + $0x3c] sm:$0xf]
  %v33 = vld [vmem:[%s0 + $0x40] sm:$0xf]
  %v34 = vld [vmem:[%s0 + $0x44] sm:$0xf]
  %v35 = vld [vmem:[%s0 + $0x48] sm:$0xf]
  %v36 = vld [vmem:[%s0 + $0x4c] sm:$0xf]
  %v37 = vld [vmem:[%s0 + $0x50] sm:$0xf]
  %v38 = vld [vmem:[%s0 + $0x54] sm:$0xf]
  %v39 = vld [vmem:[%s0 + $0x58] sm:$0xf]
  %v40 = vld [vmem:[%s0 + $0x5c] sm:$0xf]
  %v41 = vld [vmem:[%s0 + $0x60] sm:$0xf]
  %v42 = vld [vmem:[%s0 + $0x64] sm:$0xf]
  %v43 = vld [vmem:[%s0 + $0x68] sm:$0xf]
  %v44 = vld [vmem:[%s0 + $0x6c] sm:$0xf]
  %v45 = vld [vmem:[%s0 + $0x70] sm:$0xf]
  %v46 = vld [vmem:[%s0 + $0x74] sm:$0xf]
  %v47 = vld [vmem:[%s0 + $0x78] sm:$0xf]
  %v48 = vld [vmem:[%s0 + $0x7c] sm:$0xf]
  %v49 = vunpack.c.l.bf16 %v17
  %v50 = vunpack.c.l.bf16 %v18
  %v51 = vunpack.c.l.bf16 %v19
  %v52 = vunpack.c.l.bf16 %v20
  %v53 = vunpack.c.l.bf16 %v21
  %v54 = vunpack.c.l.bf16 %v22
  %v55 = vunpack.c.l.bf16 %v23
  %v56 = vunpack.c.l.bf16 %v24
  %v57 = vunpack.c.l.bf16 %v25
  %v58 = vunpack.c.l.bf16 %v26
  %v59 = vunpack.c.l.bf16 %v27
  %v60 = vunpack.c.l.bf16 %v28
  %v61 = vunpack.c.l.bf16 %v29
  %v62 = vunpack.c.l.bf16 %v30
  %v63 = vunpack.c.l.bf16 %v31
  %v64 = vunpack.c.l.bf16 %v32
  %v65 = vunpack.c.l.bf16 %v33
  %v66 = vunpack.c.l.bf16 %v34
  %v67 = vunpack.c.l.bf16 %v35
  %v68 = vunpack.c.l.bf16 %v36
  %v69 = vunpack.c.l.bf16 %v37
  %v70 = vunpack.c.l.bf16 %v38
  %v71 = vunpack.c.l.bf16 %v39
  %v72 = vunpack.c.l.bf16 %v40
  %v73 = vunpack.c.l.bf16 %v41
  %v74 = vunpack.c.l.bf16 %v42
  %v75 = vunpack.c.l.bf16 %v43
  %v76 = vunpack.c.l.bf16 %v44
  %v77 = vunpack.c.l.bf16 %v45
  %v78 = vunpack.c.l.bf16 %v46
  %v79 = vunpack.c.l.bf16 %v47
  %v80 = vunpack.c.l.bf16 %v48
  %v81 = vld [vmem:[%s2] sm:$0x1]
  %v83 = vlaneseq
  %v84 = vshrl.u32 %v83, 7
  %v85 = vsub.s32 0, %v84
  %v86 = vrot.slane %v81, %v85
  %v88 = vmul.f32 %v49, %v86
  %v89 = vmul.f32 %v50, %v86
  %v90 = vmul.f32 %v51, %v86
  %v91 = vmul.f32 %v52, %v86
  %v92 = vmul.f32 %v53, %v86
  %v93 = vmul.f32 %v54, %v86
  %v94 = vmul.f32 %v55, %v86
  %v95 = vmul.f32 %v56, %v86
  %v96 = vmul.f32 %v57, %v86
  %v97 = vmul.f32 %v58, %v86
  %v98 = vmul.f32 %v59, %v86
  %v99 = vmul.f32 %v60, %v86
  %v100 = vmul.f32 %v61, %v86
  %v101 = vmul.f32 %v62, %v86
  %v102 = vmul.f32 %v63, %v86
  %v103 = vmul.f32 %v64, %v86
  %v104 = vmul.f32 %v65, %v86
  %v105 = vmul.f32 %v66, %v86
  %v106 = vmul.f32 %v67, %v86
  %v107 = vmul.f32 %v68, %v86
  %v108 = vmul.f32 %v69, %v86
  %v109 = vmul.f32 %v70, %v86
  %v110 = vmul.f32 %v71, %v86
  %v111 = vmul.f32 %v72, %v86
  %v112 = vmul.f32 %v73, %v86
  %v113 = vmul.f32 %v74, %v86
  %v114 = vmul.f32 %v75, %v86
  %v115 = vmul.f32 %v76, %v86
  %v116 = vmul.f32 %v77, %v86
  %v117 = vmul.f32 %v78, %v86
  %v118 = vmul.f32 %v79, %v86
  %v119 = vmul.f32 %v80, %v86
  %v120 = vld [vmem:[%s3] sm:$0x1]
  %v122 = vlaneseq
  %v123 = vshrl.u32 %v122, 7
  %v124 = vsub.s32 0, %v123
  %v125 = vrot.slane %v120, %v124
  %v127 = vadd.f32 %v88, %v125
  %v128 = vadd.f32 %v89, %v125
  %v129 = vadd.f32 %v90, %v125
  %v130 = vadd.f32 %v91, %v125
  %v131 = vadd.f32 %v92, %v125
  %v132 = vadd.f32 %v93, %v125
  %v133 = vadd.f32 %v94, %v125
  %v134 = vadd.f32 %v95, %v125
  %v135 = vadd.f32 %v96, %v125
  %v136 = vadd.f32 %v97, %v125
  %v137 = vadd.f32 %v98, %v125
  %v138 = vadd.f32 %v99, %v125
  %v139 = vadd.f32 %v100, %v125
  %v140 = vadd.f32 %v101, %v125
  %v141 = vadd.f32 %v102, %v125
  %v142 = vadd.f32 %v103, %v125
  %v143 = vadd.f32 %v104, %v125
  %v144 = vadd.f32 %v105, %v125
  %v145 = vadd.f32 %v106, %v125
  %v146 = vadd.f32 %v107, %v125
  %v147 = vadd.f32 %v108, %v125
  %v148 = vadd.f32 %v109, %v125
  %v149 = vadd.f32 %v110, %v125
  %v150 = vadd.f32 %v111, %v125
  %v151 = vadd.f32 %v112, %v125
  %v152 = vadd.f32 %v113, %v125
  %v153 = vadd.f32 %v114, %v125
  %v154 = vadd.f32 %v115, %v125
  %v155 = vadd.f32 %v116, %v125
  %v156 = vadd.f32 %v117, %v125
  %v157 = vadd.f32 %v118, %v125
  %v158 = vadd.f32 %v119, %v125
  %v159 = vld [vmem:[%s1] sm:$0xf]
  %v160 = vld [vmem:[%s1 + $0x4] sm:$0xf]
  %v161 = vld [vmem:[%s1 + $0x8] sm:$0xf]
  %v162 = vld [vmem:[%s1 + $0xc] sm:$0xf]
  %v163 = vld [vmem:[%s1 + $0x10] sm:$0xf]
  %v164 = vld [vmem:[%s1 + $0x14] sm:$0xf]
  %v165 = vld [vmem:[%s1 + $0x18] sm:$0xf]
  %v166 = vld [vmem:[%s1 + $0x1c] sm:$0xf]
  %v167 = vld [vmem:[%s1 + $0x20] sm:$0xf]
  %v168 = vld [vmem:[%s1 + $0x24] sm:$0xf]
  %v169 = vld [vmem:[%s1 + $0x28] sm:$0xf]
  %v170 = vld [vmem:[%s1 + $0x2c] sm:$0xf]
  %v171 = vld [vmem:[%s1 + $0x30] sm:$0xf]
  %v172 = vld [vmem:[%s1 + $0x34] sm:$0xf]
  %v173 = vld [vmem:[%s1 + $0x38] sm:$0xf]
  %v174 = vld [vmem:[%s1 + $0x3c] sm:$0xf]
  %v175 = vld [vmem:[%s1 + $0x40] sm:$0xf]
  %v176 = vld [vmem:[%s1 + $0x44] sm:$0xf]
  %v177 = vld [vmem:[%s1 + $0x48] sm:$0xf]
  %v178 = vld [vmem:[%s1 + $0x4c] sm:$0xf]
  %v179 = vld [vmem:[%s1 + $0x50] sm:$0xf]
  %v180 = vld [vmem:[%s1 + $0x54] sm:$0xf]
  %v181 = vld [vmem:[%s1 + $0x58] sm:$0xf]
  %v182 = vld [vmem:[%s1 + $0x5c] sm:$0xf]
  %v183 = vld [vmem:[%s1 + $0x60] sm:$0xf]
  %v184 = vld [vmem:[%s1 + $0x64] sm:$0xf]
  %v185 = vld [vmem:[%s1 + $0x68] sm:$0xf]
  %v186 = vld [vmem:[%s1 + $0x6c] sm:$0xf]
  %v187 = vld [vmem:[%s1 + $0x70] sm:$0xf]
  %v188 = vld [vmem:[%s1 + $0x74] sm:$0xf]
  %v189 = vld [vmem:[%s1 + $0x78] sm:$0xf]
  %v190 = vld [vmem:[%s1 + $0x7c] sm:$0xf]
  %v191 = vunpack.c.l.bf16 %v159
  %v192 = vunpack.c.l.bf16 %v160
  %v193 = vunpack.c.l.bf16 %v161
  %v194 = vunpack.c.l.bf16 %v162
  %v195 = vunpack.c.l.bf16 %v163
  %v196 = vunpack.c.l.bf16 %v164
  %v197 = vunpack.c.l.bf16 %v165
  %v198 = vunpack.c.l.bf16 %v166
  %v199 = vunpack.c.l.bf16 %v167
  %v200 = vunpack.c.l.bf16 %v168
  %v201 = vunpack.c.l.bf16 %v169
  %v202 = vunpack.c.l.bf16 %v170
  %v203 = vunpack.c.l.bf16 %v171
  %v204 = vunpack.c.l.bf16 %v172
  %v205 = vunpack.c.l.bf16 %v173
  %v206 = vunpack.c.l.bf16 %v174
  %v207 = vunpack.c.l.bf16 %v175
  %v208 = vunpack.c.l.bf16 %v176
  %v209 = vunpack.c.l.bf16 %v177
  %v210 = vunpack.c.l.bf16 %v178
  %v211 = vunpack.c.l.bf16 %v179
  %v212 = vunpack.c.l.bf16 %v180
  %v213 = vunpack.c.l.bf16 %v181
  %v214 = vunpack.c.l.bf16 %v182
  %v215 = vunpack.c.l.bf16 %v183
  %v216 = vunpack.c.l.bf16 %v184
  %v217 = vunpack.c.l.bf16 %v185
  %v218 = vunpack.c.l.bf16 %v186
  %v219 = vunpack.c.l.bf16 %v187
  %v220 = vunpack.c.l.bf16 %v188
  %v221 = vunpack.c.l.bf16 %v189
  %v222 = vunpack.c.l.bf16 %v190
  %v223 = vadd.f32 %v127, %v191
  %v224 = vadd.f32 %v128, %v192
  %v225 = vadd.f32 %v129, %v193
  %v226 = vadd.f32 %v130, %v194
  %v227 = vadd.f32 %v131, %v195
  %v228 = vadd.f32 %v132, %v196
  %v229 = vadd.f32 %v133, %v197
  %v230 = vadd.f32 %v134, %v198
  %v231 = vadd.f32 %v135, %v199
  %v232 = vadd.f32 %v136, %v200
  %v233 = vadd.f32 %v137, %v201
  %v234 = vadd.f32 %v138, %v202
  %v235 = vadd.f32 %v139, %v203
  %v236 = vadd.f32 %v140, %v204
  %v237 = vadd.f32 %v141, %v205
  %v238 = vadd.f32 %v142, %v206
  %v239 = vadd.f32 %v143, %v207
  %v240 = vadd.f32 %v144, %v208
  %v241 = vadd.f32 %v145, %v209
  %v242 = vadd.f32 %v146, %v210
  %v243 = vadd.f32 %v147, %v211
  %v244 = vadd.f32 %v148, %v212
  %v245 = vadd.f32 %v149, %v213
  %v246 = vadd.f32 %v150, %v214
  %v247 = vadd.f32 %v151, %v215
  %v248 = vadd.f32 %v152, %v216
  %v249 = vadd.f32 %v153, %v217
  %v250 = vadd.f32 %v154, %v218
  %v251 = vadd.f32 %v155, %v219
  %v252 = vadd.f32 %v156, %v220
  %v253 = vadd.f32 %v157, %v221
  %v254 = vadd.f32 %v158, %v222
  %vm255 = vcmp.ge.f32.partialorder %v223, 0.0
  %vm256 = vcmp.ge.f32.partialorder %v224, 0.0
  %vm257 = vcmp.ge.f32.partialorder %v225, 0.0
  %vm258 = vcmp.ge.f32.partialorder %v226, 0.0
  %vm259 = vcmp.ge.f32.partialorder %v227, 0.0
  %vm260 = vcmp.ge.f32.partialorder %v228, 0.0
  %vm261 = vcmp.ge.f32.partialorder %v229, 0.0
  %vm262 = vcmp.ge.f32.partialorder %v230, 0.0
  %vm263 = vcmp.ge.f32.partialorder %v231, 0.0
  %vm264 = vcmp.ge.f32.partialorder %v232, 0.0
  %vm265 = vcmp.ge.f32.partialorder %v233, 0.0
  %vm266 = vcmp.ge.f32.partialorder %v234, 0.0
  %vm267 = vcmp.ge.f32.partialorder %v235, 0.0
  %vm268 = vcmp.ge.f32.partialorder %v236, 0.0
  %vm269 = vcmp.ge.f32.partialorder %v237, 0.0
  %vm270 = vcmp.ge.f32.partialorder %v238, 0.0
  %vm271 = vcmp.ge.f32.partialorder %v239, 0.0
  %vm272 = vcmp.ge.f32.partialorder %v240, 0.0
  %vm273 = vcmp.ge.f32.partialorder %v241, 0.0
  %vm274 = vcmp.ge.f32.partialorder %v242, 0.0
  %vm275 = vcmp.ge.f32.partialorder %v243, 0.0
  %vm276 = vcmp.ge.f32.partialorder %v244, 0.0
  %vm277 = vcmp.ge.f32.partialorder %v245, 0.0
  %vm278 = vcmp.ge.f32.partialorder %v246, 0.0
  %vm279 = vcmp.ge.f32.partialorder %v247, 0.0
  %vm280 = vcmp.ge.f32.partialorder %v248, 0.0
  %vm281 = vcmp.ge.f32.partialorder %v249, 0.0
  %vm282 = vcmp.ge.f32.partialorder %v250, 0.0
  %vm283 = vcmp.ge.f32.partialorder %v251, 0.0
  %vm284 = vcmp.ge.f32.partialorder %v252, 0.0
  %vm285 = vcmp.ge.f32.partialorder %v253, 0.0
  %vm286 = vcmp.ge.f32.partialorder %v254, 0.0
  %v287 = vmul.f32 %v223, 0.1
  %v288 = vmul.f32 %v224, 0.1
  %v289 = vmul.f32 %v225, 0.1
  %v290 = vmul.f32 %v226, 0.1
  %v291 = vmul.f32 %v227, 0.1
  %v292 = vmul.f32 %v228, 0.1
  %v293 = vmul.f32 %v229, 0.1
  %v294 = vmul.f32 %v230, 0.1
  %v295 = vmul.f32 %v231, 0.1
  %v296 = vmul.f32 %v232, 0.1
  %v297 = vmul.f32 %v233, 0.1
  %v298 = vmul.f32 %v234, 0.1
  %v299 = vmul.f32 %v235, 0.1
  %v300 = vmul.f32 %v236, 0.1
  %v301 = vmul.f32 %v237, 0.1
  %v302 = vmul.f32 %v238, 0.1
  %v303 = vmul.f32 %v239, 0.1
  %v304 = vmul.f32 %v240, 0.1
  %v305 = vmul.f32 %v241, 0.1
  %v306 = vmul.f32 %v242, 0.1
  %v307 = vmul.f32 %v243, 0.1
  %v308 = vmul.f32 %v244, 0.1
  %v309 = vmul.f32 %v245, 0.1
  %v310 = vmul.f32 %v246, 0.1
  %v311 = vmul.f32 %v247, 0.1
  %v312 = vmul.f32 %v248, 0.1
  %v313 = vmul.f32 %v249, 0.1
  %v314 = vmul.f32 %v250, 0.1
  %v315 = vmul.f32 %v251, 0.1
  %v316 = vmul.f32 %v252, 0.1
  %v317 = vmul.f32 %v253, 0.1
  %v318 = vmul.f32 %v254, 0.1
  %v319 = vsel %vm255, %v223, %v287
  %v320 = vsel %vm256, %v224, %v288
  %v321 = vsel %vm257, %v225, %v289
  %v322 = vsel %vm258, %v226, %v290
  %v323 = vsel %vm259, %v227, %v291
  %v324 = vsel %vm260, %v228, %v292
  %v325 = vsel %vm261, %v229, %v293
  %v326 = vsel %vm262, %v230, %v294
  %v327 = vsel %vm263, %v231, %v295
  %v328 = vsel %vm264, %v232, %v296
  %v329 = vsel %vm265, %v233, %v297
  %v330 = vsel %vm266, %v234, %v298
  %v331 = vsel %vm267, %v235, %v299
  %v332 = vsel %vm268, %v236, %v300
  %v333 = vsel %vm269, %v237, %v301
  %v334 = vsel %vm270, %v238, %v302
  %v335 = vsel %vm271, %v239, %v303
  %v336 = vsel %vm272, %v240, %v304
  %v337 = vsel %vm273, %v241, %v305
  %v338 = vsel %vm274, %v242, %v306
  %v339 = vsel %vm275, %v243, %v307
  %v340 = vsel %vm276, %v244, %v308
  %v341 = vsel %vm277, %v245, %v309
  %v342 = vsel %vm278, %v246, %v310
  %v343 = vsel %vm279, %v247, %v311
  %v344 = vsel %vm280, %v248, %v312
  %v345 = vsel %vm281, %v249, %v313
  %v346 = vsel %vm282, %v250, %v314
  %v347 = vsel %vm283, %v251, %v315
  %v348 = vsel %vm284, %v252, %v316
  %v349 = vsel %vm285, %v253, %v317
  %v350 = vsel %vm286, %v254, %v318
  %351 = vst [vmem:[%s4] sm:$0xff] %v319
  %352 = vst [vmem:[%s4 + $0x8] sm:$0xff] %v320
  %353 = vst [vmem:[%s4 + $0x10] sm:$0xff] %v321
  %354 = vst [vmem:[%s4 + $0x18] sm:$0xff] %v322
  %355 = vst [vmem:[%s4 + $0x20] sm:$0xff] %v323
  %356 = vst [vmem:[%s4 + $0x28] sm:$0xff] %v324
  %357 = vst [vmem:[%s4 + $0x30] sm:$0xff] %v325
  %358 = vst [vmem:[%s4 + $0x38] sm:$0xff] %v326
  %359 = vst [vmem:[%s4 + $0x40] sm:$0xff] %v327
  %360 = vst [vmem:[%s4 + $0x48] sm:$0xff] %v328
  %361 = vst [vmem:[%s4 + $0x50] sm:$0xff] %v329
  %362 = vst [vmem:[%s4 + $0x58] sm:$0xff] %v330
  %363 = vst [vmem:[%s4 + $0x60] sm:$0xff] %v331
  %364 = vst [vmem:[%s4 + $0x68] sm:$0xff] %v332
  %365 = vst [vmem:[%s4 + $0x70] sm:$0xff] %v333
  %366 = vst [vmem:[%s4 + $0x78] sm:$0xff] %v334
  %367 = vst [vmem:[%s4 + $0x80] sm:$0xff] %v335
  %368 = vst [vmem:[%s4 + $0x88] sm:$0xff] %v336
  %369 = vst [vmem:[%s4 + $0x90] sm:$0xff] %v337
  %370 = vst [vmem:[%s4 + $0x98] sm:$0xff] %v338
  %371 = vst [vmem:[%s4 + $0xa0] sm:$0xff] %v339
  %372 = vst [vmem:[%s4 + $0xa8] sm:$0xff] %v340
  %373 = vst [vmem:[%s4 + $0xb0] sm:$0xff] %v341
  %374 = vst [vmem:[%s4 + $0xb8] sm:$0xff] %v342
  %375 = vst [vmem:[%s4 + $0xc0] sm:$0xff] %v343
  %376 = vst [vmem:[%s4 + $0xc8] sm:$0xff] %v344
  %377 = vst [vmem:[%s4 + $0xd0] sm:$0xff] %v345
  %378 = vst [vmem:[%s4 + $0xd8] sm:$0xff] %v346
  %379 = vst [vmem:[%s4 + $0xe0] sm:$0xff] %v347
  %380 = vst [vmem:[%s4 + $0xe8] sm:$0xff] %v348
  %381 = vst [vmem:[%s4 + $0xf0] sm:$0xff] %v349
  %382 = vst [vmem:[%s4 + $0xf8] sm:$0xff] %v350
  // Predicated region
  $region18: #{bottleneck_forward.7} parent=0 // pred_check
    _
  $region19: #{bottleneck_forward.7} parent=0 // pred_check_branch
    %384 = sbr.rel (0) target = $region21
  $region20: #{bottleneck_forward.7} parent=0 // pred_region
    _
  $region21: #{bottleneck_forward.7} parent=0 // pred_fallthru
    _
  // Predicated region
  $region22: #{bottleneck_forward.7} parent=0 // pred_check
    _
  $region23: #{bottleneck_forward.7} parent=0 // pred_check_branch
    %386 = sbr.rel (0) target = $region25
  $region24: #{bottleneck_forward.7} parent=0 // pred_region
    _
  $region25: #{bottleneck_forward.7} parent=0 // pred_fallthru
    _

</llo_original>
